<compile_context>
chip_gen: v6e
topology: v6e:2x2x1
jax: 0.10.0
libtpu: 0.0.40
codegen_flags: <defaults>
</compile_context>

<pallas_src>
import functools

import jax
import jax.numpy as jnp
from jax.experimental import pallas as pl
from jax.experimental.pallas import tpu as pltpu


CPAD = 128                       # lane-dense channel width carried end-to-end
VMEM_LIMIT = 32 * 1024 * 1024    # explicit scoped-VMEM cap (safe on v5e/v6e/v7x)

_CONV_COMPILER_PARAMS = pltpu.CompilerParams(
    dimension_semantics=("parallel",),      # Cout-block axis: exact split for BN, feeds v7x's 2nd TC
    vmem_limit_bytes=VMEM_LIMIT,
)
_HEAD_COMPILER_PARAMS = pltpu.CompilerParams(
    dimension_semantics=("arbitrary",),
    vmem_limit_bytes=VMEM_LIMIT,
)


# ----------------------------- Pallas kernels -----------------------------

def _bn_cols(acc, g, b, eps):
    """Training-mode BatchNorm over rows of an [M, C] fp32 tile.

    Single-pass sum / sum-of-squares form (fewer live temporaries than (x-mean)^2).
    Stats are per-channel over the full M rows; the grid only splits channels, so
    they stay exact.  Zero-padded channels stay exactly zero.
    """
    inv_m = 1.0 / acc.shape[0]
    s = jnp.sum(acc, axis=0, keepdims=True)
    ss = jnp.sum(acc * acc, axis=0, keepdims=True)
    mean = s * inv_m
    var = jnp.maximum(ss * inv_m - mean * mean, 0.0)
    return (acc - mean) * jax.lax.rsqrt(var + eps) * g + b


def _conv_bn_act_kernel(a_ref, w_ref, g_ref, b_ref, o_ref, *, eps, relu):
    """Fused conv-as-matmul (bf16 operands, fp32 accumulate) + BN + optional ReLU."""
    acc = jnp.dot(a_ref[...], w_ref[...], preferred_element_type=jnp.float32)
    y = _bn_cols(acc, g_ref[...], b_ref[...], eps)
    if relu:
        y = jnp.maximum(y, 0.0)
    o_ref[...] = y


def _conv_bn_add_relu_kernel(a_ref, w_ref, g_ref, b_ref, r_ref, o_ref, *, eps):
    """Fused conv-matmul + BN + residual add + ReLU (ResNet block tail)."""
    acc = jnp.dot(a_ref[...], w_ref[...], preferred_element_type=jnp.float32)
    y = _bn_cols(acc, g_ref[...], b_ref[...], eps)
    o_ref[...] = jnp.maximum(y + r_ref[...], 0.0)


def _conv_bn_dual_kernel(a_ref, w1_ref, g1_ref, b1_ref, wd_ref, gd_ref, bd_ref,
                         o1_ref, od_ref, *, eps, doff, dcols):
    """Strided-block front: main 3x3 conv (+BN+ReLU) and 1x1 downsample conv (+BN)
    share one im2col tile; the downsample dots a dense weight against the
    lane-aligned centre-tap columns only."""
    a = a_ref[...]
    acc1 = jnp.dot(a, w1_ref[...], preferred_element_type=jnp.float32)
    o1_ref[...] = jnp.maximum(_bn_cols(acc1, g1_ref[...], b1_ref[...], eps), 0.0)
    a_c = a[:, doff:doff + dcols]                       # centre tap (lane-aligned static slice)
    accd = jnp.dot(a_c, wd_ref[...], preferred_element_type=jnp.float32)
    od_ref[...] = _bn_cols(accd, gd_ref[...], bd_ref[...], eps)


def _head_train_kernel(x_ref, ew_ref, eb_ref, fw_ref, fb_ref, o_ref):
    """Global avg-pool + embed_fc + ReLU + fc, fused (bf16 matmuls, fp32 epilogue)."""
    feat = jnp.mean(x_ref[...], axis=1)                                  # [N, C] fp32
    e = jnp.dot(feat.astype(jnp.bfloat16), ew_ref[...],
                preferred_element_type=jnp.float32) + eb_ref[...]
    e = jnp.maximum(e, 0.0)
    o_ref[...] = jnp.dot(e.astype(jnp.bfloat16), fw_ref[...],
                         preferred_element_type=jnp.float32) + fb_ref[...]


def _head_eval_kernel(x_ref, o_ref, *, eps):
    """Global avg-pool + L2 normalization (eval path), fused."""
    feat = jnp.mean(x_ref[...], axis=1)
    n = jnp.sqrt(jnp.sum(feat * feat, axis=-1, keepdims=True))
    o_ref[...] = feat / jnp.maximum(n, eps)


# ----------------------------- glue / wrappers -----------------------------

def _round_up(x, m):
    return (x + m - 1) // m * m


def _im2col(x, kh, kw, stride, padding):
    """x: [N,H,W,Cin] NHWC -> patches [N*Ho*Wo, kh*kw*Cin] (fp32); fuses under jit."""
    N, H, W, Cin = x.shape
    Ho = (H + 2 * padding - kh) // stride + 1
    Wo = (W + 2 * padding - kw) // stride + 1
    xp = jnp.pad(x, ((0, 0), (padding, padding), (padding, padding), (0, 0)))
    cols = [xp[:, ky:ky + stride * Ho:stride, kx:kx + stride * Wo:stride, :]
            for ky in range(kh) for kx in range(kw)]
    patches = jnp.stack(cols, axis=3)                       # [N,Ho,Wo,kh*kw,Cin]
    return patches.reshape(N * Ho * Wo, kh * kw * Cin), Ho, Wo


def _prep_conv_operands(x, w, stride, padding):
    """im2col + channel/contraction padding + bf16 cast.
    Returns (A[M,Kp] bf16, W[Kp,CPAD] bf16, M, Kp, Ho, Wo)."""
    cin_act = x.shape[3]
    KH, KW, cin_r, cout_r = w.shape
    a, Ho, Wo = _im2col(x, KH, KW, stride, padding)
    wm = jnp.pad(w, ((0, 0), (0, 0), (0, cin_act - cin_r), (0, CPAD - cout_r)))
    wm = wm.reshape(KH * KW * cin_act, CPAD)
    K = a.shape[1]
    Kp = _round_up(K, 128)                                  # full 128-lane groups on the MXU feed
    if Kp != K:
        a = jnp.pad(a, ((0, 0), (0, Kp - K)))
        wm = jnp.pad(wm, ((0, Kp - K), (0, 0)))
    return a.astype(jnp.bfloat16), wm.astype(jnp.bfloat16), a.shape[0], Kp, Ho, Wo


def _bn_vecs(gamma, beta, cout_r):
    g = jnp.pad(gamma, (0, CPAD - cout_r), constant_values=1.0)
    b = jnp.pad(beta, (0, CPAD - cout_r))
    return (g.reshape(1, CPAD).astype(jnp.float32),
            b.reshape(1, CPAD).astype(jnp.float32))


def conv_bn_act(x, w, gamma, beta, stride, padding, relu=True, eps=1e-5):
    """Bias-free conv + training-mode BN + optional ReLU, one pallas_call."""
    N = x.shape[0]
    cout_r = w.shape[3]
    a, wm, M, Kp, Ho, Wo = _prep_conv_operands(x, w, stride, padding)
    g, b = _bn_vecs(gamma, beta, cout_r)
    out = pl.pallas_call(
        functools.partial(_conv_bn_act_kernel, eps=eps, relu=relu),
        grid=(CPAD // 128,),
        in_specs=[
            pl.BlockSpec((M, Kp), lambda j: (0, 0)),
            pl.BlockSpec((Kp, 128), lambda j: (0, j)),
            pl.BlockSpec((1, 128), lambda j: (0, j)),
            pl.BlockSpec((1, 128), lambda j: (0, j)),
        ],
        out_specs=pl.BlockSpec((M, 128), lambda j: (0, j)),
        out_shape=jax.ShapeDtypeStruct((M, CPAD), jnp.float32),
        compiler_params=_CONV_COMPILER_PARAMS,
    )(a, wm, g, b)
    return out.reshape(N, Ho, Wo, CPAD)


def conv_bn_add_relu(x, w, gamma, beta, residual, stride, padding, eps=1e-5):
    """conv + BN + residual add + ReLU, one pallas_call (block tail)."""
    N = x.shape[0]
    cout_r = w.shape[3]
    a, wm, M, Kp, Ho, Wo = _prep_conv_operands(x, w, stride, padding)
    g, b = _bn_vecs(gamma, beta, cout_r)
    r = residual.reshape(M, CPAD).astype(jnp.float32)
    out = pl.pallas_call(
        functools.partial(_conv_bn_add_relu_kernel, eps=eps),
        grid=(CPAD // 128,),
        in_specs=[
            pl.BlockSpec((M, Kp), lambda j: (0, 0)),
            pl.BlockSpec((Kp, 128), lambda j: (0, j)),
            pl.BlockSpec((1, 128), lambda j: (0, j)),
            pl.BlockSpec((1, 128), lambda j: (0, j)),
            pl.BlockSpec((M, 128), lambda j: (0, j)),
        ],
        out_specs=pl.BlockSpec((M, 128), lambda j: (0, j)),
        out_shape=jax.ShapeDtypeStruct((M, CPAD), jnp.float32),
        compiler_params=_CONV_COMPILER_PARAMS,
    )(a, wm, g, b, r)
    return out.reshape(N, Ho, Wo, CPAD)


def conv_bn_dual(x, w1, g1, b1, wd, gd, bd, stride, eps=1e-5):
    """Fused strided-block front: 3x3/pad1 conv (BN+ReLU) + 1x1 downsample conv (BN),
    sharing one im2col.  Returns (main_path, identity_path) as NHWC tensors."""
    N = x.shape[0]
    cin_act = x.shape[3]
    cin_r, cout_r = w1.shape[2], w1.shape[3]
    a, w1m, M, Kp, Ho, Wo = _prep_conv_operands(x, w1, stride, 1)
    # Dense 1x1 downsample weight on padded input channels.
    wdm = jnp.pad(wd.reshape(cin_r, cout_r),
                  ((0, cin_act - cin_r), (0, CPAD - cout_r))).astype(jnp.bfloat16)
    g1v, b1v = _bn_vecs(g1, b1, cout_r)
    gdv, bdv = _bn_vecs(gd, bd, cout_r)
    doff = 4 * cin_act          # centre tap (ky=kx=1) of the (ky,kx) raster order; lane-aligned
    out_main, out_id = pl.pallas_call(
        functools.partial(_conv_bn_dual_kernel, eps=eps, doff=doff, dcols=cin_act),
        grid=(CPAD // 128,),
        in_specs=[
            pl.BlockSpec((M, Kp), lambda j: (0, 0)),
            pl.BlockSpec((Kp, 128), lambda j: (0, j)),
            pl.BlockSpec((1, 128), lambda j: (0, j)),
            pl.BlockSpec((1, 128), lambda j: (0, j)),
            pl.BlockSpec((cin_act, 128), lambda j: (0, j)),
            pl.BlockSpec((1, 128), lambda j: (0, j)),
            pl.BlockSpec((1, 128), lambda j: (0, j)),
        ],
        out_specs=(
            pl.BlockSpec((M, 128), lambda j: (0, j)),
            pl.BlockSpec((M, 128), lambda j: (0, j)),
        ),
        out_shape=(
            jax.ShapeDtypeStruct((M, CPAD), jnp.float32),
            jax.ShapeDtypeStruct((M, CPAD), jnp.float32),
        ),
        compiler_params=_CONV_COMPILER_PARAMS,
    )(a, w1m, g1v, b1v, wdm, gdv, bdv)
    return out_main.reshape(N, Ho, Wo, CPAD), out_id.reshape(N, Ho, Wo, CPAD)


def maxpool3x3s2(x):
    """MaxPool2d(kernel_size=3, stride=2, padding=1) — pure XLA; fuses under jit
    (per perf review: avoids an HBM round trip of a 9x-stacked tensor)."""
    N, H, W, C = x.shape
    Ho = (H + 2 - 3) // 2 + 1
    Wo = (W + 2 - 3) // 2 + 1
    neg = jnp.finfo(x.dtype).min
    xp = jnp.pad(x, ((0, 0), (1, 1), (1, 1), (0, 0)), constant_values=neg)
    wins = [xp[:, ky:ky + 2 * Ho:2, kx:kx + 2 * Wo:2, :]
            for ky in range(3) for kx in range(3)]
    return jnp.max(jnp.stack(wins, axis=0), axis=0)


def head_train(x, embed_w, embed_b, fc_w, fc_b):
    """avg-pool + embed_fc + ReLU + fc, one pallas_call. x: NHWC (CPAD channels)."""
    N, H, W, C = x.shape
    hw = H * W
    xr = x.reshape(N, hw, C)                        # no transpose; pooled in-kernel
    cin_e, E = embed_w.shape
    _, CLS = fc_w.shape
    ew = jnp.pad(embed_w, ((0, C - cin_e), (0, CPAD - E))).astype(jnp.bfloat16)
    eb = jnp.pad(embed_b, (0, CPAD - E)).reshape(1, CPAD).astype(jnp.float32)
    fw = jnp.pad(fc_w, ((0, CPAD - E), (0, CPAD - CLS))).astype(jnp.bfloat16)
    fb = jnp.pad(fc_b, (0, CPAD - CLS)).reshape(1, CPAD).astype(jnp.float32)
    out = pl.pallas_call(
        _head_train_kernel,
        grid=(1,),
        in_specs=[
            pl.BlockSpec((N, hw, C), lambda i: (0, 0, 0)),
            pl.BlockSpec((C, CPAD), lambda i: (0, 0)),
            pl.BlockSpec((1, CPAD), lambda i: (0, 0)),
            pl.BlockSpec((CPAD, CPAD), lambda i: (0, 0)),
            pl.BlockSpec((1, CPAD), lambda i: (0, 0)),
        ],
        out_specs=pl.BlockSpec((N, CPAD), lambda i: (0, 0)),
        out_shape=jax.ShapeDtypeStruct((N, CPAD), jnp.float32),
        compiler_params=_HEAD_COMPILER_PARAMS,
    )(xr, ew, eb, fw, fb)
    return out[:, :CLS]


def head_eval(x, feat_dim, eps=1e-12):
    """avg-pool + F.normalize (eval path), one pallas_call. x: NHWC (CPAD channels)."""
    N, H, W, C = x.shape
    hw = H * W
    xr = x.reshape(N, hw, C)
    out = pl.pallas_call(
        functools.partial(_head_eval_kernel, eps=eps),
        grid=(1,),
        in_specs=[pl.BlockSpec((N, hw, C), lambda i: (0, 0, 0))],
        out_specs=pl.BlockSpec((N, C), lambda i: (0, 0)),
        out_shape=jax.ShapeDtypeStruct((N, C), jnp.float32),
        compiler_params=_HEAD_COMPILER_PARAMS,
    )(xr)
    return out[:, :feat_dim]


def basic_block(x, p, stride):
    """ResNet BasicBlock: relu(bn2(conv2(relu(bn1(conv1(x))))) + downsample(x))."""
    if "wd" in p:
        out, identity = conv_bn_dual(x, p["w1"], p["g1"], p["b1"],
                                     p["wd"], p["gd"], p["bd"], stride)
    else:
        identity = x
        out = conv_bn_act(x, p["w1"], p["g1"], p["b1"], stride=stride, padding=1, relu=True)
    return conv_bn_add_relu(out, p["w2"], p["g2"], p["b2"], identity, stride=1, padding=1)


# ----------------------------- parameters -----------------------------

EMBED_DIM = 32
CLS_NUM = 16
FEAT_DIM = 64   # base.fc.in_features for this small backbone


def init_params(key):
    keys = iter(jax.random.split(key, 32))

    def conv_w(kh, kw, cin, cout):
        std = (2.0 / (kh * kw * cout)) ** 0.5          # kaiming fan_out
        return std * jax.random.normal(next(keys), (kh, kw, cin, cout), jnp.float32)

    def block(cin, cout, stride):
        p = {
            "w1": conv_w(3, 3, cin, cout),
            "g1": jnp.ones((cout,), jnp.float32), "b1": jnp.zeros((cout,), jnp.float32),
            "w2": conv_w(3, 3, cout, cout),
            "g2": jnp.ones((cout,), jnp.float32), "b2": jnp.zeros((cout,), jnp.float32),
        }
        if stride != 1 or cin != cout:
            p["wd"] = conv_w(1, 1, cin, cout)
            p["gd"] = jnp.ones((cout,), jnp.float32)
            p["bd"] = jnp.zeros((cout,), jnp.float32)
        return p

    params = {
        "conv1_w": conv_w(7, 7, 3, 8),
        "bn1_g": jnp.ones((8,), jnp.float32),
        "bn1_b": jnp.zeros((8,), jnp.float32),
        "layer1": block(8, 8, 1),
        "layer2": block(8, 16, 2),
        "layer3": block(16, 32, 2),
        "layer4": block(32, 64, 2),
        # embed_fc: kaiming_normal_(fan_out), bias 0
        "embed_w": ((2.0 / EMBED_DIM) ** 0.5)
        * jax.random.normal(next(keys), (FEAT_DIM, EMBED_DIM), jnp.float32),
        "embed_b": jnp.zeros((EMBED_DIM,), jnp.float32),
        # fc: normal_(std=0.001), bias 0
        "fc_w": 0.001 * jax.random.normal(next(keys), (EMBED_DIM, CLS_NUM), jnp.float32),
        "fc_b": jnp.zeros((CLS_NUM,), jnp.float32),
    }
    return params


# ----------------------------- forward -----------------------------

@functools.partial(jax.jit, static_argnames=("training",))
def lupnet_forward(params, x_nchw, training=True):
    # NCHW (PyTorch) -> NHWC (kernel layout)
    x = jnp.transpose(x_nchw.astype(jnp.float32), (0, 2, 3, 1))
    x = conv_bn_act(x, params["conv1_w"], params["bn1_g"], params["bn1_b"],
                    stride=2, padding=3, relu=True)
    x = maxpool3x3s2(x)
    x = basic_block(x, params["layer1"], stride=1)
    x = basic_block(x, params["layer2"], stride=2)
    x = basic_block(x, params["layer3"], stride=2)
    x = basic_block(x, params["layer4"], stride=2)
    if not training:
        return head_eval(x, FEAT_DIM)                                    # eval: F.normalize(avgpool(x))
    return head_train(x, params["embed_w"], params["embed_b"],
                      params["fc_w"], params["fc_b"])                    # embed_fc+ReLU, fc


if __name__ == "__main__":
    key = jax.random.PRNGKey(0)
    pkey, xkey = jax.random.split(key)
    params = init_params(pkey)

    x = jax.random.normal(xkey, (2, 3, 32, 32), jnp.float32)   # NCHW, like PyTorch

    logits = lupnet_forward(params, x, training=True)          # [2, CLS_NUM]
    feats = lupnet_forward(params, x, training=False)          # [2, FEAT_DIM], L2-normalized

    jax.block_until_ready(logits)
    jax.block_until_ready(feats)

    assert logits.shape == (2, CLS_NUM)
    assert feats.shape == (2, FEAT_DIM)
    assert bool(jnp.all(jnp.isfinite(logits))) and bool(jnp.all(jnp.isfinite(feats)))
    print("KERNEL_OK")
</pallas_src>

<mosaic_0001>
module attributes {stable_mosaic.version = 11 : i64} {
  func.func @_conv_bn_act_kernel(%arg0: i32, %arg1: memref<512x256xbf16, #tpu.memory_space<vmem>>, %arg2: memref<256x128xbf16, #tpu.memory_space<vmem>>, %arg3: memref<1x128xf32, #tpu.memory_space<vmem>>, %arg4: memref<1x128xf32, #tpu.memory_space<vmem>>, %arg5: memref<512x128xf32, #tpu.memory_space<vmem>>) attributes {dimension_semantics = [#tpu.dimension_semantics<parallel>], iteration_bounds = array<i64: 1>, scalar_prefetch = 0 : i64, scratch_operands = 0 : i64, tpu.core_type = #tpu.core_type<tc>, window_params = [{pipeline_mode = #tpu.pipeline_mode<synchronous>, transform_indices = @transform_0, window_bounds = array<i64: 512, 256>}, {transform_indices = @transform_1, window_bounds = array<i64: 256, 128>}, {transform_indices = @transform_2, window_bounds = array<i64: 1, 128>}, {transform_indices = @transform_3, window_bounds = array<i64: 1, 128>}, {transform_indices = @transform_4, window_bounds = array<i64: 512, 128>}]} {
    %c0 = arith.constant 0 : index
    %c0_0 = arith.constant 0 : index
    %0 = vector.load %arg1[%c0, %c0_0] : memref<512x256xbf16, #tpu.memory_space<vmem>>, vector<512x256xbf16>
    %c0_1 = arith.constant 0 : index
    %c0_2 = arith.constant 0 : index
    %1 = vector.load %arg2[%c0_1, %c0_2] : memref<256x128xbf16, #tpu.memory_space<vmem>>, vector<256x128xbf16>
    %cst = arith.constant dense<0.000000e+00> : vector<512x128xf32>
    %2 = tpu.matmul %0, %1, %cst {dimension_numbers = #tpu.dot_dimension_numbers<[1], [0], [0], [1], [0, 0, 1, 1], [], []>} : vector<512x256xbf16>, vector<256x128xbf16>, vector<512x128xf32> -> vector<512x128xf32>
    %c0_3 = arith.constant 0 : index
    %c0_4 = arith.constant 0 : index
    %3 = vector.load %arg3[%c0_3, %c0_4] : memref<1x128xf32, #tpu.memory_space<vmem>>, vector<1x128xf32>
    %c0_5 = arith.constant 0 : index
    %c0_6 = arith.constant 0 : index
    %4 = vector.load %arg4[%c0_5, %c0_6] : memref<1x128xf32, #tpu.memory_space<vmem>>, vector<1x128xf32>
    %cst_7 = arith.constant dense<0.000000e+00> : vector<128xf32>
    %5 = vector.multi_reduction <add>, %2, %cst_7 [0] : vector<512x128xf32> to vector<128xf32>
    %6 = vector.shape_cast %5 : vector<128xf32> to vector<1x128xf32>
    %7 = arith.mulf %2, %2 : vector<512x128xf32>
    %cst_8 = arith.constant dense<0.000000e+00> : vector<128xf32>
    %8 = vector.multi_reduction <add>, %7, %cst_8 [0] : vector<512x128xf32> to vector<128xf32>
    %9 = vector.shape_cast %8 : vector<128xf32> to vector<1x128xf32>
    %cst_9 = arith.constant 0.001953125 : f32
    %10 = vector.broadcast %cst_9 : f32 to vector<1x128xf32>
    %11 = arith.mulf %6, %10 : vector<1x128xf32>
    %cst_10 = arith.constant 0.001953125 : f32
    %12 = vector.broadcast %cst_10 : f32 to vector<1x128xf32>
    %13 = arith.mulf %9, %12 : vector<1x128xf32>
    %14 = arith.mulf %11, %11 : vector<1x128xf32>
    %15 = arith.subf %13, %14 : vector<1x128xf32>
    %cst_11 = arith.constant 0.000000e+00 : f32
    %16 = vector.broadcast %cst_11 : f32 to vector<1x128xf32>
    %17 = arith.maximumf %15, %16 : vector<1x128xf32>
    %18 = vector.broadcast %11 : vector<1x128xf32> to vector<512x128xf32>
    %19 = arith.subf %2, %18 : vector<512x128xf32>
    %cst_12 = arith.constant 9.99999974E-6 : f32
    %20 = vector.broadcast %cst_12 : f32 to vector<1x128xf32>
    %21 = arith.addf %17, %20 : vector<1x128xf32>
    %22 = math.rsqrt %21 : vector<1x128xf32>
    %23 = vector.broadcast %22 : vector<1x128xf32> to vector<512x128xf32>
    %24 = arith.mulf %19, %23 : vector<512x128xf32>
    %25 = vector.broadcast %3 : vector<1x128xf32> to vector<512x128xf32>
    %26 = arith.mulf %24, %25 : vector<512x128xf32>
    %27 = vector.broadcast %4 : vector<1x128xf32> to vector<512x128xf32>
    %28 = arith.addf %26, %27 : vector<512x128xf32>
    %cst_13 = arith.constant 0.000000e+00 : f32
    %29 = vector.broadcast %cst_13 : f32 to vector<512x128xf32>
    %30 = arith.maximumf %28, %29 : vector<512x128xf32>
    %c0_14 = arith.constant 0 : index
    %c0_15 = arith.constant 0 : index
    %31 = vector.load %arg5[%c0_14, %c0_15] : memref<512x128xf32, #tpu.memory_space<vmem>>, vector<512x128xf32>
    tpu.vector_store %arg5[%c0_14, %c0_15], %30 {strides = array<i32>} : memref<512x128xf32, #tpu.memory_space<vmem>>, vector<512x128xf32>,
    return
  }
  func.func @transform_0(%arg0: i32) -> (i32, i32) {
    %c0_i32 = arith.constant 0 : i32
    %c0_i32_0 = arith.constant 0 : i32
    %c0_i32_1 = arith.constant 0 : i32
    return %c0_i32, %c0_i32_0 : i32, i32
  }
  func.func @transform_1(%arg0: i32) -> (i32, i32) {
    %c0_i32 = arith.constant 0 : i32
    %c0_i32_0 = arith.constant 0 : i32
    return %c0_i32, %arg0 : i32, i32
  }
  func.func @transform_2(%arg0: i32) -> (i32, i32) {
    %c0_i32 = arith.constant 0 : i32
    %c0_i32_0 = arith.constant 0 : i32
    return %c0_i32, %arg0 : i32, i32
  }
  func.func @transform_3(%arg0: i32) -> (i32, i32) {
    %c0_i32 = arith.constant 0 : i32
    %c0_i32_0 = arith.constant 0 : i32
    return %c0_i32, %arg0 : i32, i32
  }
  func.func @transform_4(%arg0: i32) -> (i32, i32) {
    %c0_i32 = arith.constant 0 : i32
    %c0_i32_0 = arith.constant 0 : i32
    return %c0_i32, %arg0 : i32, i32
  }
}

module attributes {stable_mosaic.version = 11 : i64} {
  func.func @_conv_bn_act_kernel(%arg0: i32, %arg1: memref<128x1152xbf16, #tpu.memory_space<vmem>>, %arg2: memref<1152x128xbf16, #tpu.memory_space<vmem>>, %arg3: memref<1x128xf32, #tpu.memory_space<vmem>>, %arg4: memref<1x128xf32, #tpu.memory_space<vmem>>, %arg5: memref<128x128xf32, #tpu.memory_space<vmem>>) attributes {dimension_semantics = [#tpu.dimension_semantics<parallel>], iteration_bounds = array<i64: 1>, scalar_prefetch = 0 : i64, scratch_operands = 0 : i64, tpu.core_type = #tpu.core_type<tc>, window_params = [{pipeline_mode = #tpu.pipeline_mode<synchronous>, transform_indices = @transform_0, window_bounds = array<i64: 128, 1152>}, {transform_indices = @transform_1, window_bounds = array<i64: 1152, 128>}, {transform_indices = @transform_2, window_bounds = array<i64: 1, 128>}, {transform_indices = @transform_3, window_bounds = array<i64: 1, 128>}, {transform_indices = @transform_4, window_bounds = array<i64: 128, 128>}]} {
    %c0 = arith.constant 0 : index
    %c0_0 = arith.constant 0 : index
    %0 = vector.load %arg1[%c0, %c0_0] : memref<128x1152xbf16, #tpu.memory_space<vmem>>, vector<128x1152xbf16>
    %c0_1 = arith.constant 0 : index
    %c0_2 = arith.constant 0 : index
    %1 = vector.load %arg2[%c0_1, %c0_2] : memref<1152x128xbf16, #tpu.memory_space<vmem>>, vector<1152x128xbf16>
    %cst = arith.constant dense<0.000000e+00> : vector<128x128xf32>
    %2 = tpu.matmul %0, %1, %cst {dimension_numbers = #tpu.dot_dimension_numbers<[1], [0], [0], [1], [0, 0, 1, 1], [], []>} : vector<128x1152xbf16>, vector<1152x128xbf16>, vector<128x128xf32> -> vector<128x128xf32>
    %c0_3 = arith.constant 0 : index
    %c0_4 = arith.constant 0 : index
    %3 = vector.load %arg3[%c0_3, %c0_4] : memref<1x128xf32, #tpu.memory_space<vmem>>, vector<1x128xf32>
    %c0_5 = arith.constant 0 : index
    %c0_6 = arith.constant 0 : index
    %4 = vector.load %arg4[%c0_5, %c0_6] : memref<1x128xf32, #tpu.memory_space<vmem>>, vector<1x128xf32>
    %cst_7 = arith.constant dense<0.000000e+00> : vector<128xf32>
    %5 = vector.multi_reduction <add>, %2, %cst_7 [0] : vector<128x128xf32> to vector<128xf32>
    %6 = vector.shape_cast %5 : vector<128xf32> to vector<1x128xf32>
    %7 = arith.mulf %2, %2 : vector<128x128xf32>
    %cst_8 = arith.constant dense<0.000000e+00> : vector<128xf32>
    %8 = vector.multi_reduction <add>, %7, %cst_8 [0] : vector<128x128xf32> to vector<128xf32>
    %9 = vector.shape_cast %8 : vector<128xf32> to vector<1x128xf32>
    %cst_9 = arith.constant 7.812500e-03 : f32
    %10 = vector.broadcast %cst_9 : f32 to vector<1x128xf32>
    %11 = arith.mulf %6, %10 : vector<1x128xf32>
    %cst_10 = arith.constant 7.812500e-03 : f32
    %12 = vector.broadcast %cst_10 : f32 to vector<1x128xf32>
    %13 = arith.mulf %9, %12 : vector<1x128xf32>
    %14 = arith.mulf %11, %11 : vector<1x128xf32>
    %15 = arith.subf %13, %14 : vector<1x128xf32>
    %cst_11 = arith.constant 0.000000e+00 : f32
    %16 = vector.broadcast %cst_11 : f32 to vector<1x128xf32>
    %17 = arith.maximumf %15, %16 : vector<1x128xf32>
    %18 = vector.broadcast %11 : vector<1x128xf32> to vector<128x128xf32>
    %19 = arith.subf %2, %18 : vector<128x128xf32>
    %cst_12 = arith.constant 9.99999974E-6 : f32
    %20 = vector.broadcast %cst_12 : f32 to vector<1x128xf32>
    %21 = arith.addf %17, %20 : vector<1x128xf32>
    %22 = math.rsqrt %21 : vector<1x128xf32>
    %23 = vector.broadcast %22 : vector<1x128xf32> to vector<128x128xf32>
    %24 = arith.mulf %19, %23 : vector<128x128xf32>
    %25 = vector.broadcast %3 : vector<1x128xf32> to vector<128x128xf32>
    %26 = arith.mulf %24, %25 : vector<128x128xf32>
    %27 = vector.broadcast %4 : vector<1x128xf32> to vector<128x128xf32>
    %28 = arith.addf %26, %27 : vector<128x128xf32>
    %cst_13 = arith.constant 0.000000e+00 : f32
    %29 = vector.broadcast %cst_13 : f32 to vector<128x128xf32>
    %30 = arith.maximumf %28, %29 : vector<128x128xf32>
    %c0_14 = arith.constant 0 : index
    %c0_15 = arith.constant 0 : index
    %31 = vector.load %arg5[%c0_14, %c0_15] : memref<128x128xf32, #tpu.memory_space<vmem>>, vector<128x128xf32>
    tpu.vector_store %arg5[%c0_14, %c0_15], %30 {strides = array<i32>} : memref<128x128xf32, #tpu.memory_space<vmem>>, vector<128x128xf32>,
    return
  }
  func.func @transform_0(%arg0: i32) -> (i32, i32) {
    %c0_i32 = arith.constant 0 : i32
    %c0_i32_0 = arith.constant 0 : i32
    %c0_i32_1 = arith.constant 0 : i32
    return %c0_i32, %c0_i32_0 : i32, i32
  }
  func.func @transform_1(%arg0: i32) -> (i32, i32) {
    %c0_i32 = arith.constant 0 : i32
    %c0_i32_0 = arith.constant 0 : i32
    return %c0_i32, %arg0 : i32, i32
  }
  func.func @transform_2(%arg0: i32) -> (i32, i32) {
    %c0_i32 = arith.constant 0 : i32
    %c0_i32_0 = arith.constant 0 : i32
    return %c0_i32, %arg0 : i32, i32
  }
  func.func @transform_3(%arg0: i32) -> (i32, i32) {
    %c0_i32 = arith.constant 0 : i32
    %c0_i32_0 = arith.constant 0 : i32
    return %c0_i32, %arg0 : i32, i32
  }
  func.func @transform_4(%arg0: i32) -> (i32, i32) {
    %c0_i32 = arith.constant 0 : i32
    %c0_i32_0 = arith.constant 0 : i32
    return %c0_i32, %arg0 : i32, i32
  }
}

module attributes {stable_mosaic.version = 11 : i64} {
  func.func @_conv_bn_add_relu_kernel(%arg0: i32, %arg1: memref<128x1152xbf16, #tpu.memory_space<vmem>>, %arg2: memref<1152x128xbf16, #tpu.memory_space<vmem>>, %arg3: memref<1x128xf32, #tpu.memory_space<vmem>>, %arg4: memref<1x128xf32, #tpu.memory_space<vmem>>, %arg5: memref<128x128xf32, #tpu.memory_space<vmem>>, %arg6: memref<128x128xf32, #tpu.memory_space<vmem>>) attributes {dimension_semantics = [#tpu.dimension_semantics<parallel>], iteration_bounds = array<i64: 1>, scalar_prefetch = 0 : i64, scratch_operands = 0 : i64, tpu.core_type = #tpu.core_type<tc>, window_params = [{pipeline_mode = #tpu.pipeline_mode<synchronous>, transform_indices = @transform_0, window_bounds = array<i64: 128, 1152>}, {transform_indices = @transform_1, window_bounds = array<i64: 1152, 128>}, {transform_indices = @transform_2, window_bounds = array<i64: 1, 128>}, {transform_indices = @transform_3, window_bounds = array<i64: 1, 128>}, {transform_indices = @transform_4, window_bounds = array<i64: 128, 128>}, {transform_indices = @transform_5, window_bounds = array<i64: 128, 128>}]} {
    %c0 = arith.constant 0 : index
    %c0_0 = arith.constant 0 : index
    %0 = vector.load %arg1[%c0, %c0_0] : memref<128x1152xbf16, #tpu.memory_space<vmem>>, vector<128x1152xbf16>
    %c0_1 = arith.constant 0 : index
    %c0_2 = arith.constant 0 : index
    %1 = vector.load %arg2[%c0_1, %c0_2] : memref<1152x128xbf16, #tpu.memory_space<vmem>>, vector<1152x128xbf16>
    %cst = arith.constant dense<0.000000e+00> : vector<128x128xf32>
    %2 = tpu.matmul %0, %1, %cst {dimension_numbers = #tpu.dot_dimension_numbers<[1], [0], [0], [1], [0, 0, 1, 1], [], []>} : vector<128x1152xbf16>, vector<1152x128xbf16>, vector<128x128xf32> -> vector<128x128xf32>
    %c0_3 = arith.constant 0 : index
    %c0_4 = arith.constant 0 : index
    %3 = vector.load %arg3[%c0_3, %c0_4] : memref<1x128xf32, #tpu.memory_space<vmem>>, vector<1x128xf32>
    %c0_5 = arith.constant 0 : index
    %c0_6 = arith.constant 0 : index
    %4 = vector.load %arg4[%c0_5, %c0_6] : memref<1x128xf32, #tpu.memory_space<vmem>>, vector<1x128xf32>
    %cst_7 = arith.constant dense<0.000000e+00> : vector<128xf32>
    %5 = vector.multi_reduction <add>, %2, %cst_7 [0] : vector<128x128xf32> to vector<128xf32>
    %6 = vector.shape_cast %5 : vector<128xf32> to vector<1x128xf32>
    %7 = arith.mulf %2, %2 : vector<128x128xf32>
    %cst_8 = arith.constant dense<0.000000e+00> : vector<128xf32>
    %8 = vector.multi_reduction <add>, %7, %cst_8 [0] : vector<128x128xf32> to vector<128xf32>
    %9 = vector.shape_cast %8 : vector<128xf32> to vector<1x128xf32>
    %cst_9 = arith.constant 7.812500e-03 : f32
    %10 = vector.broadcast %cst_9 : f32 to vector<1x128xf32>
    %11 = arith.mulf %6, %10 : vector<1x128xf32>
    %cst_10 = arith.constant 7.812500e-03 : f32
    %12 = vector.broadcast %cst_10 : f32 to vector<1x128xf32>
    %13 = arith.mulf %9, %12 : vector<1x128xf32>
    %14 = arith.mulf %11, %11 : vector<1x128xf32>
    %15 = arith.subf %13, %14 : vector<1x128xf32>
    %cst_11 = arith.constant 0.000000e+00 : f32
    %16 = vector.broadcast %cst_11 : f32 to vector<1x128xf32>
    %17 = arith.maximumf %15, %16 : vector<1x128xf32>
    %18 = vector.broadcast %11 : vector<1x128xf32> to vector<128x128xf32>
    %19 = arith.subf %2, %18 : vector<128x128xf32>
    %cst_12 = arith.constant 9.99999974E-6 : f32
    %20 = vector.broadcast %cst_12 : f32 to vector<1x128xf32>
    %21 = arith.addf %17, %20 : vector<1x128xf32>
    %22 = math.rsqrt %21 : vector<1x128xf32>
    %23 = vector.broadcast %22 : vector<1x128xf32> to vector<128x128xf32>
    %24 = arith.mulf %19, %23 : vector<128x128xf32>
    %25 = vector.broadcast %3 : vector<1x128xf32> to vector<128x128xf32>
    %26 = arith.mulf %24, %25 : vector<128x128xf32>
    %27 = vector.broadcast %4 : vector<1x128xf32> to vector<128x128xf32>
    %28 = arith.addf %26, %27 : vector<128x128xf32>
    %c0_13 = arith.constant 0 : index
    %c0_14 = arith.constant 0 : index
    %29 = vector.load %arg5[%c0_13, %c0_14] : memref<128x128xf32, #tpu.memory_space<vmem>>, vector<128x128xf32>
    %30 = arith.addf %28, %29 : vector<128x128xf32>
    %cst_15 = arith.constant 0.000000e+00 : f32
    %31 = vector.broadcast %cst_15 : f32 to vector<128x128xf32>
    %32 = arith.maximumf %30, %31 : vector<128x128xf32>
    %c0_16 = arith.constant 0 : index
    %c0_17 = arith.constant 0 : index
    %33 = vector.load %arg6[%c0_16, %c0_17] : memref<128x128xf32, #tpu.memory_space<vmem>>, vector<128x128xf32>
    tpu.vector_store %arg6[%c0_16, %c0_17], %32 {strides = array<i32>} : memref<128x128xf32, #tpu.memory_space<vmem>>, vector<128x128xf32>,
    return
  }
  func.func @transform_0(%arg0: i32) -> (i32, i32) {
    %c0_i32 = arith.constant 0 : i32
    %c0_i32_0 = arith.constant 0 : i32
    %c0_i32_1 = arith.constant 0 : i32
    return %c0_i32, %c0_i32_0 : i32, i32
  }
  func.func @transform_1(%arg0: i32) -> (i32, i32) {
    %c0_i32 = arith.constant 0 : i32
    %c0_i32_0 = arith.constant 0 : i32
    return %c0_i32, %arg0 : i32, i32
  }
  func.func @transform_2(%arg0: i32) -> (i32, i32) {
    %c0_i32 = arith.constant 0 : i32
    %c0_i32_0 = arith.constant 0 : i32
    return %c0_i32, %arg0 : i32, i32
  }
  func.func @transform_3(%arg0: i32) -> (i32, i32) {
    %c0_i32 = arith.constant 0 : i32
    %c0_i32_0 = arith.constant 0 : i32
    return %c0_i32, %arg0 : i32, i32
  }
  func.func @transform_4(%arg0: i32) -> (i32, i32) {
    %c0_i32 = arith.constant 0 : i32
    %c0_i32_0 = arith.constant 0 : i32
    return %c0_i32, %arg0 : i32, i32
  }
  func.func @transform_5(%arg0: i32) -> (i32, i32) {
    %c0_i32 = arith.constant 0 : i32
    %c0_i32_0 = arith.constant 0 : i32
    return %c0_i32, %arg0 : i32, i32
  }
}

module attributes {stable_mosaic.version = 11 : i64} {
  func.func @_conv_bn_dual_kernel(%arg0: i32, %arg1: memref<32x1152xbf16, #tpu.memory_space<vmem>>, %arg2: memref<1152x128xbf16, #tpu.memory_space<vmem>>, %arg3: memref<1x128xf32, #tpu.memory_space<vmem>>, %arg4: memref<1x128xf32, #tpu.memory_space<vmem>>, %arg5: memref<128x128xbf16, #tpu.memory_space<vmem>>, %arg6: memref<1x128xf32, #tpu.memory_space<vmem>>, %arg7: memref<1x128xf32, #tpu.memory_space<vmem>>, %arg8: memref<32x128xf32, #tpu.memory_space<vmem>>, %arg9: memref<32x128xf32, #tpu.memory_space<vmem>>) attributes {dimension_semantics = [#tpu.dimension_semantics<parallel>], iteration_bounds = array<i64: 1>, scalar_prefetch = 0 : i64, scratch_operands = 0 : i64, tpu.core_type = #tpu.core_type<tc>, window_params = [{pipeline_mode = #tpu.pipeline_mode<synchronous>, transform_indices = @transform_0, window_bounds = array<i64: 32, 1152>}, {transform_indices = @transform_1, window_bounds = array<i64: 1152, 128>}, {transform_indices = @transform_2, window_bounds = array<i64: 1, 128>}, {transform_indices = @transform_3, window_bounds = array<i64: 1, 128>}, {transform_indices = @transform_4, window_bounds = array<i64: 128, 128>}, {transform_indices = @transform_5, window_bounds = array<i64: 1, 128>}, {transform_indices = @transform_6, window_bounds = array<i64: 1, 128>}, {transform_indices = @transform_7, window_bounds = array<i64: 32, 128>}, {transform_indices = @transform_8, window_bounds = array<i64: 32, 128>}]} {
    %c0 = arith.constant 0 : index
    %c0_0 = arith.constant 0 : index
    %0 = vector.load %arg1[%c0, %c0_0] : memref<32x1152xbf16, #tpu.memory_space<vmem>>, vector<32x1152xbf16>
    %c0_1 = arith.constant 0 : index
    %c0_2 = arith.constant 0 : index
    %1 = vector.load %arg2[%c0_1, %c0_2] : memref<1152x128xbf16, #tpu.memory_space<vmem>>, vector<1152x128xbf16>
    %cst = arith.constant dense<0.000000e+00> : vector<32x128xf32>
    %2 = tpu.matmul %0, %1, %cst {dimension_numbers = #tpu.dot_dimension_numbers<[1], [0], [0], [1], [0, 0, 1, 1], [], []>} : vector<32x1152xbf16>, vector<1152x128xbf16>, vector<32x128xf32> -> vector<32x128xf32>
    %c0_3 = arith.constant 0 : index
    %c0_4 = arith.constant 0 : index
    %3 = vector.load %arg3[%c0_3, %c0_4] : memref<1x128xf32, #tpu.memory_space<vmem>>, vector<1x128xf32>
    %c0_5 = arith.constant 0 : index
    %c0_6 = arith.constant 0 : index
    %4 = vector.load %arg4[%c0_5, %c0_6] : memref<1x128xf32, #tpu.memory_space<vmem>>, vector<1x128xf32>
    %cst_7 = arith.constant dense<0.000000e+00> : vector<128xf32>
    %5 = vector.multi_reduction <add>, %2, %cst_7 [0] : vector<32x128xf32> to vector<128xf32>
    %6 = vector.shape_cast %5 : vector<128xf32> to vector<1x128xf32>
    %7 = arith.mulf %2, %2 : vector<32x128xf32>
    %cst_8 = arith.constant dense<0.000000e+00> : vector<128xf32>
    %8 = vector.multi_reduction <add>, %7, %cst_8 [0] : vector<32x128xf32> to vector<128xf32>
    %9 = vector.shape_cast %8 : vector<128xf32> to vector<1x128xf32>
    %cst_9 = arith.constant 3.125000e-02 : f32
    %10 = vector.broadcast %cst_9 : f32 to vector<1x128xf32>
    %11 = arith.mulf %6, %10 : vector<1x128xf32>
    %cst_10 = arith.constant 3.125000e-02 : f32
    %12 = vector.broadcast %cst_10 : f32 to vector<1x128xf32>
    %13 = arith.mulf %9, %12 : vector<1x128xf32>
    %14 = arith.mulf %11, %11 : vector<1x128xf32>
    %15 = arith.subf %13, %14 : vector<1x128xf32>
    %cst_11 = arith.constant 0.000000e+00 : f32
    %16 = vector.broadcast %cst_11 : f32 to vector<1x128xf32>
    %17 = arith.maximumf %15, %16 : vector<1x128xf32>
    %18 = vector.broadcast %11 : vector<1x128xf32> to vector<32x128xf32>
    %19 = arith.subf %2, %18 : vector<32x128xf32>
    %cst_12 = arith.constant 9.99999974E-6 : f32
    %20 = vector.broadcast %cst_12 : f32 to vector<1x128xf32>
    %21 = arith.addf %17, %20 : vector<1x128xf32>
    %22 = math.rsqrt %21 : vector<1x128xf32>
    %23 = vector.broadcast %22 : vector<1x128xf32> to vector<32x128xf32>
    %24 = arith.mulf %19, %23 : vector<32x128xf32>
    %25 = vector.broadcast %3 : vector<1x128xf32> to vector<32x128xf32>
    %26 = arith.mulf %24, %25 : vector<32x128xf32>
    %27 = vector.broadcast %4 : vector<1x128xf32> to vector<32x128xf32>
    %28 = arith.addf %26, %27 : vector<32x128xf32>
    %cst_13 = arith.constant 0.000000e+00 : f32
    %29 = vector.broadcast %cst_13 : f32 to vector<32x128xf32>
    %30 = arith.maximumf %28, %29 : vector<32x128xf32>
    %c0_14 = arith.constant 0 : index
    %c0_15 = arith.constant 0 : index
    %31 = vector.load %arg8[%c0_14, %c0_15] : memref<32x128xf32, #tpu.memory_space<vmem>>, vector<32x128xf32>
    tpu.vector_store %arg8[%c0_14, %c0_15], %30 {strides = array<i32>} : memref<32x128xf32, #tpu.memory_space<vmem>>, vector<32x128xf32>,
    %32 = vector.extract_strided_slice %0 {offsets = [0, 512], sizes = [32, 128], strides = [1, 1]} : vector<32x1152xbf16> to vector<32x128xbf16>
    %c0_16 = arith.constant 0 : index
    %c0_17 = arith.constant 0 : index
    %33 = vector.load %arg5[%c0_16, %c0_17] : memref<128x128xbf16, #tpu.memory_space<vmem>>, vector<128x128xbf16>
    %cst_18 = arith.constant dense<0.000000e+00> : vector<32x128xf32>
    %34 = tpu.matmul %32, %33, %cst_18 {dimension_numbers = #tpu.dot_dimension_numbers<[1], [0], [0], [1], [0, 0, 1, 1], [], []>} : vector<32x128xbf16>, vector<128x128xbf16>, vector<32x128xf32> -> vector<32x128xf32>
    %c0_19 = arith.constant 0 : index
    %c0_20 = arith.constant 0 : index
    %35 = vector.load %arg6[%c0_19, %c0_20] : memref<1x128xf32, #tpu.memory_space<vmem>>, vector<1x128xf32>
    %c0_21 = arith.constant 0 : index
    %c0_22 = arith.constant 0 : index
    %36 = vector.load %arg7[%c0_21, %c0_22] : memref<1x128xf32, #tpu.memory_space<vmem>>, vector<1x128xf32>
    %cst_23 = arith.constant dense<0.000000e+00> : vector<128xf32>
    %37 = vector.multi_reduction <add>, %34, %cst_23 [0] : vector<32x128xf32> to vector<128xf32>
    %38 = vector.shape_cast %37 : vector<128xf32> to vector<1x128xf32>
    %39 = arith.mulf %34, %34 : vector<32x128xf32>
    %cst_24 = arith.constant dense<0.000000e+00> : vector<128xf32>
    %40 = vector.multi_reduction <add>, %39, %cst_24 [0] : vector<32x128xf32> to vector<128xf32>
    %41 = vector.shape_cast %40 : vector<128xf32> to vector<1x128xf32>
    %cst_25 = arith.constant 3.125000e-02 : f32
    %42 = vector.broadcast %cst_25 : f32 to vector<1x128xf32>
    %43 = arith.mulf %38, %42 : vector<1x128xf32>
    %cst_26 = arith.constant 3.125000e-02 : f32
    %44 = vector.broadcast %cst_26 : f32 to vector<1x128xf32>
    %45 = arith.mulf %41, %44 : vector<1x128xf32>
    %46 = arith.mulf %43, %43 : vector<1x128xf32>
    %47 = arith.subf %45, %46 : vector<1x128xf32>
    %cst_27 = arith.constant 0.000000e+00 : f32
    %48 = vector.broadcast %cst_27 : f32 to vector<1x128xf32>
    %49 = arith.maximumf %47, %48 : vector<1x128xf32>
    %50 = vector.broadcast %43 : vector<1x128xf32> to vector<32x128xf32>
    %51 = arith.subf %34, %50 : vector<32x128xf32>
    %cst_28 = arith.constant 9.99999974E-6 : f32
    %52 = vector.broadcast %cst_28 : f32 to vector<1x128xf32>
    %53 = arith.addf %49, %52 : vector<1x128xf32>
    %54 = math.rsqrt %53 : vector<1x128xf32>
    %55 = vector.broadcast %54 : vector<1x128xf32> to vector<32x128xf32>
    %56 = arith.mulf %51, %55 : vector<32x128xf32>
    %57 = vector.broadcast %35 : vector<1x128xf32> to vector<32x128xf32>
    %58 = arith.mulf %56, %57 : vector<32x128xf32>
    %59 = vector.broadcast %36 : vector<1x128xf32> to vector<32x128xf32>
    %60 = arith.addf %58, %59 : vector<32x128xf32>
    %c0_29 = arith.constant 0 : index
    %c0_30 = arith.constant 0 : index
    %61 = vector.load %arg9[%c0_29, %c0_30] : memref<32x128xf32, #tpu.memory_space<vmem>>, vector<32x128xf32>
    tpu.vector_store %arg9[%c0_29, %c0_30], %60 {strides = array<i32>} : memref<32x128xf32, #tpu.memory_space<vmem>>, vector<32x128xf32>,
    return
  }
  func.func @transform_0(%arg0: i32) -> (i32, i32) {
    %c0_i32 = arith.constant 0 : i32
    %c0_i32_0 = arith.constant 0 : i32
    %c0_i32_1 = arith.constant 0 : i32
    return %c0_i32, %c0_i32_0 : i32, i32
  }
  func.func @transform_1(%arg0: i32) -> (i32, i32) {
    %c0_i32 = arith.constant 0 : i32
    %c0_i32_0 = arith.constant 0 : i32
    return %c0_i32, %arg0 : i32, i32
  }
  func.func @transform_2(%arg0: i32) -> (i32, i32) {
    %c0_i32 = arith.constant 0 : i32
    %c0_i32_0 = arith.constant 0 : i32
    return %c0_i32, %arg0 : i32, i32
  }
  func.func @transform_3(%arg0: i32) -> (i32, i32) {
    %c0_i32 = arith.constant 0 : i32
    %c0_i32_0 = arith.constant 0 : i32
    return %c0_i32, %arg0 : i32, i32
  }
  func.func @transform_4(%arg0: i32) -> (i32, i32) {
    %c0_i32 = arith.constant 0 : i32
    %c0_i32_0 = arith.constant 0 : i32
    return %c0_i32, %arg0 : i32, i32
  }
  func.func @transform_5(%arg0: i32) -> (i32, i32) {
    %c0_i32 = arith.constant 0 : i32
    %c0_i32_0 = arith.constant 0 : i32
    return %c0_i32, %arg0 : i32, i32
  }
  func.func @transform_6(%arg0: i32) -> (i32, i32) {
    %c0_i32 = arith.constant 0 : i32
    %c0_i32_0 = arith.constant 0 : i32
    return %c0_i32, %arg0 : i32, i32
  }
  func.func @transform_7(%arg0: i32) -> (i32, i32) {
    %c0_i32 = arith.constant 0 : i32
    %c0_i32_0 = arith.constant 0 : i32
    return %c0_i32, %arg0 : i32, i32
  }
  func.func @transform_8(%arg0: i32) -> (i32, i32) {
    %c0_i32 = arith.constant 0 : i32
    %c0_i32_0 = arith.constant 0 : i32
    return %c0_i32, %arg0 : i32, i32
  }
}

module attributes {stable_mosaic.version = 11 : i64} {
  func.func @_conv_bn_add_relu_kernel(%arg0: i32, %arg1: memref<32x1152xbf16, #tpu.memory_space<vmem>>, %arg2: memref<1152x128xbf16, #tpu.memory_space<vmem>>, %arg3: memref<1x128xf32, #tpu.memory_space<vmem>>, %arg4: memref<1x128xf32, #tpu.memory_space<vmem>>, %arg5: memref<32x128xf32, #tpu.memory_space<vmem>>, %arg6: memref<32x128xf32, #tpu.memory_space<vmem>>) attributes {dimension_semantics = [#tpu.dimension_semantics<parallel>], iteration_bounds = array<i64: 1>, scalar_prefetch = 0 : i64, scratch_operands = 0 : i64, tpu.core_type = #tpu.core_type<tc>, window_params = [{pipeline_mode = #tpu.pipeline_mode<synchronous>, transform_indices = @transform_0, window_bounds = array<i64: 32, 1152>}, {transform_indices = @transform_1, window_bounds = array<i64: 1152, 128>}, {transform_indices = @transform_2, window_bounds = array<i64: 1, 128>}, {transform_indices = @transform_3, window_bounds = array<i64: 1, 128>}, {transform_indices = @transform_4, window_bounds = array<i64: 32, 128>}, {transform_indices = @transform_5, window_bounds = array<i64: 32, 128>}]} {
    %c0 = arith.constant 0 : index
    %c0_0 = arith.constant 0 : index
    %0 = vector.load %arg1[%c0, %c0_0] : memref<32x1152xbf16, #tpu.memory_space<vmem>>, vector<32x1152xbf16>
    %c0_1 = arith.constant 0 : index
    %c0_2 = arith.constant 0 : index
    %1 = vector.load %arg2[%c0_1, %c0_2] : memref<1152x128xbf16, #tpu.memory_space<vmem>>, vector<1152x128xbf16>
    %cst = arith.constant dense<0.000000e+00> : vector<32x128xf32>
    %2 = tpu.matmul %0, %1, %cst {dimension_numbers = #tpu.dot_dimension_numbers<[1], [0], [0], [1], [0, 0, 1, 1], [], []>} : vector<32x1152xbf16>, vector<1152x128xbf16>, vector<32x128xf32> -> vector<32x128xf32>
    %c0_3 = arith.constant 0 : index
    %c0_4 = arith.constant 0 : index
    %3 = vector.load %arg3[%c0_3, %c0_4] : memref<1x128xf32, #tpu.memory_space<vmem>>, vector<1x128xf32>
    %c0_5 = arith.constant 0 : index
    %c0_6 = arith.constant 0 : index
    %4 = vector.load %arg4[%c0_5, %c0_6] : memref<1x128xf32, #tpu.memory_space<vmem>>, vector<1x128xf32>
    %cst_7 = arith.constant dense<0.000000e+00> : vector<128xf32>
    %5 = vector.multi_reduction <add>, %2, %cst_7 [0] : vector<32x128xf32> to vector<128xf32>
    %6 = vector.shape_cast %5 : vector<128xf32> to vector<1x128xf32>
    %7 = arith.mulf %2, %2 : vector<32x128xf32>
    %cst_8 = arith.constant dense<0.000000e+00> : vector<128xf32>
    %8 = vector.multi_reduction <add>, %7, %cst_8 [0] : vector<32x128xf32> to vector<128xf32>
    %9 = vector.shape_cast %8 : vector<128xf32> to vector<1x128xf32>
    %cst_9 = arith.constant 3.125000e-02 : f32
    %10 = vector.broadcast %cst_9 : f32 to vector<1x128xf32>
    %11 = arith.mulf %6, %10 : vector<1x128xf32>
    %cst_10 = arith.constant 3.125000e-02 : f32
    %12 = vector.broadcast %cst_10 : f32 to vector<1x128xf32>
    %13 = arith.mulf %9, %12 : vector<1x128xf32>
    %14 = arith.mulf %11, %11 : vector<1x128xf32>
    %15 = arith.subf %13, %14 : vector<1x128xf32>
    %cst_11 = arith.constant 0.000000e+00 : f32
    %16 = vector.broadcast %cst_11 : f32 to vector<1x128xf32>
    %17 = arith.maximumf %15, %16 : vector<1x128xf32>
    %18 = vector.broadcast %11 : vector<1x128xf32> to vector<32x128xf32>
    %19 = arith.subf %2, %18 : vector<32x128xf32>
    %cst_12 = arith.constant 9.99999974E-6 : f32
    %20 = vector.broadcast %cst_12 : f32 to vector<1x128xf32>
    %21 = arith.addf %17, %20 : vector<1x128xf32>
    %22 = math.rsqrt %21 : vector<1x128xf32>
    %23 = vector.broadcast %22 : vector<1x128xf32> to vector<32x128xf32>
    %24 = arith.mulf %19, %23 : vector<32x128xf32>
    %25 = vector.broadcast %3 : vector<1x128xf32> to vector<32x128xf32>
    %26 = arith.mulf %24, %25 : vector<32x128xf32>
    %27 = vector.broadcast %4 : vector<1x128xf32> to vector<32x128xf32>
    %28 = arith.addf %26, %27 : vector<32x128xf32>
    %c0_13 = arith.constant 0 : index
    %c0_14 = arith.constant 0 : index
    %29 = vector.load %arg5[%c0_13, %c0_14] : memref<32x128xf32, #tpu.memory_space<vmem>>, vector<32x128xf32>
    %30 = arith.addf %28, %29 : vector<32x128xf32>
    %cst_15 = arith.constant 0.000000e+00 : f32
    %31 = vector.broadcast %cst_15 : f32 to vector<32x128xf32>
    %32 = arith.maximumf %30, %31 : vector<32x128xf32>
    %c0_16 = arith.constant 0 : index
    %c0_17 = arith.constant 0 : index
    %33 = vector.load %arg6[%c0_16, %c0_17] : memref<32x128xf32, #tpu.memory_space<vmem>>, vector<32x128xf32>
    tpu.vector_store %arg6[%c0_16, %c0_17], %32 {strides = array<i32>} : memref<32x128xf32, #tpu.memory_space<vmem>>, vector<32x128xf32>,
    return
  }
  func.func @transform_0(%arg0: i32) -> (i32, i32) {
    %c0_i32 = arith.constant 0 : i32
    %c0_i32_0 = arith.constant 0 : i32
    %c0_i32_1 = arith.constant 0 : i32
    return %c0_i32, %c0_i32_0 : i32, i32
  }
  func.func @transform_1(%arg0: i32) -> (i32, i32) {
    %c0_i32 = arith.constant 0 : i32
    %c0_i32_0 = arith.constant 0 : i32
    return %c0_i32, %arg0 : i32, i32
  }
  func.func @transform_2(%arg0: i32) -> (i32, i32) {
    %c0_i32 = arith.constant 0 : i32
    %c0_i32_0 = arith.constant 0 : i32
    return %c0_i32, %arg0 : i32, i32
  }
  func.func @transform_3(%arg0: i32) -> (i32, i32) {
    %c0_i32 = arith.constant 0 : i32
    %c0_i32_0 = arith.constant 0 : i32
    return %c0_i32, %arg0 : i32, i32
  }
  func.func @transform_4(%arg0: i32) -> (i32, i32) {
    %c0_i32 = arith.constant 0 : i32
    %c0_i32_0 = arith.constant 0 : i32
    return %c0_i32, %arg0 : i32, i32
  }
  func.func @transform_5(%arg0: i32) -> (i32, i32) {
    %c0_i32 = arith.constant 0 : i32
    %c0_i32_0 = arith.constant 0 : i32
    return %c0_i32, %arg0 : i32, i32
  }
}

module attributes {stable_mosaic.version = 11 : i64} {
  func.func @_conv_bn_dual_kernel(%arg0: i32, %arg1: memref<8x1152xbf16, #tpu.memory_space<vmem>>, %arg2: memref<1152x128xbf16, #tpu.memory_space<vmem>>, %arg3: memref<1x128xf32, #tpu.memory_space<vmem>>, %arg4: memref<1x128xf32, #tpu.memory_space<vmem>>, %arg5: memref<128x128xbf16, #tpu.memory_space<vmem>>, %arg6: memref<1x128xf32, #tpu.memory_space<vmem>>, %arg7: memref<1x128xf32, #tpu.memory_space<vmem>>, %arg8: memref<8x128xf32, #tpu.memory_space<vmem>>, %arg9: memref<8x128xf32, #tpu.memory_space<vmem>>) attributes {dimension_semantics = [#tpu.dimension_semantics<parallel>], iteration_bounds = array<i64: 1>, scalar_prefetch = 0 : i64, scratch_operands = 0 : i64, tpu.core_type = #tpu.core_type<tc>, window_params = [{pipeline_mode = #tpu.pipeline_mode<synchronous>, transform_indices = @transform_0, window_bounds = array<i64: 8, 1152>}, {transform_indices = @transform_1, window_bounds = array<i64: 1152, 128>}, {transform_indices = @transform_2, window_bounds = array<i64: 1, 128>}, {transform_indices = @transform_3, window_bounds = array<i64: 1, 128>}, {transform_indices = @transform_4, window_bounds = array<i64: 128, 128>}, {transform_indices = @transform_5, window_bounds = array<i64: 1, 128>}, {transform_indices = @transform_6, window_bounds = array<i64: 1, 128>}, {transform_indices = @transform_7, window_bounds = array<i64: 8, 128>}, {transform_indices = @transform_8, window_bounds = array<i64: 8, 128>}]} {
    %c0 = arith.constant 0 : index
    %c0_0 = arith.constant 0 : index
    %0 = vector.load %arg1[%c0, %c0_0] : memref<8x1152xbf16, #tpu.memory_space<vmem>>, vector<8x1152xbf16>
    %c0_1 = arith.constant 0 : index
    %c0_2 = arith.constant 0 : index
    %1 = vector.load %arg2[%c0_1, %c0_2] : memref<1152x128xbf16, #tpu.memory_space<vmem>>, vector<1152x128xbf16>
    %cst = arith.constant dense<0.000000e+00> : vector<8x128xf32>
    %2 = tpu.matmul %0, %1, %cst {dimension_numbers = #tpu.dot_dimension_numbers<[1], [0], [0], [1], [0, 0, 1, 1], [], []>} : vector<8x1152xbf16>, vector<1152x128xbf16>, vector<8x128xf32> -> vector<8x128xf32>
    %c0_3 = arith.constant 0 : index
    %c0_4 = arith.constant 0 : index
    %3 = vector.load %arg3[%c0_3, %c0_4] : memref<1x128xf32, #tpu.memory_space<vmem>>, vector<1x128xf32>
    %c0_5 = arith.constant 0 : index
    %c0_6 = arith.constant 0 : index
    %4 = vector.load %arg4[%c0_5, %c0_6] : memref<1x128xf32, #tpu.memory_space<vmem>>, vector<1x128xf32>
    %cst_7 = arith.constant dense<0.000000e+00> : vector<128xf32>
    %5 = vector.multi_reduction <add>, %2, %cst_7 [0] : vector<8x128xf32> to vector<128xf32>
    %6 = vector.shape_cast %5 : vector<128xf32> to vector<1x128xf32>
    %7 = arith.mulf %2, %2 : vector<8x128xf32>
    %cst_8 = arith.constant dense<0.000000e+00> : vector<128xf32>
    %8 = vector.multi_reduction <add>, %7, %cst_8 [0] : vector<8x128xf32> to vector<128xf32>
    %9 = vector.shape_cast %8 : vector<128xf32> to vector<1x128xf32>
    %cst_9 = arith.constant 1.250000e-01 : f32
    %10 = vector.broadcast %cst_9 : f32 to vector<1x128xf32>
    %11 = arith.mulf %6, %10 : vector<1x128xf32>
    %cst_10 = arith.constant 1.250000e-01 : f32
    %12 = vector.broadcast %cst_10 : f32 to vector<1x128xf32>
    %13 = arith.mulf %9, %12 : vector<1x128xf32>
    %14 = arith.mulf %11, %11 : vector<1x128xf32>
    %15 = arith.subf %13, %14 : vector<1x128xf32>
    %cst_11 = arith.constant 0.000000e+00 : f32
    %16 = vector.broadcast %cst_11 : f32 to vector<1x128xf32>
    %17 = arith.maximumf %15, %16 : vector<1x128xf32>
    %18 = vector.broadcast %11 : vector<1x128xf32> to vector<8x128xf32>
    %19 = arith.subf %2, %18 : vector<8x128xf32>
    %cst_12 = arith.constant 9.99999974E-6 : f32
    %20 = vector.broadcast %cst_12 : f32 to vector<1x128xf32>
    %21 = arith.addf %17, %20 : vector<1x128xf32>
    %22 = math.rsqrt %21 : vector<1x128xf32>
    %23 = vector.broadcast %22 : vector<1x128xf32> to vector<8x128xf32>
    %24 = arith.mulf %19, %23 : vector<8x128xf32>
    %25 = vector.broadcast %3 : vector<1x128xf32> to vector<8x128xf32>
    %26 = arith.mulf %24, %25 : vector<8x128xf32>
    %27 = vector.broadcast %4 : vector<1x128xf32> to vector<8x128xf32>
    %28 = arith.addf %26, %27 : vector<8x128xf32>
    %cst_13 = arith.constant 0.000000e+00 : f32
    %29 = vector.broadcast %cst_13 : f32 to vector<8x128xf32>
    %30 = arith.maximumf %28, %29 : vector<8x128xf32>
    %c0_14 = arith.constant 0 : index
    %c0_15 = arith.constant 0 : index
    %31 = vector.load %arg8[%c0_14, %c0_15] : memref<8x128xf32, #tpu.memory_space<vmem>>, vector<8x128xf32>
    tpu.vector_store %arg8[%c0_14, %c0_15], %30 {strides = array<i32>} : memref<8x128xf32, #tpu.memory_space<vmem>>, vector<8x128xf32>,
    %32 = vector.extract_strided_slice %0 {offsets = [0, 512], sizes = [8, 128], strides = [1, 1]} : vector<8x1152xbf16> to vector<8x128xbf16>
    %c0_16 = arith.constant 0 : index
    %c0_17 = arith.constant 0 : index
    %33 = vector.load %arg5[%c0_16, %c0_17] : memref<128x128xbf16, #tpu.memory_space<vmem>>, vector<128x128xbf16>
    %cst_18 = arith.constant dense<0.000000e+00> : vector<8x128xf32>
    %34 = tpu.matmul %32, %33, %cst_18 {dimension_numbers = #tpu.dot_dimension_numbers<[1], [0], [0], [1], [0, 0, 1, 1], [], []>} : vector<8x128xbf16>, vector<128x128xbf16>, vector<8x128xf32> -> vector<8x128xf32>
    %c0_19 = arith.constant 0 : index
    %c0_20 = arith.constant 0 : index
    %35 = vector.load %arg6[%c0_19, %c0_20] : memref<1x128xf32, #tpu.memory_space<vmem>>, vector<1x128xf32>
    %c0_21 = arith.constant 0 : index
    %c0_22 = arith.constant 0 : index
    %36 = vector.load %arg7[%c0_21, %c0_22] : memref<1x128xf32, #tpu.memory_space<vmem>>, vector<1x128xf32>
    %cst_23 = arith.constant dense<0.000000e+00> : vector<128xf32>
    %37 = vector.multi_reduction <add>, %34, %cst_23 [0] : vector<8x128xf32> to vector<128xf32>
    %38 = vector.shape_cast %37 : vector<128xf32> to vector<1x128xf32>
    %39 = arith.mulf %34, %34 : vector<8x128xf32>
    %cst_24 = arith.constant dense<0.000000e+00> : vector<128xf32>
    %40 = vector.multi_reduction <add>, %39, %cst_24 [0] : vector<8x128xf32> to vector<128xf32>
    %41 = vector.shape_cast %40 : vector<128xf32> to vector<1x128xf32>
    %cst_25 = arith.constant 1.250000e-01 : f32
    %42 = vector.broadcast %cst_25 : f32 to vector<1x128xf32>
    %43 = arith.mulf %38, %42 : vector<1x128xf32>
    %cst_26 = arith.constant 1.250000e-01 : f32
    %44 = vector.broadcast %cst_26 : f32 to vector<1x128xf32>
    %45 = arith.mulf %41, %44 : vector<1x128xf32>
    %46 = arith.mulf %43, %43 : vector<1x128xf32>
    %47 = arith.subf %45, %46 : vector<1x128xf32>
    %cst_27 = arith.constant 0.000000e+00 : f32
    %48 = vector.broadcast %cst_27 : f32 to vector<1x128xf32>
    %49 = arith.maximumf %47, %48 : vector<1x128xf32>
    %50 = vector.broadcast %43 : vector<1x128xf32> to vector<8x128xf32>
    %51 = arith.subf %34, %50 : vector<8x128xf32>
    %cst_28 = arith.constant 9.99999974E-6 : f32
    %52 = vector.broadcast %cst_28 : f32 to vector<1x128xf32>
    %53 = arith.addf %49, %52 : vector<1x128xf32>
    %54 = math.rsqrt %53 : vector<1x128xf32>
    %55 = vector.broadcast %54 : vector<1x128xf32> to vector<8x128xf32>
    %56 = arith.mulf %51, %55 : vector<8x128xf32>
    %57 = vector.broadcast %35 : vector<1x128xf32> to vector<8x128xf32>
    %58 = arith.mulf %56, %57 : vector<8x128xf32>
    %59 = vector.broadcast %36 : vector<1x128xf32> to vector<8x128xf32>
    %60 = arith.addf %58, %59 : vector<8x128xf32>
    %c0_29 = arith.constant 0 : index
    %c0_30 = arith.constant 0 : index
    %61 = vector.load %arg9[%c0_29, %c0_30] : memref<8x128xf32, #tpu.memory_space<vmem>>, vector<8x128xf32>
    tpu.vector_store %arg9[%c0_29, %c0_30], %60 {strides = array<i32>} : memref<8x128xf32, #tpu.memory_space<vmem>>, vector<8x128xf32>,
    return
  }
  func.func @transform_0(%arg0: i32) -> (i32, i32) {
    %c0_i32 = arith.constant 0 : i32
    %c0_i32_0 = arith.constant 0 : i32
    %c0_i32_1 = arith.constant 0 : i32
    return %c0_i32, %c0_i32_0 : i32, i32
  }
  func.func @transform_1(%arg0: i32) -> (i32, i32) {
    %c0_i32 = arith.constant 0 : i32
    %c0_i32_0 = arith.constant 0 : i32
    return %c0_i32, %arg0 : i32, i32
  }
  func.func @transform_2(%arg0: i32) -> (i32, i32) {
    %c0_i32 = arith.constant 0 : i32
    %c0_i32_0 = arith.constant 0 : i32
    return %c0_i32, %arg0 : i32, i32
  }
  func.func @transform_3(%arg0: i32) -> (i32, i32) {
    %c0_i32 = arith.constant 0 : i32
    %c0_i32_0 = arith.constant 0 : i32
    return %c0_i32, %arg0 : i32, i32
  }
  func.func @transform_4(%arg0: i32) -> (i32, i32) {
    %c0_i32 = arith.constant 0 : i32
    %c0_i32_0 = arith.constant 0 : i32
    return %c0_i32, %arg0 : i32, i32
  }
  func.func @transform_5(%arg0: i32) -> (i32, i32) {
    %c0_i32 = arith.constant 0 : i32
    %c0_i32_0 = arith.constant 0 : i32
    return %c0_i32, %arg0 : i32, i32
  }
  func.func @transform_6(%arg0: i32) -> (i32, i32) {
    %c0_i32 = arith.constant 0 : i32
    %c0_i32_0 = arith.constant 0 : i32
    return %c0_i32, %arg0 : i32, i32
  }
  func.func @transform_7(%arg0: i32) -> (i32, i32) {
    %c0_i32 = arith.constant 0 : i32
    %c0_i32_0 = arith.constant 0 : i32
    return %c0_i32, %arg0 : i32, i32
  }
  func.func @transform_8(%arg0: i32) -> (i32, i32) {
    %c0_i32 = arith.constant 0 : i32
    %c0_i32_0 = arith.constant 0 : i32
    return %c0_i32, %arg0 : i32, i32
  }
}

module attributes {stable_mosaic.version = 11 : i64} {
  func.func @_conv_bn_add_relu_kernel(%arg0: i32, %arg1: memref<8x1152xbf16, #tpu.memory_space<vmem>>, %arg2: memref<1152x128xbf16, #tpu.memory_space<vmem>>, %arg3: memref<1x128xf32, #tpu.memory_space<vmem>>, %arg4: memref<1x128xf32, #tpu.memory_space<vmem>>, %arg5: memref<8x128xf32, #tpu.memory_space<vmem>>, %arg6: memref<8x128xf32, #tpu.memory_space<vmem>>) attributes {dimension_semantics = [#tpu.dimension_semantics<parallel>], iteration_bounds = array<i64: 1>, scalar_prefetch = 0 : i64, scratch_operands = 0 : i64, tpu.core_type = #tpu.core_type<tc>, window_params = [{pipeline_mode = #tpu.pipeline_mode<synchronous>, transform_indices = @transform_0, window_bounds = array<i64: 8, 1152>}, {transform_indices = @transform_1, window_bounds = array<i64: 1152, 128>}, {transform_indices = @transform_2, window_bounds = array<i64: 1, 128>}, {transform_indices = @transform_3, window_bounds = array<i64: 1, 128>}, {transform_indices = @transform_4, window_bounds = array<i64: 8, 128>}, {transform_indices = @transform_5, window_bounds = array<i64: 8, 128>}]} {
    %c0 = arith.constant 0 : index
    %c0_0 = arith.constant 0 : index
    %0 = vector.load %arg1[%c0, %c0_0] : memref<8x1152xbf16, #tpu.memory_space<vmem>>, vector<8x1152xbf16>
    %c0_1 = arith.constant 0 : index
    %c0_2 = arith.constant 0 : index
    %1 = vector.load %arg2[%c0_1, %c0_2] : memref<1152x128xbf16, #tpu.memory_space<vmem>>, vector<1152x128xbf16>
    %cst = arith.constant dense<0.000000e+00> : vector<8x128xf32>
    %2 = tpu.matmul %0, %1, %cst {dimension_numbers = #tpu.dot_dimension_numbers<[1], [0], [0], [1], [0, 0, 1, 1], [], []>} : vector<8x1152xbf16>, vector<1152x128xbf16>, vector<8x128xf32> -> vector<8x128xf32>
    %c0_3 = arith.constant 0 : index
    %c0_4 = arith.constant 0 : index
    %3 = vector.load %arg3[%c0_3, %c0_4] : memref<1x128xf32, #tpu.memory_space<vmem>>, vector<1x128xf32>
    %c0_5 = arith.constant 0 : index
    %c0_6 = arith.constant 0 : index
    %4 = vector.load %arg4[%c0_5, %c0_6] : memref<1x128xf32, #tpu.memory_space<vmem>>, vector<1x128xf32>
    %cst_7 = arith.constant dense<0.000000e+00> : vector<128xf32>
    %5 = vector.multi_reduction <add>, %2, %cst_7 [0] : vector<8x128xf32> to vector<128xf32>
    %6 = vector.shape_cast %5 : vector<128xf32> to vector<1x128xf32>
    %7 = arith.mulf %2, %2 : vector<8x128xf32>
    %cst_8 = arith.constant dense<0.000000e+00> : vector<128xf32>
    %8 = vector.multi_reduction <add>, %7, %cst_8 [0] : vector<8x128xf32> to vector<128xf32>
    %9 = vector.shape_cast %8 : vector<128xf32> to vector<1x128xf32>
    %cst_9 = arith.constant 1.250000e-01 : f32
    %10 = vector.broadcast %cst_9 : f32 to vector<1x128xf32>
    %11 = arith.mulf %6, %10 : vector<1x128xf32>
    %cst_10 = arith.constant 1.250000e-01 : f32
    %12 = vector.broadcast %cst_10 : f32 to vector<1x128xf32>
    %13 = arith.mulf %9, %12 : vector<1x128xf32>
    %14 = arith.mulf %11, %11 : vector<1x128xf32>
    %15 = arith.subf %13, %14 : vector<1x128xf32>
    %cst_11 = arith.constant 0.000000e+00 : f32
    %16 = vector.broadcast %cst_11 : f32 to vector<1x128xf32>
    %17 = arith.maximumf %15, %16 : vector<1x128xf32>
    %18 = vector.broadcast %11 : vector<1x128xf32> to vector<8x128xf32>
    %19 = arith.subf %2, %18 : vector<8x128xf32>
    %cst_12 = arith.constant 9.99999974E-6 : f32
    %20 = vector.broadcast %cst_12 : f32 to vector<1x128xf32>
    %21 = arith.addf %17, %20 : vector<1x128xf32>
    %22 = math.rsqrt %21 : vector<1x128xf32>
    %23 = vector.broadcast %22 : vector<1x128xf32> to vector<8x128xf32>
    %24 = arith.mulf %19, %23 : vector<8x128xf32>
    %25 = vector.broadcast %3 : vector<1x128xf32> to vector<8x128xf32>
    %26 = arith.mulf %24, %25 : vector<8x128xf32>
    %27 = vector.broadcast %4 : vector<1x128xf32> to vector<8x128xf32>
    %28 = arith.addf %26, %27 : vector<8x128xf32>
    %c0_13 = arith.constant 0 : index
    %c0_14 = arith.constant 0 : index
    %29 = vector.load %arg5[%c0_13, %c0_14] : memref<8x128xf32, #tpu.memory_space<vmem>>, vector<8x128xf32>
    %30 = arith.addf %28, %29 : vector<8x128xf32>
    %cst_15 = arith.constant 0.000000e+00 : f32
    %31 = vector.broadcast %cst_15 : f32 to vector<8x128xf32>
    %32 = arith.maximumf %30, %31 : vector<8x128xf32>
    %c0_16 = arith.constant 0 : index
    %c0_17 = arith.constant 0 : index
    %33 = vector.load %arg6[%c0_16, %c0_17] : memref<8x128xf32, #tpu.memory_space<vmem>>, vector<8x128xf32>
    tpu.vector_store %arg6[%c0_16, %c0_17], %32 {strides = array<i32>} : memref<8x128xf32, #tpu.memory_space<vmem>>, vector<8x128xf32>,
    return
  }
  func.func @transform_0(%arg0: i32) -> (i32, i32) {
    %c0_i32 = arith.constant 0 : i32
    %c0_i32_0 = arith.constant 0 : i32
    %c0_i32_1 = arith.constant 0 : i32
    return %c0_i32, %c0_i32_0 : i32, i32
  }
  func.func @transform_1(%arg0: i32) -> (i32, i32) {
    %c0_i32 = arith.constant 0 : i32
    %c0_i32_0 = arith.constant 0 : i32
    return %c0_i32, %arg0 : i32, i32
  }
  func.func @transform_2(%arg0: i32) -> (i32, i32) {
    %c0_i32 = arith.constant 0 : i32
    %c0_i32_0 = arith.constant 0 : i32
    return %c0_i32, %arg0 : i32, i32
  }
  func.func @transform_3(%arg0: i32) -> (i32, i32) {
    %c0_i32 = arith.constant 0 : i32
    %c0_i32_0 = arith.constant 0 : i32
    return %c0_i32, %arg0 : i32, i32
  }
  func.func @transform_4(%arg0: i32) -> (i32, i32) {
    %c0_i32 = arith.constant 0 : i32
    %c0_i32_0 = arith.constant 0 : i32
    return %c0_i32, %arg0 : i32, i32
  }
  func.func @transform_5(%arg0: i32) -> (i32, i32) {
    %c0_i32 = arith.constant 0 : i32
    %c0_i32_0 = arith.constant 0 : i32
    return %c0_i32, %arg0 : i32, i32
  }
}

module attributes {stable_mosaic.version = 11 : i64} {
  func.func @_conv_bn_dual_kernel(%arg0: i32, %arg1: memref<2x1152xbf16, #tpu.memory_space<vmem>>, %arg2: memref<1152x128xbf16, #tpu.memory_space<vmem>>, %arg3: memref<1x128xf32, #tpu.memory_space<vmem>>, %arg4: memref<1x128xf32, #tpu.memory_space<vmem>>, %arg5: memref<128x128xbf16, #tpu.memory_space<vmem>>, %arg6: memref<1x128xf32, #tpu.memory_space<vmem>>, %arg7: memref<1x128xf32, #tpu.memory_space<vmem>>, %arg8: memref<2x128xf32, #tpu.memory_space<vmem>>, %arg9: memref<2x128xf32, #tpu.memory_space<vmem>>) attributes {dimension_semantics = [#tpu.dimension_semantics<parallel>], iteration_bounds = array<i64: 1>, scalar_prefetch = 0 : i64, scratch_operands = 0 : i64, tpu.core_type = #tpu.core_type<tc>, window_params = [{pipeline_mode = #tpu.pipeline_mode<synchronous>, transform_indices = @transform_0, window_bounds = array<i64: 2, 1152>}, {transform_indices = @transform_1, window_bounds = array<i64: 1152, 128>}, {transform_indices = @transform_2, window_bounds = array<i64: 1, 128>}, {transform_indices = @transform_3, window_bounds = array<i64: 1, 128>}, {transform_indices = @transform_4, window_bounds = array<i64: 128, 128>}, {transform_indices = @transform_5, window_bounds = array<i64: 1, 128>}, {transform_indices = @transform_6, window_bounds = array<i64: 1, 128>}, {transform_indices = @transform_7, window_bounds = array<i64: 2, 128>}, {transform_indices = @transform_8, window_bounds = array<i64: 2, 128>}]} {
    %c0 = arith.constant 0 : index
    %c0_0 = arith.constant 0 : index
    %0 = vector.load %arg1[%c0, %c0_0] : memref<2x1152xbf16, #tpu.memory_space<vmem>>, vector<2x1152xbf16>
    %c0_1 = arith.constant 0 : index
    %c0_2 = arith.constant 0 : index
    %1 = vector.load %arg2[%c0_1, %c0_2] : memref<1152x128xbf16, #tpu.memory_space<vmem>>, vector<1152x128xbf16>
    %cst = arith.constant dense<0.000000e+00> : vector<2x128xf32>
    %2 = tpu.matmul %0, %1, %cst {dimension_numbers = #tpu.dot_dimension_numbers<[1], [0], [0], [1], [0, 0, 1, 1], [], []>} : vector<2x1152xbf16>, vector<1152x128xbf16>, vector<2x128xf32> -> vector<2x128xf32>
    %c0_3 = arith.constant 0 : index
    %c0_4 = arith.constant 0 : index
    %3 = vector.load %arg3[%c0_3, %c0_4] : memref<1x128xf32, #tpu.memory_space<vmem>>, vector<1x128xf32>
    %c0_5 = arith.constant 0 : index
    %c0_6 = arith.constant 0 : index
    %4 = vector.load %arg4[%c0_5, %c0_6] : memref<1x128xf32, #tpu.memory_space<vmem>>, vector<1x128xf32>
    %cst_7 = arith.constant dense<0.000000e+00> : vector<128xf32>
    %5 = vector.multi_reduction <add>, %2, %cst_7 [0] : vector<2x128xf32> to vector<128xf32>
    %6 = vector.shape_cast %5 : vector<128xf32> to vector<1x128xf32>
    %7 = arith.mulf %2, %2 : vector<2x128xf32>
    %cst_8 = arith.constant dense<0.000000e+00> : vector<128xf32>
    %8 = vector.multi_reduction <add>, %7, %cst_8 [0] : vector<2x128xf32> to vector<128xf32>
    %9 = vector.shape_cast %8 : vector<128xf32> to vector<1x128xf32>
    %cst_9 = arith.constant 5.000000e-01 : f32
    %10 = vector.broadcast %cst_9 : f32 to vector<1x128xf32>
    %11 = arith.mulf %6, %10 : vector<1x128xf32>
    %cst_10 = arith.constant 5.000000e-01 : f32
    %12 = vector.broadcast %cst_10 : f32 to vector<1x128xf32>
    %13 = arith.mulf %9, %12 : vector<1x128xf32>
    %14 = arith.mulf %11, %11 : vector<1x128xf32>
    %15 = arith.subf %13, %14 : vector<1x128xf32>
    %cst_11 = arith.constant 0.000000e+00 : f32
    %16 = vector.broadcast %cst_11 : f32 to vector<1x128xf32>
    %17 = arith.maximumf %15, %16 : vector<1x128xf32>
    %18 = vector.broadcast %11 : vector<1x128xf32> to vector<2x128xf32>
    %19 = arith.subf %2, %18 : vector<2x128xf32>
    %cst_12 = arith.constant 9.99999974E-6 : f32
    %20 = vector.broadcast %cst_12 : f32 to vector<1x128xf32>
    %21 = arith.addf %17, %20 : vector<1x128xf32>
    %22 = math.rsqrt %21 : vector<1x128xf32>
    %23 = vector.broadcast %22 : vector<1x128xf32> to vector<2x128xf32>
    %24 = arith.mulf %19, %23 : vector<2x128xf32>
    %25 = vector.broadcast %3 : vector<1x128xf32> to vector<2x128xf32>
    %26 = arith.mulf %24, %25 : vector<2x128xf32>
    %27 = vector.broadcast %4 : vector<1x128xf32> to vector<2x128xf32>
    %28 = arith.addf %26, %27 : vector<2x128xf32>
    %cst_13 = arith.constant 0.000000e+00 : f32
    %29 = vector.broadcast %cst_13 : f32 to vector<2x128xf32>
    %30 = arith.maximumf %28, %29 : vector<2x128xf32>
    %c0_14 = arith.constant 0 : index
    %c0_15 = arith.constant 0 : index
    %31 = vector.load %arg8[%c0_14, %c0_15] : memref<2x128xf32, #tpu.memory_space<vmem>>, vector<2x128xf32>
    tpu.vector_store %arg8[%c0_14, %c0_15], %30 {strides = array<i32>} : memref<2x128xf32, #tpu.memory_space<vmem>>, vector<2x128xf32>,
    %32 = vector.extract_strided_slice %0 {offsets = [0, 512], sizes = [2, 128], strides = [1, 1]} : vector<2x1152xbf16> to vector<2x128xbf16>
    %c0_16 = arith.constant 0 : index
    %c0_17 = arith.constant 0 : index
    %33 = vector.load %arg5[%c0_16, %c0_17] : memref<128x128xbf16, #tpu.memory_space<vmem>>, vector<128x128xbf16>
    %cst_18 = arith.constant dense<0.000000e+00> : vector<2x128xf32>
    %34 = tpu.matmul %32, %33, %cst_18 {dimension_numbers = #tpu.dot_dimension_numbers<[1], [0], [0], [1], [0, 0, 1, 1], [], []>} : vector<2x128xbf16>, vector<128x128xbf16>, vector<2x128xf32> -> vector<2x128xf32>
    %c0_19 = arith.constant 0 : index
    %c0_20 = arith.constant 0 : index
    %35 = vector.load %arg6[%c0_19, %c0_20] : memref<1x128xf32, #tpu.memory_space<vmem>>, vector<1x128xf32>
    %c0_21 = arith.constant 0 : index
    %c0_22 = arith.constant 0 : index
    %36 = vector.load %arg7[%c0_21, %c0_22] : memref<1x128xf32, #tpu.memory_space<vmem>>, vector<1x128xf32>
    %cst_23 = arith.constant dense<0.000000e+00> : vector<128xf32>
    %37 = vector.multi_reduction <add>, %34, %cst_23 [0] : vector<2x128xf32> to vector<128xf32>
    %38 = vector.shape_cast %37 : vector<128xf32> to vector<1x128xf32>
    %39 = arith.mulf %34, %34 : vector<2x128xf32>
    %cst_24 = arith.constant dense<0.000000e+00> : vector<128xf32>
    %40 = vector.multi_reduction <add>, %39, %cst_24 [0] : vector<2x128xf32> to vector<128xf32>
    %41 = vector.shape_cast %40 : vector<128xf32> to vector<1x128xf32>
    %cst_25 = arith.constant 5.000000e-01 : f32
    %42 = vector.broadcast %cst_25 : f32 to vector<1x128xf32>
    %43 = arith.mulf %38, %42 : vector<1x128xf32>
    %cst_26 = arith.constant 5.000000e-01 : f32
    %44 = vector.broadcast %cst_26 : f32 to vector<1x128xf32>
    %45 = arith.mulf %41, %44 : vector<1x128xf32>
    %46 = arith.mulf %43, %43 : vector<1x128xf32>
    %47 = arith.subf %45, %46 : vector<1x128xf32>
    %cst_27 = arith.constant 0.000000e+00 : f32
    %48 = vector.broadcast %cst_27 : f32 to vector<1x128xf32>
    %49 = arith.maximumf %47, %48 : vector<1x128xf32>
    %50 = vector.broadcast %43 : vector<1x128xf32> to vector<2x128xf32>
    %51 = arith.subf %34, %50 : vector<2x128xf32>
    %cst_28 = arith.constant 9.99999974E-6 : f32
    %52 = vector.broadcast %cst_28 : f32 to vector<1x128xf32>
    %53 = arith.addf %49, %52 : vector<1x128xf32>
    %54 = math.rsqrt %53 : vector<1x128xf32>
    %55 = vector.broadcast %54 : vector<1x128xf32> to vector<2x128xf32>
    %56 = arith.mulf %51, %55 : vector<2x128xf32>
    %57 = vector.broadcast %35 : vector<1x128xf32> to vector<2x128xf32>
    %58 = arith.mulf %56, %57 : vector<2x128xf32>
    %59 = vector.broadcast %36 : vector<1x128xf32> to vector<2x128xf32>
    %60 = arith.addf %58, %59 : vector<2x128xf32>
    %c0_29 = arith.constant 0 : index
    %c0_30 = arith.constant 0 : index
    %61 = vector.load %arg9[%c0_29, %c0_30] : memref<2x128xf32, #tpu.memory_space<vmem>>, vector<2x128xf32>
    tpu.vector_store %arg9[%c0_29, %c0_30], %60 {strides = array<i32>} : memref<2x128xf32, #tpu.memory_space<vmem>>, vector<2x128xf32>,
    return
  }
  func.func @transform_0(%arg0: i32) -> (i32, i32) {
    %c0_i32 = arith.constant 0 : i32
    %c0_i32_0 = arith.constant 0 : i32
    %c0_i32_1 = arith.constant 0 : i32
    return %c0_i32, %c0_i32_0 : i32, i32
  }
  func.func @transform_1(%arg0: i32) -> (i32, i32) {
    %c0_i32 = arith.constant 0 : i32
    %c0_i32_0 = arith.constant 0 : i32
    return %c0_i32, %arg0 : i32, i32
  }
  func.func @transform_2(%arg0: i32) -> (i32, i32) {
    %c0_i32 = arith.constant 0 : i32
    %c0_i32_0 = arith.constant 0 : i32
    return %c0_i32, %arg0 : i32, i32
  }
  func.func @transform_3(%arg0: i32) -> (i32, i32) {
    %c0_i32 = arith.constant 0 : i32
    %c0_i32_0 = arith.constant 0 : i32
    return %c0_i32, %arg0 : i32, i32
  }
  func.func @transform_4(%arg0: i32) -> (i32, i32) {
    %c0_i32 = arith.constant 0 : i32
    %c0_i32_0 = arith.constant 0 : i32
    return %c0_i32, %arg0 : i32, i32
  }
  func.func @transform_5(%arg0: i32) -> (i32, i32) {
    %c0_i32 = arith.constant 0 : i32
    %c0_i32_0 = arith.constant 0 : i32
    return %c0_i32, %arg0 : i32, i32
  }
  func.func @transform_6(%arg0: i32) -> (i32, i32) {
    %c0_i32 = arith.constant 0 : i32
    %c0_i32_0 = arith.constant 0 : i32
    return %c0_i32, %arg0 : i32, i32
  }
  func.func @transform_7(%arg0: i32) -> (i32, i32) {
    %c0_i32 = arith.constant 0 : i32
    %c0_i32_0 = arith.constant 0 : i32
    return %c0_i32, %arg0 : i32, i32
  }
  func.func @transform_8(%arg0: i32) -> (i32, i32) {
    %c0_i32 = arith.constant 0 : i32
    %c0_i32_0 = arith.constant 0 : i32
    return %c0_i32, %arg0 : i32, i32
  }
}

module attributes {stable_mosaic.version = 11 : i64} {
  func.func @_conv_bn_add_relu_kernel(%arg0: i32, %arg1: memref<2x1152xbf16, #tpu.memory_space<vmem>>, %arg2: memref<1152x128xbf16, #tpu.memory_space<vmem>>, %arg3: memref<1x128xf32, #tpu.memory_space<vmem>>, %arg4: memref<1x128xf32, #tpu.memory_space<vmem>>, %arg5: memref<2x128xf32, #tpu.memory_space<vmem>>, %arg6: memref<2x128xf32, #tpu.memory_space<vmem>>) attributes {dimension_semantics = [#tpu.dimension_semantics<parallel>], iteration_bounds = array<i64: 1>, scalar_prefetch = 0 : i64, scratch_operands = 0 : i64, tpu.core_type = #tpu.core_type<tc>, window_params = [{pipeline_mode = #tpu.pipeline_mode<synchronous>, transform_indices = @transform_0, window_bounds = array<i64: 2, 1152>}, {transform_indices = @transform_1, window_bounds = array<i64: 1152, 128>}, {transform_indices = @transform_2, window_bounds = array<i64: 1, 128>}, {transform_indices = @transform_3, window_bounds = array<i64: 1, 128>}, {transform_indices = @transform_4, window_bounds = array<i64: 2, 128>}, {transform_indices = @transform_5, window_bounds = array<i64: 2, 128>}]} {
    %c0 = arith.constant 0 : index
    %c0_0 = arith.constant 0 : index
    %0 = vector.load %arg1[%c0, %c0_0] : memref<2x1152xbf16, #tpu.memory_space<vmem>>, vector<2x1152xbf16>
    %c0_1 = arith.constant 0 : index
    %c0_2 = arith.constant 0 : index
    %1 = vector.load %arg2[%c0_1, %c0_2] : memref<1152x128xbf16, #tpu.memory_space<vmem>>, vector<1152x128xbf16>
    %cst = arith.constant dense<0.000000e+00> : vector<2x128xf32>
    %2 = tpu.matmul %0, %1, %cst {dimension_numbers = #tpu.dot_dimension_numbers<[1], [0], [0], [1], [0, 0, 1, 1], [], []>} : vector<2x1152xbf16>, vector<1152x128xbf16>, vector<2x128xf32> -> vector<2x128xf32>
    %c0_3 = arith.constant 0 : index
    %c0_4 = arith.constant 0 : index
    %3 = vector.load %arg3[%c0_3, %c0_4] : memref<1x128xf32, #tpu.memory_space<vmem>>, vector<1x128xf32>
    %c0_5 = arith.constant 0 : index
    %c0_6 = arith.constant 0 : index
    %4 = vector.load %arg4[%c0_5, %c0_6] : memref<1x128xf32, #tpu.memory_space<vmem>>, vector<1x128xf32>
    %cst_7 = arith.constant dense<0.000000e+00> : vector<128xf32>
    %5 = vector.multi_reduction <add>, %2, %cst_7 [0] : vector<2x128xf32> to vector<128xf32>
    %6 = vector.shape_cast %5 : vector<128xf32> to vector<1x128xf32>
    %7 = arith.mulf %2, %2 : vector<2x128xf32>
    %cst_8 = arith.constant dense<0.000000e+00> : vector<128xf32>
    %8 = vector.multi_reduction <add>, %7, %cst_8 [0] : vector<2x128xf32> to vector<128xf32>
    %9 = vector.shape_cast %8 : vector<128xf32> to vector<1x128xf32>
    %cst_9 = arith.constant 5.000000e-01 : f32
    %10 = vector.broadcast %cst_9 : f32 to vector<1x128xf32>
    %11 = arith.mulf %6, %10 : vector<1x128xf32>
    %cst_10 = arith.constant 5.000000e-01 : f32
    %12 = vector.broadcast %cst_10 : f32 to vector<1x128xf32>
    %13 = arith.mulf %9, %12 : vector<1x128xf32>
    %14 = arith.mulf %11, %11 : vector<1x128xf32>
    %15 = arith.subf %13, %14 : vector<1x128xf32>
    %cst_11 = arith.constant 0.000000e+00 : f32
    %16 = vector.broadcast %cst_11 : f32 to vector<1x128xf32>
    %17 = arith.maximumf %15, %16 : vector<1x128xf32>
    %18 = vector.broadcast %11 : vector<1x128xf32> to vector<2x128xf32>
    %19 = arith.subf %2, %18 : vector<2x128xf32>
    %cst_12 = arith.constant 9.99999974E-6 : f32
    %20 = vector.broadcast %cst_12 : f32 to vector<1x128xf32>
    %21 = arith.addf %17, %20 : vector<1x128xf32>
    %22 = math.rsqrt %21 : vector<1x128xf32>
    %23 = vector.broadcast %22 : vector<1x128xf32> to vector<2x128xf32>
    %24 = arith.mulf %19, %23 : vector<2x128xf32>
    %25 = vector.broadcast %3 : vector<1x128xf32> to vector<2x128xf32>
    %26 = arith.mulf %24, %25 : vector<2x128xf32>
    %27 = vector.broadcast %4 : vector<1x128xf32> to vector<2x128xf32>
    %28 = arith.addf %26, %27 : vector<2x128xf32>
    %c0_13 = arith.constant 0 : index
    %c0_14 = arith.constant 0 : index
    %29 = vector.load %arg5[%c0_13, %c0_14] : memref<2x128xf32, #tpu.memory_space<vmem>>, vector<2x128xf32>
    %30 = arith.addf %28, %29 : vector<2x128xf32>
    %cst_15 = arith.constant 0.000000e+00 : f32
    %31 = vector.broadcast %cst_15 : f32 to vector<2x128xf32>
    %32 = arith.maximumf %30, %31 : vector<2x128xf32>
    %c0_16 = arith.constant 0 : index
    %c0_17 = arith.constant 0 : index
    %33 = vector.load %arg6[%c0_16, %c0_17] : memref<2x128xf32, #tpu.memory_space<vmem>>, vector<2x128xf32>
    tpu.vector_store %arg6[%c0_16, %c0_17], %32 {strides = array<i32>} : memref<2x128xf32, #tpu.memory_space<vmem>>, vector<2x128xf32>,
    return
  }
  func.func @transform_0(%arg0: i32) -> (i32, i32) {
    %c0_i32 = arith.constant 0 : i32
    %c0_i32_0 = arith.constant 0 : i32
    %c0_i32_1 = arith.constant 0 : i32
    return %c0_i32, %c0_i32_0 : i32, i32
  }
  func.func @transform_1(%arg0: i32) -> (i32, i32) {
    %c0_i32 = arith.constant 0 : i32
    %c0_i32_0 = arith.constant 0 : i32
    return %c0_i32, %arg0 : i32, i32
  }
  func.func @transform_2(%arg0: i32) -> (i32, i32) {
    %c0_i32 = arith.constant 0 : i32
    %c0_i32_0 = arith.constant 0 : i32
    return %c0_i32, %arg0 : i32, i32
  }
  func.func @transform_3(%arg0: i32) -> (i32, i32) {
    %c0_i32 = arith.constant 0 : i32
    %c0_i32_0 = arith.constant 0 : i32
    return %c0_i32, %arg0 : i32, i32
  }
  func.func @transform_4(%arg0: i32) -> (i32, i32) {
    %c0_i32 = arith.constant 0 : i32
    %c0_i32_0 = arith.constant 0 : i32
    return %c0_i32, %arg0 : i32, i32
  }
  func.func @transform_5(%arg0: i32) -> (i32, i32) {
    %c0_i32 = arith.constant 0 : i32
    %c0_i32_0 = arith.constant 0 : i32
    return %c0_i32, %arg0 : i32, i32
  }
}

module attributes {stable_mosaic.version = 11 : i64} {
  func.func @_head_train_kernel(%arg0: i32, %arg1: memref<2x1x128xf32, #tpu.memory_space<vmem>>, %arg2: memref<128x128xbf16, #tpu.memory_space<vmem>>, %arg3: memref<1x128xf32, #tpu.memory_space<vmem>>, %arg4: memref<128x128xbf16, #tpu.memory_space<vmem>>, %arg5: memref<1x128xf32, #tpu.memory_space<vmem>>, %arg6: memref<2x128xf32, #tpu.memory_space<vmem>>) attributes {dimension_semantics = [#tpu.dimension_semantics<arbitrary>], iteration_bounds = array<i64: 1>, scalar_prefetch = 0 : i64, scratch_operands = 0 : i64, tpu.core_type = #tpu.core_type<tc>, window_params = [{pipeline_mode = #tpu.pipeline_mode<synchronous>, transform_indices = @transform_0, window_bounds = array<i64: 2, 1, 128>}, {pipeline_mode = #tpu.pipeline_mode<synchronous>, transform_indices = @transform_1, window_bounds = array<i64: 128, 128>}, {pipeline_mode = #tpu.pipeline_mode<synchronous>, transform_indices = @transform_2, window_bounds = array<i64: 1, 128>}, {pipeline_mode = #tpu.pipeline_mode<synchronous>, transform_indices = @transform_3, window_bounds = array<i64: 128, 128>}, {pipeline_mode = #tpu.pipeline_mode<synchronous>, transform_indices = @transform_4, window_bounds = array<i64: 1, 128>}, {pipeline_mode = #tpu.pipeline_mode<synchronous>, transform_indices = @transform_5, window_bounds = array<i64: 2, 128>}]} {
    %c0 = arith.constant 0 : index
    %c0_0 = arith.constant 0 : index
    %c0_1 = arith.constant 0 : index
    %0 = vector.load %arg1[%c0, %c0_0, %c0_1] : memref<2x1x128xf32, #tpu.memory_space<vmem>>, vector<2x1x128xf32>
    %cst = arith.constant dense<0.000000e+00> : vector<2x128xf32>
    %1 = vector.multi_reduction <add>, %0, %cst [1] : vector<2x1x128xf32> to vector<2x128xf32>
    %cst_2 = arith.constant 1.000000e+00 : f32
    %2 = vector.broadcast %cst_2 : f32 to vector<2x128xf32>
    %3 = arith.divf %1, %2 : vector<2x128xf32>
    %4 = arith.truncf %3 : vector<2x128xf32> to vector<2x128xbf16>
    %c0_3 = arith.constant 0 : index
    %c0_4 = arith.constant 0 : index
    %5 = vector.load %arg2[%c0_3, %c0_4] : memref<128x128xbf16, #tpu.memory_space<vmem>>, vector<128x128xbf16>
    %cst_5 = arith.constant dense<0.000000e+00> : vector<2x128xf32>
    %6 = tpu.matmul %4, %5, %cst_5 {dimension_numbers = #tpu.dot_dimension_numbers<[1], [0], [0], [1], [0, 0, 1, 1], [], []>} : vector<2x128xbf16>, vector<128x128xbf16>, vector<2x128xf32> -> vector<2x128xf32>
    %c0_6 = arith.constant 0 : index
    %c0_7 = arith.constant 0 : index
    %7 = vector.load %arg3[%c0_6, %c0_7] : memref<1x128xf32, #tpu.memory_space<vmem>>, vector<1x128xf32>
    %8 = vector.broadcast %7 : vector<1x128xf32> to vector<2x128xf32>
    %9 = arith.addf %6, %8 : vector<2x128xf32>
    %cst_8 = arith.constant 0.000000e+00 : f32
    %10 = vector.broadcast %cst_8 : f32 to vector<2x128xf32>
    %11 = arith.maximumf %9, %10 : vector<2x128xf32>
    %12 = arith.truncf %11 : vector<2x128xf32> to vector<2x128xbf16>
    %c0_9 = arith.constant 0 : index
    %c0_10 = arith.constant 0 : index
    %13 = vector.load %arg4[%c0_9, %c0_10] : memref<128x128xbf16, #tpu.memory_space<vmem>>, vector<128x128xbf16>
    %cst_11 = arith.constant dense<0.000000e+00> : vector<2x128xf32>
    %14 = tpu.matmul %12, %13, %cst_11 {dimension_numbers = #tpu.dot_dimension_numbers<[1], [0], [0], [1], [0, 0, 1, 1], [], []>} : vector<2x128xbf16>, vector<128x128xbf16>, vector<2x128xf32> -> vector<2x128xf32>
    %c0_12 = arith.constant 0 : index
    %c0_13 = arith.constant 0 : index
    %15 = vector.load %arg5[%c0_12, %c0_13] : memref<1x128xf32, #tpu.memory_space<vmem>>, vector<1x128xf32>
    %16 = vector.broadcast %15 : vector<1x128xf32> to vector<2x128xf32>
    %17 = arith.addf %14, %16 : vector<2x128xf32>
    %c0_14 = arith.constant 0 : index
    %c0_15 = arith.constant 0 : index
    %18 = vector.load %arg6[%c0_14, %c0_15] : memref<2x128xf32, #tpu.memory_space<vmem>>, vector<2x128xf32>
    tpu.vector_store %arg6[%c0_14, %c0_15], %17 {strides = array<i32>} : memref<2x128xf32, #tpu.memory_space<vmem>>, vector<2x128xf32>,
    return
  }
  func.func @transform_0(%arg0: i32) -> (i32, i32, i32) {
    %c0_i32 = arith.constant 0 : i32
    %c0_i32_0 = arith.constant 0 : i32
    %c0_i32_1 = arith.constant 0 : i32
    %c0_i32_2 = arith.constant 0 : i32
    return %c0_i32, %c0_i32_0, %c0_i32_1 : i32, i32, i32
  }
  func.func @transform_1(%arg0: i32) -> (i32, i32) {
    %c0_i32 = arith.constant 0 : i32
    %c0_i32_0 = arith.constant 0 : i32
    %c0_i32_1 = arith.constant 0 : i32
    return %c0_i32, %c0_i32_0 : i32, i32
  }
  func.func @transform_2(%arg0: i32) -> (i32, i32) {
    %c0_i32 = arith.constant 0 : i32
    %c0_i32_0 = arith.constant 0 : i32
    %c0_i32_1 = arith.constant 0 : i32
    return %c0_i32, %c0_i32_0 : i32, i32
  }
  func.func @transform_3(%arg0: i32) -> (i32, i32) {
    %c0_i32 = arith.constant 0 : i32
    %c0_i32_0 = arith.constant 0 : i32
    %c0_i32_1 = arith.constant 0 : i32
    return %c0_i32, %c0_i32_0 : i32, i32
  }
  func.func @transform_4(%arg0: i32) -> (i32, i32) {
    %c0_i32 = arith.constant 0 : i32
    %c0_i32_0 = arith.constant 0 : i32
    %c0_i32_1 = arith.constant 0 : i32
    return %c0_i32, %c0_i32_0 : i32, i32
  }
  func.func @transform_5(%arg0: i32) -> (i32, i32) {
    %c0_i32 = arith.constant 0 : i32
    %c0_i32_0 = arith.constant 0 : i32
    %c0_i32_1 = arith.constant 0 : i32
    return %c0_i32, %c0_i32_0 : i32, i32
  }
}

</mosaic_0001>

<llo_original>
// kernel: lupnet_forward.10
$region0: #{lupnet_forward.10}
  #allocation0 [shape = 'u32[]', space=smem, size = 0x4, offset = 0x4, fixed_abs, tag = 'smem constant byte address 0x4 - core index']
  #allocation1 [shape = 'u32[144,128]{1,0:T(1,128)}', space=vmem, size = 0x12000, scoped, tag = 'internal scratch']
  %s0 = inlined_call_operand.vmem [shape: bf16[512,256], index: 0, kind: input, shape index: {}]
  %s1 = inlined_call_operand.vmem [shape: bf16[256,128], index: 1, kind: input, shape index: {}]
  %s2 = inlined_call_operand.vmem [shape: f32[1,128], index: 2, kind: input, shape index: {}]
  %s3 = inlined_call_operand.vmem [shape: f32[1,128], index: 3, kind: input, shape index: {}]
  %s4 = inlined_call_operand.vmem [shape: f32[512,128], index: 4, kind: output, shape index: {}]
  %s5 = sld [smem:[#allocation0]]
  $region26: #{lupnet_forward.10} parent=0
    _
  %s7 = ssub.s32 1, %s5
  %s8 = scalar_select 0, %s7, %s5
  // Predicated region
  $region2: #{lupnet_forward.10} parent=0 // pred_check
    _
  $region3: #{lupnet_forward.10} parent=0 // pred_check_branch
    %10 = sbr.rel (0) target = $region5
  $region4: #{lupnet_forward.10} parent=0 // pred_region
    _
  $region5: #{lupnet_forward.10} parent=0 // pred_fallthru
    _
  // Predicated region
  $region6: #{lupnet_forward.10} parent=0 // pred_check
    _
  $region7: #{lupnet_forward.10} parent=0 // pred_check_branch
    %12 = sbr.rel (0) target = $region9
  $region8: #{lupnet_forward.10} parent=0 // pred_region
    _
  $region9: #{lupnet_forward.10} parent=0 // pred_fallthru
    _
  // Predicated region
  $region10: #{lupnet_forward.10} parent=0 // pred_check
    _
  $region11: #{lupnet_forward.10} parent=0 // pred_check_branch
    %14 = sbr.rel (0) target = $region13
  $region12: #{lupnet_forward.10} parent=0 // pred_region
    _
  $region13: #{lupnet_forward.10} parent=0 // pred_fallthru
    _
  // Predicated region
  $region14: #{lupnet_forward.10} parent=0 // pred_check
    _
  $region15: #{lupnet_forward.10} parent=0 // pred_check_branch
    %16 = sbr.rel (0) target = $region17
  $region16: #{lupnet_forward.10} parent=0 // pred_region
    _
  $region17: #{lupnet_forward.10} parent=0 // pred_fallthru
    _
  %v18 = vld [vmem:[%s0] sm:$0xff]
  %v19 = vld [vmem:[%s0 + $0x8] sm:$0xff]
  %v20 = vld [vmem:[%s0 + $0x10] sm:$0xff]
  %v21 = vld [vmem:[%s0 + $0x18] sm:$0xff]
  %v22 = vld [vmem:[%s0 + $0x20] sm:$0xff]
  %v23 = vld [vmem:[%s0 + $0x28] sm:$0xff]
  %v24 = vld [vmem:[%s0 + $0x30] sm:$0xff]
  %v25 = vld [vmem:[%s0 + $0x38] sm:$0xff]
  %v26 = vld [vmem:[%s0 + $0x40] sm:$0xff]
  %v27 = vld [vmem:[%s0 + $0x48] sm:$0xff]
  %v28 = vld [vmem:[%s0 + $0x50] sm:$0xff]
  %v29 = vld [vmem:[%s0 + $0x58] sm:$0xff]
  %v30 = vld [vmem:[%s0 + $0x60] sm:$0xff]
  %v31 = vld [vmem:[%s0 + $0x68] sm:$0xff]
  %v32 = vld [vmem:[%s0 + $0x70] sm:$0xff]
  %v33 = vld [vmem:[%s0 + $0x78] sm:$0xff]
  %v34 = vld [vmem:[%s0 + $0x80] sm:$0xff]
  %v35 = vld [vmem:[%s0 + $0x88] sm:$0xff]
  %v36 = vld [vmem:[%s0 + $0x90] sm:$0xff]
  %v37 = vld [vmem:[%s0 + $0x98] sm:$0xff]
  %v38 = vld [vmem:[%s0 + $0xa0] sm:$0xff]
  %v39 = vld [vmem:[%s0 + $0xa8] sm:$0xff]
  %v40 = vld [vmem:[%s0 + $0xb0] sm:$0xff]
  %v41 = vld [vmem:[%s0 + $0xb8] sm:$0xff]
  %v42 = vld [vmem:[%s0 + $0xc0] sm:$0xff]
  %v43 = vld [vmem:[%s0 + $0xc8] sm:$0xff]
  %v44 = vld [vmem:[%s0 + $0xd0] sm:$0xff]
  %v45 = vld [vmem:[%s0 + $0xd8] sm:$0xff]
  %v46 = vld [vmem:[%s0 + $0xe0] sm:$0xff]
  %v47 = vld [vmem:[%s0 + $0xe8] sm:$0xff]
  %v48 = vld [vmem:[%s0 + $0xf0] sm:$0xff]
  %v49 = vld [vmem:[%s0 + $0xf8] sm:$0xff]
  %v50 = vld [vmem:[%s0 + $0x100] sm:$0xff]
  %v51 = vld [vmem:[%s0 + $0x108] sm:$0xff]
  %v52 = vld [vmem:[%s0 + $0x110] sm:$0xff]
  %v53 = vld [vmem:[%s0 + $0x118] sm:$0xff]
  %v54 = vld [vmem:[%s0 + $0x120] sm:$0xff]
  %v55 = vld [vmem:[%s0 + $0x128] sm:$0xff]
  %v56 = vld [vmem:[%s0 + $0x130] sm:$0xff]
  %v57 = vld [vmem:[%s0 + $0x138] sm:$0xff]
  %v58 = vld [vmem:[%s0 + $0x140] sm:$0xff]
  %v59 = vld [vmem:[%s0 + $0x148] sm:$0xff]
  %v60 = vld [vmem:[%s0 + $0x150] sm:$0xff]
  %v61 = vld [vmem:[%s0 + $0x158] sm:$0xff]
  %v62 = vld [vmem:[%s0 + $0x160] sm:$0xff]
  %v63 = vld [vmem:[%s0 + $0x168] sm:$0xff]
  %v64 = vld [vmem:[%s0 + $0x170] sm:$0xff]
  %v65 = vld [vmem:[%s0 + $0x178] sm:$0xff]
  %v66 = vld [vmem:[%s0 + $0x180] sm:$0xff]
  %v67 = vld [vmem:[%s0 + $0x188] sm:$0xff]
  %v68 = vld [vmem:[%s0 + $0x190] sm:$0xff]
  %v69 = vld [vmem:[%s0 + $0x198] sm:$0xff]
  %v70 = vld [vmem:[%s0 + $0x1a0] sm:$0xff]
  %v71 = vld [vmem:[%s0 + $0x1a8] sm:$0xff]
  %v72 = vld [vmem:[%s0 + $0x1b0] sm:$0xff]
  %v73 = vld [vmem:[%s0 + $0x1b8] sm:$0xff]
  %v74 = vld [vmem:[%s0 + $0x1c0] sm:$0xff]
  %v75 = vld [vmem:[%s0 + $0x1c8] sm:$0xff]
  %v76 = vld [vmem:[%s0 + $0x1d0] sm:$0xff]
  %v77 = vld [vmem:[%s0 + $0x1d8] sm:$0xff]
  %v78 = vld [vmem:[%s0 + $0x1e0] sm:$0xff]
  %v79 = vld [vmem:[%s0 + $0x1e8] sm:$0xff]
  %v80 = vld [vmem:[%s0 + $0x1f0] sm:$0xff]
  %v81 = vld [vmem:[%s0 + $0x1f8] sm:$0xff]
  %v82 = vld [vmem:[%s1] sm:$0xf]
  %v83 = vld [vmem:[%s1 + $0x4] sm:$0xf]
  %v84 = vld [vmem:[%s1 + $0x8] sm:$0xf]
  %v85 = vld [vmem:[%s1 + $0xc] sm:$0xf]
  %v86 = vld [vmem:[%s1 + $0x10] sm:$0xf]
  %v87 = vld [vmem:[%s1 + $0x14] sm:$0xf]
  %v88 = vld [vmem:[%s1 + $0x18] sm:$0xf]
  %v89 = vld [vmem:[%s1 + $0x1c] sm:$0xf]
  %v90 = vld [vmem:[%s1 + $0x20] sm:$0xf]
  %v91 = vld [vmem:[%s1 + $0x24] sm:$0xf]
  %v92 = vld [vmem:[%s1 + $0x28] sm:$0xf]
  %v93 = vld [vmem:[%s1 + $0x2c] sm:$0xf]
  %v94 = vld [vmem:[%s1 + $0x30] sm:$0xf]
  %v95 = vld [vmem:[%s1 + $0x34] sm:$0xf]
  %v96 = vld [vmem:[%s1 + $0x38] sm:$0xf]
  %v97 = vld [vmem:[%s1 + $0x3c] sm:$0xf]
  %v98 = vld [vmem:[%s1 + $0x40] sm:$0xf]
  %v99 = vld [vmem:[%s1 + $0x44] sm:$0xf]
  %v100 = vld [vmem:[%s1 + $0x48] sm:$0xf]
  %v101 = vld [vmem:[%s1 + $0x4c] sm:$0xf]
  %v102 = vld [vmem:[%s1 + $0x50] sm:$0xf]
  %v103 = vld [vmem:[%s1 + $0x54] sm:$0xf]
  %v104 = vld [vmem:[%s1 + $0x58] sm:$0xf]
  %v105 = vld [vmem:[%s1 + $0x5c] sm:$0xf]
  %v106 = vld [vmem:[%s1 + $0x60] sm:$0xf]
  %v107 = vld [vmem:[%s1 + $0x64] sm:$0xf]
  %v108 = vld [vmem:[%s1 + $0x68] sm:$0xf]
  %v109 = vld [vmem:[%s1 + $0x6c] sm:$0xf]
  %v110 = vld [vmem:[%s1 + $0x70] sm:$0xf]
  %v111 = vld [vmem:[%s1 + $0x74] sm:$0xf]
  %v112 = vld [vmem:[%s1 + $0x78] sm:$0xf]
  %v113 = vld [vmem:[%s1 + $0x7c] sm:$0xf]
  %v178 = vunpack.c.l.b16 %v18
  %v179 = vunpack.c.h.b16 %v18
  %v180 = vunpack.c.l.b16 %v19
  %v181 = vunpack.c.h.b16 %v19
  %v182 = vunpack.c.l.b16 %v20
  %v183 = vunpack.c.h.b16 %v20
  %v184 = vunpack.c.l.b16 %v21
  %v185 = vunpack.c.h.b16 %v21
  %v186 = vunpack.c.l.b16 %v22
  %v187 = vunpack.c.h.b16 %v22
  %v188 = vunpack.c.l.b16 %v23
  %v189 = vunpack.c.h.b16 %v23
  %v190 = vunpack.c.l.b16 %v24
  %v191 = vunpack.c.h.b16 %v24
  %v192 = vunpack.c.l.b16 %v25
  %v193 = vunpack.c.h.b16 %v25
  %v194 = vunpack.c.l.b16 %v26
  %v195 = vunpack.c.h.b16 %v26
  %v196 = vunpack.c.l.b16 %v27
  %v197 = vunpack.c.h.b16 %v27
  %v198 = vunpack.c.l.b16 %v28
  %v199 = vunpack.c.h.b16 %v28
  %v200 = vunpack.c.l.b16 %v29
  %v201 = vunpack.c.h.b16 %v29
  %v202 = vunpack.c.l.b16 %v30
  %v203 = vunpack.c.h.b16 %v30
  %v204 = vunpack.c.l.b16 %v31
  %v205 = vunpack.c.h.b16 %v31
  %v206 = vunpack.c.l.b16 %v32
  %v207 = vunpack.c.h.b16 %v32
  %v208 = vunpack.c.l.b16 %v33
  %v209 = vunpack.c.h.b16 %v33
  %v210 = vunpack.c.l.b16 %v34
  %v211 = vunpack.c.h.b16 %v34
  %v212 = vunpack.c.l.b16 %v35
  %v213 = vunpack.c.h.b16 %v35
  %v214 = vunpack.c.l.b16 %v36
  %v215 = vunpack.c.h.b16 %v36
  %v216 = vunpack.c.l.b16 %v37
  %v217 = vunpack.c.h.b16 %v37
  %v218 = vunpack.c.l.b16 %v38
  %v219 = vunpack.c.h.b16 %v38
  %v220 = vunpack.c.l.b16 %v39
  %v221 = vunpack.c.h.b16 %v39
  %v222 = vunpack.c.l.b16 %v40
  %v223 = vunpack.c.h.b16 %v40
  %v224 = vunpack.c.l.b16 %v41
  %v225 = vunpack.c.h.b16 %v41
  %v226 = vunpack.c.l.b16 %v42
  %v227 = vunpack.c.h.b16 %v42
  %v228 = vunpack.c.l.b16 %v43
  %v229 = vunpack.c.h.b16 %v43
  %v230 = vunpack.c.l.b16 %v44
  %v231 = vunpack.c.h.b16 %v44
  %v232 = vunpack.c.l.b16 %v45
  %v233 = vunpack.c.h.b16 %v45
  %v234 = vunpack.c.l.b16 %v46
  %v235 = vunpack.c.h.b16 %v46
  %v236 = vunpack.c.l.b16 %v47
  %v237 = vunpack.c.h.b16 %v47
  %v238 = vunpack.c.l.b16 %v48
  %v239 = vunpack.c.h.b16 %v48
  %v240 = vunpack.c.l.b16 %v49
  %v241 = vunpack.c.h.b16 %v49
  %v242 = vunpack.c.l.b16 %v50
  %v243 = vunpack.c.h.b16 %v50
  %v244 = vunpack.c.l.b16 %v51
  %v245 = vunpack.c.h.b16 %v51
  %v246 = vunpack.c.l.b16 %v52
  %v247 = vunpack.c.h.b16 %v52
  %v248 = vunpack.c.l.b16 %v53
  %v249 = vunpack.c.h.b16 %v53
  %v250 = vunpack.c.l.b16 %v54
  %v251 = vunpack.c.h.b16 %v54
  %v252 = vunpack.c.l.b16 %v55
  %v253 = vunpack.c.h.b16 %v55
  %v254 = vunpack.c.l.b16 %v56
  %v255 = vunpack.c.h.b16 %v56
  %v256 = vunpack.c.l.b16 %v57
  %v257 = vunpack.c.h.b16 %v57
  %v258 = vunpack.c.l.b16 %v58
  %v259 = vunpack.c.h.b16 %v58
  %v260 = vunpack.c.l.b16 %v59
  %v261 = vunpack.c.h.b16 %v59
  %v262 = vunpack.c.l.b16 %v60
  %v263 = vunpack.c.h.b16 %v60
  %v264 = vunpack.c.l.b16 %v61
  %v265 = vunpack.c.h.b16 %v61
  %v266 = vunpack.c.l.b16 %v62
  %v267 = vunpack.c.h.b16 %v62
  %v268 = vunpack.c.l.b16 %v63
  %v269 = vunpack.c.h.b16 %v63
  %v270 = vunpack.c.l.b16 %v64
  %v271 = vunpack.c.h.b16 %v64
  %v272 = vunpack.c.l.b16 %v65
  %v273 = vunpack.c.h.b16 %v65
  %v274 = vunpack.c.l.b16 %v66
  %v275 = vunpack.c.h.b16 %v66
  %v276 = vunpack.c.l.b16 %v67
  %v277 = vunpack.c.h.b16 %v67
  %v278 = vunpack.c.l.b16 %v68
  %v279 = vunpack.c.h.b16 %v68
  %v280 = vunpack.c.l.b16 %v69
  %v281 = vunpack.c.h.b16 %v69
  %v282 = vunpack.c.l.b16 %v70
  %v283 = vunpack.c.h.b16 %v70
  %v284 = vunpack.c.l.b16 %v71
  %v285 = vunpack.c.h.b16 %v71
  %v286 = vunpack.c.l.b16 %v72
  %v287 = vunpack.c.h.b16 %v72
  %v288 = vunpack.c.l.b16 %v73
  %v289 = vunpack.c.h.b16 %v73
  %v290 = vunpack.c.l.b16 %v74
  %v291 = vunpack.c.h.b16 %v74
  %v292 = vunpack.c.l.b16 %v75
  %v293 = vunpack.c.h.b16 %v75
  %v294 = vunpack.c.l.b16 %v76
  %v295 = vunpack.c.h.b16 %v76
  %v296 = vunpack.c.l.b16 %v77
  %v297 = vunpack.c.h.b16 %v77
  %v298 = vunpack.c.l.b16 %v78
  %v299 = vunpack.c.h.b16 %v78
  %v300 = vunpack.c.l.b16 %v79
  %v301 = vunpack.c.h.b16 %v79
  %v302 = vunpack.c.l.b16 %v80
  %v303 = vunpack.c.h.b16 %v80
  %v304 = vunpack.c.l.b16 %v81
  %v305 = vunpack.c.h.b16 %v81
  %v306 = vpack.c.b16 %v180, %v178
  %v307 = vpack.c.b16 %v181, %v179
  %v308 = vpack.c.b16 %v184, %v182
  %v309 = vpack.c.b16 %v185, %v183
  %v310 = vpack.c.b16 %v188, %v186
  %v311 = vpack.c.b16 %v189, %v187
  %v312 = vpack.c.b16 %v192, %v190
  %v313 = vpack.c.b16 %v193, %v191
  %v314 = vpack.c.b16 %v196, %v194
  %v315 = vpack.c.b16 %v197, %v195
  %v316 = vpack.c.b16 %v200, %v198
  %v317 = vpack.c.b16 %v201, %v199
  %v318 = vpack.c.b16 %v204, %v202
  %v319 = vpack.c.b16 %v205, %v203
  %v320 = vpack.c.b16 %v208, %v206
  %v321 = vpack.c.b16 %v209, %v207
  %v322 = vpack.c.b16 %v212, %v210
  %v323 = vpack.c.b16 %v213, %v211
  %v324 = vpack.c.b16 %v216, %v214
  %v325 = vpack.c.b16 %v217, %v215
  %v326 = vpack.c.b16 %v220, %v218
  %v327 = vpack.c.b16 %v221, %v219
  %v328 = vpack.c.b16 %v224, %v222
  %v329 = vpack.c.b16 %v225, %v223
  %v330 = vpack.c.b16 %v228, %v226
  %v331 = vpack.c.b16 %v229, %v227
  %v332 = vpack.c.b16 %v232, %v230
  %v333 = vpack.c.b16 %v233, %v231
  %v334 = vpack.c.b16 %v236, %v234
  %v335 = vpack.c.b16 %v237, %v235
  %v336 = vpack.c.b16 %v240, %v238
  %v337 = vpack.c.b16 %v241, %v239
  %v338 = vpack.c.b16 %v244, %v242
  %v339 = vpack.c.b16 %v245, %v243
  %v340 = vpack.c.b16 %v248, %v246
  %v341 = vpack.c.b16 %v249, %v247
  %v342 = vpack.c.b16 %v252, %v250
  %v343 = vpack.c.b16 %v253, %v251
  %v344 = vpack.c.b16 %v256, %v254
  %v345 = vpack.c.b16 %v257, %v255
  %v346 = vpack.c.b16 %v260, %v258
  %v347 = vpack.c.b16 %v261, %v259
  %v348 = vpack.c.b16 %v264, %v262
  %v349 = vpack.c.b16 %v265, %v263
  %v350 = vpack.c.b16 %v268, %v266
  %v351 = vpack.c.b16 %v269, %v267
  %v352 = vpack.c.b16 %v272, %v270
  %v353 = vpack.c.b16 %v273, %v271
  %v354 = vpack.c.b16 %v276, %v274
  %v355 = vpack.c.b16 %v277, %v275
  %v356 = vpack.c.b16 %v280, %v278
  %v357 = vpack.c.b16 %v281, %v279
  %v358 = vpack.c.b16 %v284, %v282
  %v359 = vpack.c.b16 %v285, %v283
  %v360 = vpack.c.b16 %v288, %v286
  %v361 = vpack.c.b16 %v289, %v287
  %v362 = vpack.c.b16 %v292, %v290
  %v363 = vpack.c.b16 %v293, %v291
  %v364 = vpack.c.b16 %v296, %v294
  %v365 = vpack.c.b16 %v297, %v295
  %v366 = vpack.c.b16 %v300, %v298
  %v367 = vpack.c.b16 %v301, %v299
  %v368 = vpack.c.b16 %v304, %v302
  %v369 = vpack.c.b16 %v305, %v303
  %v466 = vunpack.c.l.b16 %v82
  %v467 = vunpack.c.l.b16 %v83
  %v468 = vunpack.c.l.b16 %v84
  %v469 = vunpack.c.l.b16 %v85
  %v470 = vunpack.c.l.b16 %v86
  %v471 = vunpack.c.l.b16 %v87
  %v472 = vunpack.c.l.b16 %v88
  %v473 = vunpack.c.l.b16 %v89
  %v474 = vunpack.c.l.b16 %v90
  %v475 = vunpack.c.l.b16 %v91
  %v476 = vunpack.c.l.b16 %v92
  %v477 = vunpack.c.l.b16 %v93
  %v478 = vunpack.c.l.b16 %v94
  %v479 = vunpack.c.l.b16 %v95
  %v480 = vunpack.c.l.b16 %v96
  %v481 = vunpack.c.l.b16 %v97
  %v482 = vunpack.c.l.b16 %v98
  %v483 = vunpack.c.l.b16 %v99
  %v484 = vunpack.c.l.b16 %v100
  %v485 = vunpack.c.l.b16 %v101
  %v486 = vunpack.c.l.b16 %v102
  %v487 = vunpack.c.l.b16 %v103
  %v488 = vunpack.c.l.b16 %v104
  %v489 = vunpack.c.l.b16 %v105
  %v490 = vunpack.c.l.b16 %v106
  %v491 = vunpack.c.l.b16 %v107
  %v492 = vunpack.c.l.b16 %v108
  %v493 = vunpack.c.l.b16 %v109
  %v494 = vunpack.c.l.b16 %v110
  %v495 = vunpack.c.l.b16 %v111
  %v496 = vunpack.c.l.b16 %v112
  %v497 = vunpack.c.l.b16 %v113
  %v498 = vpack.c.b16 %v467, %v466
  %v499 = vpack.c.b16 %v469, %v468
  %v500 = vpack.c.b16 %v471, %v470
  %v501 = vpack.c.b16 %v473, %v472
  %v502 = vpack.c.b16 %v475, %v474
  %v503 = vpack.c.b16 %v477, %v476
  %v504 = vpack.c.b16 %v479, %v478
  %v505 = vpack.c.b16 %v481, %v480
  %v506 = vpack.c.b16 %v483, %v482
  %v507 = vpack.c.b16 %v485, %v484
  %v508 = vpack.c.b16 %v487, %v486
  %v509 = vpack.c.b16 %v489, %v488
  %v510 = vpack.c.b16 %v491, %v490
  %v511 = vpack.c.b16 %v493, %v492
  %v512 = vpack.c.b16 %v495, %v494
  %v513 = vpack.c.b16 %v497, %v496
  %530 = vmatprep.subr.bf16.mxu0 0
  %531 = vmatpush1.bf16.msra.mxu0 %v505
  %532 = vmatprep.subr.bf16.mxu0 0
  %533 = vmatpush1.bf16.msra.mxu0 %v504
  %534 = vmatprep.subr.bf16.mxu0 0
  %535 = vmatpush1.bf16.msra.mxu0 %v503
  %536 = vmatprep.subr.bf16.mxu0 0
  %537 = vmatpush1.bf16.msra.mxu0 %v502
  %538 = vmatprep.subr.bf16.mxu0 0
  %539 = vmatpush1.bf16.msra.mxu0 %v501
  %540 = vmatprep.subr.bf16.mxu0 0
  %541 = vmatpush1.bf16.msra.mxu0 %v500
  %542 = vmatprep.subr.bf16.mxu0 0
  %543 = vmatpush1.bf16.msra.mxu0 %v499
  %544 = vmatprep.subr.bf16.mxu0 0
  %545 = vmatpush1.bf16.msra.mxu0 %v498
  %546 = vmatprep.subr.bf16.mxu0 0
  %547 = vmatpush2.bf16.msra.mxu0 %v513
  %548 = vmatprep.subr.bf16.mxu0 0
  %549 = vmatpush2.bf16.msra.mxu0 %v512
  %550 = vmatprep.subr.bf16.mxu0 0
  %551 = vmatpush2.bf16.msra.mxu0 %v511
  %552 = vmatprep.subr.bf16.mxu0 0
  %553 = vmatpush2.bf16.msra.mxu0 %v510
  %554 = vmatprep.subr.bf16.mxu0 0
  %555 = vmatpush2.bf16.msra.mxu0 %v509
  %556 = vmatprep.subr.bf16.mxu0 0
  %557 = vmatpush2.bf16.msra.mxu0 %v508
  %558 = vmatprep.subr.bf16.mxu0 0
  %559 = vmatpush2.bf16.msra.mxu0 %v507
  %560 = vmatprep.subr.bf16.mxu0 0
  %561 = vmatpush2.bf16.msra.mxu0 %v506
  %562 = vmatprep.mubr.bf16.mxu0 %v307
  %563 = vmatmul.mubr.bf16.gmra.mxu0 %v306
  %v564 = vpop.f32.mrf.mxu0
  %v565 = vadd.f32 0.0, %v564
  %v566 = vpop.f32.mrf.mxu0
  %v567 = vpop.f32.mrf.mxu0
  %v568 = vadd.f32 0.0, %v567
  %v569 = vpop.f32.mrf.mxu0
  %570 = vmatprep.mubr.bf16.mxu0 %v309
  %571 = vmatmul.mubr.bf16.gmra.mxu0 %v308
  %v572 = vpop.f32.mrf.mxu0
  %v573 = vadd.f32 0.0, %v572
  %v574 = vpop.f32.mrf.mxu0
  %v575 = vpop.f32.mrf.mxu0
  %v576 = vadd.f32 0.0, %v575
  %v577 = vpop.f32.mrf.mxu0
  %578 = vmatprep.mubr.bf16.mxu0 %v311
  %579 = vmatmul.mubr.bf16.gmra.mxu0 %v310
  %v580 = vpop.f32.mrf.mxu0
  %v581 = vadd.f32 0.0, %v580
  %v582 = vpop.f32.mrf.mxu0
  %v583 = vpop.f32.mrf.mxu0
  %v584 = vadd.f32 0.0, %v583
  %v585 = vpop.f32.mrf.mxu0
  %586 = vmatprep.mubr.bf16.mxu0 %v313
  %587 = vmatmul.mubr.bf16.gmra.mxu0 %v312
  %v588 = vpop.f32.mrf.mxu0
  %v589 = vadd.f32 0.0, %v588
  %v590 = vpop.f32.mrf.mxu0
  %v591 = vpop.f32.mrf.mxu0
  %v592 = vadd.f32 0.0, %v591
  %v593 = vpop.f32.mrf.mxu0
  %594 = vmatprep.mubr.bf16.mxu0 %v315
  %595 = vmatmul.mubr.bf16.gmra.mxu0 %v314
  %v596 = vpop.f32.mrf.mxu0
  %v597 = vadd.f32 0.0, %v596
  %v598 = vpop.f32.mrf.mxu0
  %v599 = vpop.f32.mrf.mxu0
  %v600 = vadd.f32 0.0, %v599
  %v601 = vpop.f32.mrf.mxu0
  %602 = vmatprep.mubr.bf16.mxu0 %v317
  %603 = vmatmul.mubr.bf16.gmra.mxu0 %v316
  %v604 = vpop.f32.mrf.mxu0
  %v605 = vadd.f32 0.0, %v604
  %v606 = vpop.f32.mrf.mxu0
  %v607 = vpop.f32.mrf.mxu0
  %v608 = vadd.f32 0.0, %v607
  %v609 = vpop.f32.mrf.mxu0
  %610 = vmatprep.mubr.bf16.mxu0 %v319
  %611 = vmatmul.mubr.bf16.gmra.mxu0 %v318
  %v612 = vpop.f32.mrf.mxu0
  %v613 = vadd.f32 0.0, %v612
  %v614 = vpop.f32.mrf.mxu0
  %v615 = vpop.f32.mrf.mxu0
  %v616 = vadd.f32 0.0, %v615
  %v617 = vpop.f32.mrf.mxu0
  %618 = vmatprep.mubr.bf16.mxu0 %v321
  %619 = vmatmul.mubr.bf16.gmra.mxu0 %v320
  %v620 = vpop.f32.mrf.mxu0
  %v621 = vadd.f32 0.0, %v620
  %v622 = vpop.f32.mrf.mxu0
  %v623 = vpop.f32.mrf.mxu0
  %v624 = vadd.f32 0.0, %v623
  %v625 = vpop.f32.mrf.mxu0
  %626 = vmatprep.mubr.bf16.mxu0 %v323
  %627 = vmatmul.mubr.bf16.gmra.mxu0 %v322
  %v628 = vpop.f32.mrf.mxu0
  %v629 = vadd.f32 0.0, %v628
  %v630 = vpop.f32.mrf.mxu0
  %v631 = vpop.f32.mrf.mxu0
  %v632 = vadd.f32 0.0, %v631
  %v633 = vpop.f32.mrf.mxu0
  %634 = vmatprep.mubr.bf16.mxu0 %v325
  %635 = vmatmul.mubr.bf16.gmra.mxu0 %v324
  %v636 = vpop.f32.mrf.mxu0
  %v637 = vadd.f32 0.0, %v636
  %v638 = vpop.f32.mrf.mxu0
  %v639 = vpop.f32.mrf.mxu0
  %v640 = vadd.f32 0.0, %v639
  %v641 = vpop.f32.mrf.mxu0
  %642 = vmatprep.mubr.bf16.mxu0 %v327
  %643 = vmatmul.mubr.bf16.gmra.mxu0 %v326
  %v644 = vpop.f32.mrf.mxu0
  %v645 = vadd.f32 0.0, %v644
  %v646 = vpop.f32.mrf.mxu0
  %v647 = vpop.f32.mrf.mxu0
  %v648 = vadd.f32 0.0, %v647
  %v649 = vpop.f32.mrf.mxu0
  %650 = vmatprep.mubr.bf16.mxu0 %v329
  %651 = vmatmul.mubr.bf16.gmra.mxu0 %v328
  %v652 = vpop.f32.mrf.mxu0
  %v653 = vadd.f32 0.0, %v652
  %v654 = vpop.f32.mrf.mxu0
  %v655 = vpop.f32.mrf.mxu0
  %v656 = vadd.f32 0.0, %v655
  %v657 = vpop.f32.mrf.mxu0
  %658 = vmatprep.mubr.bf16.mxu0 %v331
  %659 = vmatmul.mubr.bf16.gmra.mxu0 %v330
  %v660 = vpop.f32.mrf.mxu0
  %v661 = vadd.f32 0.0, %v660
  %v662 = vpop.f32.mrf.mxu0
  %v663 = vpop.f32.mrf.mxu0
  %v664 = vadd.f32 0.0, %v663
  %v665 = vpop.f32.mrf.mxu0
  %666 = vmatprep.mubr.bf16.mxu0 %v333
  %667 = vmatmul.mubr.bf16.gmra.mxu0 %v332
  %v668 = vpop.f32.mrf.mxu0
  %v669 = vadd.f32 0.0, %v668
  %v670 = vpop.f32.mrf.mxu0
  %v671 = vpop.f32.mrf.mxu0
  %v672 = vadd.f32 0.0, %v671
  %v673 = vpop.f32.mrf.mxu0
  %674 = vmatprep.mubr.bf16.mxu0 %v335
  %675 = vmatmul.mubr.bf16.gmra.mxu0 %v334
  %v676 = vpop.f32.mrf.mxu0
  %v677 = vadd.f32 0.0, %v676
  %v678 = vpop.f32.mrf.mxu0
  %v679 = vpop.f32.mrf.mxu0
  %v680 = vadd.f32 0.0, %v679
  %v681 = vpop.f32.mrf.mxu0
  %682 = vmatprep.mubr.bf16.mxu0 %v337
  %683 = vmatmul.mubr.bf16.gmra.mxu0 %v336
  %v684 = vpop.f32.mrf.mxu0
  %v685 = vadd.f32 0.0, %v684
  %v686 = vpop.f32.mrf.mxu0
  %v687 = vpop.f32.mrf.mxu0
  %v688 = vadd.f32 0.0, %v687
  %v689 = vpop.f32.mrf.mxu0
  %690 = vmatprep.mubr.bf16.mxu0 %v339
  %691 = vmatmul.mubr.bf16.gmra.mxu0 %v338
  %v692 = vpop.f32.mrf.mxu0
  %v693 = vadd.f32 0.0, %v692
  %v694 = vpop.f32.mrf.mxu0
  %v695 = vpop.f32.mrf.mxu0
  %v696 = vadd.f32 0.0, %v695
  %v697 = vpop.f32.mrf.mxu0
  %698 = vmatprep.mubr.bf16.mxu0 %v341
  %699 = vmatmul.mubr.bf16.gmra.mxu0 %v340
  %v700 = vpop.f32.mrf.mxu0
  %v701 = vadd.f32 0.0, %v700
  %v702 = vpop.f32.mrf.mxu0
  %v703 = vpop.f32.mrf.mxu0
  %v704 = vadd.f32 0.0, %v703
  %v705 = vpop.f32.mrf.mxu0
  %706 = vmatprep.mubr.bf16.mxu0 %v343
  %707 = vmatmul.mubr.bf16.gmra.mxu0 %v342
  %v708 = vpop.f32.mrf.mxu0
  %v709 = vadd.f32 0.0, %v708
  %v710 = vpop.f32.mrf.mxu0
  %v711 = vpop.f32.mrf.mxu0
  %v712 = vadd.f32 0.0, %v711
  %v713 = vpop.f32.mrf.mxu0
  %714 = vmatprep.mubr.bf16.mxu0 %v345
  %715 = vmatmul.mubr.bf16.gmra.mxu0 %v344
  %v716 = vpop.f32.mrf.mxu0
  %v717 = vadd.f32 0.0, %v716
  %v718 = vpop.f32.mrf.mxu0
  %v719 = vpop.f32.mrf.mxu0
  %v720 = vadd.f32 0.0, %v719
  %v721 = vpop.f32.mrf.mxu0
  %722 = vmatprep.mubr.bf16.mxu0 %v347
  %723 = vmatmul.mubr.bf16.gmra.mxu0 %v346
  %v724 = vpop.f32.mrf.mxu0
  %v725 = vadd.f32 0.0, %v724
  %v726 = vpop.f32.mrf.mxu0
  %v727 = vpop.f32.mrf.mxu0
  %v728 = vadd.f32 0.0, %v727
  %v729 = vpop.f32.mrf.mxu0
  %730 = vmatprep.mubr.bf16.mxu0 %v349
  %731 = vmatmul.mubr.bf16.gmra.mxu0 %v348
  %v732 = vpop.f32.mrf.mxu0
  %v733 = vadd.f32 0.0, %v732
  %v734 = vpop.f32.mrf.mxu0
  %v735 = vpop.f32.mrf.mxu0
  %v736 = vadd.f32 0.0, %v735
  %v737 = vpop.f32.mrf.mxu0
  %738 = vmatprep.mubr.bf16.mxu0 %v351
  %739 = vmatmul.mubr.bf16.gmra.mxu0 %v350
  %v740 = vpop.f32.mrf.mxu0
  %v741 = vadd.f32 0.0, %v740
  %v742 = vpop.f32.mrf.mxu0
  %v743 = vpop.f32.mrf.mxu0
  %v744 = vadd.f32 0.0, %v743
  %v745 = vpop.f32.mrf.mxu0
  %746 = vmatprep.mubr.bf16.mxu0 %v353
  %747 = vmatmul.mubr.bf16.gmra.mxu0 %v352
  %v748 = vpop.f32.mrf.mxu0
  %v749 = vadd.f32 0.0, %v748
  %v750 = vpop.f32.mrf.mxu0
  %v751 = vpop.f32.mrf.mxu0
  %v752 = vadd.f32 0.0, %v751
  %v753 = vpop.f32.mrf.mxu0
  %754 = vmatprep.mubr.bf16.mxu0 %v355
  %755 = vmatmul.mubr.bf16.gmra.mxu0 %v354
  %v756 = vpop.f32.mrf.mxu0
  %v757 = vadd.f32 0.0, %v756
  %v758 = vpop.f32.mrf.mxu0
  %v759 = vpop.f32.mrf.mxu0
  %v760 = vadd.f32 0.0, %v759
  %v761 = vpop.f32.mrf.mxu0
  %762 = vmatprep.mubr.bf16.mxu0 %v357
  %763 = vmatmul.mubr.bf16.gmra.mxu0 %v356
  %v764 = vpop.f32.mrf.mxu0
  %v765 = vadd.f32 0.0, %v764
  %v766 = vpop.f32.mrf.mxu0
  %v767 = vpop.f32.mrf.mxu0
  %v768 = vadd.f32 0.0, %v767
  %v769 = vpop.f32.mrf.mxu0
  %770 = vmatprep.mubr.bf16.mxu0 %v359
  %771 = vmatmul.mubr.bf16.gmra.mxu0 %v358
  %v772 = vpop.f32.mrf.mxu0
  %v773 = vadd.f32 0.0, %v772
  %v774 = vpop.f32.mrf.mxu0
  %v775 = vpop.f32.mrf.mxu0
  %v776 = vadd.f32 0.0, %v775
  %v777 = vpop.f32.mrf.mxu0
  %778 = vmatprep.mubr.bf16.mxu0 %v361
  %779 = vmatmul.mubr.bf16.gmra.mxu0 %v360
  %v780 = vpop.f32.mrf.mxu0
  %v781 = vadd.f32 0.0, %v780
  %v782 = vpop.f32.mrf.mxu0
  %v783 = vpop.f32.mrf.mxu0
  %v784 = vadd.f32 0.0, %v783
  %v785 = vpop.f32.mrf.mxu0
  %786 = vmatprep.mubr.bf16.mxu0 %v363
  %787 = vmatmul.mubr.bf16.gmra.mxu0 %v362
  %v788 = vpop.f32.mrf.mxu0
  %v789 = vadd.f32 0.0, %v788
  %v790 = vpop.f32.mrf.mxu0
  %v791 = vpop.f32.mrf.mxu0
  %v792 = vadd.f32 0.0, %v791
  %v793 = vpop.f32.mrf.mxu0
  %794 = vmatprep.mubr.bf16.mxu0 %v365
  %795 = vmatmul.mubr.bf16.gmra.mxu0 %v364
  %v796 = vpop.f32.mrf.mxu0
  %v797 = vadd.f32 0.0, %v796
  %v798 = vpop.f32.mrf.mxu0
  %v799 = vpop.f32.mrf.mxu0
  %v800 = vadd.f32 0.0, %v799
  %v801 = vpop.f32.mrf.mxu0
  %802 = vmatprep.mubr.bf16.mxu0 %v367
  %803 = vmatmul.mubr.bf16.gmra.mxu0 %v366
  %v804 = vpop.f32.mrf.mxu0
  %v805 = vadd.f32 0.0, %v804
  %v806 = vpop.f32.mrf.mxu0
  %v807 = vpop.f32.mrf.mxu0
  %v808 = vadd.f32 0.0, %v807
  %v809 = vpop.f32.mrf.mxu0
  %810 = vmatprep.mubr.bf16.mxu0 %v369
  %811 = vmatmul.mubr.bf16.gmra.mxu0 %v368
  %v812 = vpop.f32.mrf.mxu0
  %v813 = vadd.f32 0.0, %v812
  %v814 = vpop.f32.mrf.mxu0
  %v815 = vpop.f32.mrf.mxu0
  %v816 = vadd.f32 0.0, %v815
  %v817 = vpop.f32.mrf.mxu0
  %818 = vdwg.mxu0
  %v819 = vld [vmem:[%s2] sm:$0x1]
  %v820 = vld [vmem:[%s3] sm:$0x1]
  %v821 = vadd.f32 %v565, %v568
  %v822 = vadd.f32 %v821, %v573
  %v823 = vadd.f32 %v822, %v576
  %v824 = vadd.f32 %v823, %v581
  %v825 = vadd.f32 %v824, %v584
  %v826 = vadd.f32 %v825, %v589
  %v827 = vadd.f32 %v826, %v592
  %v828 = vadd.f32 %v827, %v597
  %v829 = vadd.f32 %v828, %v600
  %v830 = vadd.f32 %v829, %v605
  %v831 = vadd.f32 %v830, %v608
  %v832 = vadd.f32 %v831, %v613
  %v833 = vadd.f32 %v832, %v616
  %v834 = vadd.f32 %v833, %v621
  %v835 = vadd.f32 %v834, %v624
  %v836 = vadd.f32 %v835, %v629
  %v837 = vadd.f32 %v836, %v632
  %v838 = vadd.f32 %v837, %v637
  %v839 = vadd.f32 %v838, %v640
  %v840 = vadd.f32 %v839, %v645
  %v841 = vadd.f32 %v840, %v648
  %v842 = vadd.f32 %v841, %v653
  %v843 = vadd.f32 %v842, %v656
  %v844 = vadd.f32 %v843, %v661
  %v845 = vadd.f32 %v844, %v664
  %v846 = vadd.f32 %v845, %v669
  %v847 = vadd.f32 %v846, %v672
  %v848 = vadd.f32 %v847, %v677
  %v849 = vadd.f32 %v848, %v680
  %v850 = vadd.f32 %v849, %v685
  %v851 = vadd.f32 %v850, %v688
  %v852 = vadd.f32 %v851, %v693
  %v853 = vadd.f32 %v852, %v696
  %v854 = vadd.f32 %v853, %v701
  %v855 = vadd.f32 %v854, %v704
  %v856 = vadd.f32 %v855, %v709
  %v857 = vadd.f32 %v856, %v712
  %v858 = vadd.f32 %v857, %v717
  %v859 = vadd.f32 %v858, %v720
  %v860 = vadd.f32 %v859, %v725
  %v861 = vadd.f32 %v860, %v728
  %v862 = vadd.f32 %v861, %v733
  %v863 = vadd.f32 %v862, %v736
  %v864 = vadd.f32 %v863, %v741
  %v865 = vadd.f32 %v864, %v744
  %v866 = vadd.f32 %v865, %v749
  %v867 = vadd.f32 %v866, %v752
  %v868 = vadd.f32 %v867, %v757
  %v869 = vadd.f32 %v868, %v760
  %v870 = vadd.f32 %v869, %v765
  %v871 = vadd.f32 %v870, %v768
  %v872 = vadd.f32 %v871, %v773
  %v873 = vadd.f32 %v872, %v776
  %v874 = vadd.f32 %v873, %v781
  %v875 = vadd.f32 %v874, %v784
  %v876 = vadd.f32 %v875, %v789
  %v877 = vadd.f32 %v876, %v792
  %v878 = vadd.f32 %v877, %v797
  %v879 = vadd.f32 %v878, %v800
  %v880 = vadd.f32 %v879, %v805
  %v881 = vadd.f32 %v880, %v808
  %v882 = vadd.f32 %v881, %v813
  %v883 = vadd.f32 %v882, %v816
  %v884 = vrot.slane %v883, 4
  %v885 = vadd.f32 %v883, %v884
  %v886 = vrot.slane %v885, 2
  %v887 = vadd.f32 %v885, %v886
  %v888 = vrot.slane %v887, 1
  %v889 = vadd.f32 %v887, %v888
  %v890 = vmul.f32 %v565, %v565
  %v891 = vmul.f32 %v568, %v568
  %v892 = vmul.f32 %v573, %v573
  %v893 = vmul.f32 %v576, %v576
  %v894 = vmul.f32 %v581, %v581
  %v895 = vmul.f32 %v584, %v584
  %v896 = vmul.f32 %v589, %v589
  %v897 = vmul.f32 %v592, %v592
  %v898 = vmul.f32 %v597, %v597
  %v899 = vmul.f32 %v600, %v600
  %v900 = vmul.f32 %v605, %v605
  %v901 = vmul.f32 %v608, %v608
  %v902 = vmul.f32 %v613, %v613
  %v903 = vmul.f32 %v616, %v616
  %v904 = vmul.f32 %v621, %v621
  %v905 = vmul.f32 %v624, %v624
  %v906 = vmul.f32 %v629, %v629
  %v907 = vmul.f32 %v632, %v632
  %v908 = vmul.f32 %v637, %v637
  %v909 = vmul.f32 %v640, %v640
  %v910 = vmul.f32 %v645, %v645
  %v911 = vmul.f32 %v648, %v648
  %v912 = vmul.f32 %v653, %v653
  %v913 = vmul.f32 %v656, %v656
  %v914 = vmul.f32 %v661, %v661
  %v915 = vmul.f32 %v664, %v664
  %v916 = vmul.f32 %v669, %v669
  %v917 = vmul.f32 %v672, %v672
  %v918 = vmul.f32 %v677, %v677
  %v919 = vmul.f32 %v680, %v680
  %v920 = vmul.f32 %v685, %v685
  %v921 = vmul.f32 %v688, %v688
  %v922 = vmul.f32 %v693, %v693
  %v923 = vmul.f32 %v696, %v696
  %v924 = vmul.f32 %v701, %v701
  %v925 = vmul.f32 %v704, %v704
  %v926 = vmul.f32 %v709, %v709
  %v927 = vmul.f32 %v712, %v712
  %v928 = vmul.f32 %v717, %v717
  %v929 = vmul.f32 %v720, %v720
  %v930 = vmul.f32 %v725, %v725
  %v931 = vmul.f32 %v728, %v728
  %v932 = vmul.f32 %v733, %v733
  %v933 = vmul.f32 %v736, %v736
  %v934 = vmul.f32 %v741, %v741
  %v935 = vmul.f32 %v744, %v744
  %v936 = vmul.f32 %v749, %v749
  %v937 = vmul.f32 %v752, %v752
  %v938 = vmul.f32 %v757, %v757
  %v939 = vmul.f32 %v760, %v760
  %v940 = vmul.f32 %v765, %v765
  %v941 = vmul.f32 %v768, %v768
  %v942 = vmul.f32 %v773, %v773
  %v943 = vmul.f32 %v776, %v776
  %v944 = vmul.f32 %v781, %v781
  %v945 = vmul.f32 %v784, %v784
  %v946 = vmul.f32 %v789, %v789
  %v947 = vmul.f32 %v792, %v792
  %v948 = vmul.f32 %v797, %v797
  %v949 = vmul.f32 %v800, %v800
  %v950 = vmul.f32 %v805, %v805
  %v951 = vmul.f32 %v808, %v808
  %v952 = vmul.f32 %v813, %v813
  %v953 = vmul.f32 %v816, %v816
  %v954 = vadd.f32 %v890, %v891
  %v955 = vadd.f32 %v954, %v892
  %v956 = vadd.f32 %v955, %v893
  %v957 = vadd.f32 %v956, %v894
  %v958 = vadd.f32 %v957, %v895
  %v959 = vadd.f32 %v958, %v896
  %v960 = vadd.f32 %v959, %v897
  %v961 = vadd.f32 %v960, %v898
  %v962 = vadd.f32 %v961, %v899
  %v963 = vadd.f32 %v962, %v900
  %v964 = vadd.f32 %v963, %v901
  %v965 = vadd.f32 %v964, %v902
  %v966 = vadd.f32 %v965, %v903
  %v967 = vadd.f32 %v966, %v904
  %v968 = vadd.f32 %v967, %v905
  %v969 = vadd.f32 %v968, %v906
  %v970 = vadd.f32 %v969, %v907
  %v971 = vadd.f32 %v970, %v908
  %v972 = vadd.f32 %v971, %v909
  %v973 = vadd.f32 %v972, %v910
  %v974 = vadd.f32 %v973, %v911
  %v975 = vadd.f32 %v974, %v912
  %v976 = vadd.f32 %v975, %v913
  %v977 = vadd.f32 %v976, %v914
  %v978 = vadd.f32 %v977, %v915
  %v979 = vadd.f32 %v978, %v916
  %v980 = vadd.f32 %v979, %v917
  %v981 = vadd.f32 %v980, %v918
  %v982 = vadd.f32 %v981, %v919
  %v983 = vadd.f32 %v982, %v920
  %v984 = vadd.f32 %v983, %v921
  %v985 = vadd.f32 %v984, %v922
  %v986 = vadd.f32 %v985, %v923
  %v987 = vadd.f32 %v986, %v924
  %v988 = vadd.f32 %v987, %v925
  %v989 = vadd.f32 %v988, %v926
  %v990 = vadd.f32 %v989, %v927
  %v991 = vadd.f32 %v990, %v928
  %v992 = vadd.f32 %v991, %v929
  %v993 = vadd.f32 %v992, %v930
  %v994 = vadd.f32 %v993, %v931
  %v995 = vadd.f32 %v994, %v932
  %v996 = vadd.f32 %v995, %v933
  %v997 = vadd.f32 %v996, %v934
  %v998 = vadd.f32 %v997, %v935
  %v999 = vadd.f32 %v998, %v936
  %v1000 = vadd.f32 %v999, %v937
  %v1001 = vadd.f32 %v1000, %v938
  %v1002 = vadd.f32 %v1001, %v939
  %v1003 = vadd.f32 %v1002, %v940
  %v1004 = vadd.f32 %v1003, %v941
  %v1005 = vadd.f32 %v1004, %v942
  %v1006 = vadd.f32 %v1005, %v943
  %v1007 = vadd.f32 %v1006, %v944
  %v1008 = vadd.f32 %v1007, %v945
  %v1009 = vadd.f32 %v1008, %v946
  %v1010 = vadd.f32 %v1009, %v947
  %v1011 = vadd.f32 %v1010, %v948
  %v1012 = vadd.f32 %v1011, %v949
  %v1013 = vadd.f32 %v1012, %v950
  %v1014 = vadd.f32 %v1013, %v951
  %v1015 = vadd.f32 %v1014, %v952
  %v1016 = vadd.f32 %v1015, %v953
  %v1017 = vrot.slane %v1016, 4
  %v1018 = vadd.f32 %v1016, %v1017
  %v1019 = vrot.slane %v1018, 2
  %v1020 = vadd.f32 %v1018, %v1019
  %v1021 = vrot.slane %v1020, 1
  %v1022 = vadd.f32 %v1020, %v1021
  %v1023 = vmul.f32 %v889, 0.001953125
  %v1024 = vmul.f32 %v1022, 0.001953125
  %v1025 = vmul.f32 %v1023, %v1023
  %v1026 = vsub.f32 %v1024, %v1025
  %v1027 = vmax.f32 %v1026, 0.0
  %v1028 = vsub.f32 %v565, %v1023
  %v1029 = vsub.f32 %v568, %v1023
  %v1030 = vsub.f32 %v573, %v1023
  %v1031 = vsub.f32 %v576, %v1023
  %v1032 = vsub.f32 %v581, %v1023
  %v1033 = vsub.f32 %v584, %v1023
  %v1034 = vsub.f32 %v589, %v1023
  %v1035 = vsub.f32 %v592, %v1023
  %v1036 = vsub.f32 %v597, %v1023
  %v1037 = vsub.f32 %v600, %v1023
  %v1038 = vsub.f32 %v605, %v1023
  %v1039 = vsub.f32 %v608, %v1023
  %v1040 = vsub.f32 %v613, %v1023
  %v1041 = vsub.f32 %v616, %v1023
  %v1042 = vsub.f32 %v621, %v1023
  %v1043 = vsub.f32 %v624, %v1023
  %v1044 = vsub.f32 %v629, %v1023
  %v1045 = vsub.f32 %v632, %v1023
  %v1046 = vsub.f32 %v637, %v1023
  %v1047 = vsub.f32 %v640, %v1023
  %v1048 = vsub.f32 %v645, %v1023
  %v1049 = vsub.f32 %v648, %v1023
  %v1050 = vsub.f32 %v653, %v1023
  %v1051 = vsub.f32 %v656, %v1023
  %v1052 = vsub.f32 %v661, %v1023
  %v1053 = vsub.f32 %v664, %v1023
  %v1054 = vsub.f32 %v669, %v1023
  %v1055 = vsub.f32 %v672, %v1023
  %v1056 = vsub.f32 %v677, %v1023
  %v1057 = vsub.f32 %v680, %v1023
  %v1058 = vsub.f32 %v685, %v1023
  %v1059 = vsub.f32 %v688, %v1023
  %v1060 = vsub.f32 %v693, %v1023
  %v1061 = vsub.f32 %v696, %v1023
  %v1062 = vsub.f32 %v701, %v1023
  %v1063 = vsub.f32 %v704, %v1023
  %v1064 = vsub.f32 %v709, %v1023
  %v1065 = vsub.f32 %v712, %v1023
  %v1066 = vsub.f32 %v717, %v1023
  %v1067 = vsub.f32 %v720, %v1023
  %v1068 = vsub.f32 %v725, %v1023
  %v1069 = vsub.f32 %v728, %v1023
  %v1070 = vsub.f32 %v733, %v1023
  %v1071 = vsub.f32 %v736, %v1023
  %v1072 = vsub.f32 %v741, %v1023
  %v1073 = vsub.f32 %v744, %v1023
  %v1074 = vsub.f32 %v749, %v1023
  %v1075 = vsub.f32 %v752, %v1023
  %v1076 = vsub.f32 %v757, %v1023
  %v1077 = vsub.f32 %v760, %v1023
  %v1078 = vsub.f32 %v765, %v1023
  %v1079 = vsub.f32 %v768, %v1023
  %v1080 = vsub.f32 %v773, %v1023
  %v1081 = vsub.f32 %v776, %v1023
  %v1082 = vsub.f32 %v781, %v1023
  %v1083 = vsub.f32 %v784, %v1023
  %v1084 = vsub.f32 %v789, %v1023
  %v1085 = vsub.f32 %v792, %v1023
  %v1086 = vsub.f32 %v797, %v1023
  %v1087 = vsub.f32 %v800, %v1023
  %v1088 = vsub.f32 %v805, %v1023
  %v1089 = vsub.f32 %v808, %v1023
  %v1090 = vsub.f32 %v813, %v1023
  %v1091 = vsub.f32 %v816, %v1023
  %v1092 = vadd.f32 %v1027, 1e-05
  %v1093 = vrsqrt.pop %v1092
  %v1094 = vmul.f32 %v1028, %v1093
  %v1095 = vmul.f32 %v1029, %v1093
  %v1096 = vmul.f32 %v1030, %v1093
  %v1097 = vmul.f32 %v1031, %v1093
  %v1098 = vmul.f32 %v1032, %v1093
  %v1099 = vmul.f32 %v1033, %v1093
  %v1100 = vmul.f32 %v1034, %v1093
  %v1101 = vmul.f32 %v1035, %v1093
  %v1102 = vmul.f32 %v1036, %v1093
  %v1103 = vmul.f32 %v1037, %v1093
  %v1104 = vmul.f32 %v1038, %v1093
  %v1105 = vmul.f32 %v1039, %v1093
  %v1106 = vmul.f32 %v1040, %v1093
  %v1107 = vmul.f32 %v1041, %v1093
  %v1108 = vmul.f32 %v1042, %v1093
  %v1109 = vmul.f32 %v1043, %v1093
  %v1110 = vmul.f32 %v1044, %v1093
  %v1111 = vmul.f32 %v1045, %v1093
  %v1112 = vmul.f32 %v1046, %v1093
  %v1113 = vmul.f32 %v1047, %v1093
  %v1114 = vmul.f32 %v1048, %v1093
  %v1115 = vmul.f32 %v1049, %v1093
  %v1116 = vmul.f32 %v1050, %v1093
  %v1117 = vmul.f32 %v1051, %v1093
  %v1118 = vmul.f32 %v1052, %v1093
  %v1119 = vmul.f32 %v1053, %v1093
  %v1120 = vmul.f32 %v1054, %v1093
  %v1121 = vmul.f32 %v1055, %v1093
  %v1122 = vmul.f32 %v1056, %v1093
  %v1123 = vmul.f32 %v1057, %v1093
  %v1124 = vmul.f32 %v1058, %v1093
  %v1125 = vmul.f32 %v1059, %v1093
  %v1126 = vmul.f32 %v1060, %v1093
  %v1127 = vmul.f32 %v1061, %v1093
  %v1128 = vmul.f32 %v1062, %v1093
  %v1129 = vmul.f32 %v1063, %v1093
  %v1130 = vmul.f32 %v1064, %v1093
  %v1131 = vmul.f32 %v1065, %v1093
  %v1132 = vmul.f32 %v1066, %v1093
  %v1133 = vmul.f32 %v1067, %v1093
  %v1134 = vmul.f32 %v1068, %v1093
  %v1135 = vmul.f32 %v1069, %v1093
  %v1136 = vmul.f32 %v1070, %v1093
  %v1137 = vmul.f32 %v1071, %v1093
  %v1138 = vmul.f32 %v1072, %v1093
  %v1139 = vmul.f32 %v1073, %v1093
  %v1140 = vmul.f32 %v1074, %v1093
  %v1141 = vmul.f32 %v1075, %v1093
  %v1142 = vmul.f32 %v1076, %v1093
  %v1143 = vmul.f32 %v1077, %v1093
  %v1144 = vmul.f32 %v1078, %v1093
  %v1145 = vmul.f32 %v1079, %v1093
  %v1146 = vmul.f32 %v1080, %v1093
  %v1147 = vmul.f32 %v1081, %v1093
  %v1148 = vmul.f32 %v1082, %v1093
  %v1149 = vmul.f32 %v1083, %v1093
  %v1150 = vmul.f32 %v1084, %v1093
  %v1151 = vmul.f32 %v1085, %v1093
  %v1152 = vmul.f32 %v1086, %v1093
  %v1153 = vmul.f32 %v1087, %v1093
  %v1154 = vmul.f32 %v1088, %v1093
  %v1155 = vmul.f32 %v1089, %v1093
  %v1156 = vmul.f32 %v1090, %v1093
  %v1157 = vmul.f32 %v1091, %v1093
  %v1159 = vlaneseq
  %v1160 = vshrl.u32 %v1159, 7
  %v1161 = vsub.s32 0, %v1160
  %v1162 = vrot.slane %v819, %v1161
  %v1164 = vmul.f32 %v1094, %v1162
  %v1165 = vmul.f32 %v1095, %v1162
  %v1166 = vmul.f32 %v1096, %v1162
  %v1167 = vmul.f32 %v1097, %v1162
  %v1168 = vmul.f32 %v1098, %v1162
  %v1169 = vmul.f32 %v1099, %v1162
  %v1170 = vmul.f32 %v1100, %v1162
  %v1171 = vmul.f32 %v1101, %v1162
  %v1172 = vmul.f32 %v1102, %v1162
  %v1173 = vmul.f32 %v1103, %v1162
  %v1174 = vmul.f32 %v1104, %v1162
  %v1175 = vmul.f32 %v1105, %v1162
  %v1176 = vmul.f32 %v1106, %v1162
  %v1177 = vmul.f32 %v1107, %v1162
  %v1178 = vmul.f32 %v1108, %v1162
  %v1179 = vmul.f32 %v1109, %v1162
  %v1180 = vmul.f32 %v1110, %v1162
  %v1181 = vmul.f32 %v1111, %v1162
  %v1182 = vmul.f32 %v1112, %v1162
  %v1183 = vmul.f32 %v1113, %v1162
  %v1184 = vmul.f32 %v1114, %v1162
  %v1185 = vmul.f32 %v1115, %v1162
  %v1186 = vmul.f32 %v1116, %v1162
  %v1187 = vmul.f32 %v1117, %v1162
  %v1188 = vmul.f32 %v1118, %v1162
  %v1189 = vmul.f32 %v1119, %v1162
  %v1190 = vmul.f32 %v1120, %v1162
  %v1191 = vmul.f32 %v1121, %v1162
  %v1192 = vmul.f32 %v1122, %v1162
  %v1193 = vmul.f32 %v1123, %v1162
  %v1194 = vmul.f32 %v1124, %v1162
  %v1195 = vmul.f32 %v1125, %v1162
  %v1196 = vmul.f32 %v1126, %v1162
  %v1197 = vmul.f32 %v1127, %v1162
  %v1198 = vmul.f32 %v1128, %v1162
  %v1199 = vmul.f32 %v1129, %v1162
  %v1200 = vmul.f32 %v1130, %v1162
  %v1201 = vmul.f32 %v1131, %v1162
  %v1202 = vmul.f32 %v1132, %v1162
  %v1203 = vmul.f32 %v1133, %v1162
  %v1204 = vmul.f32 %v1134, %v1162
  %v1205 = vmul.f32 %v1135, %v1162
  %v1206 = vmul.f32 %v1136, %v1162
  %v1207 = vmul.f32 %v1137, %v1162
  %v1208 = vmul.f32 %v1138, %v1162
  %v1209 = vmul.f32 %v1139, %v1162
  %v1210 = vmul.f32 %v1140, %v1162
  %v1211 = vmul.f32 %v1141, %v1162
  %v1212 = vmul.f32 %v1142, %v1162
  %v1213 = vmul.f32 %v1143, %v1162
  %v1214 = vmul.f32 %v1144, %v1162
  %v1215 = vmul.f32 %v1145, %v1162
  %v1216 = vmul.f32 %v1146, %v1162
  %v1217 = vmul.f32 %v1147, %v1162
  %v1218 = vmul.f32 %v1148, %v1162
  %v1219 = vmul.f32 %v1149, %v1162
  %v1220 = vmul.f32 %v1150, %v1162
  %v1221 = vmul.f32 %v1151, %v1162
  %v1222 = vmul.f32 %v1152, %v1162
  %v1223 = vmul.f32 %v1153, %v1162
  %v1224 = vmul.f32 %v1154, %v1162
  %v1225 = vmul.f32 %v1155, %v1162
  %v1226 = vmul.f32 %v1156, %v1162
  %v1227 = vmul.f32 %v1157, %v1162
  %v1229 = vlaneseq
  %v1230 = vshrl.u32 %v1229, 7
  %v1231 = vsub.s32 0, %v1230
  %v1232 = vrot.slane %v820, %v1231
  %v1234 = vadd.f32 %v1164, %v1232
  %v1235 = vadd.f32 %v1165, %v1232
  %v1236 = vadd.f32 %v1166, %v1232
  %v1237 = vadd.f32 %v1167, %v1232
  %v1238 = vadd.f32 %v1168, %v1232
  %v1239 = vadd.f32 %v1169, %v1232
  %v1240 = vadd.f32 %v1170, %v1232
  %v1241 = vadd.f32 %v1171, %v1232
  %v1242 = vadd.f32 %v1172, %v1232
  %v1243 = vadd.f32 %v1173, %v1232
  %v1244 = vadd.f32 %v1174, %v1232
  %v1245 = vadd.f32 %v1175, %v1232
  %v1246 = vadd.f32 %v1176, %v1232
  %v1247 = vadd.f32 %v1177, %v1232
  %v1248 = vadd.f32 %v1178, %v1232
  %v1249 = vadd.f32 %v1179, %v1232
  %v1250 = vadd.f32 %v1180, %v1232
  %v1251 = vadd.f32 %v1181, %v1232
  %v1252 = vadd.f32 %v1182, %v1232
  %v1253 = vadd.f32 %v1183, %v1232
  %v1254 = vadd.f32 %v1184, %v1232
  %v1255 = vadd.f32 %v1185, %v1232
  %v1256 = vadd.f32 %v1186, %v1232
  %v1257 = vadd.f32 %v1187, %v1232
  %v1258 = vadd.f32 %v1188, %v1232
  %v1259 = vadd.f32 %v1189, %v1232
  %v1260 = vadd.f32 %v1190, %v1232
  %v1261 = vadd.f32 %v1191, %v1232
  %v1262 = vadd.f32 %v1192, %v1232
  %v1263 = vadd.f32 %v1193, %v1232
  %v1264 = vadd.f32 %v1194, %v1232
  %v1265 = vadd.f32 %v1195, %v1232
  %v1266 = vadd.f32 %v1196, %v1232
  %v1267 = vadd.f32 %v1197, %v1232
  %v1268 = vadd.f32 %v1198, %v1232
  %v1269 = vadd.f32 %v1199, %v1232
  %v1270 = vadd.f32 %v1200, %v1232
  %v1271 = vadd.f32 %v1201, %v1232
  %v1272 = vadd.f32 %v1202, %v1232
  %v1273 = vadd.f32 %v1203, %v1232
  %v1274 = vadd.f32 %v1204, %v1232
  %v1275 = vadd.f32 %v1205, %v1232
  %v1276 = vadd.f32 %v1206, %v1232
  %v1277 = vadd.f32 %v1207, %v1232
  %v1278 = vadd.f32 %v1208, %v1232
  %v1279 = vadd.f32 %v1209, %v1232
  %v1280 = vadd.f32 %v1210, %v1232
  %v1281 = vadd.f32 %v1211, %v1232
  %v1282 = vadd.f32 %v1212, %v1232
  %v1283 = vadd.f32 %v1213, %v1232
  %v1284 = vadd.f32 %v1214, %v1232
  %v1285 = vadd.f32 %v1215, %v1232
  %v1286 = vadd.f32 %v1216, %v1232
  %v1287 = vadd.f32 %v1217, %v1232
  %v1288 = vadd.f32 %v1218, %v1232
  %v1289 = vadd.f32 %v1219, %v1232
  %v1290 = vadd.f32 %v1220, %v1232
  %v1291 = vadd.f32 %v1221, %v1232
  %v1292 = vadd.f32 %v1222, %v1232
  %v1293 = vadd.f32 %v1223, %v1232
  %v1294 = vadd.f32 %v1224, %v1232
  %v1295 = vadd.f32 %v1225, %v1232
  %v1296 = vadd.f32 %v1226, %v1232
  %v1297 = vadd.f32 %v1227, %v1232
  %v1298 = vmax.f32 %v1234, 0.0
  %v1299 = vmax.f32 %v1235, 0.0
  %v1300 = vmax.f32 %v1236, 0.0
  %v1301 = vmax.f32 %v1237, 0.0
  %v1302 = vmax.f32 %v1238, 0.0
  %v1303 = vmax.f32 %v1239, 0.0
  %v1304 = vmax.f32 %v1240, 0.0
  %v1305 = vmax.f32 %v1241, 0.0
  %v1306 = vmax.f32 %v1242, 0.0
  %v1307 = vmax.f32 %v1243, 0.0
  %v1308 = vmax.f32 %v1244, 0.0
  %v1309 = vmax.f32 %v1245, 0.0
  %v1310 = vmax.f32 %v1246, 0.0
  %v1311 = vmax.f32 %v1247, 0.0
  %v1312 = vmax.f32 %v1248, 0.0
  %v1313 = vmax.f32 %v1249, 0.0
  %v1314 = vmax.f32 %v1250, 0.0
  %v1315 = vmax.f32 %v1251, 0.0
  %v1316 = vmax.f32 %v1252, 0.0
  %v1317 = vmax.f32 %v1253, 0.0
  %v1318 = vmax.f32 %v1254, 0.0
  %v1319 = vmax.f32 %v1255, 0.0
  %v1320 = vmax.f32 %v1256, 0.0
  %v1321 = vmax.f32 %v1257, 0.0
  %v1322 = vmax.f32 %v1258, 0.0
  %v1323 = vmax.f32 %v1259, 0.0
  %v1324 = vmax.f32 %v1260, 0.0
  %v1325 = vmax.f32 %v1261, 0.0
  %v1326 = vmax.f32 %v1262, 0.0
  %v1327 = vmax.f32 %v1263, 0.0
  %v1328 = vmax.f32 %v1264, 0.0
  %v1329 = vmax.f32 %v1265, 0.0
  %v1330 = vmax.f32 %v1266, 0.0
  %v1331 = vmax.f32 %v1267, 0.0
  %v1332 = vmax.f32 %v1268, 0.0
  %v1333 = vmax.f32 %v1269, 0.0
  %v1334 = vmax.f32 %v1270, 0.0
  %v1335 = vmax.f32 %v1271, 0.0
  %v1336 = vmax.f32 %v1272, 0.0
  %v1337 = vmax.f32 %v1273, 0.0
  %v1338 = vmax.f32 %v1274, 0.0
  %v1339 = vmax.f32 %v1275, 0.0
  %v1340 = vmax.f32 %v1276, 0.0
  %v1341 = vmax.f32 %v1277, 0.0
  %v1342 = vmax.f32 %v1278, 0.0
  %v1343 = vmax.f32 %v1279, 0.0
  %v1344 = vmax.f32 %v1280, 0.0
  %v1345 = vmax.f32 %v1281, 0.0
  %v1346 = vmax.f32 %v1282, 0.0
  %v1347 = vmax.f32 %v1283, 0.0
  %v1348 = vmax.f32 %v1284, 0.0
  %v1349 = vmax.f32 %v1285, 0.0
  %v1350 = vmax.f32 %v1286, 0.0
  %v1351 = vmax.f32 %v1287, 0.0
  %v1352 = vmax.f32 %v1288, 0.0
  %v1353 = vmax.f32 %v1289, 0.0
  %v1354 = vmax.f32 %v1290, 0.0
  %v1355 = vmax.f32 %v1291, 0.0
  %v1356 = vmax.f32 %v1292, 0.0
  %v1357 = vmax.f32 %v1293, 0.0
  %v1358 = vmax.f32 %v1294, 0.0
  %v1359 = vmax.f32 %v1295, 0.0
  %v1360 = vmax.f32 %v1296, 0.0
  %v1361 = vmax.f32 %v1297, 0.0
  %1362 = vst [vmem:[%s4] sm:$0xff] %v1298
  %1363 = vst [vmem:[%s4 + $0x8] sm:$0xff] %v1299
  %1364 = vst [vmem:[%s4 + $0x10] sm:$0xff] %v1300
  %1365 = vst [vmem:[%s4 + $0x18] sm:$0xff] %v1301
  %1366 = vst [vmem:[%s4 + $0x20] sm:$0xff] %v1302
  %1367 = vst [vmem:[%s4 + $0x28] sm:$0xff] %v1303
  %1368 = vst [vmem:[%s4 + $0x30] sm:$0xff] %v1304
  %1369 = vst [vmem:[%s4 + $0x38] sm:$0xff] %v1305
  %1370 = vst [vmem:[%s4 + $0x40] sm:$0xff] %v1306
  %1371 = vst [vmem:[%s4 + $0x48] sm:$0xff] %v1307
  %1372 = vst [vmem:[%s4 + $0x50] sm:$0xff] %v1308
  %1373 = vst [vmem:[%s4 + $0x58] sm:$0xff] %v1309
  %1374 = vst [vmem:[%s4 + $0x60] sm:$0xff] %v1310
  %1375 = vst [vmem:[%s4 + $0x68] sm:$0xff] %v1311
  %1376 = vst [vmem:[%s4 + $0x70] sm:$0xff] %v1312
  %1377 = vst [vmem:[%s4 + $0x78] sm:$0xff] %v1313
  %1378 = vst [vmem:[%s4 + $0x80] sm:$0xff] %v1314
  %1379 = vst [vmem:[%s4 + $0x88] sm:$0xff] %v1315
  %1380 = vst [vmem:[%s4 + $0x90] sm:$0xff] %v1316
  %1381 = vst [vmem:[%s4 + $0x98] sm:$0xff] %v1317
  %1382 = vst [vmem:[%s4 + $0xa0] sm:$0xff] %v1318
  %1383 = vst [vmem:[%s4 + $0xa8] sm:$0xff] %v1319
  %1384 = vst [vmem:[%s4 + $0xb0] sm:$0xff] %v1320
  %1385 = vst [vmem:[%s4 + $0xb8] sm:$0xff] %v1321
  %1386 = vst [vmem:[%s4 + $0xc0] sm:$0xff] %v1322
  %1387 = vst [vmem:[%s4 + $0xc8] sm:$0xff] %v1323
  %1388 = vst [vmem:[%s4 + $0xd0] sm:$0xff] %v1324
  %1389 = vst [vmem:[%s4 + $0xd8] sm:$0xff] %v1325
  %1390 = vst [vmem:[%s4 + $0xe0] sm:$0xff] %v1326
  %1391 = vst [vmem:[%s4 + $0xe8] sm:$0xff] %v1327
  %1392 = vst [vmem:[%s4 + $0xf0] sm:$0xff] %v1328
  %1393 = vst [vmem:[%s4 + $0xf8] sm:$0xff] %v1329
  %1394 = vst [vmem:[%s4 + $0x100] sm:$0xff] %v1330
  %1395 = vst [vmem:[%s4 + $0x108] sm:$0xff] %v1331
  %1396 = vst [vmem:[%s4 + $0x110] sm:$0xff] %v1332
  %1397 = vst [vmem:[%s4 + $0x118] sm:$0xff] %v1333
  %1398 = vst [vmem:[%s4 + $0x120] sm:$0xff] %v1334
  %1399 = vst [vmem:[%s4 + $0x128] sm:$0xff] %v1335
  %1400 = vst [vmem:[%s4 + $0x130] sm:$0xff] %v1336
  %1401 = vst [vmem:[%s4 + $0x138] sm:$0xff] %v1337
  %1402 = vst [vmem:[%s4 + $0x140] sm:$0xff] %v1338
  %1403 = vst [vmem:[%s4 + $0x148] sm:$0xff] %v1339
  %1404 = vst [vmem:[%s4 + $0x150] sm:$0xff] %v1340
  %1405 = vst [vmem:[%s4 + $0x158] sm:$0xff] %v1341
  %1406 = vst [vmem:[%s4 + $0x160] sm:$0xff] %v1342
  %1407 = vst [vmem:[%s4 + $0x168] sm:$0xff] %v1343
  %1408 = vst [vmem:[%s4 + $0x170] sm:$0xff] %v1344
  %1409 = vst [vmem:[%s4 + $0x178] sm:$0xff] %v1345
  %1410 = vst [vmem:[%s4 + $0x180] sm:$0xff] %v1346
  %1411 = vst [vmem:[%s4 + $0x188] sm:$0xff] %v1347
  %1412 = vst [vmem:[%s4 + $0x190] sm:$0xff] %v1348
  %1413 = vst [vmem:[%s4 + $0x198] sm:$0xff] %v1349
  %1414 = vst [vmem:[%s4 + $0x1a0] sm:$0xff] %v1350
  %1415 = vst [vmem:[%s4 + $0x1a8] sm:$0xff] %v1351
  %1416 = vst [vmem:[%s4 + $0x1b0] sm:$0xff] %v1352
  %1417 = vst [vmem:[%s4 + $0x1b8] sm:$0xff] %v1353
  %1418 = vst [vmem:[%s4 + $0x1c0] sm:$0xff] %v1354
  %1419 = vst [vmem:[%s4 + $0x1c8] sm:$0xff] %v1355
  %1420 = vst [vmem:[%s4 + $0x1d0] sm:$0xff] %v1356
  %1421 = vst [vmem:[%s4 + $0x1d8] sm:$0xff] %v1357
  %1422 = vst [vmem:[%s4 + $0x1e0] sm:$0xff] %v1358
  %1423 = vst [vmem:[%s4 + $0x1e8] sm:$0xff] %v1359
  %1424 = vst [vmem:[%s4 + $0x1f0] sm:$0xff] %v1360
  %1425 = vst [vmem:[%s4 + $0x1f8] sm:$0xff] %v1361
  // Predicated region
  $region18: #{lupnet_forward.10} parent=0 // pred_check
    _
  $region19: #{lupnet_forward.10} parent=0 // pred_check_branch
    %1427 = sbr.rel (0) target = $region21
  $region20: #{lupnet_forward.10} parent=0 // pred_region
    _
  $region21: #{lupnet_forward.10} parent=0 // pred_fallthru
    _
  // Predicated region
  $region22: #{lupnet_forward.10} parent=0 // pred_check
    _
  $region23: #{lupnet_forward.10} parent=0 // pred_check_branch
    %1429 = sbr.rel (0) target = $region25
  $region24: #{lupnet_forward.10} parent=0 // pred_region
    _
  $region25: #{lupnet_forward.10} parent=0 // pred_fallthru
    _

// kernel: lupnet_forward.11
$region0: #{lupnet_forward.11}
  #allocation0 [shape = 'u32[]', space=smem, size = 0x4, offset = 0x4, fixed_abs, tag = 'smem constant byte address 0x4 - core index']
  #allocation1 [shape = 'u32[144,128]{1,0:T(1,128)}', space=vmem, size = 0x12000, scoped, tag = 'internal scratch']
  %s0 = inlined_call_operand.vmem [shape: bf16[128,1152], index: 0, kind: input, shape index: {}]
  %s1 = inlined_call_operand.vmem [shape: bf16[1152,128], index: 1, kind: input, shape index: {}]
  %s2 = inlined_call_operand.vmem [shape: f32[1,128], index: 2, kind: input, shape index: {}]
  %s3 = inlined_call_operand.vmem [shape: f32[1,128], index: 3, kind: input, shape index: {}]
  %s4 = inlined_call_operand.vmem [shape: f32[128,128], index: 4, kind: output, shape index: {}]
  %s5 = sld [smem:[#allocation0]]
  $region26: #{lupnet_forward.11} parent=0
    _
  %s7 = ssub.s32 1, %s5
  %s8 = scalar_select 0, %s7, %s5
  // Predicated region
  $region2: #{lupnet_forward.11} parent=0 // pred_check
    _
  $region3: #{lupnet_forward.11} parent=0 // pred_check_branch
    %10 = sbr.rel (0) target = $region5
  $region4: #{lupnet_forward.11} parent=0 // pred_region
    _
  $region5: #{lupnet_forward.11} parent=0 // pred_fallthru
    _
  // Predicated region
  $region6: #{lupnet_forward.11} parent=0 // pred_check
    _
  $region7: #{lupnet_forward.11} parent=0 // pred_check_branch
    %12 = sbr.rel (0) target = $region9
  $region8: #{lupnet_forward.11} parent=0 // pred_region
    _
  $region9: #{lupnet_forward.11} parent=0 // pred_fallthru
    _
  // Predicated region
  $region10: #{lupnet_forward.11} parent=0 // pred_check
    _
  $region11: #{lupnet_forward.11} parent=0 // pred_check_branch
    %14 = sbr.rel (0) target = $region13
  $region12: #{lupnet_forward.11} parent=0 // pred_region
    _
  $region13: #{lupnet_forward.11} parent=0 // pred_fallthru
    _
  // Predicated region
  $region14: #{lupnet_forward.11} parent=0 // pred_check
    _
  $region15: #{lupnet_forward.11} parent=0 // pred_check_branch
    %16 = sbr.rel (0) target = $region17
  $region16: #{lupnet_forward.11} parent=0 // pred_region
    _
  $region17: #{lupnet_forward.11} parent=0 // pred_fallthru
    _
  %v18 = vld [vmem:[%s0] sm:$0xff]
  %v19 = vld [vmem:[%s0 + $0x8] sm:$0xff]
  %v20 = vld [vmem:[%s0 + $0x10] sm:$0xff]
  %v21 = vld [vmem:[%s0 + $0x18] sm:$0xff]
  %v22 = vld [vmem:[%s0 + $0x20] sm:$0xf]
  %v23 = vld [vmem:[%s0 + $0x24] sm:$0xff]
  %v24 = vld [vmem:[%s0 + $0x2c] sm:$0xff]
  %v25 = vld [vmem:[%s0 + $0x34] sm:$0xff]
  %v26 = vld [vmem:[%s0 + $0x3c] sm:$0xff]
  %v27 = vld [vmem:[%s0 + $0x44] sm:$0xf]
  %v28 = vld [vmem:[%s0 + $0x48] sm:$0xff]
  %v29 = vld [vmem:[%s0 + $0x50] sm:$0xff]
  %v30 = vld [vmem:[%s0 + $0x58] sm:$0xff]
  %v31 = vld [vmem:[%s0 + $0x60] sm:$0xff]
  %v32 = vld [vmem:[%s0 + $0x68] sm:$0xf]
  %v33 = vld [vmem:[%s0 + $0x6c] sm:$0xff]
  %v34 = vld [vmem:[%s0 + $0x74] sm:$0xff]
  %v35 = vld [vmem:[%s0 + $0x7c] sm:$0xff]
  %v36 = vld [vmem:[%s0 + $0x84] sm:$0xff]
  %v37 = vld [vmem:[%s0 + $0x8c] sm:$0xf]
  %v38 = vld [vmem:[%s0 + $0x90] sm:$0xff]
  %v39 = vld [vmem:[%s0 + $0x98] sm:$0xff]
  %v40 = vld [vmem:[%s0 + $0xa0] sm:$0xff]
  %v41 = vld [vmem:[%s0 + $0xa8] sm:$0xff]
  %v42 = vld [vmem:[%s0 + $0xb0] sm:$0xf]
  %v43 = vld [vmem:[%s0 + $0xb4] sm:$0xff]
  %v44 = vld [vmem:[%s0 + $0xbc] sm:$0xff]
  %v45 = vld [vmem:[%s0 + $0xc4] sm:$0xff]
  %v46 = vld [vmem:[%s0 + $0xcc] sm:$0xff]
  %v47 = vld [vmem:[%s0 + $0xd4] sm:$0xf]
  %v48 = vld [vmem:[%s0 + $0xd8] sm:$0xff]
  %v49 = vld [vmem:[%s0 + $0xe0] sm:$0xff]
  %v50 = vld [vmem:[%s0 + $0xe8] sm:$0xff]
  %v51 = vld [vmem:[%s0 + $0xf0] sm:$0xff]
  %v52 = vld [vmem:[%s0 + $0xf8] sm:$0xf]
  %v53 = vld [vmem:[%s0 + $0xfc] sm:$0xff]
  %v54 = vld [vmem:[%s0 + $0x104] sm:$0xff]
  %v55 = vld [vmem:[%s0 + $0x10c] sm:$0xff]
  %v56 = vld [vmem:[%s0 + $0x114] sm:$0xff]
  %v57 = vld [vmem:[%s0 + $0x11c] sm:$0xf]
  %v58 = vld [vmem:[%s0 + $0x120] sm:$0xff]
  %v59 = vld [vmem:[%s0 + $0x128] sm:$0xff]
  %v60 = vld [vmem:[%s0 + $0x130] sm:$0xff]
  %v61 = vld [vmem:[%s0 + $0x138] sm:$0xff]
  %v62 = vld [vmem:[%s0 + $0x140] sm:$0xf]
  %v63 = vld [vmem:[%s0 + $0x144] sm:$0xff]
  %v64 = vld [vmem:[%s0 + $0x14c] sm:$0xff]
  %v65 = vld [vmem:[%s0 + $0x154] sm:$0xff]
  %v66 = vld [vmem:[%s0 + $0x15c] sm:$0xff]
  %v67 = vld [vmem:[%s0 + $0x164] sm:$0xf]
  %v68 = vld [vmem:[%s0 + $0x168] sm:$0xff]
  %v69 = vld [vmem:[%s0 + $0x170] sm:$0xff]
  %v70 = vld [vmem:[%s0 + $0x178] sm:$0xff]
  %v71 = vld [vmem:[%s0 + $0x180] sm:$0xff]
  %v72 = vld [vmem:[%s0 + $0x188] sm:$0xf]
  %v73 = vld [vmem:[%s0 + $0x18c] sm:$0xff]
  %v74 = vld [vmem:[%s0 + $0x194] sm:$0xff]
  %v75 = vld [vmem:[%s0 + $0x19c] sm:$0xff]
  %v76 = vld [vmem:[%s0 + $0x1a4] sm:$0xff]
  %v77 = vld [vmem:[%s0 + $0x1ac] sm:$0xf]
  %v78 = vld [vmem:[%s0 + $0x1b0] sm:$0xff]
  %v79 = vld [vmem:[%s0 + $0x1b8] sm:$0xff]
  %v80 = vld [vmem:[%s0 + $0x1c0] sm:$0xff]
  %v81 = vld [vmem:[%s0 + $0x1c8] sm:$0xff]
  %v82 = vld [vmem:[%s0 + $0x1d0] sm:$0xf]
  %v83 = vld [vmem:[%s0 + $0x1d4] sm:$0xff]
  %v84 = vld [vmem:[%s0 + $0x1dc] sm:$0xff]
  %v85 = vld [vmem:[%s0 + $0x1e4] sm:$0xff]
  %v86 = vld [vmem:[%s0 + $0x1ec] sm:$0xff]
  %v87 = vld [vmem:[%s0 + $0x1f4] sm:$0xf]
  %v88 = vld [vmem:[%s0 + $0x1f8] sm:$0xff]
  %v89 = vld [vmem:[%s0 + $0x200] sm:$0xff]
  %v90 = vld [vmem:[%s0 + $0x208] sm:$0xff]
  %v91 = vld [vmem:[%s0 + $0x210] sm:$0xff]
  %v92 = vld [vmem:[%s0 + $0x218] sm:$0xf]
  %v93 = vld [vmem:[%s0 + $0x21c] sm:$0xff]
  %v94 = vld [vmem:[%s0 + $0x224] sm:$0xff]
  %v95 = vld [vmem:[%s0 + $0x22c] sm:$0xff]
  %v96 = vld [vmem:[%s0 + $0x234] sm:$0xff]
  %v97 = vld [vmem:[%s0 + $0x23c] sm:$0xf]
  %v98 = vld [vmem:[%s1] sm:$0xf]
  %v99 = vld [vmem:[%s1 + $0x4] sm:$0xf]
  %v100 = vld [vmem:[%s1 + $0x8] sm:$0xf]
  %v101 = vld [vmem:[%s1 + $0xc] sm:$0xf]
  %v102 = vld [vmem:[%s1 + $0x10] sm:$0xf]
  %v103 = vld [vmem:[%s1 + $0x14] sm:$0xf]
  %v104 = vld [vmem:[%s1 + $0x18] sm:$0xf]
  %v105 = vld [vmem:[%s1 + $0x1c] sm:$0xf]
  %v106 = vld [vmem:[%s1 + $0x20] sm:$0xf]
  %v107 = vld [vmem:[%s1 + $0x24] sm:$0xf]
  %v108 = vld [vmem:[%s1 + $0x28] sm:$0xf]
  %v109 = vld [vmem:[%s1 + $0x2c] sm:$0xf]
  %v110 = vld [vmem:[%s1 + $0x30] sm:$0xf]
  %v111 = vld [vmem:[%s1 + $0x34] sm:$0xf]
  %v112 = vld [vmem:[%s1 + $0x38] sm:$0xf]
  %v113 = vld [vmem:[%s1 + $0x3c] sm:$0xf]
  %v114 = vld [vmem:[%s1 + $0x40] sm:$0xf]
  %v115 = vld [vmem:[%s1 + $0x44] sm:$0xf]
  %v116 = vld [vmem:[%s1 + $0x48] sm:$0xf]
  %v117 = vld [vmem:[%s1 + $0x4c] sm:$0xf]
  %v118 = vld [vmem:[%s1 + $0x50] sm:$0xf]
  %v119 = vld [vmem:[%s1 + $0x54] sm:$0xf]
  %v120 = vld [vmem:[%s1 + $0x58] sm:$0xf]
  %v121 = vld [vmem:[%s1 + $0x5c] sm:$0xf]
  %v122 = vld [vmem:[%s1 + $0x60] sm:$0xf]
  %v123 = vld [vmem:[%s1 + $0x64] sm:$0xf]
  %v124 = vld [vmem:[%s1 + $0x68] sm:$0xf]
  %v125 = vld [vmem:[%s1 + $0x6c] sm:$0xf]
  %v126 = vld [vmem:[%s1 + $0x70] sm:$0xf]
  %v127 = vld [vmem:[%s1 + $0x74] sm:$0xf]
  %v128 = vld [vmem:[%s1 + $0x78] sm:$0xf]
  %v129 = vld [vmem:[%s1 + $0x7c] sm:$0xf]
  %v130 = vld [vmem:[%s1 + $0x80] sm:$0xf]
  %v131 = vld [vmem:[%s1 + $0x84] sm:$0xf]
  %v132 = vld [vmem:[%s1 + $0x88] sm:$0xf]
  %v133 = vld [vmem:[%s1 + $0x8c] sm:$0xf]
  %v134 = vld [vmem:[%s1 + $0x90] sm:$0xf]
  %v135 = vld [vmem:[%s1 + $0x94] sm:$0xf]
  %v136 = vld [vmem:[%s1 + $0x98] sm:$0xf]
  %v137 = vld [vmem:[%s1 + $0x9c] sm:$0xf]
  %v138 = vld [vmem:[%s1 + $0xa0] sm:$0xf]
  %v139 = vld [vmem:[%s1 + $0xa4] sm:$0xf]
  %v140 = vld [vmem:[%s1 + $0xa8] sm:$0xf]
  %v141 = vld [vmem:[%s1 + $0xac] sm:$0xf]
  %v142 = vld [vmem:[%s1 + $0xb0] sm:$0xf]
  %v143 = vld [vmem:[%s1 + $0xb4] sm:$0xf]
  %v144 = vld [vmem:[%s1 + $0xb8] sm:$0xf]
  %v145 = vld [vmem:[%s1 + $0xbc] sm:$0xf]
  %v146 = vld [vmem:[%s1 + $0xc0] sm:$0xf]
  %v147 = vld [vmem:[%s1 + $0xc4] sm:$0xf]
  %v148 = vld [vmem:[%s1 + $0xc8] sm:$0xf]
  %v149 = vld [vmem:[%s1 + $0xcc] sm:$0xf]
  %v150 = vld [vmem:[%s1 + $0xd0] sm:$0xf]
  %v151 = vld [vmem:[%s1 + $0xd4] sm:$0xf]
  %v152 = vld [vmem:[%s1 + $0xd8] sm:$0xf]
  %v153 = vld [vmem:[%s1 + $0xdc] sm:$0xf]
  %v154 = vld [vmem:[%s1 + $0xe0] sm:$0xf]
  %v155 = vld [vmem:[%s1 + $0xe4] sm:$0xf]
  %v156 = vld [vmem:[%s1 + $0xe8] sm:$0xf]
  %v157 = vld [vmem:[%s1 + $0xec] sm:$0xf]
  %v158 = vld [vmem:[%s1 + $0xf0] sm:$0xf]
  %v159 = vld [vmem:[%s1 + $0xf4] sm:$0xf]
  %v160 = vld [vmem:[%s1 + $0xf8] sm:$0xf]
  %v161 = vld [vmem:[%s1 + $0xfc] sm:$0xf]
  %v162 = vld [vmem:[%s1 + $0x100] sm:$0xf]
  %v163 = vld [vmem:[%s1 + $0x104] sm:$0xf]
  %v164 = vld [vmem:[%s1 + $0x108] sm:$0xf]
  %v165 = vld [vmem:[%s1 + $0x10c] sm:$0xf]
  %v166 = vld [vmem:[%s1 + $0x110] sm:$0xf]
  %v167 = vld [vmem:[%s1 + $0x114] sm:$0xf]
  %v168 = vld [vmem:[%s1 + $0x118] sm:$0xf]
  %v169 = vld [vmem:[%s1 + $0x11c] sm:$0xf]
  %v170 = vld [vmem:[%s1 + $0x120] sm:$0xf]
  %v171 = vld [vmem:[%s1 + $0x124] sm:$0xf]
  %v172 = vld [vmem:[%s1 + $0x128] sm:$0xf]
  %v173 = vld [vmem:[%s1 + $0x12c] sm:$0xf]
  %v174 = vld [vmem:[%s1 + $0x130] sm:$0xf]
  %v175 = vld [vmem:[%s1 + $0x134] sm:$0xf]
  %v176 = vld [vmem:[%s1 + $0x138] sm:$0xf]
  %v177 = vld [vmem:[%s1 + $0x13c] sm:$0xf]
  %v178 = vld [vmem:[%s1 + $0x140] sm:$0xf]
  %v179 = vld [vmem:[%s1 + $0x144] sm:$0xf]
  %v180 = vld [vmem:[%s1 + $0x148] sm:$0xf]
  %v181 = vld [vmem:[%s1 + $0x14c] sm:$0xf]
  %v182 = vld [vmem:[%s1 + $0x150] sm:$0xf]
  %v183 = vld [vmem:[%s1 + $0x154] sm:$0xf]
  %v184 = vld [vmem:[%s1 + $0x158] sm:$0xf]
  %v185 = vld [vmem:[%s1 + $0x15c] sm:$0xf]
  %v186 = vld [vmem:[%s1 + $0x160] sm:$0xf]
  %v187 = vld [vmem:[%s1 + $0x164] sm:$0xf]
  %v188 = vld [vmem:[%s1 + $0x168] sm:$0xf]
  %v189 = vld [vmem:[%s1 + $0x16c] sm:$0xf]
  %v190 = vld [vmem:[%s1 + $0x170] sm:$0xf]
  %v191 = vld [vmem:[%s1 + $0x174] sm:$0xf]
  %v192 = vld [vmem:[%s1 + $0x178] sm:$0xf]
  %v193 = vld [vmem:[%s1 + $0x17c] sm:$0xf]
  %v194 = vld [vmem:[%s1 + $0x180] sm:$0xf]
  %v195 = vld [vmem:[%s1 + $0x184] sm:$0xf]
  %v196 = vld [vmem:[%s1 + $0x188] sm:$0xf]
  %v197 = vld [vmem:[%s1 + $0x18c] sm:$0xf]
  %v198 = vld [vmem:[%s1 + $0x190] sm:$0xf]
  %v199 = vld [vmem:[%s1 + $0x194] sm:$0xf]
  %v200 = vld [vmem:[%s1 + $0x198] sm:$0xf]
  %v201 = vld [vmem:[%s1 + $0x19c] sm:$0xf]
  %v202 = vld [vmem:[%s1 + $0x1a0] sm:$0xf]
  %v203 = vld [vmem:[%s1 + $0x1a4] sm:$0xf]
  %v204 = vld [vmem:[%s1 + $0x1a8] sm:$0xf]
  %v205 = vld [vmem:[%s1 + $0x1ac] sm:$0xf]
  %v206 = vld [vmem:[%s1 + $0x1b0] sm:$0xf]
  %v207 = vld [vmem:[%s1 + $0x1b4] sm:$0xf]
  %v208 = vld [vmem:[%s1 + $0x1b8] sm:$0xf]
  %v209 = vld [vmem:[%s1 + $0x1bc] sm:$0xf]
  %v210 = vld [vmem:[%s1 + $0x1c0] sm:$0xf]
  %v211 = vld [vmem:[%s1 + $0x1c4] sm:$0xf]
  %v212 = vld [vmem:[%s1 + $0x1c8] sm:$0xf]
  %v213 = vld [vmem:[%s1 + $0x1cc] sm:$0xf]
  %v214 = vld [vmem:[%s1 + $0x1d0] sm:$0xf]
  %v215 = vld [vmem:[%s1 + $0x1d4] sm:$0xf]
  %v216 = vld [vmem:[%s1 + $0x1d8] sm:$0xf]
  %v217 = vld [vmem:[%s1 + $0x1dc] sm:$0xf]
  %v218 = vld [vmem:[%s1 + $0x1e0] sm:$0xf]
  %v219 = vld [vmem:[%s1 + $0x1e4] sm:$0xf]
  %v220 = vld [vmem:[%s1 + $0x1e8] sm:$0xf]
  %v221 = vld [vmem:[%s1 + $0x1ec] sm:$0xf]
  %v222 = vld [vmem:[%s1 + $0x1f0] sm:$0xf]
  %v223 = vld [vmem:[%s1 + $0x1f4] sm:$0xf]
  %v224 = vld [vmem:[%s1 + $0x1f8] sm:$0xf]
  %v225 = vld [vmem:[%s1 + $0x1fc] sm:$0xf]
  %v226 = vld [vmem:[%s1 + $0x200] sm:$0xf]
  %v227 = vld [vmem:[%s1 + $0x204] sm:$0xf]
  %v228 = vld [vmem:[%s1 + $0x208] sm:$0xf]
  %v229 = vld [vmem:[%s1 + $0x20c] sm:$0xf]
  %v230 = vld [vmem:[%s1 + $0x210] sm:$0xf]
  %v231 = vld [vmem:[%s1 + $0x214] sm:$0xf]
  %v232 = vld [vmem:[%s1 + $0x218] sm:$0xf]
  %v233 = vld [vmem:[%s1 + $0x21c] sm:$0xf]
  %v234 = vld [vmem:[%s1 + $0x220] sm:$0xf]
  %v235 = vld [vmem:[%s1 + $0x224] sm:$0xf]
  %v236 = vld [vmem:[%s1 + $0x228] sm:$0xf]
  %v237 = vld [vmem:[%s1 + $0x22c] sm:$0xf]
  %v238 = vld [vmem:[%s1 + $0x230] sm:$0xf]
  %v239 = vld [vmem:[%s1 + $0x234] sm:$0xf]
  %v240 = vld [vmem:[%s1 + $0x238] sm:$0xf]
  %v241 = vld [vmem:[%s1 + $0x23c] sm:$0xf]
  %v322 = vunpack.c.l.b16 %v18
  %v323 = vunpack.c.h.b16 %v18
  %v324 = vunpack.c.l.b16 %v19
  %v325 = vunpack.c.h.b16 %v19
  %v326 = vunpack.c.l.b16 %v20
  %v327 = vunpack.c.h.b16 %v20
  %v328 = vunpack.c.l.b16 %v21
  %v329 = vunpack.c.h.b16 %v21
  %v330 = vunpack.c.l.b16 %v22
  %v331 = vunpack.c.l.b16 %v23
  %v332 = vunpack.c.h.b16 %v23
  %v333 = vunpack.c.l.b16 %v24
  %v334 = vunpack.c.h.b16 %v24
  %v335 = vunpack.c.l.b16 %v25
  %v336 = vunpack.c.h.b16 %v25
  %v337 = vunpack.c.l.b16 %v26
  %v338 = vunpack.c.h.b16 %v26
  %v339 = vunpack.c.l.b16 %v27
  %v340 = vunpack.c.l.b16 %v28
  %v341 = vunpack.c.h.b16 %v28
  %v342 = vunpack.c.l.b16 %v29
  %v343 = vunpack.c.h.b16 %v29
  %v344 = vunpack.c.l.b16 %v30
  %v345 = vunpack.c.h.b16 %v30
  %v346 = vunpack.c.l.b16 %v31
  %v347 = vunpack.c.h.b16 %v31
  %v348 = vunpack.c.l.b16 %v32
  %v349 = vunpack.c.l.b16 %v33
  %v350 = vunpack.c.h.b16 %v33
  %v351 = vunpack.c.l.b16 %v34
  %v352 = vunpack.c.h.b16 %v34
  %v353 = vunpack.c.l.b16 %v35
  %v354 = vunpack.c.h.b16 %v35
  %v355 = vunpack.c.l.b16 %v36
  %v356 = vunpack.c.h.b16 %v36
  %v357 = vunpack.c.l.b16 %v37
  %v358 = vunpack.c.l.b16 %v38
  %v359 = vunpack.c.h.b16 %v38
  %v360 = vunpack.c.l.b16 %v39
  %v361 = vunpack.c.h.b16 %v39
  %v362 = vunpack.c.l.b16 %v40
  %v363 = vunpack.c.h.b16 %v40
  %v364 = vunpack.c.l.b16 %v41
  %v365 = vunpack.c.h.b16 %v41
  %v366 = vunpack.c.l.b16 %v42
  %v367 = vunpack.c.l.b16 %v43
  %v368 = vunpack.c.h.b16 %v43
  %v369 = vunpack.c.l.b16 %v44
  %v370 = vunpack.c.h.b16 %v44
  %v371 = vunpack.c.l.b16 %v45
  %v372 = vunpack.c.h.b16 %v45
  %v373 = vunpack.c.l.b16 %v46
  %v374 = vunpack.c.h.b16 %v46
  %v375 = vunpack.c.l.b16 %v47
  %v376 = vunpack.c.l.b16 %v48
  %v377 = vunpack.c.h.b16 %v48
  %v378 = vunpack.c.l.b16 %v49
  %v379 = vunpack.c.h.b16 %v49
  %v380 = vunpack.c.l.b16 %v50
  %v381 = vunpack.c.h.b16 %v50
  %v382 = vunpack.c.l.b16 %v51
  %v383 = vunpack.c.h.b16 %v51
  %v384 = vunpack.c.l.b16 %v52
  %v385 = vunpack.c.l.b16 %v53
  %v386 = vunpack.c.h.b16 %v53
  %v387 = vunpack.c.l.b16 %v54
  %v388 = vunpack.c.h.b16 %v54
  %v389 = vunpack.c.l.b16 %v55
  %v390 = vunpack.c.h.b16 %v55
  %v391 = vunpack.c.l.b16 %v56
  %v392 = vunpack.c.h.b16 %v56
  %v393 = vunpack.c.l.b16 %v57
  %v394 = vunpack.c.l.b16 %v58
  %v395 = vunpack.c.h.b16 %v58
  %v396 = vunpack.c.l.b16 %v59
  %v397 = vunpack.c.h.b16 %v59
  %v398 = vunpack.c.l.b16 %v60
  %v399 = vunpack.c.h.b16 %v60
  %v400 = vunpack.c.l.b16 %v61
  %v401 = vunpack.c.h.b16 %v61
  %v402 = vunpack.c.l.b16 %v62
  %v403 = vunpack.c.l.b16 %v63
  %v404 = vunpack.c.h.b16 %v63
  %v405 = vunpack.c.l.b16 %v64
  %v406 = vunpack.c.h.b16 %v64
  %v407 = vunpack.c.l.b16 %v65
  %v408 = vunpack.c.h.b16 %v65
  %v409 = vunpack.c.l.b16 %v66
  %v410 = vunpack.c.h.b16 %v66
  %v411 = vunpack.c.l.b16 %v67
  %v412 = vunpack.c.l.b16 %v68
  %v413 = vunpack.c.h.b16 %v68
  %v414 = vunpack.c.l.b16 %v69
  %v415 = vunpack.c.h.b16 %v69
  %v416 = vunpack.c.l.b16 %v70
  %v417 = vunpack.c.h.b16 %v70
  %v418 = vunpack.c.l.b16 %v71
  %v419 = vunpack.c.h.b16 %v71
  %v420 = vunpack.c.l.b16 %v72
  %v421 = vunpack.c.l.b16 %v73
  %v422 = vunpack.c.h.b16 %v73
  %v423 = vunpack.c.l.b16 %v74
  %v424 = vunpack.c.h.b16 %v74
  %v425 = vunpack.c.l.b16 %v75
  %v426 = vunpack.c.h.b16 %v75
  %v427 = vunpack.c.l.b16 %v76
  %v428 = vunpack.c.h.b16 %v76
  %v429 = vunpack.c.l.b16 %v77
  %v430 = vunpack.c.l.b16 %v78
  %v431 = vunpack.c.h.b16 %v78
  %v432 = vunpack.c.l.b16 %v79
  %v433 = vunpack.c.h.b16 %v79
  %v434 = vunpack.c.l.b16 %v80
  %v435 = vunpack.c.h.b16 %v80
  %v436 = vunpack.c.l.b16 %v81
  %v437 = vunpack.c.h.b16 %v81
  %v438 = vunpack.c.l.b16 %v82
  %v439 = vunpack.c.l.b16 %v83
  %v440 = vunpack.c.h.b16 %v83
  %v441 = vunpack.c.l.b16 %v84
  %v442 = vunpack.c.h.b16 %v84
  %v443 = vunpack.c.l.b16 %v85
  %v444 = vunpack.c.h.b16 %v85
  %v445 = vunpack.c.l.b16 %v86
  %v446 = vunpack.c.h.b16 %v86
  %v447 = vunpack.c.l.b16 %v87
  %v448 = vunpack.c.l.b16 %v88
  %v449 = vunpack.c.h.b16 %v88
  %v450 = vunpack.c.l.b16 %v89
  %v451 = vunpack.c.h.b16 %v89
  %v452 = vunpack.c.l.b16 %v90
  %v453 = vunpack.c.h.b16 %v90
  %v454 = vunpack.c.l.b16 %v91
  %v455 = vunpack.c.h.b16 %v91
  %v456 = vunpack.c.l.b16 %v92
  %v457 = vunpack.c.l.b16 %v93
  %v458 = vunpack.c.h.b16 %v93
  %v459 = vunpack.c.l.b16 %v94
  %v460 = vunpack.c.h.b16 %v94
  %v461 = vunpack.c.l.b16 %v95
  %v462 = vunpack.c.h.b16 %v95
  %v463 = vunpack.c.l.b16 %v96
  %v464 = vunpack.c.h.b16 %v96
  %v465 = vunpack.c.l.b16 %v97
  %v466 = vpack.c.b16 %v331, %v322
  %v467 = vpack.c.b16 %v332, %v323
  %v468 = vpack.c.b16 %v333, %v324
  %v469 = vpack.c.b16 %v334, %v325
  %v470 = vpack.c.b16 %v335, %v326
  %v471 = vpack.c.b16 %v336, %v327
  %v472 = vpack.c.b16 %v337, %v328
  %v473 = vpack.c.b16 %v338, %v329
  %v474 = vpack.c.b16 %v339, %v330
  %v475 = vpack.c.b16 %v349, %v340
  %v476 = vpack.c.b16 %v350, %v341
  %v477 = vpack.c.b16 %v351, %v342
  %v478 = vpack.c.b16 %v352, %v343
  %v479 = vpack.c.b16 %v353, %v344
  %v480 = vpack.c.b16 %v354, %v345
  %v481 = vpack.c.b16 %v355, %v346
  %v482 = vpack.c.b16 %v356, %v347
  %v483 = vpack.c.b16 %v357, %v348
  %v484 = vpack.c.b16 %v367, %v358
  %v485 = vpack.c.b16 %v368, %v359
  %v486 = vpack.c.b16 %v369, %v360
  %v487 = vpack.c.b16 %v370, %v361
  %v488 = vpack.c.b16 %v371, %v362
  %v489 = vpack.c.b16 %v372, %v363
  %v490 = vpack.c.b16 %v373, %v364
  %v491 = vpack.c.b16 %v374, %v365
  %v492 = vpack.c.b16 %v375, %v366
  %v493 = vpack.c.b16 %v385, %v376
  %v494 = vpack.c.b16 %v386, %v377
  %v495 = vpack.c.b16 %v387, %v378
  %v496 = vpack.c.b16 %v388, %v379
  %v497 = vpack.c.b16 %v389, %v380
  %v498 = vpack.c.b16 %v390, %v381
  %v499 = vpack.c.b16 %v391, %v382
  %v500 = vpack.c.b16 %v392, %v383
  %v501 = vpack.c.b16 %v393, %v384
  %v502 = vpack.c.b16 %v403, %v394
  %v503 = vpack.c.b16 %v404, %v395
  %v504 = vpack.c.b16 %v405, %v396
  %v505 = vpack.c.b16 %v406, %v397
  %v506 = vpack.c.b16 %v407, %v398
  %v507 = vpack.c.b16 %v408, %v399
  %v508 = vpack.c.b16 %v409, %v400
  %v509 = vpack.c.b16 %v410, %v401
  %v510 = vpack.c.b16 %v411, %v402
  %v511 = vpack.c.b16 %v421, %v412
  %v512 = vpack.c.b16 %v422, %v413
  %v513 = vpack.c.b16 %v423, %v414
  %v514 = vpack.c.b16 %v424, %v415
  %v515 = vpack.c.b16 %v425, %v416
  %v516 = vpack.c.b16 %v426, %v417
  %v517 = vpack.c.b16 %v427, %v418
  %v518 = vpack.c.b16 %v428, %v419
  %v519 = vpack.c.b16 %v429, %v420
  %v520 = vpack.c.b16 %v439, %v430
  %v521 = vpack.c.b16 %v440, %v431
  %v522 = vpack.c.b16 %v441, %v432
  %v523 = vpack.c.b16 %v442, %v433
  %v524 = vpack.c.b16 %v443, %v434
  %v525 = vpack.c.b16 %v444, %v435
  %v526 = vpack.c.b16 %v445, %v436
  %v527 = vpack.c.b16 %v446, %v437
  %v528 = vpack.c.b16 %v447, %v438
  %v529 = vpack.c.b16 %v457, %v448
  %v530 = vpack.c.b16 %v458, %v449
  %v531 = vpack.c.b16 %v459, %v450
  %v532 = vpack.c.b16 %v460, %v451
  %v533 = vpack.c.b16 %v461, %v452
  %v534 = vpack.c.b16 %v462, %v453
  %v535 = vpack.c.b16 %v463, %v454
  %v536 = vpack.c.b16 %v464, %v455
  %v537 = vpack.c.b16 %v465, %v456
  %v754 = vunpack.c.l.b16 %v98
  %v755 = vunpack.c.l.b16 %v99
  %v756 = vunpack.c.l.b16 %v100
  %v757 = vunpack.c.l.b16 %v101
  %v758 = vunpack.c.l.b16 %v102
  %v759 = vunpack.c.l.b16 %v103
  %v760 = vunpack.c.l.b16 %v104
  %v761 = vunpack.c.l.b16 %v105
  %v762 = vunpack.c.l.b16 %v106
  %v763 = vunpack.c.l.b16 %v107
  %v764 = vunpack.c.l.b16 %v108
  %v765 = vunpack.c.l.b16 %v109
  %v766 = vunpack.c.l.b16 %v110
  %v767 = vunpack.c.l.b16 %v111
  %v768 = vunpack.c.l.b16 %v112
  %v769 = vunpack.c.l.b16 %v113
  %v770 = vunpack.c.l.b16 %v114
  %v771 = vunpack.c.l.b16 %v115
  %v772 = vunpack.c.l.b16 %v116
  %v773 = vunpack.c.l.b16 %v117
  %v774 = vunpack.c.l.b16 %v118
  %v775 = vunpack.c.l.b16 %v119
  %v776 = vunpack.c.l.b16 %v120
  %v777 = vunpack.c.l.b16 %v121
  %v778 = vunpack.c.l.b16 %v122
  %v779 = vunpack.c.l.b16 %v123
  %v780 = vunpack.c.l.b16 %v124
  %v781 = vunpack.c.l.b16 %v125
  %v782 = vunpack.c.l.b16 %v126
  %v783 = vunpack.c.l.b16 %v127
  %v784 = vunpack.c.l.b16 %v128
  %v785 = vunpack.c.l.b16 %v129
  %v786 = vunpack.c.l.b16 %v130
  %v787 = vunpack.c.l.b16 %v131
  %v788 = vunpack.c.l.b16 %v132
  %v789 = vunpack.c.l.b16 %v133
  %v790 = vunpack.c.l.b16 %v134
  %v791 = vunpack.c.l.b16 %v135
  %v792 = vunpack.c.l.b16 %v136
  %v793 = vunpack.c.l.b16 %v137
  %v794 = vunpack.c.l.b16 %v138
  %v795 = vunpack.c.l.b16 %v139
  %v796 = vunpack.c.l.b16 %v140
  %v797 = vunpack.c.l.b16 %v141
  %v798 = vunpack.c.l.b16 %v142
  %v799 = vunpack.c.l.b16 %v143
  %v800 = vunpack.c.l.b16 %v144
  %v801 = vunpack.c.l.b16 %v145
  %v802 = vunpack.c.l.b16 %v146
  %v803 = vunpack.c.l.b16 %v147
  %v804 = vunpack.c.l.b16 %v148
  %v805 = vunpack.c.l.b16 %v149
  %v806 = vunpack.c.l.b16 %v150
  %v807 = vunpack.c.l.b16 %v151
  %v808 = vunpack.c.l.b16 %v152
  %v809 = vunpack.c.l.b16 %v153
  %v810 = vunpack.c.l.b16 %v154
  %v811 = vunpack.c.l.b16 %v155
  %v812 = vunpack.c.l.b16 %v156
  %v813 = vunpack.c.l.b16 %v157
  %v814 = vunpack.c.l.b16 %v158
  %v815 = vunpack.c.l.b16 %v159
  %v816 = vunpack.c.l.b16 %v160
  %v817 = vunpack.c.l.b16 %v161
  %v818 = vunpack.c.l.b16 %v162
  %v819 = vunpack.c.l.b16 %v163
  %v820 = vunpack.c.l.b16 %v164
  %v821 = vunpack.c.l.b16 %v165
  %v822 = vunpack.c.l.b16 %v166
  %v823 = vunpack.c.l.b16 %v167
  %v824 = vunpack.c.l.b16 %v168
  %v825 = vunpack.c.l.b16 %v169
  %v826 = vunpack.c.l.b16 %v170
  %v827 = vunpack.c.l.b16 %v171
  %v828 = vunpack.c.l.b16 %v172
  %v829 = vunpack.c.l.b16 %v173
  %v830 = vunpack.c.l.b16 %v174
  %v831 = vunpack.c.l.b16 %v175
  %v832 = vunpack.c.l.b16 %v176
  %v833 = vunpack.c.l.b16 %v177
  %v834 = vunpack.c.l.b16 %v178
  %v835 = vunpack.c.l.b16 %v179
  %v836 = vunpack.c.l.b16 %v180
  %v837 = vunpack.c.l.b16 %v181
  %v838 = vunpack.c.l.b16 %v182
  %v839 = vunpack.c.l.b16 %v183
  %v840 = vunpack.c.l.b16 %v184
  %v841 = vunpack.c.l.b16 %v185
  %v842 = vunpack.c.l.b16 %v186
  %v843 = vunpack.c.l.b16 %v187
  %v844 = vunpack.c.l.b16 %v188
  %v845 = vunpack.c.l.b16 %v189
  %v846 = vunpack.c.l.b16 %v190
  %v847 = vunpack.c.l.b16 %v191
  %v848 = vunpack.c.l.b16 %v192
  %v849 = vunpack.c.l.b16 %v193
  %v850 = vunpack.c.l.b16 %v194
  %v851 = vunpack.c.l.b16 %v195
  %v852 = vunpack.c.l.b16 %v196
  %v853 = vunpack.c.l.b16 %v197
  %v854 = vunpack.c.l.b16 %v198
  %v855 = vunpack.c.l.b16 %v199
  %v856 = vunpack.c.l.b16 %v200
  %v857 = vunpack.c.l.b16 %v201
  %v858 = vunpack.c.l.b16 %v202
  %v859 = vunpack.c.l.b16 %v203
  %v860 = vunpack.c.l.b16 %v204
  %v861 = vunpack.c.l.b16 %v205
  %v862 = vunpack.c.l.b16 %v206
  %v863 = vunpack.c.l.b16 %v207
  %v864 = vunpack.c.l.b16 %v208
  %v865 = vunpack.c.l.b16 %v209
  %v866 = vunpack.c.l.b16 %v210
  %v867 = vunpack.c.l.b16 %v211
  %v868 = vunpack.c.l.b16 %v212
  %v869 = vunpack.c.l.b16 %v213
  %v870 = vunpack.c.l.b16 %v214
  %v871 = vunpack.c.l.b16 %v215
  %v872 = vunpack.c.l.b16 %v216
  %v873 = vunpack.c.l.b16 %v217
  %v874 = vunpack.c.l.b16 %v218
  %v875 = vunpack.c.l.b16 %v219
  %v876 = vunpack.c.l.b16 %v220
  %v877 = vunpack.c.l.b16 %v221
  %v878 = vunpack.c.l.b16 %v222
  %v879 = vunpack.c.l.b16 %v223
  %v880 = vunpack.c.l.b16 %v224
  %v881 = vunpack.c.l.b16 %v225
  %v882 = vunpack.c.l.b16 %v226
  %v883 = vunpack.c.l.b16 %v227
  %v884 = vunpack.c.l.b16 %v228
  %v885 = vunpack.c.l.b16 %v229
  %v886 = vunpack.c.l.b16 %v230
  %v887 = vunpack.c.l.b16 %v231
  %v888 = vunpack.c.l.b16 %v232
  %v889 = vunpack.c.l.b16 %v233
  %v890 = vunpack.c.l.b16 %v234
  %v891 = vunpack.c.l.b16 %v235
  %v892 = vunpack.c.l.b16 %v236
  %v893 = vunpack.c.l.b16 %v237
  %v894 = vunpack.c.l.b16 %v238
  %v895 = vunpack.c.l.b16 %v239
  %v896 = vunpack.c.l.b16 %v240
  %v897 = vunpack.c.l.b16 %v241
  %v898 = vpack.c.b16 %v755, %v754
  %v899 = vpack.c.b16 %v757, %v756
  %v900 = vpack.c.b16 %v759, %v758
  %v901 = vpack.c.b16 %v761, %v760
  %v902 = vpack.c.b16 %v763, %v762
  %v903 = vpack.c.b16 %v765, %v764
  %v904 = vpack.c.b16 %v767, %v766
  %v905 = vpack.c.b16 %v769, %v768
  %v906 = vpack.c.b16 %v771, %v770
  %v907 = vpack.c.b16 %v773, %v772
  %v908 = vpack.c.b16 %v775, %v774
  %v909 = vpack.c.b16 %v777, %v776
  %v910 = vpack.c.b16 %v779, %v778
  %v911 = vpack.c.b16 %v781, %v780
  %v912 = vpack.c.b16 %v783, %v782
  %v913 = vpack.c.b16 %v785, %v784
  %v914 = vpack.c.b16 %v787, %v786
  %v915 = vpack.c.b16 %v789, %v788
  %v916 = vpack.c.b16 %v791, %v790
  %v917 = vpack.c.b16 %v793, %v792
  %v918 = vpack.c.b16 %v795, %v794
  %v919 = vpack.c.b16 %v797, %v796
  %v920 = vpack.c.b16 %v799, %v798
  %v921 = vpack.c.b16 %v801, %v800
  %v922 = vpack.c.b16 %v803, %v802
  %v923 = vpack.c.b16 %v805, %v804
  %v924 = vpack.c.b16 %v807, %v806
  %v925 = vpack.c.b16 %v809, %v808
  %v926 = vpack.c.b16 %v811, %v810
  %v927 = vpack.c.b16 %v813, %v812
  %v928 = vpack.c.b16 %v815, %v814
  %v929 = vpack.c.b16 %v817, %v816
  %v930 = vpack.c.b16 %v819, %v818
  %v931 = vpack.c.b16 %v821, %v820
  %v932 = vpack.c.b16 %v823, %v822
  %v933 = vpack.c.b16 %v825, %v824
  %v934 = vpack.c.b16 %v827, %v826
  %v935 = vpack.c.b16 %v829, %v828
  %v936 = vpack.c.b16 %v831, %v830
  %v937 = vpack.c.b16 %v833, %v832
  %v938 = vpack.c.b16 %v835, %v834
  %v939 = vpack.c.b16 %v837, %v836
  %v940 = vpack.c.b16 %v839, %v838
  %v941 = vpack.c.b16 %v841, %v840
  %v942 = vpack.c.b16 %v843, %v842
  %v943 = vpack.c.b16 %v845, %v844
  %v944 = vpack.c.b16 %v847, %v846
  %v945 = vpack.c.b16 %v849, %v848
  %v946 = vpack.c.b16 %v851, %v850
  %v947 = vpack.c.b16 %v853, %v852
  %v948 = vpack.c.b16 %v855, %v854
  %v949 = vpack.c.b16 %v857, %v856
  %v950 = vpack.c.b16 %v859, %v858
  %v951 = vpack.c.b16 %v861, %v860
  %v952 = vpack.c.b16 %v863, %v862
  %v953 = vpack.c.b16 %v865, %v864
  %v954 = vpack.c.b16 %v867, %v866
  %v955 = vpack.c.b16 %v869, %v868
  %v956 = vpack.c.b16 %v871, %v870
  %v957 = vpack.c.b16 %v873, %v872
  %v958 = vpack.c.b16 %v875, %v874
  %v959 = vpack.c.b16 %v877, %v876
  %v960 = vpack.c.b16 %v879, %v878
  %v961 = vpack.c.b16 %v881, %v880
  %v962 = vpack.c.b16 %v883, %v882
  %v963 = vpack.c.b16 %v885, %v884
  %v964 = vpack.c.b16 %v887, %v886
  %v965 = vpack.c.b16 %v889, %v888
  %v966 = vpack.c.b16 %v891, %v890
  %v967 = vpack.c.b16 %v893, %v892
  %v968 = vpack.c.b16 %v895, %v894
  %v969 = vpack.c.b16 %v897, %v896
  %1042 = vmatprep.subr.bf16.mxu0 0
  %1043 = vmatpush1.bf16.msra.mxu0 %v905
  %1044 = vmatprep.subr.bf16.mxu0 0
  %1045 = vmatpush1.bf16.msra.mxu0 %v904
  %1046 = vmatprep.subr.bf16.mxu0 0
  %1047 = vmatpush1.bf16.msra.mxu0 %v903
  %1048 = vmatprep.subr.bf16.mxu0 0
  %1049 = vmatpush1.bf16.msra.mxu0 %v902
  %1050 = vmatprep.subr.bf16.mxu0 0
  %1051 = vmatpush1.bf16.msra.mxu0 %v901
  %1052 = vmatprep.subr.bf16.mxu0 0
  %1053 = vmatpush1.bf16.msra.mxu0 %v900
  %1054 = vmatprep.subr.bf16.mxu0 0
  %1055 = vmatpush1.bf16.msra.mxu0 %v899
  %1056 = vmatprep.subr.bf16.mxu0 0
  %1057 = vmatpush1.bf16.msra.mxu0 %v898
  %1058 = vmatprep.subr.bf16.mxu0 0
  %1059 = vmatpush2.bf16.msra.mxu0 %v913
  %1060 = vmatprep.subr.bf16.mxu0 0
  %1061 = vmatpush2.bf16.msra.mxu0 %v912
  %1062 = vmatprep.subr.bf16.mxu0 0
  %1063 = vmatpush2.bf16.msra.mxu0 %v911
  %1064 = vmatprep.subr.bf16.mxu0 0
  %1065 = vmatpush2.bf16.msra.mxu0 %v910
  %1066 = vmatprep.subr.bf16.mxu0 0
  %1067 = vmatpush2.bf16.msra.mxu0 %v909
  %1068 = vmatprep.subr.bf16.mxu0 0
  %1069 = vmatpush2.bf16.msra.mxu0 %v908
  %1070 = vmatprep.subr.bf16.mxu0 0
  %1071 = vmatpush2.bf16.msra.mxu0 %v907
  %1072 = vmatprep.subr.bf16.mxu0 0
  %1073 = vmatpush2.bf16.msra.mxu0 %v906
  %1074 = vmatprep.mubr.bf16.mxu0 %v467
  %1075 = vmatmul.mubr.bf16.gmra.mxu0 %v466
  %v1076 = vpop.f32.mrf.mxu0
  %v1077 = vadd.f32 0.0, %v1076
  %v1078 = vpop.f32.mrf.mxu0
  %v1079 = vpop.f32.mrf.mxu0
  %v1080 = vadd.f32 0.0, %v1079
  %v1081 = vpop.f32.mrf.mxu0
  %1082 = vmatprep.mubr.bf16.mxu0 %v476
  %1083 = vmatmul.mubr.bf16.gmra.mxu0 %v475
  %v1084 = vpop.f32.mrf.mxu0
  %v1085 = vadd.f32 0.0, %v1084
  %v1086 = vpop.f32.mrf.mxu0
  %v1087 = vpop.f32.mrf.mxu0
  %v1088 = vadd.f32 0.0, %v1087
  %v1089 = vpop.f32.mrf.mxu0
  %1090 = vmatprep.mubr.bf16.mxu0 %v485
  %1091 = vmatmul.mubr.bf16.gmra.mxu0 %v484
  %v1092 = vpop.f32.mrf.mxu0
  %v1093 = vadd.f32 0.0, %v1092
  %v1094 = vpop.f32.mrf.mxu0
  %v1095 = vpop.f32.mrf.mxu0
  %v1096 = vadd.f32 0.0, %v1095
  %v1097 = vpop.f32.mrf.mxu0
  %1098 = vmatprep.mubr.bf16.mxu0 %v494
  %1099 = vmatmul.mubr.bf16.gmra.mxu0 %v493
  %v1100 = vpop.f32.mrf.mxu0
  %v1101 = vadd.f32 0.0, %v1100
  %v1102 = vpop.f32.mrf.mxu0
  %v1103 = vpop.f32.mrf.mxu0
  %v1104 = vadd.f32 0.0, %v1103
  %v1105 = vpop.f32.mrf.mxu0
  %1106 = vmatprep.mubr.bf16.mxu0 %v503
  %1107 = vmatmul.mubr.bf16.gmra.mxu0 %v502
  %v1108 = vpop.f32.mrf.mxu0
  %v1109 = vadd.f32 0.0, %v1108
  %v1110 = vpop.f32.mrf.mxu0
  %v1111 = vpop.f32.mrf.mxu0
  %v1112 = vadd.f32 0.0, %v1111
  %v1113 = vpop.f32.mrf.mxu0
  %1114 = vmatprep.mubr.bf16.mxu0 %v512
  %1115 = vmatmul.mubr.bf16.gmra.mxu0 %v511
  %v1116 = vpop.f32.mrf.mxu0
  %v1117 = vadd.f32 0.0, %v1116
  %v1118 = vpop.f32.mrf.mxu0
  %v1119 = vpop.f32.mrf.mxu0
  %v1120 = vadd.f32 0.0, %v1119
  %v1121 = vpop.f32.mrf.mxu0
  %1122 = vmatprep.mubr.bf16.mxu0 %v521
  %1123 = vmatmul.mubr.bf16.gmra.mxu0 %v520
  %v1124 = vpop.f32.mrf.mxu0
  %v1125 = vadd.f32 0.0, %v1124
  %v1126 = vpop.f32.mrf.mxu0
  %v1127 = vpop.f32.mrf.mxu0
  %v1128 = vadd.f32 0.0, %v1127
  %v1129 = vpop.f32.mrf.mxu0
  %1130 = vmatprep.mubr.bf16.mxu0 %v530
  %1131 = vmatmul.mubr.bf16.gmra.mxu0 %v529
  %v1132 = vpop.f32.mrf.mxu0
  %v1133 = vadd.f32 0.0, %v1132
  %v1134 = vpop.f32.mrf.mxu0
  %v1135 = vpop.f32.mrf.mxu0
  %v1136 = vadd.f32 0.0, %v1135
  %v1137 = vpop.f32.mrf.mxu0
  %1138 = vdwg.mxu0
  %1139 = vmatprep.subr.bf16.mxu0 0
  %1140 = vmatpush1.bf16.msra.mxu0 %v921
  %1141 = vmatprep.subr.bf16.mxu0 0
  %1142 = vmatpush1.bf16.msra.mxu0 %v920
  %1143 = vmatprep.subr.bf16.mxu0 0
  %1144 = vmatpush1.bf16.msra.mxu0 %v919
  %1145 = vmatprep.subr.bf16.mxu0 0
  %1146 = vmatpush1.bf16.msra.mxu0 %v918
  %1147 = vmatprep.subr.bf16.mxu0 0
  %1148 = vmatpush1.bf16.msra.mxu0 %v917
  %1149 = vmatprep.subr.bf16.mxu0 0
  %1150 = vmatpush1.bf16.msra.mxu0 %v916
  %1151 = vmatprep.subr.bf16.mxu0 0
  %1152 = vmatpush1.bf16.msra.mxu0 %v915
  %1153 = vmatprep.subr.bf16.mxu0 0
  %1154 = vmatpush1.bf16.msra.mxu0 %v914
  %1155 = vmatprep.subr.bf16.mxu0 0
  %1156 = vmatpush2.bf16.msra.mxu0 %v929
  %1157 = vmatprep.subr.bf16.mxu0 0
  %1158 = vmatpush2.bf16.msra.mxu0 %v928
  %1159 = vmatprep.subr.bf16.mxu0 0
  %1160 = vmatpush2.bf16.msra.mxu0 %v927
  %1161 = vmatprep.subr.bf16.mxu0 0
  %1162 = vmatpush2.bf16.msra.mxu0 %v926
  %1163 = vmatprep.subr.bf16.mxu0 0
  %1164 = vmatpush2.bf16.msra.mxu0 %v925
  %1165 = vmatprep.subr.bf16.mxu0 0
  %1166 = vmatpush2.bf16.msra.mxu0 %v924
  %1167 = vmatprep.subr.bf16.mxu0 0
  %1168 = vmatpush2.bf16.msra.mxu0 %v923
  %1169 = vmatprep.subr.bf16.mxu0 0
  %1170 = vmatpush2.bf16.msra.mxu0 %v922
  %1171 = vmatprep.mubr.bf16.mxu0 %v469
  %1172 = vmatmul.mubr.bf16.gmra.mxu0 %v468
  %v1173 = vpop.f32.mrf.mxu0
  %v1174 = vadd.f32 %v1077, %v1173
  %v1175 = vpop.f32.mrf.mxu0
  %v1176 = vpop.f32.mrf.mxu0
  %v1177 = vadd.f32 %v1080, %v1176
  %v1178 = vpop.f32.mrf.mxu0
  %1179 = vmatprep.mubr.bf16.mxu0 %v478
  %1180 = vmatmul.mubr.bf16.gmra.mxu0 %v477
  %v1181 = vpop.f32.mrf.mxu0
  %v1182 = vadd.f32 %v1085, %v1181
  %v1183 = vpop.f32.mrf.mxu0
  %v1184 = vpop.f32.mrf.mxu0
  %v1185 = vadd.f32 %v1088, %v1184
  %v1186 = vpop.f32.mrf.mxu0
  %1187 = vmatprep.mubr.bf16.mxu0 %v487
  %1188 = vmatmul.mubr.bf16.gmra.mxu0 %v486
  %v1189 = vpop.f32.mrf.mxu0
  %v1190 = vadd.f32 %v1093, %v1189
  %v1191 = vpop.f32.mrf.mxu0
  %v1192 = vpop.f32.mrf.mxu0
  %v1193 = vadd.f32 %v1096, %v1192
  %v1194 = vpop.f32.mrf.mxu0
  %1195 = vmatprep.mubr.bf16.mxu0 %v496
  %1196 = vmatmul.mubr.bf16.gmra.mxu0 %v495
  %v1197 = vpop.f32.mrf.mxu0
  %v1198 = vadd.f32 %v1101, %v1197
  %v1199 = vpop.f32.mrf.mxu0
  %v1200 = vpop.f32.mrf.mxu0
  %v1201 = vadd.f32 %v1104, %v1200
  %v1202 = vpop.f32.mrf.mxu0
  %1203 = vmatprep.mubr.bf16.mxu0 %v505
  %1204 = vmatmul.mubr.bf16.gmra.mxu0 %v504
  %v1205 = vpop.f32.mrf.mxu0
  %v1206 = vadd.f32 %v1109, %v1205
  %v1207 = vpop.f32.mrf.mxu0
  %v1208 = vpop.f32.mrf.mxu0
  %v1209 = vadd.f32 %v1112, %v1208
  %v1210 = vpop.f32.mrf.mxu0
  %1211 = vmatprep.mubr.bf16.mxu0 %v514
  %1212 = vmatmul.mubr.bf16.gmra.mxu0 %v513
  %v1213 = vpop.f32.mrf.mxu0
  %v1214 = vadd.f32 %v1117, %v1213
  %v1215 = vpop.f32.mrf.mxu0
  %v1216 = vpop.f32.mrf.mxu0
  %v1217 = vadd.f32 %v1120, %v1216
  %v1218 = vpop.f32.mrf.mxu0
  %1219 = vmatprep.mubr.bf16.mxu0 %v523
  %1220 = vmatmul.mubr.bf16.gmra.mxu0 %v522
  %v1221 = vpop.f32.mrf.mxu0
  %v1222 = vadd.f32 %v1125, %v1221
  %v1223 = vpop.f32.mrf.mxu0
  %v1224 = vpop.f32.mrf.mxu0
  %v1225 = vadd.f32 %v1128, %v1224
  %v1226 = vpop.f32.mrf.mxu0
  %1227 = vmatprep.mubr.bf16.mxu0 %v532
  %1228 = vmatmul.mubr.bf16.gmra.mxu0 %v531
  %v1229 = vpop.f32.mrf.mxu0
  %v1230 = vadd.f32 %v1133, %v1229
  %v1231 = vpop.f32.mrf.mxu0
  %v1232 = vpop.f32.mrf.mxu0
  %v1233 = vadd.f32 %v1136, %v1232
  %v1234 = vpop.f32.mrf.mxu0
  %1235 = vdwg.mxu0
  %1236 = vmatprep.subr.bf16.mxu0 0
  %1237 = vmatpush1.bf16.msra.mxu0 %v937
  %1238 = vmatprep.subr.bf16.mxu0 0
  %1239 = vmatpush1.bf16.msra.mxu0 %v936
  %1240 = vmatprep.subr.bf16.mxu0 0
  %1241 = vmatpush1.bf16.msra.mxu0 %v935
  %1242 = vmatprep.subr.bf16.mxu0 0
  %1243 = vmatpush1.bf16.msra.mxu0 %v934
  %1244 = vmatprep.subr.bf16.mxu0 0
  %1245 = vmatpush1.bf16.msra.mxu0 %v933
  %1246 = vmatprep.subr.bf16.mxu0 0
  %1247 = vmatpush1.bf16.msra.mxu0 %v932
  %1248 = vmatprep.subr.bf16.mxu0 0
  %1249 = vmatpush1.bf16.msra.mxu0 %v931
  %1250 = vmatprep.subr.bf16.mxu0 0
  %1251 = vmatpush1.bf16.msra.mxu0 %v930
  %1252 = vmatprep.subr.bf16.mxu0 0
  %1253 = vmatpush2.bf16.msra.mxu0 %v945
  %1254 = vmatprep.subr.bf16.mxu0 0
  %1255 = vmatpush2.bf16.msra.mxu0 %v944
  %1256 = vmatprep.subr.bf16.mxu0 0
  %1257 = vmatpush2.bf16.msra.mxu0 %v943
  %1258 = vmatprep.subr.bf16.mxu0 0
  %1259 = vmatpush2.bf16.msra.mxu0 %v942
  %1260 = vmatprep.subr.bf16.mxu0 0
  %1261 = vmatpush2.bf16.msra.mxu0 %v941
  %1262 = vmatprep.subr.bf16.mxu0 0
  %1263 = vmatpush2.bf16.msra.mxu0 %v940
  %1264 = vmatprep.subr.bf16.mxu0 0
  %1265 = vmatpush2.bf16.msra.mxu0 %v939
  %1266 = vmatprep.subr.bf16.mxu0 0
  %1267 = vmatpush2.bf16.msra.mxu0 %v938
  %1268 = vmatprep.mubr.bf16.mxu0 %v471
  %1269 = vmatmul.mubr.bf16.gmra.mxu0 %v470
  %v1270 = vpop.f32.mrf.mxu0
  %v1271 = vadd.f32 %v1174, %v1270
  %v1272 = vpop.f32.mrf.mxu0
  %v1273 = vpop.f32.mrf.mxu0
  %v1274 = vadd.f32 %v1177, %v1273
  %v1275 = vpop.f32.mrf.mxu0
  %1276 = vmatprep.mubr.bf16.mxu0 %v480
  %1277 = vmatmul.mubr.bf16.gmra.mxu0 %v479
  %v1278 = vpop.f32.mrf.mxu0
  %v1279 = vadd.f32 %v1182, %v1278
  %v1280 = vpop.f32.mrf.mxu0
  %v1281 = vpop.f32.mrf.mxu0
  %v1282 = vadd.f32 %v1185, %v1281
  %v1283 = vpop.f32.mrf.mxu0
  %1284 = vmatprep.mubr.bf16.mxu0 %v489
  %1285 = vmatmul.mubr.bf16.gmra.mxu0 %v488
  %v1286 = vpop.f32.mrf.mxu0
  %v1287 = vadd.f32 %v1190, %v1286
  %v1288 = vpop.f32.mrf.mxu0
  %v1289 = vpop.f32.mrf.mxu0
  %v1290 = vadd.f32 %v1193, %v1289
  %v1291 = vpop.f32.mrf.mxu0
  %1292 = vmatprep.mubr.bf16.mxu0 %v498
  %1293 = vmatmul.mubr.bf16.gmra.mxu0 %v497
  %v1294 = vpop.f32.mrf.mxu0
  %v1295 = vadd.f32 %v1198, %v1294
  %v1296 = vpop.f32.mrf.mxu0
  %v1297 = vpop.f32.mrf.mxu0
  %v1298 = vadd.f32 %v1201, %v1297
  %v1299 = vpop.f32.mrf.mxu0
  %1300 = vmatprep.mubr.bf16.mxu0 %v507
  %1301 = vmatmul.mubr.bf16.gmra.mxu0 %v506
  %v1302 = vpop.f32.mrf.mxu0
  %v1303 = vadd.f32 %v1206, %v1302
  %v1304 = vpop.f32.mrf.mxu0
  %v1305 = vpop.f32.mrf.mxu0
  %v1306 = vadd.f32 %v1209, %v1305
  %v1307 = vpop.f32.mrf.mxu0
  %1308 = vmatprep.mubr.bf16.mxu0 %v516
  %1309 = vmatmul.mubr.bf16.gmra.mxu0 %v515
  %v1310 = vpop.f32.mrf.mxu0
  %v1311 = vadd.f32 %v1214, %v1310
  %v1312 = vpop.f32.mrf.mxu0
  %v1313 = vpop.f32.mrf.mxu0
  %v1314 = vadd.f32 %v1217, %v1313
  %v1315 = vpop.f32.mrf.mxu0
  %1316 = vmatprep.mubr.bf16.mxu0 %v525
  %1317 = vmatmul.mubr.bf16.gmra.mxu0 %v524
  %v1318 = vpop.f32.mrf.mxu0
  %v1319 = vadd.f32 %v1222, %v1318
  %v1320 = vpop.f32.mrf.mxu0
  %v1321 = vpop.f32.mrf.mxu0
  %v1322 = vadd.f32 %v1225, %v1321
  %v1323 = vpop.f32.mrf.mxu0
  %1324 = vmatprep.mubr.bf16.mxu0 %v534
  %1325 = vmatmul.mubr.bf16.gmra.mxu0 %v533
  %v1326 = vpop.f32.mrf.mxu0
  %v1327 = vadd.f32 %v1230, %v1326
  %v1328 = vpop.f32.mrf.mxu0
  %v1329 = vpop.f32.mrf.mxu0
  %v1330 = vadd.f32 %v1233, %v1329
  %v1331 = vpop.f32.mrf.mxu0
  %1332 = vdwg.mxu0
  %1333 = vmatprep.subr.bf16.mxu0 0
  %1334 = vmatpush1.bf16.msra.mxu0 %v953
  %1335 = vmatprep.subr.bf16.mxu0 0
  %1336 = vmatpush1.bf16.msra.mxu0 %v952
  %1337 = vmatprep.subr.bf16.mxu0 0
  %1338 = vmatpush1.bf16.msra.mxu0 %v951
  %1339 = vmatprep.subr.bf16.mxu0 0
  %1340 = vmatpush1.bf16.msra.mxu0 %v950
  %1341 = vmatprep.subr.bf16.mxu0 0
  %1342 = vmatpush1.bf16.msra.mxu0 %v949
  %1343 = vmatprep.subr.bf16.mxu0 0
  %1344 = vmatpush1.bf16.msra.mxu0 %v948
  %1345 = vmatprep.subr.bf16.mxu0 0
  %1346 = vmatpush1.bf16.msra.mxu0 %v947
  %1347 = vmatprep.subr.bf16.mxu0 0
  %1348 = vmatpush1.bf16.msra.mxu0 %v946
  %1349 = vmatprep.subr.bf16.mxu0 0
  %1350 = vmatpush2.bf16.msra.mxu0 %v961
  %1351 = vmatprep.subr.bf16.mxu0 0
  %1352 = vmatpush2.bf16.msra.mxu0 %v960
  %1353 = vmatprep.subr.bf16.mxu0 0
  %1354 = vmatpush2.bf16.msra.mxu0 %v959
  %1355 = vmatprep.subr.bf16.mxu0 0
  %1356 = vmatpush2.bf16.msra.mxu0 %v958
  %1357 = vmatprep.subr.bf16.mxu0 0
  %1358 = vmatpush2.bf16.msra.mxu0 %v957
  %1359 = vmatprep.subr.bf16.mxu0 0
  %1360 = vmatpush2.bf16.msra.mxu0 %v956
  %1361 = vmatprep.subr.bf16.mxu0 0
  %1362 = vmatpush2.bf16.msra.mxu0 %v955
  %1363 = vmatprep.subr.bf16.mxu0 0
  %1364 = vmatpush2.bf16.msra.mxu0 %v954
  %1365 = vmatprep.mubr.bf16.mxu0 %v473
  %1366 = vmatmul.mubr.bf16.gmra.mxu0 %v472
  %v1367 = vpop.f32.mrf.mxu0
  %v1368 = vadd.f32 %v1271, %v1367
  %v1369 = vpop.f32.mrf.mxu0
  %v1370 = vpop.f32.mrf.mxu0
  %v1371 = vadd.f32 %v1274, %v1370
  %v1372 = vpop.f32.mrf.mxu0
  %1373 = vmatprep.mubr.bf16.mxu0 %v482
  %1374 = vmatmul.mubr.bf16.gmra.mxu0 %v481
  %v1375 = vpop.f32.mrf.mxu0
  %v1376 = vadd.f32 %v1279, %v1375
  %v1377 = vpop.f32.mrf.mxu0
  %v1378 = vpop.f32.mrf.mxu0
  %v1379 = vadd.f32 %v1282, %v1378
  %v1380 = vpop.f32.mrf.mxu0
  %1381 = vmatprep.mubr.bf16.mxu0 %v491
  %1382 = vmatmul.mubr.bf16.gmra.mxu0 %v490
  %v1383 = vpop.f32.mrf.mxu0
  %v1384 = vadd.f32 %v1287, %v1383
  %v1385 = vpop.f32.mrf.mxu0
  %v1386 = vpop.f32.mrf.mxu0
  %v1387 = vadd.f32 %v1290, %v1386
  %v1388 = vpop.f32.mrf.mxu0
  %1389 = vmatprep.mubr.bf16.mxu0 %v500
  %1390 = vmatmul.mubr.bf16.gmra.mxu0 %v499
  %v1391 = vpop.f32.mrf.mxu0
  %v1392 = vadd.f32 %v1295, %v1391
  %v1393 = vpop.f32.mrf.mxu0
  %v1394 = vpop.f32.mrf.mxu0
  %v1395 = vadd.f32 %v1298, %v1394
  %v1396 = vpop.f32.mrf.mxu0
  %1397 = vmatprep.mubr.bf16.mxu0 %v509
  %1398 = vmatmul.mubr.bf16.gmra.mxu0 %v508
  %v1399 = vpop.f32.mrf.mxu0
  %v1400 = vadd.f32 %v1303, %v1399
  %v1401 = vpop.f32.mrf.mxu0
  %v1402 = vpop.f32.mrf.mxu0
  %v1403 = vadd.f32 %v1306, %v1402
  %v1404 = vpop.f32.mrf.mxu0
  %1405 = vmatprep.mubr.bf16.mxu0 %v518
  %1406 = vmatmul.mubr.bf16.gmra.mxu0 %v517
  %v1407 = vpop.f32.mrf.mxu0
  %v1408 = vadd.f32 %v1311, %v1407
  %v1409 = vpop.f32.mrf.mxu0
  %v1410 = vpop.f32.mrf.mxu0
  %v1411 = vadd.f32 %v1314, %v1410
  %v1412 = vpop.f32.mrf.mxu0
  %1413 = vmatprep.mubr.bf16.mxu0 %v527
  %1414 = vmatmul.mubr.bf16.gmra.mxu0 %v526
  %v1415 = vpop.f32.mrf.mxu0
  %v1416 = vadd.f32 %v1319, %v1415
  %v1417 = vpop.f32.mrf.mxu0
  %v1418 = vpop.f32.mrf.mxu0
  %v1419 = vadd.f32 %v1322, %v1418
  %v1420 = vpop.f32.mrf.mxu0
  %1421 = vmatprep.mubr.bf16.mxu0 %v536
  %1422 = vmatmul.mubr.bf16.gmra.mxu0 %v535
  %v1423 = vpop.f32.mrf.mxu0
  %v1424 = vadd.f32 %v1327, %v1423
  %v1425 = vpop.f32.mrf.mxu0
  %v1426 = vpop.f32.mrf.mxu0
  %v1427 = vadd.f32 %v1330, %v1426
  %v1428 = vpop.f32.mrf.mxu0
  %1429 = vdwg.mxu0
  %1430 = vmatprep.subr.bf16.mxu0 0
  %1431 = vmatpush1.bf16.msra.mxu0 %v969
  %1432 = vmatprep.subr.bf16.mxu0 0
  %1433 = vmatpush1.bf16.msra.mxu0 %v968
  %1434 = vmatprep.subr.bf16.mxu0 0
  %1435 = vmatpush1.bf16.msra.mxu0 %v967
  %1436 = vmatprep.subr.bf16.mxu0 0
  %1437 = vmatpush1.bf16.msra.mxu0 %v966
  %1438 = vmatprep.subr.bf16.mxu0 0
  %1439 = vmatpush1.bf16.msra.mxu0 %v965
  %1440 = vmatprep.subr.bf16.mxu0 0
  %1441 = vmatpush1.bf16.msra.mxu0 %v964
  %1442 = vmatprep.subr.bf16.mxu0 0
  %1443 = vmatpush1.bf16.msra.mxu0 %v963
  %1444 = vmatprep.subr.bf16.mxu0 0
  %1445 = vmatpush1.bf16.msra.mxu0 %v962
  %1446 = vmatprep.subr.bf16.mxu0 0
  %1447 = vmatpush2.bf16.msra.mxu0 0
  %1448 = vmatprep.subr.bf16.mxu0 0
  %1449 = vmatpush2.bf16.msra.mxu0 0
  %1450 = vmatprep.subr.bf16.mxu0 0
  %1451 = vmatpush2.bf16.msra.mxu0 0
  %1452 = vmatprep.subr.bf16.mxu0 0
  %1453 = vmatpush2.bf16.msra.mxu0 0
  %1454 = vmatprep.subr.bf16.mxu0 0
  %1455 = vmatpush2.bf16.msra.mxu0 0
  %1456 = vmatprep.subr.bf16.mxu0 0
  %1457 = vmatpush2.bf16.msra.mxu0 0
  %1458 = vmatprep.subr.bf16.mxu0 0
  %1459 = vmatpush2.bf16.msra.mxu0 0
  %1460 = vmatprep.subr.bf16.mxu0 0
  %1461 = vmatpush2.bf16.msra.mxu0 0
  %1462 = vmatprep.mubr.bf16.mxu0 0
  %1463 = vmatmul.mubr.bf16.gmra.mxu0 %v474
  %v1464 = vpop.f32.mrf.mxu0
  %v1465 = vadd.f32 %v1368, %v1464
  %v1466 = vpop.f32.mrf.mxu0
  %v1467 = vpop.f32.mrf.mxu0
  %v1468 = vadd.f32 %v1371, %v1467
  %v1469 = vpop.f32.mrf.mxu0
  %1470 = vmatprep.mubr.bf16.mxu0 0
  %1471 = vmatmul.mubr.bf16.gmra.mxu0 %v483
  %v1472 = vpop.f32.mrf.mxu0
  %v1473 = vadd.f32 %v1376, %v1472
  %v1474 = vpop.f32.mrf.mxu0
  %v1475 = vpop.f32.mrf.mxu0
  %v1476 = vadd.f32 %v1379, %v1475
  %v1477 = vpop.f32.mrf.mxu0
  %1478 = vmatprep.mubr.bf16.mxu0 0
  %1479 = vmatmul.mubr.bf16.gmra.mxu0 %v492
  %v1480 = vpop.f32.mrf.mxu0
  %v1481 = vadd.f32 %v1384, %v1480
  %v1482 = vpop.f32.mrf.mxu0
  %v1483 = vpop.f32.mrf.mxu0
  %v1484 = vadd.f32 %v1387, %v1483
  %v1485 = vpop.f32.mrf.mxu0
  %1486 = vmatprep.mubr.bf16.mxu0 0
  %1487 = vmatmul.mubr.bf16.gmra.mxu0 %v501
  %v1488 = vpop.f32.mrf.mxu0
  %v1489 = vadd.f32 %v1392, %v1488
  %v1490 = vpop.f32.mrf.mxu0
  %v1491 = vpop.f32.mrf.mxu0
  %v1492 = vadd.f32 %v1395, %v1491
  %v1493 = vpop.f32.mrf.mxu0
  %1494 = vmatprep.mubr.bf16.mxu0 0
  %1495 = vmatmul.mubr.bf16.gmra.mxu0 %v510
  %v1496 = vpop.f32.mrf.mxu0
  %v1497 = vadd.f32 %v1400, %v1496
  %v1498 = vpop.f32.mrf.mxu0
  %v1499 = vpop.f32.mrf.mxu0
  %v1500 = vadd.f32 %v1403, %v1499
  %v1501 = vpop.f32.mrf.mxu0
  %1502 = vmatprep.mubr.bf16.mxu0 0
  %1503 = vmatmul.mubr.bf16.gmra.mxu0 %v519
  %v1504 = vpop.f32.mrf.mxu0
  %v1505 = vadd.f32 %v1408, %v1504
  %v1506 = vpop.f32.mrf.mxu0
  %v1507 = vpop.f32.mrf.mxu0
  %v1508 = vadd.f32 %v1411, %v1507
  %v1509 = vpop.f32.mrf.mxu0
  %1510 = vmatprep.mubr.bf16.mxu0 0
  %1511 = vmatmul.mubr.bf16.gmra.mxu0 %v528
  %v1512 = vpop.f32.mrf.mxu0
  %v1513 = vadd.f32 %v1416, %v1512
  %v1514 = vpop.f32.mrf.mxu0
  %v1515 = vpop.f32.mrf.mxu0
  %v1516 = vadd.f32 %v1419, %v1515
  %v1517 = vpop.f32.mrf.mxu0
  %1518 = vmatprep.mubr.bf16.mxu0 0
  %1519 = vmatmul.mubr.bf16.gmra.mxu0 %v537
  %v1520 = vpop.f32.mrf.mxu0
  %v1521 = vadd.f32 %v1424, %v1520
  %v1522 = vpop.f32.mrf.mxu0
  %v1523 = vpop.f32.mrf.mxu0
  %v1524 = vadd.f32 %v1427, %v1523
  %v1525 = vpop.f32.mrf.mxu0
  %1526 = vdwg.mxu0
  %v1527 = vld [vmem:[%s2] sm:$0x1]
  %v1528 = vld [vmem:[%s3] sm:$0x1]
  %v1529 = vadd.f32 %v1465, %v1468
  %v1530 = vadd.f32 %v1529, %v1473
  %v1531 = vadd.f32 %v1530, %v1476
  %v1532 = vadd.f32 %v1531, %v1481
  %v1533 = vadd.f32 %v1532, %v1484
  %v1534 = vadd.f32 %v1533, %v1489
  %v1535 = vadd.f32 %v1534, %v1492
  %v1536 = vadd.f32 %v1535, %v1497
  %v1537 = vadd.f32 %v1536, %v1500
  %v1538 = vadd.f32 %v1537, %v1505
  %v1539 = vadd.f32 %v1538, %v1508
  %v1540 = vadd.f32 %v1539, %v1513
  %v1541 = vadd.f32 %v1540, %v1516
  %v1542 = vadd.f32 %v1541, %v1521
  %v1543 = vadd.f32 %v1542, %v1524
  %v1544 = vrot.slane %v1543, 4
  %v1545 = vadd.f32 %v1543, %v1544
  %v1546 = vrot.slane %v1545, 2
  %v1547 = vadd.f32 %v1545, %v1546
  %v1548 = vrot.slane %v1547, 1
  %v1549 = vadd.f32 %v1547, %v1548
  %v1550 = vmul.f32 %v1465, %v1465
  %v1551 = vmul.f32 %v1468, %v1468
  %v1552 = vmul.f32 %v1473, %v1473
  %v1553 = vmul.f32 %v1476, %v1476
  %v1554 = vmul.f32 %v1481, %v1481
  %v1555 = vmul.f32 %v1484, %v1484
  %v1556 = vmul.f32 %v1489, %v1489
  %v1557 = vmul.f32 %v1492, %v1492
  %v1558 = vmul.f32 %v1497, %v1497
  %v1559 = vmul.f32 %v1500, %v1500
  %v1560 = vmul.f32 %v1505, %v1505
  %v1561 = vmul.f32 %v1508, %v1508
  %v1562 = vmul.f32 %v1513, %v1513
  %v1563 = vmul.f32 %v1516, %v1516
  %v1564 = vmul.f32 %v1521, %v1521
  %v1565 = vmul.f32 %v1524, %v1524
  %v1566 = vadd.f32 %v1550, %v1551
  %v1567 = vadd.f32 %v1566, %v1552
  %v1568 = vadd.f32 %v1567, %v1553
  %v1569 = vadd.f32 %v1568, %v1554
  %v1570 = vadd.f32 %v1569, %v1555
  %v1571 = vadd.f32 %v1570, %v1556
  %v1572 = vadd.f32 %v1571, %v1557
  %v1573 = vadd.f32 %v1572, %v1558
  %v1574 = vadd.f32 %v1573, %v1559
  %v1575 = vadd.f32 %v1574, %v1560
  %v1576 = vadd.f32 %v1575, %v1561
  %v1577 = vadd.f32 %v1576, %v1562
  %v1578 = vadd.f32 %v1577, %v1563
  %v1579 = vadd.f32 %v1578, %v1564
  %v1580 = vadd.f32 %v1579, %v1565
  %v1581 = vrot.slane %v1580, 4
  %v1582 = vadd.f32 %v1580, %v1581
  %v1583 = vrot.slane %v1582, 2
  %v1584 = vadd.f32 %v1582, %v1583
  %v1585 = vrot.slane %v1584, 1
  %v1586 = vadd.f32 %v1584, %v1585
  %v1587 = vmul.f32 %v1549, 0.0078125
  %v1588 = vmul.f32 %v1586, 0.0078125
  %v1589 = vmul.f32 %v1587, %v1587
  %v1590 = vsub.f32 %v1588, %v1589
  %v1591 = vmax.f32 %v1590, 0.0
  %v1592 = vsub.f32 %v1465, %v1587
  %v1593 = vsub.f32 %v1468, %v1587
  %v1594 = vsub.f32 %v1473, %v1587
  %v1595 = vsub.f32 %v1476, %v1587
  %v1596 = vsub.f32 %v1481, %v1587
  %v1597 = vsub.f32 %v1484, %v1587
  %v1598 = vsub.f32 %v1489, %v1587
  %v1599 = vsub.f32 %v1492, %v1587
  %v1600 = vsub.f32 %v1497, %v1587
  %v1601 = vsub.f32 %v1500, %v1587
  %v1602 = vsub.f32 %v1505, %v1587
  %v1603 = vsub.f32 %v1508, %v1587
  %v1604 = vsub.f32 %v1513, %v1587
  %v1605 = vsub.f32 %v1516, %v1587
  %v1606 = vsub.f32 %v1521, %v1587
  %v1607 = vsub.f32 %v1524, %v1587
  %v1608 = vadd.f32 %v1591, 1e-05
  %v1609 = vrsqrt.pop %v1608
  %v1610 = vmul.f32 %v1592, %v1609
  %v1611 = vmul.f32 %v1593, %v1609
  %v1612 = vmul.f32 %v1594, %v1609
  %v1613 = vmul.f32 %v1595, %v1609
  %v1614 = vmul.f32 %v1596, %v1609
  %v1615 = vmul.f32 %v1597, %v1609
  %v1616 = vmul.f32 %v1598, %v1609
  %v1617 = vmul.f32 %v1599, %v1609
  %v1618 = vmul.f32 %v1600, %v1609
  %v1619 = vmul.f32 %v1601, %v1609
  %v1620 = vmul.f32 %v1602, %v1609
  %v1621 = vmul.f32 %v1603, %v1609
  %v1622 = vmul.f32 %v1604, %v1609
  %v1623 = vmul.f32 %v1605, %v1609
  %v1624 = vmul.f32 %v1606, %v1609
  %v1625 = vmul.f32 %v1607, %v1609
  %v1627 = vlaneseq
  %v1628 = vshrl.u32 %v1627, 7
  %v1629 = vsub.s32 0, %v1628
  %v1630 = vrot.slane %v1527, %v1629
  %v1632 = vmul.f32 %v1610, %v1630
  %v1633 = vmul.f32 %v1611, %v1630
  %v1634 = vmul.f32 %v1612, %v1630
  %v1635 = vmul.f32 %v1613, %v1630
  %v1636 = vmul.f32 %v1614, %v1630
  %v1637 = vmul.f32 %v1615, %v1630
  %v1638 = vmul.f32 %v1616, %v1630
  %v1639 = vmul.f32 %v1617, %v1630
  %v1640 = vmul.f32 %v1618, %v1630
  %v1641 = vmul.f32 %v1619, %v1630
  %v1642 = vmul.f32 %v1620, %v1630
  %v1643 = vmul.f32 %v1621, %v1630
  %v1644 = vmul.f32 %v1622, %v1630
  %v1645 = vmul.f32 %v1623, %v1630
  %v1646 = vmul.f32 %v1624, %v1630
  %v1647 = vmul.f32 %v1625, %v1630
  %v1649 = vlaneseq
  %v1650 = vshrl.u32 %v1649, 7
  %v1651 = vsub.s32 0, %v1650
  %v1652 = vrot.slane %v1528, %v1651
  %v1654 = vadd.f32 %v1632, %v1652
  %v1655 = vadd.f32 %v1633, %v1652
  %v1656 = vadd.f32 %v1634, %v1652
  %v1657 = vadd.f32 %v1635, %v1652
  %v1658 = vadd.f32 %v1636, %v1652
  %v1659 = vadd.f32 %v1637, %v1652
  %v1660 = vadd.f32 %v1638, %v1652
  %v1661 = vadd.f32 %v1639, %v1652
  %v1662 = vadd.f32 %v1640, %v1652
  %v1663 = vadd.f32 %v1641, %v1652
  %v1664 = vadd.f32 %v1642, %v1652
  %v1665 = vadd.f32 %v1643, %v1652
  %v1666 = vadd.f32 %v1644, %v1652
  %v1667 = vadd.f32 %v1645, %v1652
  %v1668 = vadd.f32 %v1646, %v1652
  %v1669 = vadd.f32 %v1647, %v1652
  %v1670 = vmax.f32 %v1654, 0.0
  %v1671 = vmax.f32 %v1655, 0.0
  %v1672 = vmax.f32 %v1656, 0.0
  %v1673 = vmax.f32 %v1657, 0.0
  %v1674 = vmax.f32 %v1658, 0.0
  %v1675 = vmax.f32 %v1659, 0.0
  %v1676 = vmax.f32 %v1660, 0.0
  %v1677 = vmax.f32 %v1661, 0.0
  %v1678 = vmax.f32 %v1662, 0.0
  %v1679 = vmax.f32 %v1663, 0.0
  %v1680 = vmax.f32 %v1664, 0.0
  %v1681 = vmax.f32 %v1665, 0.0
  %v1682 = vmax.f32 %v1666, 0.0
  %v1683 = vmax.f32 %v1667, 0.0
  %v1684 = vmax.f32 %v1668, 0.0
  %v1685 = vmax.f32 %v1669, 0.0
  %1686 = vst [vmem:[%s4] sm:$0xff] %v1670
  %1687 = vst [vmem:[%s4 + $0x8] sm:$0xff] %v1671
  %1688 = vst [vmem:[%s4 + $0x10] sm:$0xff] %v1672
  %1689 = vst [vmem:[%s4 + $0x18] sm:$0xff] %v1673
  %1690 = vst [vmem:[%s4 + $0x20] sm:$0xff] %v1674
  %1691 = vst [vmem:[%s4 + $0x28] sm:$0xff] %v1675
  %1692 = vst [vmem:[%s4 + $0x30] sm:$0xff] %v1676
  %1693 = vst [vmem:[%s4 + $0x38] sm:$0xff] %v1677
  %1694 = vst [vmem:[%s4 + $0x40] sm:$0xff] %v1678
  %1695 = vst [vmem:[%s4 + $0x48] sm:$0xff] %v1679
  %1696 = vst [vmem:[%s4 + $0x50] sm:$0xff] %v1680
  %1697 = vst [vmem:[%s4 + $0x58] sm:$0xff] %v1681
  %1698 = vst [vmem:[%s4 + $0x60] sm:$0xff] %v1682
  %1699 = vst [vmem:[%s4 + $0x68] sm:$0xff] %v1683
  %1700 = vst [vmem:[%s4 + $0x70] sm:$0xff] %v1684
  %1701 = vst [vmem:[%s4 + $0x78] sm:$0xff] %v1685
  // Predicated region
  $region18: #{lupnet_forward.11} parent=0 // pred_check
    _
  $region19: #{lupnet_forward.11} parent=0 // pred_check_branch
    %1703 = sbr.rel (0) target = $region21
  $region20: #{lupnet_forward.11} parent=0 // pred_region
    _
  $region21: #{lupnet_forward.11} parent=0 // pred_fallthru
    _
  // Predicated region
  $region22: #{lupnet_forward.11} parent=0 // pred_check
    _
  $region23: #{lupnet_forward.11} parent=0 // pred_check_branch
    %1705 = sbr.rel (0) target = $region25
  $region24: #{lupnet_forward.11} parent=0 // pred_region
    _
  $region25: #{lupnet_forward.11} parent=0 // pred_fallthru
    _

// kernel: lupnet_forward.12
$region0: #{lupnet_forward.12}
  #allocation0 [shape = 'u32[]', space=smem, size = 0x4, offset = 0x4, fixed_abs, tag = 'smem constant byte address 0x4 - core index']
  #allocation1 [shape = 'u32[144,128]{1,0:T(1,128)}', space=vmem, size = 0x12000, scoped, tag = 'internal scratch']
  %s0 = inlined_call_operand.vmem [shape: bf16[128,1152], index: 0, kind: input, shape index: {}]
  %s1 = inlined_call_operand.vmem [shape: bf16[1152,128], index: 1, kind: input, shape index: {}]
  %s2 = inlined_call_operand.vmem [shape: f32[1,128], index: 2, kind: input, shape index: {}]
  %s3 = inlined_call_operand.vmem [shape: f32[1,128], index: 3, kind: input, shape index: {}]
  %s4 = inlined_call_operand.vmem [shape: f32[128,128], index: 4, kind: input, shape index: {}]
  %s5 = inlined_call_operand.vmem [shape: f32[128,128], index: 5, kind: output, shape index: {}]
  %s6 = sld [smem:[#allocation0]]
  $region30: #{lupnet_forward.12} parent=0
    _
  %s8 = ssub.s32 1, %s6
  %s9 = scalar_select 0, %s8, %s6
  // Predicated region
  $region2: #{lupnet_forward.12} parent=0 // pred_check
    _
  $region3: #{lupnet_forward.12} parent=0 // pred_check_branch
    %11 = sbr.rel (0) target = $region5
  $region4: #{lupnet_forward.12} parent=0 // pred_region
    _
  $region5: #{lupnet_forward.12} parent=0 // pred_fallthru
    _
  // Predicated region
  $region6: #{lupnet_forward.12} parent=0 // pred_check
    _
  $region7: #{lupnet_forward.12} parent=0 // pred_check_branch
    %13 = sbr.rel (0) target = $region9
  $region8: #{lupnet_forward.12} parent=0 // pred_region
    _
  $region9: #{lupnet_forward.12} parent=0 // pred_fallthru
    _
  // Predicated region
  $region10: #{lupnet_forward.12} parent=0 // pred_check
    _
  $region11: #{lupnet_forward.12} parent=0 // pred_check_branch
    %15 = sbr.rel (0) target = $region13
  $region12: #{lupnet_forward.12} parent=0 // pred_region
    _
  $region13: #{lupnet_forward.12} parent=0 // pred_fallthru
    _
  // Predicated region
  $region14: #{lupnet_forward.12} parent=0 // pred_check
    _
  $region15: #{lupnet_forward.12} parent=0 // pred_check_branch
    %17 = sbr.rel (0) target = $region17
  $region16: #{lupnet_forward.12} parent=0 // pred_region
    _
  $region17: #{lupnet_forward.12} parent=0 // pred_fallthru
    _
  // Predicated region
  $region18: #{lupnet_forward.12} parent=0 // pred_check
    _
  $region19: #{lupnet_forward.12} parent=0 // pred_check_branch
    %19 = sbr.rel (0) target = $region21
  $region20: #{lupnet_forward.12} parent=0 // pred_region
    _
  $region21: #{lupnet_forward.12} parent=0 // pred_fallthru
    _
  %v21 = vld [vmem:[%s0] sm:$0xff]
  %v22 = vld [vmem:[%s0 + $0x8] sm:$0xff]
  %v23 = vld [vmem:[%s0 + $0x10] sm:$0xff]
  %v24 = vld [vmem:[%s0 + $0x18] sm:$0xff]
  %v25 = vld [vmem:[%s0 + $0x20] sm:$0xf]
  %v26 = vld [vmem:[%s0 + $0x24] sm:$0xff]
  %v27 = vld [vmem:[%s0 + $0x2c] sm:$0xff]
  %v28 = vld [vmem:[%s0 + $0x34] sm:$0xff]
  %v29 = vld [vmem:[%s0 + $0x3c] sm:$0xff]
  %v30 = vld [vmem:[%s0 + $0x44] sm:$0xf]
  %v31 = vld [vmem:[%s0 + $0x48] sm:$0xff]
  %v32 = vld [vmem:[%s0 + $0x50] sm:$0xff]
  %v33 = vld [vmem:[%s0 + $0x58] sm:$0xff]
  %v34 = vld [vmem:[%s0 + $0x60] sm:$0xff]
  %v35 = vld [vmem:[%s0 + $0x68] sm:$0xf]
  %v36 = vld [vmem:[%s0 + $0x6c] sm:$0xff]
  %v37 = vld [vmem:[%s0 + $0x74] sm:$0xff]
  %v38 = vld [vmem:[%s0 + $0x7c] sm:$0xff]
  %v39 = vld [vmem:[%s0 + $0x84] sm:$0xff]
  %v40 = vld [vmem:[%s0 + $0x8c] sm:$0xf]
  %v41 = vld [vmem:[%s0 + $0x90] sm:$0xff]
  %v42 = vld [vmem:[%s0 + $0x98] sm:$0xff]
  %v43 = vld [vmem:[%s0 + $0xa0] sm:$0xff]
  %v44 = vld [vmem:[%s0 + $0xa8] sm:$0xff]
  %v45 = vld [vmem:[%s0 + $0xb0] sm:$0xf]
  %v46 = vld [vmem:[%s0 + $0xb4] sm:$0xff]
  %v47 = vld [vmem:[%s0 + $0xbc] sm:$0xff]
  %v48 = vld [vmem:[%s0 + $0xc4] sm:$0xff]
  %v49 = vld [vmem:[%s0 + $0xcc] sm:$0xff]
  %v50 = vld [vmem:[%s0 + $0xd4] sm:$0xf]
  %v51 = vld [vmem:[%s0 + $0xd8] sm:$0xff]
  %v52 = vld [vmem:[%s0 + $0xe0] sm:$0xff]
  %v53 = vld [vmem:[%s0 + $0xe8] sm:$0xff]
  %v54 = vld [vmem:[%s0 + $0xf0] sm:$0xff]
  %v55 = vld [vmem:[%s0 + $0xf8] sm:$0xf]
  %v56 = vld [vmem:[%s0 + $0xfc] sm:$0xff]
  %v57 = vld [vmem:[%s0 + $0x104] sm:$0xff]
  %v58 = vld [vmem:[%s0 + $0x10c] sm:$0xff]
  %v59 = vld [vmem:[%s0 + $0x114] sm:$0xff]
  %v60 = vld [vmem:[%s0 + $0x11c] sm:$0xf]
  %v61 = vld [vmem:[%s0 + $0x120] sm:$0xff]
  %v62 = vld [vmem:[%s0 + $0x128] sm:$0xff]
  %v63 = vld [vmem:[%s0 + $0x130] sm:$0xff]
  %v64 = vld [vmem:[%s0 + $0x138] sm:$0xff]
  %v65 = vld [vmem:[%s0 + $0x140] sm:$0xf]
  %v66 = vld [vmem:[%s0 + $0x144] sm:$0xff]
  %v67 = vld [vmem:[%s0 + $0x14c] sm:$0xff]
  %v68 = vld [vmem:[%s0 + $0x154] sm:$0xff]
  %v69 = vld [vmem:[%s0 + $0x15c] sm:$0xff]
  %v70 = vld [vmem:[%s0 + $0x164] sm:$0xf]
  %v71 = vld [vmem:[%s0 + $0x168] sm:$0xff]
  %v72 = vld [vmem:[%s0 + $0x170] sm:$0xff]
  %v73 = vld [vmem:[%s0 + $0x178] sm:$0xff]
  %v74 = vld [vmem:[%s0 + $0x180] sm:$0xff]
  %v75 = vld [vmem:[%s0 + $0x188] sm:$0xf]
  %v76 = vld [vmem:[%s0 + $0x18c] sm:$0xff]
  %v77 = vld [vmem:[%s0 + $0x194] sm:$0xff]
  %v78 = vld [vmem:[%s0 + $0x19c] sm:$0xff]
  %v79 = vld [vmem:[%s0 + $0x1a4] sm:$0xff]
  %v80 = vld [vmem:[%s0 + $0x1ac] sm:$0xf]
  %v81 = vld [vmem:[%s0 + $0x1b0] sm:$0xff]
  %v82 = vld [vmem:[%s0 + $0x1b8] sm:$0xff]
  %v83 = vld [vmem:[%s0 + $0x1c0] sm:$0xff]
  %v84 = vld [vmem:[%s0 + $0x1c8] sm:$0xff]
  %v85 = vld [vmem:[%s0 + $0x1d0] sm:$0xf]
  %v86 = vld [vmem:[%s0 + $0x1d4] sm:$0xff]
  %v87 = vld [vmem:[%s0 + $0x1dc] sm:$0xff]
  %v88 = vld [vmem:[%s0 + $0x1e4] sm:$0xff]
  %v89 = vld [vmem:[%s0 + $0x1ec] sm:$0xff]
  %v90 = vld [vmem:[%s0 + $0x1f4] sm:$0xf]
  %v91 = vld [vmem:[%s0 + $0x1f8] sm:$0xff]
  %v92 = vld [vmem:[%s0 + $0x200] sm:$0xff]
  %v93 = vld [vmem:[%s0 + $0x208] sm:$0xff]
  %v94 = vld [vmem:[%s0 + $0x210] sm:$0xff]
  %v95 = vld [vmem:[%s0 + $0x218] sm:$0xf]
  %v96 = vld [vmem:[%s0 + $0x21c] sm:$0xff]
  %v97 = vld [vmem:[%s0 + $0x224] sm:$0xff]
  %v98 = vld [vmem:[%s0 + $0x22c] sm:$0xff]
  %v99 = vld [vmem:[%s0 + $0x234] sm:$0xff]
  %v100 = vld [vmem:[%s0 + $0x23c] sm:$0xf]
  %v101 = vld [vmem:[%s1] sm:$0xf]
  %v102 = vld [vmem:[%s1 + $0x4] sm:$0xf]
  %v103 = vld [vmem:[%s1 + $0x8] sm:$0xf]
  %v104 = vld [vmem:[%s1 + $0xc] sm:$0xf]
  %v105 = vld [vmem:[%s1 + $0x10] sm:$0xf]
  %v106 = vld [vmem:[%s1 + $0x14] sm:$0xf]
  %v107 = vld [vmem:[%s1 + $0x18] sm:$0xf]
  %v108 = vld [vmem:[%s1 + $0x1c] sm:$0xf]
  %v109 = vld [vmem:[%s1 + $0x20] sm:$0xf]
  %v110 = vld [vmem:[%s1 + $0x24] sm:$0xf]
  %v111 = vld [vmem:[%s1 + $0x28] sm:$0xf]
  %v112 = vld [vmem:[%s1 + $0x2c] sm:$0xf]
  %v113 = vld [vmem:[%s1 + $0x30] sm:$0xf]
  %v114 = vld [vmem:[%s1 + $0x34] sm:$0xf]
  %v115 = vld [vmem:[%s1 + $0x38] sm:$0xf]
  %v116 = vld [vmem:[%s1 + $0x3c] sm:$0xf]
  %v117 = vld [vmem:[%s1 + $0x40] sm:$0xf]
  %v118 = vld [vmem:[%s1 + $0x44] sm:$0xf]
  %v119 = vld [vmem:[%s1 + $0x48] sm:$0xf]
  %v120 = vld [vmem:[%s1 + $0x4c] sm:$0xf]
  %v121 = vld [vmem:[%s1 + $0x50] sm:$0xf]
  %v122 = vld [vmem:[%s1 + $0x54] sm:$0xf]
  %v123 = vld [vmem:[%s1 + $0x58] sm:$0xf]
  %v124 = vld [vmem:[%s1 + $0x5c] sm:$0xf]
  %v125 = vld [vmem:[%s1 + $0x60] sm:$0xf]
  %v126 = vld [vmem:[%s1 + $0x64] sm:$0xf]
  %v127 = vld [vmem:[%s1 + $0x68] sm:$0xf]
  %v128 = vld [vmem:[%s1 + $0x6c] sm:$0xf]
  %v129 = vld [vmem:[%s1 + $0x70] sm:$0xf]
  %v130 = vld [vmem:[%s1 + $0x74] sm:$0xf]
  %v131 = vld [vmem:[%s1 + $0x78] sm:$0xf]
  %v132 = vld [vmem:[%s1 + $0x7c] sm:$0xf]
  %v133 = vld [vmem:[%s1 + $0x80] sm:$0xf]
  %v134 = vld [vmem:[%s1 + $0x84] sm:$0xf]
  %v135 = vld [vmem:[%s1 + $0x88] sm:$0xf]
  %v136 = vld [vmem:[%s1 + $0x8c] sm:$0xf]
  %v137 = vld [vmem:[%s1 + $0x90] sm:$0xf]
  %v138 = vld [vmem:[%s1 + $0x94] sm:$0xf]
  %v139 = vld [vmem:[%s1 + $0x98] sm:$0xf]
  %v140 = vld [vmem:[%s1 + $0x9c] sm:$0xf]
  %v141 = vld [vmem:[%s1 + $0xa0] sm:$0xf]
  %v142 = vld [vmem:[%s1 + $0xa4] sm:$0xf]
  %v143 = vld [vmem:[%s1 + $0xa8] sm:$0xf]
  %v144 = vld [vmem:[%s1 + $0xac] sm:$0xf]
  %v145 = vld [vmem:[%s1 + $0xb0] sm:$0xf]
  %v146 = vld [vmem:[%s1 + $0xb4] sm:$0xf]
  %v147 = vld [vmem:[%s1 + $0xb8] sm:$0xf]
  %v148 = vld [vmem:[%s1 + $0xbc] sm:$0xf]
  %v149 = vld [vmem:[%s1 + $0xc0] sm:$0xf]
  %v150 = vld [vmem:[%s1 + $0xc4] sm:$0xf]
  %v151 = vld [vmem:[%s1 + $0xc8] sm:$0xf]
  %v152 = vld [vmem:[%s1 + $0xcc] sm:$0xf]
  %v153 = vld [vmem:[%s1 + $0xd0] sm:$0xf]
  %v154 = vld [vmem:[%s1 + $0xd4] sm:$0xf]
  %v155 = vld [vmem:[%s1 + $0xd8] sm:$0xf]
  %v156 = vld [vmem:[%s1 + $0xdc] sm:$0xf]
  %v157 = vld [vmem:[%s1 + $0xe0] sm:$0xf]
  %v158 = vld [vmem:[%s1 + $0xe4] sm:$0xf]
  %v159 = vld [vmem:[%s1 + $0xe8] sm:$0xf]
  %v160 = vld [vmem:[%s1 + $0xec] sm:$0xf]
  %v161 = vld [vmem:[%s1 + $0xf0] sm:$0xf]
  %v162 = vld [vmem:[%s1 + $0xf4] sm:$0xf]
  %v163 = vld [vmem:[%s1 + $0xf8] sm:$0xf]
  %v164 = vld [vmem:[%s1 + $0xfc] sm:$0xf]
  %v165 = vld [vmem:[%s1 + $0x100] sm:$0xf]
  %v166 = vld [vmem:[%s1 + $0x104] sm:$0xf]
  %v167 = vld [vmem:[%s1 + $0x108] sm:$0xf]
  %v168 = vld [vmem:[%s1 + $0x10c] sm:$0xf]
  %v169 = vld [vmem:[%s1 + $0x110] sm:$0xf]
  %v170 = vld [vmem:[%s1 + $0x114] sm:$0xf]
  %v171 = vld [vmem:[%s1 + $0x118] sm:$0xf]
  %v172 = vld [vmem:[%s1 + $0x11c] sm:$0xf]
  %v173 = vld [vmem:[%s1 + $0x120] sm:$0xf]
  %v174 = vld [vmem:[%s1 + $0x124] sm:$0xf]
  %v175 = vld [vmem:[%s1 + $0x128] sm:$0xf]
  %v176 = vld [vmem:[%s1 + $0x12c] sm:$0xf]
  %v177 = vld [vmem:[%s1 + $0x130] sm:$0xf]
  %v178 = vld [vmem:[%s1 + $0x134] sm:$0xf]
  %v179 = vld [vmem:[%s1 + $0x138] sm:$0xf]
  %v180 = vld [vmem:[%s1 + $0x13c] sm:$0xf]
  %v181 = vld [vmem:[%s1 + $0x140] sm:$0xf]
  %v182 = vld [vmem:[%s1 + $0x144] sm:$0xf]
  %v183 = vld [vmem:[%s1 + $0x148] sm:$0xf]
  %v184 = vld [vmem:[%s1 + $0x14c] sm:$0xf]
  %v185 = vld [vmem:[%s1 + $0x150] sm:$0xf]
  %v186 = vld [vmem:[%s1 + $0x154] sm:$0xf]
  %v187 = vld [vmem:[%s1 + $0x158] sm:$0xf]
  %v188 = vld [vmem:[%s1 + $0x15c] sm:$0xf]
  %v189 = vld [vmem:[%s1 + $0x160] sm:$0xf]
  %v190 = vld [vmem:[%s1 + $0x164] sm:$0xf]
  %v191 = vld [vmem:[%s1 + $0x168] sm:$0xf]
  %v192 = vld [vmem:[%s1 + $0x16c] sm:$0xf]
  %v193 = vld [vmem:[%s1 + $0x170] sm:$0xf]
  %v194 = vld [vmem:[%s1 + $0x174] sm:$0xf]
  %v195 = vld [vmem:[%s1 + $0x178] sm:$0xf]
  %v196 = vld [vmem:[%s1 + $0x17c] sm:$0xf]
  %v197 = vld [vmem:[%s1 + $0x180] sm:$0xf]
  %v198 = vld [vmem:[%s1 + $0x184] sm:$0xf]
  %v199 = vld [vmem:[%s1 + $0x188] sm:$0xf]
  %v200 = vld [vmem:[%s1 + $0x18c] sm:$0xf]
  %v201 = vld [vmem:[%s1 + $0x190] sm:$0xf]
  %v202 = vld [vmem:[%s1 + $0x194] sm:$0xf]
  %v203 = vld [vmem:[%s1 + $0x198] sm:$0xf]
  %v204 = vld [vmem:[%s1 + $0x19c] sm:$0xf]
  %v205 = vld [vmem:[%s1 + $0x1a0] sm:$0xf]
  %v206 = vld [vmem:[%s1 + $0x1a4] sm:$0xf]
  %v207 = vld [vmem:[%s1 + $0x1a8] sm:$0xf]
  %v208 = vld [vmem:[%s1 + $0x1ac] sm:$0xf]
  %v209 = vld [vmem:[%s1 + $0x1b0] sm:$0xf]
  %v210 = vld [vmem:[%s1 + $0x1b4] sm:$0xf]
  %v211 = vld [vmem:[%s1 + $0x1b8] sm:$0xf]
  %v212 = vld [vmem:[%s1 + $0x1bc] sm:$0xf]
  %v213 = vld [vmem:[%s1 + $0x1c0] sm:$0xf]
  %v214 = vld [vmem:[%s1 + $0x1c4] sm:$0xf]
  %v215 = vld [vmem:[%s1 + $0x1c8] sm:$0xf]
  %v216 = vld [vmem:[%s1 + $0x1cc] sm:$0xf]
  %v217 = vld [vmem:[%s1 + $0x1d0] sm:$0xf]
  %v218 = vld [vmem:[%s1 + $0x1d4] sm:$0xf]
  %v219 = vld [vmem:[%s1 + $0x1d8] sm:$0xf]
  %v220 = vld [vmem:[%s1 + $0x1dc] sm:$0xf]
  %v221 = vld [vmem:[%s1 + $0x1e0] sm:$0xf]
  %v222 = vld [vmem:[%s1 + $0x1e4] sm:$0xf]
  %v223 = vld [vmem:[%s1 + $0x1e8] sm:$0xf]
  %v224 = vld [vmem:[%s1 + $0x1ec] sm:$0xf]
  %v225 = vld [vmem:[%s1 + $0x1f0] sm:$0xf]
  %v226 = vld [vmem:[%s1 + $0x1f4] sm:$0xf]
  %v227 = vld [vmem:[%s1 + $0x1f8] sm:$0xf]
  %v228 = vld [vmem:[%s1 + $0x1fc] sm:$0xf]
  %v229 = vld [vmem:[%s1 + $0x200] sm:$0xf]
  %v230 = vld [vmem:[%s1 + $0x204] sm:$0xf]
  %v231 = vld [vmem:[%s1 + $0x208] sm:$0xf]
  %v232 = vld [vmem:[%s1 + $0x20c] sm:$0xf]
  %v233 = vld [vmem:[%s1 + $0x210] sm:$0xf]
  %v234 = vld [vmem:[%s1 + $0x214] sm:$0xf]
  %v235 = vld [vmem:[%s1 + $0x218] sm:$0xf]
  %v236 = vld [vmem:[%s1 + $0x21c] sm:$0xf]
  %v237 = vld [vmem:[%s1 + $0x220] sm:$0xf]
  %v238 = vld [vmem:[%s1 + $0x224] sm:$0xf]
  %v239 = vld [vmem:[%s1 + $0x228] sm:$0xf]
  %v240 = vld [vmem:[%s1 + $0x22c] sm:$0xf]
  %v241 = vld [vmem:[%s1 + $0x230] sm:$0xf]
  %v242 = vld [vmem:[%s1 + $0x234] sm:$0xf]
  %v243 = vld [vmem:[%s1 + $0x238] sm:$0xf]
  %v244 = vld [vmem:[%s1 + $0x23c] sm:$0xf]
  %v325 = vunpack.c.l.b16 %v21
  %v326 = vunpack.c.h.b16 %v21
  %v327 = vunpack.c.l.b16 %v22
  %v328 = vunpack.c.h.b16 %v22
  %v329 = vunpack.c.l.b16 %v23
  %v330 = vunpack.c.h.b16 %v23
  %v331 = vunpack.c.l.b16 %v24
  %v332 = vunpack.c.h.b16 %v24
  %v333 = vunpack.c.l.b16 %v25
  %v334 = vunpack.c.l.b16 %v26
  %v335 = vunpack.c.h.b16 %v26
  %v336 = vunpack.c.l.b16 %v27
  %v337 = vunpack.c.h.b16 %v27
  %v338 = vunpack.c.l.b16 %v28
  %v339 = vunpack.c.h.b16 %v28
  %v340 = vunpack.c.l.b16 %v29
  %v341 = vunpack.c.h.b16 %v29
  %v342 = vunpack.c.l.b16 %v30
  %v343 = vunpack.c.l.b16 %v31
  %v344 = vunpack.c.h.b16 %v31
  %v345 = vunpack.c.l.b16 %v32
  %v346 = vunpack.c.h.b16 %v32
  %v347 = vunpack.c.l.b16 %v33
  %v348 = vunpack.c.h.b16 %v33
  %v349 = vunpack.c.l.b16 %v34
  %v350 = vunpack.c.h.b16 %v34
  %v351 = vunpack.c.l.b16 %v35
  %v352 = vunpack.c.l.b16 %v36
  %v353 = vunpack.c.h.b16 %v36
  %v354 = vunpack.c.l.b16 %v37
  %v355 = vunpack.c.h.b16 %v37
  %v356 = vunpack.c.l.b16 %v38
  %v357 = vunpack.c.h.b16 %v38
  %v358 = vunpack.c.l.b16 %v39
  %v359 = vunpack.c.h.b16 %v39
  %v360 = vunpack.c.l.b16 %v40
  %v361 = vunpack.c.l.b16 %v41
  %v362 = vunpack.c.h.b16 %v41
  %v363 = vunpack.c.l.b16 %v42
  %v364 = vunpack.c.h.b16 %v42
  %v365 = vunpack.c.l.b16 %v43
  %v366 = vunpack.c.h.b16 %v43
  %v367 = vunpack.c.l.b16 %v44
  %v368 = vunpack.c.h.b16 %v44
  %v369 = vunpack.c.l.b16 %v45
  %v370 = vunpack.c.l.b16 %v46
  %v371 = vunpack.c.h.b16 %v46
  %v372 = vunpack.c.l.b16 %v47
  %v373 = vunpack.c.h.b16 %v47
  %v374 = vunpack.c.l.b16 %v48
  %v375 = vunpack.c.h.b16 %v48
  %v376 = vunpack.c.l.b16 %v49
  %v377 = vunpack.c.h.b16 %v49
  %v378 = vunpack.c.l.b16 %v50
  %v379 = vunpack.c.l.b16 %v51
  %v380 = vunpack.c.h.b16 %v51
  %v381 = vunpack.c.l.b16 %v52
  %v382 = vunpack.c.h.b16 %v52
  %v383 = vunpack.c.l.b16 %v53
  %v384 = vunpack.c.h.b16 %v53
  %v385 = vunpack.c.l.b16 %v54
  %v386 = vunpack.c.h.b16 %v54
  %v387 = vunpack.c.l.b16 %v55
  %v388 = vunpack.c.l.b16 %v56
  %v389 = vunpack.c.h.b16 %v56
  %v390 = vunpack.c.l.b16 %v57
  %v391 = vunpack.c.h.b16 %v57
  %v392 = vunpack.c.l.b16 %v58
  %v393 = vunpack.c.h.b16 %v58
  %v394 = vunpack.c.l.b16 %v59
  %v395 = vunpack.c.h.b16 %v59
  %v396 = vunpack.c.l.b16 %v60
  %v397 = vunpack.c.l.b16 %v61
  %v398 = vunpack.c.h.b16 %v61
  %v399 = vunpack.c.l.b16 %v62
  %v400 = vunpack.c.h.b16 %v62
  %v401 = vunpack.c.l.b16 %v63
  %v402 = vunpack.c.h.b16 %v63
  %v403 = vunpack.c.l.b16 %v64
  %v404 = vunpack.c.h.b16 %v64
  %v405 = vunpack.c.l.b16 %v65
  %v406 = vunpack.c.l.b16 %v66
  %v407 = vunpack.c.h.b16 %v66
  %v408 = vunpack.c.l.b16 %v67
  %v409 = vunpack.c.h.b16 %v67
  %v410 = vunpack.c.l.b16 %v68
  %v411 = vunpack.c.h.b16 %v68
  %v412 = vunpack.c.l.b16 %v69
  %v413 = vunpack.c.h.b16 %v69
  %v414 = vunpack.c.l.b16 %v70
  %v415 = vunpack.c.l.b16 %v71
  %v416 = vunpack.c.h.b16 %v71
  %v417 = vunpack.c.l.b16 %v72
  %v418 = vunpack.c.h.b16 %v72
  %v419 = vunpack.c.l.b16 %v73
  %v420 = vunpack.c.h.b16 %v73
  %v421 = vunpack.c.l.b16 %v74
  %v422 = vunpack.c.h.b16 %v74
  %v423 = vunpack.c.l.b16 %v75
  %v424 = vunpack.c.l.b16 %v76
  %v425 = vunpack.c.h.b16 %v76
  %v426 = vunpack.c.l.b16 %v77
  %v427 = vunpack.c.h.b16 %v77
  %v428 = vunpack.c.l.b16 %v78
  %v429 = vunpack.c.h.b16 %v78
  %v430 = vunpack.c.l.b16 %v79
  %v431 = vunpack.c.h.b16 %v79
  %v432 = vunpack.c.l.b16 %v80
  %v433 = vunpack.c.l.b16 %v81
  %v434 = vunpack.c.h.b16 %v81
  %v435 = vunpack.c.l.b16 %v82
  %v436 = vunpack.c.h.b16 %v82
  %v437 = vunpack.c.l.b16 %v83
  %v438 = vunpack.c.h.b16 %v83
  %v439 = vunpack.c.l.b16 %v84
  %v440 = vunpack.c.h.b16 %v84
  %v441 = vunpack.c.l.b16 %v85
  %v442 = vunpack.c.l.b16 %v86
  %v443 = vunpack.c.h.b16 %v86
  %v444 = vunpack.c.l.b16 %v87
  %v445 = vunpack.c.h.b16 %v87
  %v446 = vunpack.c.l.b16 %v88
  %v447 = vunpack.c.h.b16 %v88
  %v448 = vunpack.c.l.b16 %v89
  %v449 = vunpack.c.h.b16 %v89
  %v450 = vunpack.c.l.b16 %v90
  %v451 = vunpack.c.l.b16 %v91
  %v452 = vunpack.c.h.b16 %v91
  %v453 = vunpack.c.l.b16 %v92
  %v454 = vunpack.c.h.b16 %v92
  %v455 = vunpack.c.l.b16 %v93
  %v456 = vunpack.c.h.b16 %v93
  %v457 = vunpack.c.l.b16 %v94
  %v458 = vunpack.c.h.b16 %v94
  %v459 = vunpack.c.l.b16 %v95
  %v460 = vunpack.c.l.b16 %v96
  %v461 = vunpack.c.h.b16 %v96
  %v462 = vunpack.c.l.b16 %v97
  %v463 = vunpack.c.h.b16 %v97
  %v464 = vunpack.c.l.b16 %v98
  %v465 = vunpack.c.h.b16 %v98
  %v466 = vunpack.c.l.b16 %v99
  %v467 = vunpack.c.h.b16 %v99
  %v468 = vunpack.c.l.b16 %v100
  %v469 = vpack.c.b16 %v334, %v325
  %v470 = vpack.c.b16 %v335, %v326
  %v471 = vpack.c.b16 %v336, %v327
  %v472 = vpack.c.b16 %v337, %v328
  %v473 = vpack.c.b16 %v338, %v329
  %v474 = vpack.c.b16 %v339, %v330
  %v475 = vpack.c.b16 %v340, %v331
  %v476 = vpack.c.b16 %v341, %v332
  %v477 = vpack.c.b16 %v342, %v333
  %v478 = vpack.c.b16 %v352, %v343
  %v479 = vpack.c.b16 %v353, %v344
  %v480 = vpack.c.b16 %v354, %v345
  %v481 = vpack.c.b16 %v355, %v346
  %v482 = vpack.c.b16 %v356, %v347
  %v483 = vpack.c.b16 %v357, %v348
  %v484 = vpack.c.b16 %v358, %v349
  %v485 = vpack.c.b16 %v359, %v350
  %v486 = vpack.c.b16 %v360, %v351
  %v487 = vpack.c.b16 %v370, %v361
  %v488 = vpack.c.b16 %v371, %v362
  %v489 = vpack.c.b16 %v372, %v363
  %v490 = vpack.c.b16 %v373, %v364
  %v491 = vpack.c.b16 %v374, %v365
  %v492 = vpack.c.b16 %v375, %v366
  %v493 = vpack.c.b16 %v376, %v367
  %v494 = vpack.c.b16 %v377, %v368
  %v495 = vpack.c.b16 %v378, %v369
  %v496 = vpack.c.b16 %v388, %v379
  %v497 = vpack.c.b16 %v389, %v380
  %v498 = vpack.c.b16 %v390, %v381
  %v499 = vpack.c.b16 %v391, %v382
  %v500 = vpack.c.b16 %v392, %v383
  %v501 = vpack.c.b16 %v393, %v384
  %v502 = vpack.c.b16 %v394, %v385
  %v503 = vpack.c.b16 %v395, %v386
  %v504 = vpack.c.b16 %v396, %v387
  %v505 = vpack.c.b16 %v406, %v397
  %v506 = vpack.c.b16 %v407, %v398
  %v507 = vpack.c.b16 %v408, %v399
  %v508 = vpack.c.b16 %v409, %v400
  %v509 = vpack.c.b16 %v410, %v401
  %v510 = vpack.c.b16 %v411, %v402
  %v511 = vpack.c.b16 %v412, %v403
  %v512 = vpack.c.b16 %v413, %v404
  %v513 = vpack.c.b16 %v414, %v405
  %v514 = vpack.c.b16 %v424, %v415
  %v515 = vpack.c.b16 %v425, %v416
  %v516 = vpack.c.b16 %v426, %v417
  %v517 = vpack.c.b16 %v427, %v418
  %v518 = vpack.c.b16 %v428, %v419
  %v519 = vpack.c.b16 %v429, %v420
  %v520 = vpack.c.b16 %v430, %v421
  %v521 = vpack.c.b16 %v431, %v422
  %v522 = vpack.c.b16 %v432, %v423
  %v523 = vpack.c.b16 %v442, %v433
  %v524 = vpack.c.b16 %v443, %v434
  %v525 = vpack.c.b16 %v444, %v435
  %v526 = vpack.c.b16 %v445, %v436
  %v527 = vpack.c.b16 %v446, %v437
  %v528 = vpack.c.b16 %v447, %v438
  %v529 = vpack.c.b16 %v448, %v439
  %v530 = vpack.c.b16 %v449, %v440
  %v531 = vpack.c.b16 %v450, %v441
  %v532 = vpack.c.b16 %v460, %v451
  %v533 = vpack.c.b16 %v461, %v452
  %v534 = vpack.c.b16 %v462, %v453
  %v535 = vpack.c.b16 %v463, %v454
  %v536 = vpack.c.b16 %v464, %v455
  %v537 = vpack.c.b16 %v465, %v456
  %v538 = vpack.c.b16 %v466, %v457
  %v539 = vpack.c.b16 %v467, %v458
  %v540 = vpack.c.b16 %v468, %v459
  %v757 = vunpack.c.l.b16 %v101
  %v758 = vunpack.c.l.b16 %v102
  %v759 = vunpack.c.l.b16 %v103
  %v760 = vunpack.c.l.b16 %v104
  %v761 = vunpack.c.l.b16 %v105
  %v762 = vunpack.c.l.b16 %v106
  %v763 = vunpack.c.l.b16 %v107
  %v764 = vunpack.c.l.b16 %v108
  %v765 = vunpack.c.l.b16 %v109
  %v766 = vunpack.c.l.b16 %v110
  %v767 = vunpack.c.l.b16 %v111
  %v768 = vunpack.c.l.b16 %v112
  %v769 = vunpack.c.l.b16 %v113
  %v770 = vunpack.c.l.b16 %v114
  %v771 = vunpack.c.l.b16 %v115
  %v772 = vunpack.c.l.b16 %v116
  %v773 = vunpack.c.l.b16 %v117
  %v774 = vunpack.c.l.b16 %v118
  %v775 = vunpack.c.l.b16 %v119
  %v776 = vunpack.c.l.b16 %v120
  %v777 = vunpack.c.l.b16 %v121
  %v778 = vunpack.c.l.b16 %v122
  %v779 = vunpack.c.l.b16 %v123
  %v780 = vunpack.c.l.b16 %v124
  %v781 = vunpack.c.l.b16 %v125
  %v782 = vunpack.c.l.b16 %v126
  %v783 = vunpack.c.l.b16 %v127
  %v784 = vunpack.c.l.b16 %v128
  %v785 = vunpack.c.l.b16 %v129
  %v786 = vunpack.c.l.b16 %v130
  %v787 = vunpack.c.l.b16 %v131
  %v788 = vunpack.c.l.b16 %v132
  %v789 = vunpack.c.l.b16 %v133
  %v790 = vunpack.c.l.b16 %v134
  %v791 = vunpack.c.l.b16 %v135
  %v792 = vunpack.c.l.b16 %v136
  %v793 = vunpack.c.l.b16 %v137
  %v794 = vunpack.c.l.b16 %v138
  %v795 = vunpack.c.l.b16 %v139
  %v796 = vunpack.c.l.b16 %v140
  %v797 = vunpack.c.l.b16 %v141
  %v798 = vunpack.c.l.b16 %v142
  %v799 = vunpack.c.l.b16 %v143
  %v800 = vunpack.c.l.b16 %v144
  %v801 = vunpack.c.l.b16 %v145
  %v802 = vunpack.c.l.b16 %v146
  %v803 = vunpack.c.l.b16 %v147
  %v804 = vunpack.c.l.b16 %v148
  %v805 = vunpack.c.l.b16 %v149
  %v806 = vunpack.c.l.b16 %v150
  %v807 = vunpack.c.l.b16 %v151
  %v808 = vunpack.c.l.b16 %v152
  %v809 = vunpack.c.l.b16 %v153
  %v810 = vunpack.c.l.b16 %v154
  %v811 = vunpack.c.l.b16 %v155
  %v812 = vunpack.c.l.b16 %v156
  %v813 = vunpack.c.l.b16 %v157
  %v814 = vunpack.c.l.b16 %v158
  %v815 = vunpack.c.l.b16 %v159
  %v816 = vunpack.c.l.b16 %v160
  %v817 = vunpack.c.l.b16 %v161
  %v818 = vunpack.c.l.b16 %v162
  %v819 = vunpack.c.l.b16 %v163
  %v820 = vunpack.c.l.b16 %v164
  %v821 = vunpack.c.l.b16 %v165
  %v822 = vunpack.c.l.b16 %v166
  %v823 = vunpack.c.l.b16 %v167
  %v824 = vunpack.c.l.b16 %v168
  %v825 = vunpack.c.l.b16 %v169
  %v826 = vunpack.c.l.b16 %v170
  %v827 = vunpack.c.l.b16 %v171
  %v828 = vunpack.c.l.b16 %v172
  %v829 = vunpack.c.l.b16 %v173
  %v830 = vunpack.c.l.b16 %v174
  %v831 = vunpack.c.l.b16 %v175
  %v832 = vunpack.c.l.b16 %v176
  %v833 = vunpack.c.l.b16 %v177
  %v834 = vunpack.c.l.b16 %v178
  %v835 = vunpack.c.l.b16 %v179
  %v836 = vunpack.c.l.b16 %v180
  %v837 = vunpack.c.l.b16 %v181
  %v838 = vunpack.c.l.b16 %v182
  %v839 = vunpack.c.l.b16 %v183
  %v840 = vunpack.c.l.b16 %v184
  %v841 = vunpack.c.l.b16 %v185
  %v842 = vunpack.c.l.b16 %v186
  %v843 = vunpack.c.l.b16 %v187
  %v844 = vunpack.c.l.b16 %v188
  %v845 = vunpack.c.l.b16 %v189
  %v846 = vunpack.c.l.b16 %v190
  %v847 = vunpack.c.l.b16 %v191
  %v848 = vunpack.c.l.b16 %v192
  %v849 = vunpack.c.l.b16 %v193
  %v850 = vunpack.c.l.b16 %v194
  %v851 = vunpack.c.l.b16 %v195
  %v852 = vunpack.c.l.b16 %v196
  %v853 = vunpack.c.l.b16 %v197
  %v854 = vunpack.c.l.b16 %v198
  %v855 = vunpack.c.l.b16 %v199
  %v856 = vunpack.c.l.b16 %v200
  %v857 = vunpack.c.l.b16 %v201
  %v858 = vunpack.c.l.b16 %v202
  %v859 = vunpack.c.l.b16 %v203
  %v860 = vunpack.c.l.b16 %v204
  %v861 = vunpack.c.l.b16 %v205
  %v862 = vunpack.c.l.b16 %v206
  %v863 = vunpack.c.l.b16 %v207
  %v864 = vunpack.c.l.b16 %v208
  %v865 = vunpack.c.l.b16 %v209
  %v866 = vunpack.c.l.b16 %v210
  %v867 = vunpack.c.l.b16 %v211
  %v868 = vunpack.c.l.b16 %v212
  %v869 = vunpack.c.l.b16 %v213
  %v870 = vunpack.c.l.b16 %v214
  %v871 = vunpack.c.l.b16 %v215
  %v872 = vunpack.c.l.b16 %v216
  %v873 = vunpack.c.l.b16 %v217
  %v874 = vunpack.c.l.b16 %v218
  %v875 = vunpack.c.l.b16 %v219
  %v876 = vunpack.c.l.b16 %v220
  %v877 = vunpack.c.l.b16 %v221
  %v878 = vunpack.c.l.b16 %v222
  %v879 = vunpack.c.l.b16 %v223
  %v880 = vunpack.c.l.b16 %v224
  %v881 = vunpack.c.l.b16 %v225
  %v882 = vunpack.c.l.b16 %v226
  %v883 = vunpack.c.l.b16 %v227
  %v884 = vunpack.c.l.b16 %v228
  %v885 = vunpack.c.l.b16 %v229
  %v886 = vunpack.c.l.b16 %v230
  %v887 = vunpack.c.l.b16 %v231
  %v888 = vunpack.c.l.b16 %v232
  %v889 = vunpack.c.l.b16 %v233
  %v890 = vunpack.c.l.b16 %v234
  %v891 = vunpack.c.l.b16 %v235
  %v892 = vunpack.c.l.b16 %v236
  %v893 = vunpack.c.l.b16 %v237
  %v894 = vunpack.c.l.b16 %v238
  %v895 = vunpack.c.l.b16 %v239
  %v896 = vunpack.c.l.b16 %v240
  %v897 = vunpack.c.l.b16 %v241
  %v898 = vunpack.c.l.b16 %v242
  %v899 = vunpack.c.l.b16 %v243
  %v900 = vunpack.c.l.b16 %v244
  %v901 = vpack.c.b16 %v758, %v757
  %v902 = vpack.c.b16 %v760, %v759
  %v903 = vpack.c.b16 %v762, %v761
  %v904 = vpack.c.b16 %v764, %v763
  %v905 = vpack.c.b16 %v766, %v765
  %v906 = vpack.c.b16 %v768, %v767
  %v907 = vpack.c.b16 %v770, %v769
  %v908 = vpack.c.b16 %v772, %v771
  %v909 = vpack.c.b16 %v774, %v773
  %v910 = vpack.c.b16 %v776, %v775
  %v911 = vpack.c.b16 %v778, %v777
  %v912 = vpack.c.b16 %v780, %v779
  %v913 = vpack.c.b16 %v782, %v781
  %v914 = vpack.c.b16 %v784, %v783
  %v915 = vpack.c.b16 %v786, %v785
  %v916 = vpack.c.b16 %v788, %v787
  %v917 = vpack.c.b16 %v790, %v789
  %v918 = vpack.c.b16 %v792, %v791
  %v919 = vpack.c.b16 %v794, %v793
  %v920 = vpack.c.b16 %v796, %v795
  %v921 = vpack.c.b16 %v798, %v797
  %v922 = vpack.c.b16 %v800, %v799
  %v923 = vpack.c.b16 %v802, %v801
  %v924 = vpack.c.b16 %v804, %v803
  %v925 = vpack.c.b16 %v806, %v805
  %v926 = vpack.c.b16 %v808, %v807
  %v927 = vpack.c.b16 %v810, %v809
  %v928 = vpack.c.b16 %v812, %v811
  %v929 = vpack.c.b16 %v814, %v813
  %v930 = vpack.c.b16 %v816, %v815
  %v931 = vpack.c.b16 %v818, %v817
  %v932 = vpack.c.b16 %v820, %v819
  %v933 = vpack.c.b16 %v822, %v821
  %v934 = vpack.c.b16 %v824, %v823
  %v935 = vpack.c.b16 %v826, %v825
  %v936 = vpack.c.b16 %v828, %v827
  %v937 = vpack.c.b16 %v830, %v829
  %v938 = vpack.c.b16 %v832, %v831
  %v939 = vpack.c.b16 %v834, %v833
  %v940 = vpack.c.b16 %v836, %v835
  %v941 = vpack.c.b16 %v838, %v837
  %v942 = vpack.c.b16 %v840, %v839
  %v943 = vpack.c.b16 %v842, %v841
  %v944 = vpack.c.b16 %v844, %v843
  %v945 = vpack.c.b16 %v846, %v845
  %v946 = vpack.c.b16 %v848, %v847
  %v947 = vpack.c.b16 %v850, %v849
  %v948 = vpack.c.b16 %v852, %v851
  %v949 = vpack.c.b16 %v854, %v853
  %v950 = vpack.c.b16 %v856, %v855
  %v951 = vpack.c.b16 %v858, %v857
  %v952 = vpack.c.b16 %v860, %v859
  %v953 = vpack.c.b16 %v862, %v861
  %v954 = vpack.c.b16 %v864, %v863
  %v955 = vpack.c.b16 %v866, %v865
  %v956 = vpack.c.b16 %v868, %v867
  %v957 = vpack.c.b16 %v870, %v869
  %v958 = vpack.c.b16 %v872, %v871
  %v959 = vpack.c.b16 %v874, %v873
  %v960 = vpack.c.b16 %v876, %v875
  %v961 = vpack.c.b16 %v878, %v877
  %v962 = vpack.c.b16 %v880, %v879
  %v963 = vpack.c.b16 %v882, %v881
  %v964 = vpack.c.b16 %v884, %v883
  %v965 = vpack.c.b16 %v886, %v885
  %v966 = vpack.c.b16 %v888, %v887
  %v967 = vpack.c.b16 %v890, %v889
  %v968 = vpack.c.b16 %v892, %v891
  %v969 = vpack.c.b16 %v894, %v893
  %v970 = vpack.c.b16 %v896, %v895
  %v971 = vpack.c.b16 %v898, %v897
  %v972 = vpack.c.b16 %v900, %v899
  %1045 = vmatprep.subr.bf16.mxu0 0
  %1046 = vmatpush1.bf16.msra.mxu0 %v908
  %1047 = vmatprep.subr.bf16.mxu0 0
  %1048 = vmatpush1.bf16.msra.mxu0 %v907
  %1049 = vmatprep.subr.bf16.mxu0 0
  %1050 = vmatpush1.bf16.msra.mxu0 %v906
  %1051 = vmatprep.subr.bf16.mxu0 0
  %1052 = vmatpush1.bf16.msra.mxu0 %v905
  %1053 = vmatprep.subr.bf16.mxu0 0
  %1054 = vmatpush1.bf16.msra.mxu0 %v904
  %1055 = vmatprep.subr.bf16.mxu0 0
  %1056 = vmatpush1.bf16.msra.mxu0 %v903
  %1057 = vmatprep.subr.bf16.mxu0 0
  %1058 = vmatpush1.bf16.msra.mxu0 %v902
  %1059 = vmatprep.subr.bf16.mxu0 0
  %1060 = vmatpush1.bf16.msra.mxu0 %v901
  %1061 = vmatprep.subr.bf16.mxu0 0
  %1062 = vmatpush2.bf16.msra.mxu0 %v916
  %1063 = vmatprep.subr.bf16.mxu0 0
  %1064 = vmatpush2.bf16.msra.mxu0 %v915
  %1065 = vmatprep.subr.bf16.mxu0 0
  %1066 = vmatpush2.bf16.msra.mxu0 %v914
  %1067 = vmatprep.subr.bf16.mxu0 0
  %1068 = vmatpush2.bf16.msra.mxu0 %v913
  %1069 = vmatprep.subr.bf16.mxu0 0
  %1070 = vmatpush2.bf16.msra.mxu0 %v912
  %1071 = vmatprep.subr.bf16.mxu0 0
  %1072 = vmatpush2.bf16.msra.mxu0 %v911
  %1073 = vmatprep.subr.bf16.mxu0 0
  %1074 = vmatpush2.bf16.msra.mxu0 %v910
  %1075 = vmatprep.subr.bf16.mxu0 0
  %1076 = vmatpush2.bf16.msra.mxu0 %v909
  %1077 = vmatprep.mubr.bf16.mxu0 %v470
  %1078 = vmatmul.mubr.bf16.gmra.mxu0 %v469
  %v1079 = vpop.f32.mrf.mxu0
  %v1080 = vadd.f32 0.0, %v1079
  %v1081 = vpop.f32.mrf.mxu0
  %v1082 = vpop.f32.mrf.mxu0
  %v1083 = vadd.f32 0.0, %v1082
  %v1084 = vpop.f32.mrf.mxu0
  %1085 = vmatprep.mubr.bf16.mxu0 %v479
  %1086 = vmatmul.mubr.bf16.gmra.mxu0 %v478
  %v1087 = vpop.f32.mrf.mxu0
  %v1088 = vadd.f32 0.0, %v1087
  %v1089 = vpop.f32.mrf.mxu0
  %v1090 = vpop.f32.mrf.mxu0
  %v1091 = vadd.f32 0.0, %v1090
  %v1092 = vpop.f32.mrf.mxu0
  %1093 = vmatprep.mubr.bf16.mxu0 %v488
  %1094 = vmatmul.mubr.bf16.gmra.mxu0 %v487
  %v1095 = vpop.f32.mrf.mxu0
  %v1096 = vadd.f32 0.0, %v1095
  %v1097 = vpop.f32.mrf.mxu0
  %v1098 = vpop.f32.mrf.mxu0
  %v1099 = vadd.f32 0.0, %v1098
  %v1100 = vpop.f32.mrf.mxu0
  %1101 = vmatprep.mubr.bf16.mxu0 %v497
  %1102 = vmatmul.mubr.bf16.gmra.mxu0 %v496
  %v1103 = vpop.f32.mrf.mxu0
  %v1104 = vadd.f32 0.0, %v1103
  %v1105 = vpop.f32.mrf.mxu0
  %v1106 = vpop.f32.mrf.mxu0
  %v1107 = vadd.f32 0.0, %v1106
  %v1108 = vpop.f32.mrf.mxu0
  %1109 = vmatprep.mubr.bf16.mxu0 %v506
  %1110 = vmatmul.mubr.bf16.gmra.mxu0 %v505
  %v1111 = vpop.f32.mrf.mxu0
  %v1112 = vadd.f32 0.0, %v1111
  %v1113 = vpop.f32.mrf.mxu0
  %v1114 = vpop.f32.mrf.mxu0
  %v1115 = vadd.f32 0.0, %v1114
  %v1116 = vpop.f32.mrf.mxu0
  %1117 = vmatprep.mubr.bf16.mxu0 %v515
  %1118 = vmatmul.mubr.bf16.gmra.mxu0 %v514
  %v1119 = vpop.f32.mrf.mxu0
  %v1120 = vadd.f32 0.0, %v1119
  %v1121 = vpop.f32.mrf.mxu0
  %v1122 = vpop.f32.mrf.mxu0
  %v1123 = vadd.f32 0.0, %v1122
  %v1124 = vpop.f32.mrf.mxu0
  %1125 = vmatprep.mubr.bf16.mxu0 %v524
  %1126 = vmatmul.mubr.bf16.gmra.mxu0 %v523
  %v1127 = vpop.f32.mrf.mxu0
  %v1128 = vadd.f32 0.0, %v1127
  %v1129 = vpop.f32.mrf.mxu0
  %v1130 = vpop.f32.mrf.mxu0
  %v1131 = vadd.f32 0.0, %v1130
  %v1132 = vpop.f32.mrf.mxu0
  %1133 = vmatprep.mubr.bf16.mxu0 %v533
  %1134 = vmatmul.mubr.bf16.gmra.mxu0 %v532
  %v1135 = vpop.f32.mrf.mxu0
  %v1136 = vadd.f32 0.0, %v1135
  %v1137 = vpop.f32.mrf.mxu0
  %v1138 = vpop.f32.mrf.mxu0
  %v1139 = vadd.f32 0.0, %v1138
  %v1140 = vpop.f32.mrf.mxu0
  %1141 = vdwg.mxu0
  %1142 = vmatprep.subr.bf16.mxu0 0
  %1143 = vmatpush1.bf16.msra.mxu0 %v924
  %1144 = vmatprep.subr.bf16.mxu0 0
  %1145 = vmatpush1.bf16.msra.mxu0 %v923
  %1146 = vmatprep.subr.bf16.mxu0 0
  %1147 = vmatpush1.bf16.msra.mxu0 %v922
  %1148 = vmatprep.subr.bf16.mxu0 0
  %1149 = vmatpush1.bf16.msra.mxu0 %v921
  %1150 = vmatprep.subr.bf16.mxu0 0
  %1151 = vmatpush1.bf16.msra.mxu0 %v920
  %1152 = vmatprep.subr.bf16.mxu0 0
  %1153 = vmatpush1.bf16.msra.mxu0 %v919
  %1154 = vmatprep.subr.bf16.mxu0 0
  %1155 = vmatpush1.bf16.msra.mxu0 %v918
  %1156 = vmatprep.subr.bf16.mxu0 0
  %1157 = vmatpush1.bf16.msra.mxu0 %v917
  %1158 = vmatprep.subr.bf16.mxu0 0
  %1159 = vmatpush2.bf16.msra.mxu0 %v932
  %1160 = vmatprep.subr.bf16.mxu0 0
  %1161 = vmatpush2.bf16.msra.mxu0 %v931
  %1162 = vmatprep.subr.bf16.mxu0 0
  %1163 = vmatpush2.bf16.msra.mxu0 %v930
  %1164 = vmatprep.subr.bf16.mxu0 0
  %1165 = vmatpush2.bf16.msra.mxu0 %v929
  %1166 = vmatprep.subr.bf16.mxu0 0
  %1167 = vmatpush2.bf16.msra.mxu0 %v928
  %1168 = vmatprep.subr.bf16.mxu0 0
  %1169 = vmatpush2.bf16.msra.mxu0 %v927
  %1170 = vmatprep.subr.bf16.mxu0 0
  %1171 = vmatpush2.bf16.msra.mxu0 %v926
  %1172 = vmatprep.subr.bf16.mxu0 0
  %1173 = vmatpush2.bf16.msra.mxu0 %v925
  %1174 = vmatprep.mubr.bf16.mxu0 %v472
  %1175 = vmatmul.mubr.bf16.gmra.mxu0 %v471
  %v1176 = vpop.f32.mrf.mxu0
  %v1177 = vadd.f32 %v1080, %v1176
  %v1178 = vpop.f32.mrf.mxu0
  %v1179 = vpop.f32.mrf.mxu0
  %v1180 = vadd.f32 %v1083, %v1179
  %v1181 = vpop.f32.mrf.mxu0
  %1182 = vmatprep.mubr.bf16.mxu0 %v481
  %1183 = vmatmul.mubr.bf16.gmra.mxu0 %v480
  %v1184 = vpop.f32.mrf.mxu0
  %v1185 = vadd.f32 %v1088, %v1184
  %v1186 = vpop.f32.mrf.mxu0
  %v1187 = vpop.f32.mrf.mxu0
  %v1188 = vadd.f32 %v1091, %v1187
  %v1189 = vpop.f32.mrf.mxu0
  %1190 = vmatprep.mubr.bf16.mxu0 %v490
  %1191 = vmatmul.mubr.bf16.gmra.mxu0 %v489
  %v1192 = vpop.f32.mrf.mxu0
  %v1193 = vadd.f32 %v1096, %v1192
  %v1194 = vpop.f32.mrf.mxu0
  %v1195 = vpop.f32.mrf.mxu0
  %v1196 = vadd.f32 %v1099, %v1195
  %v1197 = vpop.f32.mrf.mxu0
  %1198 = vmatprep.mubr.bf16.mxu0 %v499
  %1199 = vmatmul.mubr.bf16.gmra.mxu0 %v498
  %v1200 = vpop.f32.mrf.mxu0
  %v1201 = vadd.f32 %v1104, %v1200
  %v1202 = vpop.f32.mrf.mxu0
  %v1203 = vpop.f32.mrf.mxu0
  %v1204 = vadd.f32 %v1107, %v1203
  %v1205 = vpop.f32.mrf.mxu0
  %1206 = vmatprep.mubr.bf16.mxu0 %v508
  %1207 = vmatmul.mubr.bf16.gmra.mxu0 %v507
  %v1208 = vpop.f32.mrf.mxu0
  %v1209 = vadd.f32 %v1112, %v1208
  %v1210 = vpop.f32.mrf.mxu0
  %v1211 = vpop.f32.mrf.mxu0
  %v1212 = vadd.f32 %v1115, %v1211
  %v1213 = vpop.f32.mrf.mxu0
  %1214 = vmatprep.mubr.bf16.mxu0 %v517
  %1215 = vmatmul.mubr.bf16.gmra.mxu0 %v516
  %v1216 = vpop.f32.mrf.mxu0
  %v1217 = vadd.f32 %v1120, %v1216
  %v1218 = vpop.f32.mrf.mxu0
  %v1219 = vpop.f32.mrf.mxu0
  %v1220 = vadd.f32 %v1123, %v1219
  %v1221 = vpop.f32.mrf.mxu0
  %1222 = vmatprep.mubr.bf16.mxu0 %v526
  %1223 = vmatmul.mubr.bf16.gmra.mxu0 %v525
  %v1224 = vpop.f32.mrf.mxu0
  %v1225 = vadd.f32 %v1128, %v1224
  %v1226 = vpop.f32.mrf.mxu0
  %v1227 = vpop.f32.mrf.mxu0
  %v1228 = vadd.f32 %v1131, %v1227
  %v1229 = vpop.f32.mrf.mxu0
  %1230 = vmatprep.mubr.bf16.mxu0 %v535
  %1231 = vmatmul.mubr.bf16.gmra.mxu0 %v534
  %v1232 = vpop.f32.mrf.mxu0
  %v1233 = vadd.f32 %v1136, %v1232
  %v1234 = vpop.f32.mrf.mxu0
  %v1235 = vpop.f32.mrf.mxu0
  %v1236 = vadd.f32 %v1139, %v1235
  %v1237 = vpop.f32.mrf.mxu0
  %1238 = vdwg.mxu0
  %1239 = vmatprep.subr.bf16.mxu0 0
  %1240 = vmatpush1.bf16.msra.mxu0 %v940
  %1241 = vmatprep.subr.bf16.mxu0 0
  %1242 = vmatpush1.bf16.msra.mxu0 %v939
  %1243 = vmatprep.subr.bf16.mxu0 0
  %1244 = vmatpush1.bf16.msra.mxu0 %v938
  %1245 = vmatprep.subr.bf16.mxu0 0
  %1246 = vmatpush1.bf16.msra.mxu0 %v937
  %1247 = vmatprep.subr.bf16.mxu0 0
  %1248 = vmatpush1.bf16.msra.mxu0 %v936
  %1249 = vmatprep.subr.bf16.mxu0 0
  %1250 = vmatpush1.bf16.msra.mxu0 %v935
  %1251 = vmatprep.subr.bf16.mxu0 0
  %1252 = vmatpush1.bf16.msra.mxu0 %v934
  %1253 = vmatprep.subr.bf16.mxu0 0
  %1254 = vmatpush1.bf16.msra.mxu0 %v933
  %1255 = vmatprep.subr.bf16.mxu0 0
  %1256 = vmatpush2.bf16.msra.mxu0 %v948
  %1257 = vmatprep.subr.bf16.mxu0 0
  %1258 = vmatpush2.bf16.msra.mxu0 %v947
  %1259 = vmatprep.subr.bf16.mxu0 0
  %1260 = vmatpush2.bf16.msra.mxu0 %v946
  %1261 = vmatprep.subr.bf16.mxu0 0
  %1262 = vmatpush2.bf16.msra.mxu0 %v945
  %1263 = vmatprep.subr.bf16.mxu0 0
  %1264 = vmatpush2.bf16.msra.mxu0 %v944
  %1265 = vmatprep.subr.bf16.mxu0 0
  %1266 = vmatpush2.bf16.msra.mxu0 %v943
  %1267 = vmatprep.subr.bf16.mxu0 0
  %1268 = vmatpush2.bf16.msra.mxu0 %v942
  %1269 = vmatprep.subr.bf16.mxu0 0
  %1270 = vmatpush2.bf16.msra.mxu0 %v941
  %1271 = vmatprep.mubr.bf16.mxu0 %v474
  %1272 = vmatmul.mubr.bf16.gmra.mxu0 %v473
  %v1273 = vpop.f32.mrf.mxu0
  %v1274 = vadd.f32 %v1177, %v1273
  %v1275 = vpop.f32.mrf.mxu0
  %v1276 = vpop.f32.mrf.mxu0
  %v1277 = vadd.f32 %v1180, %v1276
  %v1278 = vpop.f32.mrf.mxu0
  %1279 = vmatprep.mubr.bf16.mxu0 %v483
  %1280 = vmatmul.mubr.bf16.gmra.mxu0 %v482
  %v1281 = vpop.f32.mrf.mxu0
  %v1282 = vadd.f32 %v1185, %v1281
  %v1283 = vpop.f32.mrf.mxu0
  %v1284 = vpop.f32.mrf.mxu0
  %v1285 = vadd.f32 %v1188, %v1284
  %v1286 = vpop.f32.mrf.mxu0
  %1287 = vmatprep.mubr.bf16.mxu0 %v492
  %1288 = vmatmul.mubr.bf16.gmra.mxu0 %v491
  %v1289 = vpop.f32.mrf.mxu0
  %v1290 = vadd.f32 %v1193, %v1289
  %v1291 = vpop.f32.mrf.mxu0
  %v1292 = vpop.f32.mrf.mxu0
  %v1293 = vadd.f32 %v1196, %v1292
  %v1294 = vpop.f32.mrf.mxu0
  %1295 = vmatprep.mubr.bf16.mxu0 %v501
  %1296 = vmatmul.mubr.bf16.gmra.mxu0 %v500
  %v1297 = vpop.f32.mrf.mxu0
  %v1298 = vadd.f32 %v1201, %v1297
  %v1299 = vpop.f32.mrf.mxu0
  %v1300 = vpop.f32.mrf.mxu0
  %v1301 = vadd.f32 %v1204, %v1300
  %v1302 = vpop.f32.mrf.mxu0
  %1303 = vmatprep.mubr.bf16.mxu0 %v510
  %1304 = vmatmul.mubr.bf16.gmra.mxu0 %v509
  %v1305 = vpop.f32.mrf.mxu0
  %v1306 = vadd.f32 %v1209, %v1305
  %v1307 = vpop.f32.mrf.mxu0
  %v1308 = vpop.f32.mrf.mxu0
  %v1309 = vadd.f32 %v1212, %v1308
  %v1310 = vpop.f32.mrf.mxu0
  %1311 = vmatprep.mubr.bf16.mxu0 %v519
  %1312 = vmatmul.mubr.bf16.gmra.mxu0 %v518
  %v1313 = vpop.f32.mrf.mxu0
  %v1314 = vadd.f32 %v1217, %v1313
  %v1315 = vpop.f32.mrf.mxu0
  %v1316 = vpop.f32.mrf.mxu0
  %v1317 = vadd.f32 %v1220, %v1316
  %v1318 = vpop.f32.mrf.mxu0
  %1319 = vmatprep.mubr.bf16.mxu0 %v528
  %1320 = vmatmul.mubr.bf16.gmra.mxu0 %v527
  %v1321 = vpop.f32.mrf.mxu0
  %v1322 = vadd.f32 %v1225, %v1321
  %v1323 = vpop.f32.mrf.mxu0
  %v1324 = vpop.f32.mrf.mxu0
  %v1325 = vadd.f32 %v1228, %v1324
  %v1326 = vpop.f32.mrf.mxu0
  %1327 = vmatprep.mubr.bf16.mxu0 %v537
  %1328 = vmatmul.mubr.bf16.gmra.mxu0 %v536
  %v1329 = vpop.f32.mrf.mxu0
  %v1330 = vadd.f32 %v1233, %v1329
  %v1331 = vpop.f32.mrf.mxu0
  %v1332 = vpop.f32.mrf.mxu0
  %v1333 = vadd.f32 %v1236, %v1332
  %v1334 = vpop.f32.mrf.mxu0
  %1335 = vdwg.mxu0
  %1336 = vmatprep.subr.bf16.mxu0 0
  %1337 = vmatpush1.bf16.msra.mxu0 %v956
  %1338 = vmatprep.subr.bf16.mxu0 0
  %1339 = vmatpush1.bf16.msra.mxu0 %v955
  %1340 = vmatprep.subr.bf16.mxu0 0
  %1341 = vmatpush1.bf16.msra.mxu0 %v954
  %1342 = vmatprep.subr.bf16.mxu0 0
  %1343 = vmatpush1.bf16.msra.mxu0 %v953
  %1344 = vmatprep.subr.bf16.mxu0 0
  %1345 = vmatpush1.bf16.msra.mxu0 %v952
  %1346 = vmatprep.subr.bf16.mxu0 0
  %1347 = vmatpush1.bf16.msra.mxu0 %v951
  %1348 = vmatprep.subr.bf16.mxu0 0
  %1349 = vmatpush1.bf16.msra.mxu0 %v950
  %1350 = vmatprep.subr.bf16.mxu0 0
  %1351 = vmatpush1.bf16.msra.mxu0 %v949
  %1352 = vmatprep.subr.bf16.mxu0 0
  %1353 = vmatpush2.bf16.msra.mxu0 %v964
  %1354 = vmatprep.subr.bf16.mxu0 0
  %1355 = vmatpush2.bf16.msra.mxu0 %v963
  %1356 = vmatprep.subr.bf16.mxu0 0
  %1357 = vmatpush2.bf16.msra.mxu0 %v962
  %1358 = vmatprep.subr.bf16.mxu0 0
  %1359 = vmatpush2.bf16.msra.mxu0 %v961
  %1360 = vmatprep.subr.bf16.mxu0 0
  %1361 = vmatpush2.bf16.msra.mxu0 %v960
  %1362 = vmatprep.subr.bf16.mxu0 0
  %1363 = vmatpush2.bf16.msra.mxu0 %v959
  %1364 = vmatprep.subr.bf16.mxu0 0
  %1365 = vmatpush2.bf16.msra.mxu0 %v958
  %1366 = vmatprep.subr.bf16.mxu0 0
  %1367 = vmatpush2.bf16.msra.mxu0 %v957
  %1368 = vmatprep.mubr.bf16.mxu0 %v476
  %1369 = vmatmul.mubr.bf16.gmra.mxu0 %v475
  %v1370 = vpop.f32.mrf.mxu0
  %v1371 = vadd.f32 %v1274, %v1370
  %v1372 = vpop.f32.mrf.mxu0
  %v1373 = vpop.f32.mrf.mxu0
  %v1374 = vadd.f32 %v1277, %v1373
  %v1375 = vpop.f32.mrf.mxu0
  %1376 = vmatprep.mubr.bf16.mxu0 %v485
  %1377 = vmatmul.mubr.bf16.gmra.mxu0 %v484
  %v1378 = vpop.f32.mrf.mxu0
  %v1379 = vadd.f32 %v1282, %v1378
  %v1380 = vpop.f32.mrf.mxu0
  %v1381 = vpop.f32.mrf.mxu0
  %v1382 = vadd.f32 %v1285, %v1381
  %v1383 = vpop.f32.mrf.mxu0
  %1384 = vmatprep.mubr.bf16.mxu0 %v494
  %1385 = vmatmul.mubr.bf16.gmra.mxu0 %v493
  %v1386 = vpop.f32.mrf.mxu0
  %v1387 = vadd.f32 %v1290, %v1386
  %v1388 = vpop.f32.mrf.mxu0
  %v1389 = vpop.f32.mrf.mxu0
  %v1390 = vadd.f32 %v1293, %v1389
  %v1391 = vpop.f32.mrf.mxu0
  %1392 = vmatprep.mubr.bf16.mxu0 %v503
  %1393 = vmatmul.mubr.bf16.gmra.mxu0 %v502
  %v1394 = vpop.f32.mrf.mxu0
  %v1395 = vadd.f32 %v1298, %v1394
  %v1396 = vpop.f32.mrf.mxu0
  %v1397 = vpop.f32.mrf.mxu0
  %v1398 = vadd.f32 %v1301, %v1397
  %v1399 = vpop.f32.mrf.mxu0
  %1400 = vmatprep.mubr.bf16.mxu0 %v512
  %1401 = vmatmul.mubr.bf16.gmra.mxu0 %v511
  %v1402 = vpop.f32.mrf.mxu0
  %v1403 = vadd.f32 %v1306, %v1402
  %v1404 = vpop.f32.mrf.mxu0
  %v1405 = vpop.f32.mrf.mxu0
  %v1406 = vadd.f32 %v1309, %v1405
  %v1407 = vpop.f32.mrf.mxu0
  %1408 = vmatprep.mubr.bf16.mxu0 %v521
  %1409 = vmatmul.mubr.bf16.gmra.mxu0 %v520
  %v1410 = vpop.f32.mrf.mxu0
  %v1411 = vadd.f32 %v1314, %v1410
  %v1412 = vpop.f32.mrf.mxu0
  %v1413 = vpop.f32.mrf.mxu0
  %v1414 = vadd.f32 %v1317, %v1413
  %v1415 = vpop.f32.mrf.mxu0
  %1416 = vmatprep.mubr.bf16.mxu0 %v530
  %1417 = vmatmul.mubr.bf16.gmra.mxu0 %v529
  %v1418 = vpop.f32.mrf.mxu0
  %v1419 = vadd.f32 %v1322, %v1418
  %v1420 = vpop.f32.mrf.mxu0
  %v1421 = vpop.f32.mrf.mxu0
  %v1422 = vadd.f32 %v1325, %v1421
  %v1423 = vpop.f32.mrf.mxu0
  %1424 = vmatprep.mubr.bf16.mxu0 %v539
  %1425 = vmatmul.mubr.bf16.gmra.mxu0 %v538
  %v1426 = vpop.f32.mrf.mxu0
  %v1427 = vadd.f32 %v1330, %v1426
  %v1428 = vpop.f32.mrf.mxu0
  %v1429 = vpop.f32.mrf.mxu0
  %v1430 = vadd.f32 %v1333, %v1429
  %v1431 = vpop.f32.mrf.mxu0
  %1432 = vdwg.mxu0
  %1433 = vmatprep.subr.bf16.mxu0 0
  %1434 = vmatpush1.bf16.msra.mxu0 %v972
  %1435 = vmatprep.subr.bf16.mxu0 0
  %1436 = vmatpush1.bf16.msra.mxu0 %v971
  %1437 = vmatprep.subr.bf16.mxu0 0
  %1438 = vmatpush1.bf16.msra.mxu0 %v970
  %1439 = vmatprep.subr.bf16.mxu0 0
  %1440 = vmatpush1.bf16.msra.mxu0 %v969
  %1441 = vmatprep.subr.bf16.mxu0 0
  %1442 = vmatpush1.bf16.msra.mxu0 %v968
  %1443 = vmatprep.subr.bf16.mxu0 0
  %1444 = vmatpush1.bf16.msra.mxu0 %v967
  %1445 = vmatprep.subr.bf16.mxu0 0
  %1446 = vmatpush1.bf16.msra.mxu0 %v966
  %1447 = vmatprep.subr.bf16.mxu0 0
  %1448 = vmatpush1.bf16.msra.mxu0 %v965
  %1449 = vmatprep.subr.bf16.mxu0 0
  %1450 = vmatpush2.bf16.msra.mxu0 0
  %1451 = vmatprep.subr.bf16.mxu0 0
  %1452 = vmatpush2.bf16.msra.mxu0 0
  %1453 = vmatprep.subr.bf16.mxu0 0
  %1454 = vmatpush2.bf16.msra.mxu0 0
  %1455 = vmatprep.subr.bf16.mxu0 0
  %1456 = vmatpush2.bf16.msra.mxu0 0
  %1457 = vmatprep.subr.bf16.mxu0 0
  %1458 = vmatpush2.bf16.msra.mxu0 0
  %1459 = vmatprep.subr.bf16.mxu0 0
  %1460 = vmatpush2.bf16.msra.mxu0 0
  %1461 = vmatprep.subr.bf16.mxu0 0
  %1462 = vmatpush2.bf16.msra.mxu0 0
  %1463 = vmatprep.subr.bf16.mxu0 0
  %1464 = vmatpush2.bf16.msra.mxu0 0
  %1465 = vmatprep.mubr.bf16.mxu0 0
  %1466 = vmatmul.mubr.bf16.gmra.mxu0 %v477
  %v1467 = vpop.f32.mrf.mxu0
  %v1468 = vadd.f32 %v1371, %v1467
  %v1469 = vpop.f32.mrf.mxu0
  %v1470 = vpop.f32.mrf.mxu0
  %v1471 = vadd.f32 %v1374, %v1470
  %v1472 = vpop.f32.mrf.mxu0
  %1473 = vmatprep.mubr.bf16.mxu0 0
  %1474 = vmatmul.mubr.bf16.gmra.mxu0 %v486
  %v1475 = vpop.f32.mrf.mxu0
  %v1476 = vadd.f32 %v1379, %v1475
  %v1477 = vpop.f32.mrf.mxu0
  %v1478 = vpop.f32.mrf.mxu0
  %v1479 = vadd.f32 %v1382, %v1478
  %v1480 = vpop.f32.mrf.mxu0
  %1481 = vmatprep.mubr.bf16.mxu0 0
  %1482 = vmatmul.mubr.bf16.gmra.mxu0 %v495
  %v1483 = vpop.f32.mrf.mxu0
  %v1484 = vadd.f32 %v1387, %v1483
  %v1485 = vpop.f32.mrf.mxu0
  %v1486 = vpop.f32.mrf.mxu0
  %v1487 = vadd.f32 %v1390, %v1486
  %v1488 = vpop.f32.mrf.mxu0
  %1489 = vmatprep.mubr.bf16.mxu0 0
  %1490 = vmatmul.mubr.bf16.gmra.mxu0 %v504
  %v1491 = vpop.f32.mrf.mxu0
  %v1492 = vadd.f32 %v1395, %v1491
  %v1493 = vpop.f32.mrf.mxu0
  %v1494 = vpop.f32.mrf.mxu0
  %v1495 = vadd.f32 %v1398, %v1494
  %v1496 = vpop.f32.mrf.mxu0
  %1497 = vmatprep.mubr.bf16.mxu0 0
  %1498 = vmatmul.mubr.bf16.gmra.mxu0 %v513
  %v1499 = vpop.f32.mrf.mxu0
  %v1500 = vadd.f32 %v1403, %v1499
  %v1501 = vpop.f32.mrf.mxu0
  %v1502 = vpop.f32.mrf.mxu0
  %v1503 = vadd.f32 %v1406, %v1502
  %v1504 = vpop.f32.mrf.mxu0
  %1505 = vmatprep.mubr.bf16.mxu0 0
  %1506 = vmatmul.mubr.bf16.gmra.mxu0 %v522
  %v1507 = vpop.f32.mrf.mxu0
  %v1508 = vadd.f32 %v1411, %v1507
  %v1509 = vpop.f32.mrf.mxu0
  %v1510 = vpop.f32.mrf.mxu0
  %v1511 = vadd.f32 %v1414, %v1510
  %v1512 = vpop.f32.mrf.mxu0
  %1513 = vmatprep.mubr.bf16.mxu0 0
  %1514 = vmatmul.mubr.bf16.gmra.mxu0 %v531
  %v1515 = vpop.f32.mrf.mxu0
  %v1516 = vadd.f32 %v1419, %v1515
  %v1517 = vpop.f32.mrf.mxu0
  %v1518 = vpop.f32.mrf.mxu0
  %v1519 = vadd.f32 %v1422, %v1518
  %v1520 = vpop.f32.mrf.mxu0
  %1521 = vmatprep.mubr.bf16.mxu0 0
  %1522 = vmatmul.mubr.bf16.gmra.mxu0 %v540
  %v1523 = vpop.f32.mrf.mxu0
  %v1524 = vadd.f32 %v1427, %v1523
  %v1525 = vpop.f32.mrf.mxu0
  %v1526 = vpop.f32.mrf.mxu0
  %v1527 = vadd.f32 %v1430, %v1526
  %v1528 = vpop.f32.mrf.mxu0
  %1529 = vdwg.mxu0
  %v1530 = vld [vmem:[%s2] sm:$0x1]
  %v1531 = vld [vmem:[%s3] sm:$0x1]
  %v1532 = vadd.f32 %v1468, %v1471
  %v1533 = vadd.f32 %v1532, %v1476
  %v1534 = vadd.f32 %v1533, %v1479
  %v1535 = vadd.f32 %v1534, %v1484
  %v1536 = vadd.f32 %v1535, %v1487
  %v1537 = vadd.f32 %v1536, %v1492
  %v1538 = vadd.f32 %v1537, %v1495
  %v1539 = vadd.f32 %v1538, %v1500
  %v1540 = vadd.f32 %v1539, %v1503
  %v1541 = vadd.f32 %v1540, %v1508
  %v1542 = vadd.f32 %v1541, %v1511
  %v1543 = vadd.f32 %v1542, %v1516
  %v1544 = vadd.f32 %v1543, %v1519
  %v1545 = vadd.f32 %v1544, %v1524
  %v1546 = vadd.f32 %v1545, %v1527
  %v1547 = vrot.slane %v1546, 4
  %v1548 = vadd.f32 %v1546, %v1547
  %v1549 = vrot.slane %v1548, 2
  %v1550 = vadd.f32 %v1548, %v1549
  %v1551 = vrot.slane %v1550, 1
  %v1552 = vadd.f32 %v1550, %v1551
  %v1553 = vmul.f32 %v1468, %v1468
  %v1554 = vmul.f32 %v1471, %v1471
  %v1555 = vmul.f32 %v1476, %v1476
  %v1556 = vmul.f32 %v1479, %v1479
  %v1557 = vmul.f32 %v1484, %v1484
  %v1558 = vmul.f32 %v1487, %v1487
  %v1559 = vmul.f32 %v1492, %v1492
  %v1560 = vmul.f32 %v1495, %v1495
  %v1561 = vmul.f32 %v1500, %v1500
  %v1562 = vmul.f32 %v1503, %v1503
  %v1563 = vmul.f32 %v1508, %v1508
  %v1564 = vmul.f32 %v1511, %v1511
  %v1565 = vmul.f32 %v1516, %v1516
  %v1566 = vmul.f32 %v1519, %v1519
  %v1567 = vmul.f32 %v1524, %v1524
  %v1568 = vmul.f32 %v1527, %v1527
  %v1569 = vadd.f32 %v1553, %v1554
  %v1570 = vadd.f32 %v1569, %v1555
  %v1571 = vadd.f32 %v1570, %v1556
  %v1572 = vadd.f32 %v1571, %v1557
  %v1573 = vadd.f32 %v1572, %v1558
  %v1574 = vadd.f32 %v1573, %v1559
  %v1575 = vadd.f32 %v1574, %v1560
  %v1576 = vadd.f32 %v1575, %v1561
  %v1577 = vadd.f32 %v1576, %v1562
  %v1578 = vadd.f32 %v1577, %v1563
  %v1579 = vadd.f32 %v1578, %v1564
  %v1580 = vadd.f32 %v1579, %v1565
  %v1581 = vadd.f32 %v1580, %v1566
  %v1582 = vadd.f32 %v1581, %v1567
  %v1583 = vadd.f32 %v1582, %v1568
  %v1584 = vrot.slane %v1583, 4
  %v1585 = vadd.f32 %v1583, %v1584
  %v1586 = vrot.slane %v1585, 2
  %v1587 = vadd.f32 %v1585, %v1586
  %v1588 = vrot.slane %v1587, 1
  %v1589 = vadd.f32 %v1587, %v1588
  %v1590 = vmul.f32 %v1552, 0.0078125
  %v1591 = vmul.f32 %v1589, 0.0078125
  %v1592 = vmul.f32 %v1590, %v1590
  %v1593 = vsub.f32 %v1591, %v1592
  %v1594 = vmax.f32 %v1593, 0.0
  %v1595 = vsub.f32 %v1468, %v1590
  %v1596 = vsub.f32 %v1471, %v1590
  %v1597 = vsub.f32 %v1476, %v1590
  %v1598 = vsub.f32 %v1479, %v1590
  %v1599 = vsub.f32 %v1484, %v1590
  %v1600 = vsub.f32 %v1487, %v1590
  %v1601 = vsub.f32 %v1492, %v1590
  %v1602 = vsub.f32 %v1495, %v1590
  %v1603 = vsub.f32 %v1500, %v1590
  %v1604 = vsub.f32 %v1503, %v1590
  %v1605 = vsub.f32 %v1508, %v1590
  %v1606 = vsub.f32 %v1511, %v1590
  %v1607 = vsub.f32 %v1516, %v1590
  %v1608 = vsub.f32 %v1519, %v1590
  %v1609 = vsub.f32 %v1524, %v1590
  %v1610 = vsub.f32 %v1527, %v1590
  %v1611 = vadd.f32 %v1594, 1e-05
  %v1612 = vrsqrt.pop %v1611
  %v1613 = vmul.f32 %v1595, %v1612
  %v1614 = vmul.f32 %v1596, %v1612
  %v1615 = vmul.f32 %v1597, %v1612
  %v1616 = vmul.f32 %v1598, %v1612
  %v1617 = vmul.f32 %v1599, %v1612
  %v1618 = vmul.f32 %v1600, %v1612
  %v1619 = vmul.f32 %v1601, %v1612
  %v1620 = vmul.f32 %v1602, %v1612
  %v1621 = vmul.f32 %v1603, %v1612
  %v1622 = vmul.f32 %v1604, %v1612
  %v1623 = vmul.f32 %v1605, %v1612
  %v1624 = vmul.f32 %v1606, %v1612
  %v1625 = vmul.f32 %v1607, %v1612
  %v1626 = vmul.f32 %v1608, %v1612
  %v1627 = vmul.f32 %v1609, %v1612
  %v1628 = vmul.f32 %v1610, %v1612
  %v1630 = vlaneseq
  %v1631 = vshrl.u32 %v1630, 7
  %v1632 = vsub.s32 0, %v1631
  %v1633 = vrot.slane %v1530, %v1632
  %v1635 = vmul.f32 %v1613, %v1633
  %v1636 = vmul.f32 %v1614, %v1633
  %v1637 = vmul.f32 %v1615, %v1633
  %v1638 = vmul.f32 %v1616, %v1633
  %v1639 = vmul.f32 %v1617, %v1633
  %v1640 = vmul.f32 %v1618, %v1633
  %v1641 = vmul.f32 %v1619, %v1633
  %v1642 = vmul.f32 %v1620, %v1633
  %v1643 = vmul.f32 %v1621, %v1633
  %v1644 = vmul.f32 %v1622, %v1633
  %v1645 = vmul.f32 %v1623, %v1633
  %v1646 = vmul.f32 %v1624, %v1633
  %v1647 = vmul.f32 %v1625, %v1633
  %v1648 = vmul.f32 %v1626, %v1633
  %v1649 = vmul.f32 %v1627, %v1633
  %v1650 = vmul.f32 %v1628, %v1633
  %v1652 = vlaneseq
  %v1653 = vshrl.u32 %v1652, 7
  %v1654 = vsub.s32 0, %v1653
  %v1655 = vrot.slane %v1531, %v1654
  %v1657 = vadd.f32 %v1635, %v1655
  %v1658 = vadd.f32 %v1636, %v1655
  %v1659 = vadd.f32 %v1637, %v1655
  %v1660 = vadd.f32 %v1638, %v1655
  %v1661 = vadd.f32 %v1639, %v1655
  %v1662 = vadd.f32 %v1640, %v1655
  %v1663 = vadd.f32 %v1641, %v1655
  %v1664 = vadd.f32 %v1642, %v1655
  %v1665 = vadd.f32 %v1643, %v1655
  %v1666 = vadd.f32 %v1644, %v1655
  %v1667 = vadd.f32 %v1645, %v1655
  %v1668 = vadd.f32 %v1646, %v1655
  %v1669 = vadd.f32 %v1647, %v1655
  %v1670 = vadd.f32 %v1648, %v1655
  %v1671 = vadd.f32 %v1649, %v1655
  %v1672 = vadd.f32 %v1650, %v1655
  %v1673 = vld [vmem:[%s4] sm:$0xff]
  %v1674 = vld [vmem:[%s4 + $0x8] sm:$0xff]
  %v1675 = vld [vmem:[%s4 + $0x10] sm:$0xff]
  %v1676 = vld [vmem:[%s4 + $0x18] sm:$0xff]
  %v1677 = vld [vmem:[%s4 + $0x20] sm:$0xff]
  %v1678 = vld [vmem:[%s4 + $0x28] sm:$0xff]
  %v1679 = vld [vmem:[%s4 + $0x30] sm:$0xff]
  %v1680 = vld [vmem:[%s4 + $0x38] sm:$0xff]
  %v1681 = vld [vmem:[%s4 + $0x40] sm:$0xff]
  %v1682 = vld [vmem:[%s4 + $0x48] sm:$0xff]
  %v1683 = vld [vmem:[%s4 + $0x50] sm:$0xff]
  %v1684 = vld [vmem:[%s4 + $0x58] sm:$0xff]
  %v1685 = vld [vmem:[%s4 + $0x60] sm:$0xff]
  %v1686 = vld [vmem:[%s4 + $0x68] sm:$0xff]
  %v1687 = vld [vmem:[%s4 + $0x70] sm:$0xff]
  %v1688 = vld [vmem:[%s4 + $0x78] sm:$0xff]
  %v1689 = vadd.f32 %v1657, %v1673
  %v1690 = vadd.f32 %v1658, %v1674
  %v1691 = vadd.f32 %v1659, %v1675
  %v1692 = vadd.f32 %v1660, %v1676
  %v1693 = vadd.f32 %v1661, %v1677
  %v1694 = vadd.f32 %v1662, %v1678
  %v1695 = vadd.f32 %v1663, %v1679
  %v1696 = vadd.f32 %v1664, %v1680
  %v1697 = vadd.f32 %v1665, %v1681
  %v1698 = vadd.f32 %v1666, %v1682
  %v1699 = vadd.f32 %v1667, %v1683
  %v1700 = vadd.f32 %v1668, %v1684
  %v1701 = vadd.f32 %v1669, %v1685
  %v1702 = vadd.f32 %v1670, %v1686
  %v1703 = vadd.f32 %v1671, %v1687
  %v1704 = vadd.f32 %v1672, %v1688
  %v1705 = vmax.f32 %v1689, 0.0
  %v1706 = vmax.f32 %v1690, 0.0
  %v1707 = vmax.f32 %v1691, 0.0
  %v1708 = vmax.f32 %v1692, 0.0
  %v1709 = vmax.f32 %v1693, 0.0
  %v1710 = vmax.f32 %v1694, 0.0
  %v1711 = vmax.f32 %v1695, 0.0
  %v1712 = vmax.f32 %v1696, 0.0
  %v1713 = vmax.f32 %v1697, 0.0
  %v1714 = vmax.f32 %v1698, 0.0
  %v1715 = vmax.f32 %v1699, 0.0
  %v1716 = vmax.f32 %v1700, 0.0
  %v1717 = vmax.f32 %v1701, 0.0
  %v1718 = vmax.f32 %v1702, 0.0
  %v1719 = vmax.f32 %v1703, 0.0
  %v1720 = vmax.f32 %v1704, 0.0
  %1721 = vst [vmem:[%s5] sm:$0xff] %v1705
  %1722 = vst [vmem:[%s5 + $0x8] sm:$0xff] %v1706
  %1723 = vst [vmem:[%s5 + $0x10] sm:$0xff] %v1707
  %1724 = vst [vmem:[%s5 + $0x18] sm:$0xff] %v1708
  %1725 = vst [vmem:[%s5 + $0x20] sm:$0xff] %v1709
  %1726 = vst [vmem:[%s5 + $0x28] sm:$0xff] %v1710
  %1727 = vst [vmem:[%s5 + $0x30] sm:$0xff] %v1711
  %1728 = vst [vmem:[%s5 + $0x38] sm:$0xff] %v1712
  %1729 = vst [vmem:[%s5 + $0x40] sm:$0xff] %v1713
  %1730 = vst [vmem:[%s5 + $0x48] sm:$0xff] %v1714
  %1731 = vst [vmem:[%s5 + $0x50] sm:$0xff] %v1715
  %1732 = vst [vmem:[%s5 + $0x58] sm:$0xff] %v1716
  %1733 = vst [vmem:[%s5 + $0x60] sm:$0xff] %v1717
  %1734 = vst [vmem:[%s5 + $0x68] sm:$0xff] %v1718
  %1735 = vst [vmem:[%s5 + $0x70] sm:$0xff] %v1719
  %1736 = vst [vmem:[%s5 + $0x78] sm:$0xff] %v1720
  // Predicated region
  $region22: #{lupnet_forward.12} parent=0 // pred_check
    _
  $region23: #{lupnet_forward.12} parent=0 // pred_check_branch
    %1738 = sbr.rel (0) target = $region25
  $region24: #{lupnet_forward.12} parent=0 // pred_region
    _
  $region25: #{lupnet_forward.12} parent=0 // pred_fallthru
    _
  // Predicated region
  $region26: #{lupnet_forward.12} parent=0 // pred_check
    _
  $region27: #{lupnet_forward.12} parent=0 // pred_check_branch
    %1740 = sbr.rel (0) target = $region29
  $region28: #{lupnet_forward.12} parent=0 // pred_region
    _
  $region29: #{lupnet_forward.12} parent=0 // pred_fallthru
    _

// kernel: lupnet_forward.13
$region0: #{lupnet_forward.13}
  #allocation0 [shape = 'u32[]', space=smem, size = 0x4, offset = 0x4, fixed_abs, tag = 'smem constant byte address 0x4 - core index']
  #allocation1 [shape = 'u32[144,128]{1,0:T(1,128)}', space=vmem, size = 0x12000, scoped, tag = 'internal scratch']
  %s0 = inlined_call_operand.vmem [shape: bf16[32,1152], index: 0, kind: input, shape index: {}]
  %s1 = inlined_call_operand.vmem [shape: bf16[1152,128], index: 1, kind: input, shape index: {}]
  %s2 = inlined_call_operand.vmem [shape: f32[1,128], index: 2, kind: input, shape index: {}]
  %s3 = inlined_call_operand.vmem [shape: f32[1,128], index: 3, kind: input, shape index: {}]
  %s4 = inlined_call_operand.vmem [shape: bf16[128,128], index: 4, kind: input, shape index: {}]
  %s5 = inlined_call_operand.vmem [shape: f32[1,128], index: 5, kind: input, shape index: {}]
  %s6 = inlined_call_operand.vmem [shape: f32[1,128], index: 6, kind: input, shape index: {}]
  %s7 = inlined_call_operand.vmem [shape: f32[32,128], index: 7, kind: output, shape index: {0}]
  %s8 = inlined_call_operand.vmem [shape: f32[32,128], index: 8, kind: output, shape index: {1}]
  %9 = xla_tuple %s7, %s8
  %s10 = sld [smem:[#allocation0]]
  $region46: #{lupnet_forward.13} parent=0
    _
  %s12 = ssub.s32 1, %s10
  %s13 = scalar_select 0, %s12, %s10
  // Predicated region
  $region2: #{lupnet_forward.13} parent=0 // pred_check
    _
  $region3: #{lupnet_forward.13} parent=0 // pred_check_branch
    %15 = sbr.rel (0) target = $region5
  $region4: #{lupnet_forward.13} parent=0 // pred_region
    _
  $region5: #{lupnet_forward.13} parent=0 // pred_fallthru
    _
  // Predicated region
  $region6: #{lupnet_forward.13} parent=0 // pred_check
    _
  $region7: #{lupnet_forward.13} parent=0 // pred_check_branch
    %17 = sbr.rel (0) target = $region9
  $region8: #{lupnet_forward.13} parent=0 // pred_region
    _
  $region9: #{lupnet_forward.13} parent=0 // pred_fallthru
    _
  // Predicated region
  $region10: #{lupnet_forward.13} parent=0 // pred_check
    _
  $region11: #{lupnet_forward.13} parent=0 // pred_check_branch
    %19 = sbr.rel (0) target = $region13
  $region12: #{lupnet_forward.13} parent=0 // pred_region
    _
  $region13: #{lupnet_forward.13} parent=0 // pred_fallthru
    _
  // Predicated region
  $region14: #{lupnet_forward.13} parent=0 // pred_check
    _
  $region15: #{lupnet_forward.13} parent=0 // pred_check_branch
    %21 = sbr.rel (0) target = $region17
  $region16: #{lupnet_forward.13} parent=0 // pred_region
    _
  $region17: #{lupnet_forward.13} parent=0 // pred_fallthru
    _
  // Predicated region
  $region18: #{lupnet_forward.13} parent=0 // pred_check
    _
  $region19: #{lupnet_forward.13} parent=0 // pred_check_branch
    %23 = sbr.rel (0) target = $region21
  $region20: #{lupnet_forward.13} parent=0 // pred_region
    _
  $region21: #{lupnet_forward.13} parent=0 // pred_fallthru
    _
  // Predicated region
  $region22: #{lupnet_forward.13} parent=0 // pred_check
    _
  $region23: #{lupnet_forward.13} parent=0 // pred_check_branch
    %25 = sbr.rel (0) target = $region25
  $region24: #{lupnet_forward.13} parent=0 // pred_region
    _
  $region25: #{lupnet_forward.13} parent=0 // pred_fallthru
    _
  // Predicated region
  $region26: #{lupnet_forward.13} parent=0 // pred_check
    _
  $region27: #{lupnet_forward.13} parent=0 // pred_check_branch
    %27 = sbr.rel (0) target = $region29
  $region28: #{lupnet_forward.13} parent=0 // pred_region
    _
  $region29: #{lupnet_forward.13} parent=0 // pred_fallthru
    _
  %v29 = vld [vmem:[%s0] sm:$0xff]
  %v30 = vld [vmem:[%s0 + $0x8] sm:$0xff]
  %v31 = vld [vmem:[%s0 + $0x10] sm:$0xff]
  %v32 = vld [vmem:[%s0 + $0x18] sm:$0xff]
  %v33 = vld [vmem:[%s0 + $0x20] sm:$0xf]
  %v34 = vld [vmem:[%s0 + $0x24] sm:$0xff]
  %v35 = vld [vmem:[%s0 + $0x2c] sm:$0xff]
  %v36 = vld [vmem:[%s0 + $0x34] sm:$0xff]
  %v37 = vld [vmem:[%s0 + $0x3c] sm:$0xff]
  %v38 = vld [vmem:[%s0 + $0x44] sm:$0xf]
  %v39 = vld [vmem:[%s0 + $0x48] sm:$0xff]
  %v40 = vld [vmem:[%s0 + $0x50] sm:$0xff]
  %v41 = vld [vmem:[%s0 + $0x58] sm:$0xff]
  %v42 = vld [vmem:[%s0 + $0x60] sm:$0xff]
  %v43 = vld [vmem:[%s0 + $0x68] sm:$0xf]
  %v44 = vld [vmem:[%s0 + $0x6c] sm:$0xff]
  %v45 = vld [vmem:[%s0 + $0x74] sm:$0xff]
  %v46 = vld [vmem:[%s0 + $0x7c] sm:$0xff]
  %v47 = vld [vmem:[%s0 + $0x84] sm:$0xff]
  %v48 = vld [vmem:[%s0 + $0x8c] sm:$0xf]
  %v49 = vld [vmem:[%s1] sm:$0xf]
  %v50 = vld [vmem:[%s1 + $0x4] sm:$0xf]
  %v51 = vld [vmem:[%s1 + $0x8] sm:$0xf]
  %v52 = vld [vmem:[%s1 + $0xc] sm:$0xf]
  %v53 = vld [vmem:[%s1 + $0x10] sm:$0xf]
  %v54 = vld [vmem:[%s1 + $0x14] sm:$0xf]
  %v55 = vld [vmem:[%s1 + $0x18] sm:$0xf]
  %v56 = vld [vmem:[%s1 + $0x1c] sm:$0xf]
  %v57 = vld [vmem:[%s1 + $0x20] sm:$0xf]
  %v58 = vld [vmem:[%s1 + $0x24] sm:$0xf]
  %v59 = vld [vmem:[%s1 + $0x28] sm:$0xf]
  %v60 = vld [vmem:[%s1 + $0x2c] sm:$0xf]
  %v61 = vld [vmem:[%s1 + $0x30] sm:$0xf]
  %v62 = vld [vmem:[%s1 + $0x34] sm:$0xf]
  %v63 = vld [vmem:[%s1 + $0x38] sm:$0xf]
  %v64 = vld [vmem:[%s1 + $0x3c] sm:$0xf]
  %v65 = vld [vmem:[%s1 + $0x40] sm:$0xf]
  %v66 = vld [vmem:[%s1 + $0x44] sm:$0xf]
  %v67 = vld [vmem:[%s1 + $0x48] sm:$0xf]
  %v68 = vld [vmem:[%s1 + $0x4c] sm:$0xf]
  %v69 = vld [vmem:[%s1 + $0x50] sm:$0xf]
  %v70 = vld [vmem:[%s1 + $0x54] sm:$0xf]
  %v71 = vld [vmem:[%s1 + $0x58] sm:$0xf]
  %v72 = vld [vmem:[%s1 + $0x5c] sm:$0xf]
  %v73 = vld [vmem:[%s1 + $0x60] sm:$0xf]
  %v74 = vld [vmem:[%s1 + $0x64] sm:$0xf]
  %v75 = vld [vmem:[%s1 + $0x68] sm:$0xf]
  %v76 = vld [vmem:[%s1 + $0x6c] sm:$0xf]
  %v77 = vld [vmem:[%s1 + $0x70] sm:$0xf]
  %v78 = vld [vmem:[%s1 + $0x74] sm:$0xf]
  %v79 = vld [vmem:[%s1 + $0x78] sm:$0xf]
  %v80 = vld [vmem:[%s1 + $0x7c] sm:$0xf]
  %v81 = vld [vmem:[%s1 + $0x80] sm:$0xf]
  %v82 = vld [vmem:[%s1 + $0x84] sm:$0xf]
  %v83 = vld [vmem:[%s1 + $0x88] sm:$0xf]
  %v84 = vld [vmem:[%s1 + $0x8c] sm:$0xf]
  %v85 = vld [vmem:[%s1 + $0x90] sm:$0xf]
  %v86 = vld [vmem:[%s1 + $0x94] sm:$0xf]
  %v87 = vld [vmem:[%s1 + $0x98] sm:$0xf]
  %v88 = vld [vmem:[%s1 + $0x9c] sm:$0xf]
  %v89 = vld [vmem:[%s1 + $0xa0] sm:$0xf]
  %v90 = vld [vmem:[%s1 + $0xa4] sm:$0xf]
  %v91 = vld [vmem:[%s1 + $0xa8] sm:$0xf]
  %v92 = vld [vmem:[%s1 + $0xac] sm:$0xf]
  %v93 = vld [vmem:[%s1 + $0xb0] sm:$0xf]
  %v94 = vld [vmem:[%s1 + $0xb4] sm:$0xf]
  %v95 = vld [vmem:[%s1 + $0xb8] sm:$0xf]
  %v96 = vld [vmem:[%s1 + $0xbc] sm:$0xf]
  %v97 = vld [vmem:[%s1 + $0xc0] sm:$0xf]
  %v98 = vld [vmem:[%s1 + $0xc4] sm:$0xf]
  %v99 = vld [vmem:[%s1 + $0xc8] sm:$0xf]
  %v100 = vld [vmem:[%s1 + $0xcc] sm:$0xf]
  %v101 = vld [vmem:[%s1 + $0xd0] sm:$0xf]
  %v102 = vld [vmem:[%s1 + $0xd4] sm:$0xf]
  %v103 = vld [vmem:[%s1 + $0xd8] sm:$0xf]
  %v104 = vld [vmem:[%s1 + $0xdc] sm:$0xf]
  %v105 = vld [vmem:[%s1 + $0xe0] sm:$0xf]
  %v106 = vld [vmem:[%s1 + $0xe4] sm:$0xf]
  %v107 = vld [vmem:[%s1 + $0xe8] sm:$0xf]
  %v108 = vld [vmem:[%s1 + $0xec] sm:$0xf]
  %v109 = vld [vmem:[%s1 + $0xf0] sm:$0xf]
  %v110 = vld [vmem:[%s1 + $0xf4] sm:$0xf]
  %v111 = vld [vmem:[%s1 + $0xf8] sm:$0xf]
  %v112 = vld [vmem:[%s1 + $0xfc] sm:$0xf]
  %v113 = vld [vmem:[%s1 + $0x100] sm:$0xf]
  %v114 = vld [vmem:[%s1 + $0x104] sm:$0xf]
  %v115 = vld [vmem:[%s1 + $0x108] sm:$0xf]
  %v116 = vld [vmem:[%s1 + $0x10c] sm:$0xf]
  %v117 = vld [vmem:[%s1 + $0x110] sm:$0xf]
  %v118 = vld [vmem:[%s1 + $0x114] sm:$0xf]
  %v119 = vld [vmem:[%s1 + $0x118] sm:$0xf]
  %v120 = vld [vmem:[%s1 + $0x11c] sm:$0xf]
  %v121 = vld [vmem:[%s1 + $0x120] sm:$0xf]
  %v122 = vld [vmem:[%s1 + $0x124] sm:$0xf]
  %v123 = vld [vmem:[%s1 + $0x128] sm:$0xf]
  %v124 = vld [vmem:[%s1 + $0x12c] sm:$0xf]
  %v125 = vld [vmem:[%s1 + $0x130] sm:$0xf]
  %v126 = vld [vmem:[%s1 + $0x134] sm:$0xf]
  %v127 = vld [vmem:[%s1 + $0x138] sm:$0xf]
  %v128 = vld [vmem:[%s1 + $0x13c] sm:$0xf]
  %v129 = vld [vmem:[%s1 + $0x140] sm:$0xf]
  %v130 = vld [vmem:[%s1 + $0x144] sm:$0xf]
  %v131 = vld [vmem:[%s1 + $0x148] sm:$0xf]
  %v132 = vld [vmem:[%s1 + $0x14c] sm:$0xf]
  %v133 = vld [vmem:[%s1 + $0x150] sm:$0xf]
  %v134 = vld [vmem:[%s1 + $0x154] sm:$0xf]
  %v135 = vld [vmem:[%s1 + $0x158] sm:$0xf]
  %v136 = vld [vmem:[%s1 + $0x15c] sm:$0xf]
  %v137 = vld [vmem:[%s1 + $0x160] sm:$0xf]
  %v138 = vld [vmem:[%s1 + $0x164] sm:$0xf]
  %v139 = vld [vmem:[%s1 + $0x168] sm:$0xf]
  %v140 = vld [vmem:[%s1 + $0x16c] sm:$0xf]
  %v141 = vld [vmem:[%s1 + $0x170] sm:$0xf]
  %v142 = vld [vmem:[%s1 + $0x174] sm:$0xf]
  %v143 = vld [vmem:[%s1 + $0x178] sm:$0xf]
  %v144 = vld [vmem:[%s1 + $0x17c] sm:$0xf]
  %v145 = vld [vmem:[%s1 + $0x180] sm:$0xf]
  %v146 = vld [vmem:[%s1 + $0x184] sm:$0xf]
  %v147 = vld [vmem:[%s1 + $0x188] sm:$0xf]
  %v148 = vld [vmem:[%s1 + $0x18c] sm:$0xf]
  %v149 = vld [vmem:[%s1 + $0x190] sm:$0xf]
  %v150 = vld [vmem:[%s1 + $0x194] sm:$0xf]
  %v151 = vld [vmem:[%s1 + $0x198] sm:$0xf]
  %v152 = vld [vmem:[%s1 + $0x19c] sm:$0xf]
  %v153 = vld [vmem:[%s1 + $0x1a0] sm:$0xf]
  %v154 = vld [vmem:[%s1 + $0x1a4] sm:$0xf]
  %v155 = vld [vmem:[%s1 + $0x1a8] sm:$0xf]
  %v156 = vld [vmem:[%s1 + $0x1ac] sm:$0xf]
  %v157 = vld [vmem:[%s1 + $0x1b0] sm:$0xf]
  %v158 = vld [vmem:[%s1 + $0x1b4] sm:$0xf]
  %v159 = vld [vmem:[%s1 + $0x1b8] sm:$0xf]
  %v160 = vld [vmem:[%s1 + $0x1bc] sm:$0xf]
  %v161 = vld [vmem:[%s1 + $0x1c0] sm:$0xf]
  %v162 = vld [vmem:[%s1 + $0x1c4] sm:$0xf]
  %v163 = vld [vmem:[%s1 + $0x1c8] sm:$0xf]
  %v164 = vld [vmem:[%s1 + $0x1cc] sm:$0xf]
  %v165 = vld [vmem:[%s1 + $0x1d0] sm:$0xf]
  %v166 = vld [vmem:[%s1 + $0x1d4] sm:$0xf]
  %v167 = vld [vmem:[%s1 + $0x1d8] sm:$0xf]
  %v168 = vld [vmem:[%s1 + $0x1dc] sm:$0xf]
  %v169 = vld [vmem:[%s1 + $0x1e0] sm:$0xf]
  %v170 = vld [vmem:[%s1 + $0x1e4] sm:$0xf]
  %v171 = vld [vmem:[%s1 + $0x1e8] sm:$0xf]
  %v172 = vld [vmem:[%s1 + $0x1ec] sm:$0xf]
  %v173 = vld [vmem:[%s1 + $0x1f0] sm:$0xf]
  %v174 = vld [vmem:[%s1 + $0x1f4] sm:$0xf]
  %v175 = vld [vmem:[%s1 + $0x1f8] sm:$0xf]
  %v176 = vld [vmem:[%s1 + $0x1fc] sm:$0xf]
  %v177 = vld [vmem:[%s1 + $0x200] sm:$0xf]
  %v178 = vld [vmem:[%s1 + $0x204] sm:$0xf]
  %v179 = vld [vmem:[%s1 + $0x208] sm:$0xf]
  %v180 = vld [vmem:[%s1 + $0x20c] sm:$0xf]
  %v181 = vld [vmem:[%s1 + $0x210] sm:$0xf]
  %v182 = vld [vmem:[%s1 + $0x214] sm:$0xf]
  %v183 = vld [vmem:[%s1 + $0x218] sm:$0xf]
  %v184 = vld [vmem:[%s1 + $0x21c] sm:$0xf]
  %v185 = vld [vmem:[%s1 + $0x220] sm:$0xf]
  %v186 = vld [vmem:[%s1 + $0x224] sm:$0xf]
  %v187 = vld [vmem:[%s1 + $0x228] sm:$0xf]
  %v188 = vld [vmem:[%s1 + $0x22c] sm:$0xf]
  %v189 = vld [vmem:[%s1 + $0x230] sm:$0xf]
  %v190 = vld [vmem:[%s1 + $0x234] sm:$0xf]
  %v191 = vld [vmem:[%s1 + $0x238] sm:$0xf]
  %v192 = vld [vmem:[%s1 + $0x23c] sm:$0xf]
  %v213 = vunpack.c.l.b16 %v29
  %v214 = vunpack.c.h.b16 %v29
  %v215 = vunpack.c.l.b16 %v30
  %v216 = vunpack.c.h.b16 %v30
  %v217 = vunpack.c.l.b16 %v31
  %v218 = vunpack.c.h.b16 %v31
  %v219 = vunpack.c.l.b16 %v32
  %v220 = vunpack.c.h.b16 %v32
  %v221 = vunpack.c.l.b16 %v33
  %v222 = vunpack.c.l.b16 %v34
  %v223 = vunpack.c.h.b16 %v34
  %v224 = vunpack.c.l.b16 %v35
  %v225 = vunpack.c.h.b16 %v35
  %v226 = vunpack.c.l.b16 %v36
  %v227 = vunpack.c.h.b16 %v36
  %v228 = vunpack.c.l.b16 %v37
  %v229 = vunpack.c.h.b16 %v37
  %v230 = vunpack.c.l.b16 %v38
  %v231 = vunpack.c.l.b16 %v39
  %v232 = vunpack.c.h.b16 %v39
  %v233 = vunpack.c.l.b16 %v40
  %v234 = vunpack.c.h.b16 %v40
  %v235 = vunpack.c.l.b16 %v41
  %v236 = vunpack.c.h.b16 %v41
  %v237 = vunpack.c.l.b16 %v42
  %v238 = vunpack.c.h.b16 %v42
  %v239 = vunpack.c.l.b16 %v43
  %v240 = vunpack.c.l.b16 %v44
  %v241 = vunpack.c.h.b16 %v44
  %v242 = vunpack.c.l.b16 %v45
  %v243 = vunpack.c.h.b16 %v45
  %v244 = vunpack.c.l.b16 %v46
  %v245 = vunpack.c.h.b16 %v46
  %v246 = vunpack.c.l.b16 %v47
  %v247 = vunpack.c.h.b16 %v47
  %v248 = vunpack.c.l.b16 %v48
  %v249 = vpack.c.b16 %v222, %v213
  %v250 = vpack.c.b16 %v223, %v214
  %v251 = vpack.c.b16 %v224, %v215
  %v252 = vpack.c.b16 %v225, %v216
  %v253 = vpack.c.b16 %v226, %v217
  %v254 = vpack.c.b16 %v227, %v218
  %v255 = vpack.c.b16 %v228, %v219
  %v256 = vpack.c.b16 %v229, %v220
  %v257 = vpack.c.b16 %v230, %v221
  %v258 = vpack.c.b16 %v240, %v231
  %v259 = vpack.c.b16 %v241, %v232
  %v260 = vpack.c.b16 %v242, %v233
  %v261 = vpack.c.b16 %v243, %v234
  %v262 = vpack.c.b16 %v244, %v235
  %v263 = vpack.c.b16 %v245, %v236
  %v264 = vpack.c.b16 %v246, %v237
  %v265 = vpack.c.b16 %v247, %v238
  %v266 = vpack.c.b16 %v248, %v239
  %v429 = vunpack.c.l.b16 %v49
  %v430 = vunpack.c.l.b16 %v50
  %v431 = vunpack.c.l.b16 %v51
  %v432 = vunpack.c.l.b16 %v52
  %v433 = vunpack.c.l.b16 %v53
  %v434 = vunpack.c.l.b16 %v54
  %v435 = vunpack.c.l.b16 %v55
  %v436 = vunpack.c.l.b16 %v56
  %v437 = vunpack.c.l.b16 %v57
  %v438 = vunpack.c.l.b16 %v58
  %v439 = vunpack.c.l.b16 %v59
  %v440 = vunpack.c.l.b16 %v60
  %v441 = vunpack.c.l.b16 %v61
  %v442 = vunpack.c.l.b16 %v62
  %v443 = vunpack.c.l.b16 %v63
  %v444 = vunpack.c.l.b16 %v64
  %v445 = vunpack.c.l.b16 %v65
  %v446 = vunpack.c.l.b16 %v66
  %v447 = vunpack.c.l.b16 %v67
  %v448 = vunpack.c.l.b16 %v68
  %v449 = vunpack.c.l.b16 %v69
  %v450 = vunpack.c.l.b16 %v70
  %v451 = vunpack.c.l.b16 %v71
  %v452 = vunpack.c.l.b16 %v72
  %v453 = vunpack.c.l.b16 %v73
  %v454 = vunpack.c.l.b16 %v74
  %v455 = vunpack.c.l.b16 %v75
  %v456 = vunpack.c.l.b16 %v76
  %v457 = vunpack.c.l.b16 %v77
  %v458 = vunpack.c.l.b16 %v78
  %v459 = vunpack.c.l.b16 %v79
  %v460 = vunpack.c.l.b16 %v80
  %v461 = vunpack.c.l.b16 %v81
  %v462 = vunpack.c.l.b16 %v82
  %v463 = vunpack.c.l.b16 %v83
  %v464 = vunpack.c.l.b16 %v84
  %v465 = vunpack.c.l.b16 %v85
  %v466 = vunpack.c.l.b16 %v86
  %v467 = vunpack.c.l.b16 %v87
  %v468 = vunpack.c.l.b16 %v88
  %v469 = vunpack.c.l.b16 %v89
  %v470 = vunpack.c.l.b16 %v90
  %v471 = vunpack.c.l.b16 %v91
  %v472 = vunpack.c.l.b16 %v92
  %v473 = vunpack.c.l.b16 %v93
  %v474 = vunpack.c.l.b16 %v94
  %v475 = vunpack.c.l.b16 %v95
  %v476 = vunpack.c.l.b16 %v96
  %v477 = vunpack.c.l.b16 %v97
  %v478 = vunpack.c.l.b16 %v98
  %v479 = vunpack.c.l.b16 %v99
  %v480 = vunpack.c.l.b16 %v100
  %v481 = vunpack.c.l.b16 %v101
  %v482 = vunpack.c.l.b16 %v102
  %v483 = vunpack.c.l.b16 %v103
  %v484 = vunpack.c.l.b16 %v104
  %v485 = vunpack.c.l.b16 %v105
  %v486 = vunpack.c.l.b16 %v106
  %v487 = vunpack.c.l.b16 %v107
  %v488 = vunpack.c.l.b16 %v108
  %v489 = vunpack.c.l.b16 %v109
  %v490 = vunpack.c.l.b16 %v110
  %v491 = vunpack.c.l.b16 %v111
  %v492 = vunpack.c.l.b16 %v112
  %v493 = vunpack.c.l.b16 %v113
  %v494 = vunpack.c.l.b16 %v114
  %v495 = vunpack.c.l.b16 %v115
  %v496 = vunpack.c.l.b16 %v116
  %v497 = vunpack.c.l.b16 %v117
  %v498 = vunpack.c.l.b16 %v118
  %v499 = vunpack.c.l.b16 %v119
  %v500 = vunpack.c.l.b16 %v120
  %v501 = vunpack.c.l.b16 %v121
  %v502 = vunpack.c.l.b16 %v122
  %v503 = vunpack.c.l.b16 %v123
  %v504 = vunpack.c.l.b16 %v124
  %v505 = vunpack.c.l.b16 %v125
  %v506 = vunpack.c.l.b16 %v126
  %v507 = vunpack.c.l.b16 %v127
  %v508 = vunpack.c.l.b16 %v128
  %v509 = vunpack.c.l.b16 %v129
  %v510 = vunpack.c.l.b16 %v130
  %v511 = vunpack.c.l.b16 %v131
  %v512 = vunpack.c.l.b16 %v132
  %v513 = vunpack.c.l.b16 %v133
  %v514 = vunpack.c.l.b16 %v134
  %v515 = vunpack.c.l.b16 %v135
  %v516 = vunpack.c.l.b16 %v136
  %v517 = vunpack.c.l.b16 %v137
  %v518 = vunpack.c.l.b16 %v138
  %v519 = vunpack.c.l.b16 %v139
  %v520 = vunpack.c.l.b16 %v140
  %v521 = vunpack.c.l.b16 %v141
  %v522 = vunpack.c.l.b16 %v142
  %v523 = vunpack.c.l.b16 %v143
  %v524 = vunpack.c.l.b16 %v144
  %v525 = vunpack.c.l.b16 %v145
  %v526 = vunpack.c.l.b16 %v146
  %v527 = vunpack.c.l.b16 %v147
  %v528 = vunpack.c.l.b16 %v148
  %v529 = vunpack.c.l.b16 %v149
  %v530 = vunpack.c.l.b16 %v150
  %v531 = vunpack.c.l.b16 %v151
  %v532 = vunpack.c.l.b16 %v152
  %v533 = vunpack.c.l.b16 %v153
  %v534 = vunpack.c.l.b16 %v154
  %v535 = vunpack.c.l.b16 %v155
  %v536 = vunpack.c.l.b16 %v156
  %v537 = vunpack.c.l.b16 %v157
  %v538 = vunpack.c.l.b16 %v158
  %v539 = vunpack.c.l.b16 %v159
  %v540 = vunpack.c.l.b16 %v160
  %v541 = vunpack.c.l.b16 %v161
  %v542 = vunpack.c.l.b16 %v162
  %v543 = vunpack.c.l.b16 %v163
  %v544 = vunpack.c.l.b16 %v164
  %v545 = vunpack.c.l.b16 %v165
  %v546 = vunpack.c.l.b16 %v166
  %v547 = vunpack.c.l.b16 %v167
  %v548 = vunpack.c.l.b16 %v168
  %v549 = vunpack.c.l.b16 %v169
  %v550 = vunpack.c.l.b16 %v170
  %v551 = vunpack.c.l.b16 %v171
  %v552 = vunpack.c.l.b16 %v172
  %v553 = vunpack.c.l.b16 %v173
  %v554 = vunpack.c.l.b16 %v174
  %v555 = vunpack.c.l.b16 %v175
  %v556 = vunpack.c.l.b16 %v176
  %v557 = vunpack.c.l.b16 %v177
  %v558 = vunpack.c.l.b16 %v178
  %v559 = vunpack.c.l.b16 %v179
  %v560 = vunpack.c.l.b16 %v180
  %v561 = vunpack.c.l.b16 %v181
  %v562 = vunpack.c.l.b16 %v182
  %v563 = vunpack.c.l.b16 %v183
  %v564 = vunpack.c.l.b16 %v184
  %v565 = vunpack.c.l.b16 %v185
  %v566 = vunpack.c.l.b16 %v186
  %v567 = vunpack.c.l.b16 %v187
  %v568 = vunpack.c.l.b16 %v188
  %v569 = vunpack.c.l.b16 %v189
  %v570 = vunpack.c.l.b16 %v190
  %v571 = vunpack.c.l.b16 %v191
  %v572 = vunpack.c.l.b16 %v192
  %v573 = vpack.c.b16 %v430, %v429
  %v574 = vpack.c.b16 %v432, %v431
  %v575 = vpack.c.b16 %v434, %v433
  %v576 = vpack.c.b16 %v436, %v435
  %v577 = vpack.c.b16 %v438, %v437
  %v578 = vpack.c.b16 %v440, %v439
  %v579 = vpack.c.b16 %v442, %v441
  %v580 = vpack.c.b16 %v444, %v443
  %v581 = vpack.c.b16 %v446, %v445
  %v582 = vpack.c.b16 %v448, %v447
  %v583 = vpack.c.b16 %v450, %v449
  %v584 = vpack.c.b16 %v452, %v451
  %v585 = vpack.c.b16 %v454, %v453
  %v586 = vpack.c.b16 %v456, %v455
  %v587 = vpack.c.b16 %v458, %v457
  %v588 = vpack.c.b16 %v460, %v459
  %v589 = vpack.c.b16 %v462, %v461
  %v590 = vpack.c.b16 %v464, %v463
  %v591 = vpack.c.b16 %v466, %v465
  %v592 = vpack.c.b16 %v468, %v467
  %v593 = vpack.c.b16 %v470, %v469
  %v594 = vpack.c.b16 %v472, %v471
  %v595 = vpack.c.b16 %v474, %v473
  %v596 = vpack.c.b16 %v476, %v475
  %v597 = vpack.c.b16 %v478, %v477
  %v598 = vpack.c.b16 %v480, %v479
  %v599 = vpack.c.b16 %v482, %v481
  %v600 = vpack.c.b16 %v484, %v483
  %v601 = vpack.c.b16 %v486, %v485
  %v602 = vpack.c.b16 %v488, %v487
  %v603 = vpack.c.b16 %v490, %v489
  %v604 = vpack.c.b16 %v492, %v491
  %v605 = vpack.c.b16 %v494, %v493
  %v606 = vpack.c.b16 %v496, %v495
  %v607 = vpack.c.b16 %v498, %v497
  %v608 = vpack.c.b16 %v500, %v499
  %v609 = vpack.c.b16 %v502, %v501
  %v610 = vpack.c.b16 %v504, %v503
  %v611 = vpack.c.b16 %v506, %v505
  %v612 = vpack.c.b16 %v508, %v507
  %v613 = vpack.c.b16 %v510, %v509
  %v614 = vpack.c.b16 %v512, %v511
  %v615 = vpack.c.b16 %v514, %v513
  %v616 = vpack.c.b16 %v516, %v515
  %v617 = vpack.c.b16 %v518, %v517
  %v618 = vpack.c.b16 %v520, %v519
  %v619 = vpack.c.b16 %v522, %v521
  %v620 = vpack.c.b16 %v524, %v523
  %v621 = vpack.c.b16 %v526, %v525
  %v622 = vpack.c.b16 %v528, %v527
  %v623 = vpack.c.b16 %v530, %v529
  %v624 = vpack.c.b16 %v532, %v531
  %v625 = vpack.c.b16 %v534, %v533
  %v626 = vpack.c.b16 %v536, %v535
  %v627 = vpack.c.b16 %v538, %v537
  %v628 = vpack.c.b16 %v540, %v539
  %v629 = vpack.c.b16 %v542, %v541
  %v630 = vpack.c.b16 %v544, %v543
  %v631 = vpack.c.b16 %v546, %v545
  %v632 = vpack.c.b16 %v548, %v547
  %v633 = vpack.c.b16 %v550, %v549
  %v634 = vpack.c.b16 %v552, %v551
  %v635 = vpack.c.b16 %v554, %v553
  %v636 = vpack.c.b16 %v556, %v555
  %v637 = vpack.c.b16 %v558, %v557
  %v638 = vpack.c.b16 %v560, %v559
  %v639 = vpack.c.b16 %v562, %v561
  %v640 = vpack.c.b16 %v564, %v563
  %v641 = vpack.c.b16 %v566, %v565
  %v642 = vpack.c.b16 %v568, %v567
  %v643 = vpack.c.b16 %v570, %v569
  %v644 = vpack.c.b16 %v572, %v571
  %717 = vmatprep.subr.bf16.mxu0 0
  %718 = vmatpush1.bf16.msra.mxu0 %v580
  %719 = vmatprep.subr.bf16.mxu0 0
  %720 = vmatpush1.bf16.msra.mxu0 %v579
  %721 = vmatprep.subr.bf16.mxu0 0
  %722 = vmatpush1.bf16.msra.mxu0 %v578
  %723 = vmatprep.subr.bf16.mxu0 0
  %724 = vmatpush1.bf16.msra.mxu0 %v577
  %725 = vmatprep.subr.bf16.mxu0 0
  %726 = vmatpush1.bf16.msra.mxu0 %v576
  %727 = vmatprep.subr.bf16.mxu0 0
  %728 = vmatpush1.bf16.msra.mxu0 %v575
  %729 = vmatprep.subr.bf16.mxu0 0
  %730 = vmatpush1.bf16.msra.mxu0 %v574
  %731 = vmatprep.subr.bf16.mxu0 0
  %732 = vmatpush1.bf16.msra.mxu0 %v573
  %733 = vmatprep.subr.bf16.mxu0 0
  %734 = vmatpush2.bf16.msra.mxu0 %v588
  %735 = vmatprep.subr.bf16.mxu0 0
  %736 = vmatpush2.bf16.msra.mxu0 %v587
  %737 = vmatprep.subr.bf16.mxu0 0
  %738 = vmatpush2.bf16.msra.mxu0 %v586
  %739 = vmatprep.subr.bf16.mxu0 0
  %740 = vmatpush2.bf16.msra.mxu0 %v585
  %741 = vmatprep.subr.bf16.mxu0 0
  %742 = vmatpush2.bf16.msra.mxu0 %v584
  %743 = vmatprep.subr.bf16.mxu0 0
  %744 = vmatpush2.bf16.msra.mxu0 %v583
  %745 = vmatprep.subr.bf16.mxu0 0
  %746 = vmatpush2.bf16.msra.mxu0 %v582
  %747 = vmatprep.subr.bf16.mxu0 0
  %748 = vmatpush2.bf16.msra.mxu0 %v581
  %749 = vmatprep.mubr.bf16.mxu0 %v250
  %750 = vmatmul.mubr.bf16.gmra.mxu0 %v249
  %v751 = vpop.f32.mrf.mxu0
  %v752 = vadd.f32 0.0, %v751
  %v753 = vpop.f32.mrf.mxu0
  %v754 = vpop.f32.mrf.mxu0
  %v755 = vadd.f32 0.0, %v754
  %v756 = vpop.f32.mrf.mxu0
  %757 = vmatprep.mubr.bf16.mxu0 %v259
  %758 = vmatmul.mubr.bf16.gmra.mxu0 %v258
  %v759 = vpop.f32.mrf.mxu0
  %v760 = vadd.f32 0.0, %v759
  %v761 = vpop.f32.mrf.mxu0
  %v762 = vpop.f32.mrf.mxu0
  %v763 = vadd.f32 0.0, %v762
  %v764 = vpop.f32.mrf.mxu0
  %765 = vdwg.mxu0
  %766 = vmatprep.subr.bf16.mxu0 0
  %767 = vmatpush1.bf16.msra.mxu0 %v596
  %768 = vmatprep.subr.bf16.mxu0 0
  %769 = vmatpush1.bf16.msra.mxu0 %v595
  %770 = vmatprep.subr.bf16.mxu0 0
  %771 = vmatpush1.bf16.msra.mxu0 %v594
  %772 = vmatprep.subr.bf16.mxu0 0
  %773 = vmatpush1.bf16.msra.mxu0 %v593
  %774 = vmatprep.subr.bf16.mxu0 0
  %775 = vmatpush1.bf16.msra.mxu0 %v592
  %776 = vmatprep.subr.bf16.mxu0 0
  %777 = vmatpush1.bf16.msra.mxu0 %v591
  %778 = vmatprep.subr.bf16.mxu0 0
  %779 = vmatpush1.bf16.msra.mxu0 %v590
  %780 = vmatprep.subr.bf16.mxu0 0
  %781 = vmatpush1.bf16.msra.mxu0 %v589
  %782 = vmatprep.subr.bf16.mxu0 0
  %783 = vmatpush2.bf16.msra.mxu0 %v604
  %784 = vmatprep.subr.bf16.mxu0 0
  %785 = vmatpush2.bf16.msra.mxu0 %v603
  %786 = vmatprep.subr.bf16.mxu0 0
  %787 = vmatpush2.bf16.msra.mxu0 %v602
  %788 = vmatprep.subr.bf16.mxu0 0
  %789 = vmatpush2.bf16.msra.mxu0 %v601
  %790 = vmatprep.subr.bf16.mxu0 0
  %791 = vmatpush2.bf16.msra.mxu0 %v600
  %792 = vmatprep.subr.bf16.mxu0 0
  %793 = vmatpush2.bf16.msra.mxu0 %v599
  %794 = vmatprep.subr.bf16.mxu0 0
  %795 = vmatpush2.bf16.msra.mxu0 %v598
  %796 = vmatprep.subr.bf16.mxu0 0
  %797 = vmatpush2.bf16.msra.mxu0 %v597
  %798 = vmatprep.mubr.bf16.mxu0 %v252
  %799 = vmatmul.mubr.bf16.gmra.mxu0 %v251
  %v800 = vpop.f32.mrf.mxu0
  %v801 = vadd.f32 %v752, %v800
  %v802 = vpop.f32.mrf.mxu0
  %v803 = vpop.f32.mrf.mxu0
  %v804 = vadd.f32 %v755, %v803
  %v805 = vpop.f32.mrf.mxu0
  %806 = vmatprep.mubr.bf16.mxu0 %v261
  %807 = vmatmul.mubr.bf16.gmra.mxu0 %v260
  %v808 = vpop.f32.mrf.mxu0
  %v809 = vadd.f32 %v760, %v808
  %v810 = vpop.f32.mrf.mxu0
  %v811 = vpop.f32.mrf.mxu0
  %v812 = vadd.f32 %v763, %v811
  %v813 = vpop.f32.mrf.mxu0
  %814 = vdwg.mxu0
  %815 = vmatprep.subr.bf16.mxu0 0
  %816 = vmatpush1.bf16.msra.mxu0 %v612
  %817 = vmatprep.subr.bf16.mxu0 0
  %818 = vmatpush1.bf16.msra.mxu0 %v611
  %819 = vmatprep.subr.bf16.mxu0 0
  %820 = vmatpush1.bf16.msra.mxu0 %v610
  %821 = vmatprep.subr.bf16.mxu0 0
  %822 = vmatpush1.bf16.msra.mxu0 %v609
  %823 = vmatprep.subr.bf16.mxu0 0
  %824 = vmatpush1.bf16.msra.mxu0 %v608
  %825 = vmatprep.subr.bf16.mxu0 0
  %826 = vmatpush1.bf16.msra.mxu0 %v607
  %827 = vmatprep.subr.bf16.mxu0 0
  %828 = vmatpush1.bf16.msra.mxu0 %v606
  %829 = vmatprep.subr.bf16.mxu0 0
  %830 = vmatpush1.bf16.msra.mxu0 %v605
  %831 = vmatprep.subr.bf16.mxu0 0
  %832 = vmatpush2.bf16.msra.mxu0 %v620
  %833 = vmatprep.subr.bf16.mxu0 0
  %834 = vmatpush2.bf16.msra.mxu0 %v619
  %835 = vmatprep.subr.bf16.mxu0 0
  %836 = vmatpush2.bf16.msra.mxu0 %v618
  %837 = vmatprep.subr.bf16.mxu0 0
  %838 = vmatpush2.bf16.msra.mxu0 %v617
  %839 = vmatprep.subr.bf16.mxu0 0
  %840 = vmatpush2.bf16.msra.mxu0 %v616
  %841 = vmatprep.subr.bf16.mxu0 0
  %842 = vmatpush2.bf16.msra.mxu0 %v615
  %843 = vmatprep.subr.bf16.mxu0 0
  %844 = vmatpush2.bf16.msra.mxu0 %v614
  %845 = vmatprep.subr.bf16.mxu0 0
  %846 = vmatpush2.bf16.msra.mxu0 %v613
  %847 = vmatprep.mubr.bf16.mxu0 %v254
  %848 = vmatmul.mubr.bf16.gmra.mxu0 %v253
  %v849 = vpop.f32.mrf.mxu0
  %v850 = vadd.f32 %v801, %v849
  %v851 = vpop.f32.mrf.mxu0
  %v852 = vpop.f32.mrf.mxu0
  %v853 = vadd.f32 %v804, %v852
  %v854 = vpop.f32.mrf.mxu0
  %855 = vmatprep.mubr.bf16.mxu0 %v263
  %856 = vmatmul.mubr.bf16.gmra.mxu0 %v262
  %v857 = vpop.f32.mrf.mxu0
  %v858 = vadd.f32 %v809, %v857
  %v859 = vpop.f32.mrf.mxu0
  %v860 = vpop.f32.mrf.mxu0
  %v861 = vadd.f32 %v812, %v860
  %v862 = vpop.f32.mrf.mxu0
  %863 = vdwg.mxu0
  %864 = vmatprep.subr.bf16.mxu0 0
  %865 = vmatpush1.bf16.msra.mxu0 %v628
  %866 = vmatprep.subr.bf16.mxu0 0
  %867 = vmatpush1.bf16.msra.mxu0 %v627
  %868 = vmatprep.subr.bf16.mxu0 0
  %869 = vmatpush1.bf16.msra.mxu0 %v626
  %870 = vmatprep.subr.bf16.mxu0 0
  %871 = vmatpush1.bf16.msra.mxu0 %v625
  %872 = vmatprep.subr.bf16.mxu0 0
  %873 = vmatpush1.bf16.msra.mxu0 %v624
  %874 = vmatprep.subr.bf16.mxu0 0
  %875 = vmatpush1.bf16.msra.mxu0 %v623
  %876 = vmatprep.subr.bf16.mxu0 0
  %877 = vmatpush1.bf16.msra.mxu0 %v622
  %878 = vmatprep.subr.bf16.mxu0 0
  %879 = vmatpush1.bf16.msra.mxu0 %v621
  %880 = vmatprep.subr.bf16.mxu0 0
  %881 = vmatpush2.bf16.msra.mxu0 %v636
  %882 = vmatprep.subr.bf16.mxu0 0
  %883 = vmatpush2.bf16.msra.mxu0 %v635
  %884 = vmatprep.subr.bf16.mxu0 0
  %885 = vmatpush2.bf16.msra.mxu0 %v634
  %886 = vmatprep.subr.bf16.mxu0 0
  %887 = vmatpush2.bf16.msra.mxu0 %v633
  %888 = vmatprep.subr.bf16.mxu0 0
  %889 = vmatpush2.bf16.msra.mxu0 %v632
  %890 = vmatprep.subr.bf16.mxu0 0
  %891 = vmatpush2.bf16.msra.mxu0 %v631
  %892 = vmatprep.subr.bf16.mxu0 0
  %893 = vmatpush2.bf16.msra.mxu0 %v630
  %894 = vmatprep.subr.bf16.mxu0 0
  %895 = vmatpush2.bf16.msra.mxu0 %v629
  %896 = vmatprep.mubr.bf16.mxu0 %v256
  %897 = vmatmul.mubr.bf16.gmra.mxu0 %v255
  %v898 = vpop.f32.mrf.mxu0
  %v899 = vadd.f32 %v850, %v898
  %v900 = vpop.f32.mrf.mxu0
  %v901 = vpop.f32.mrf.mxu0
  %v902 = vadd.f32 %v853, %v901
  %v903 = vpop.f32.mrf.mxu0
  %904 = vmatprep.mubr.bf16.mxu0 %v265
  %905 = vmatmul.mubr.bf16.gmra.mxu0 %v264
  %v906 = vpop.f32.mrf.mxu0
  %v907 = vadd.f32 %v858, %v906
  %v908 = vpop.f32.mrf.mxu0
  %v909 = vpop.f32.mrf.mxu0
  %v910 = vadd.f32 %v861, %v909
  %v911 = vpop.f32.mrf.mxu0
  %912 = vdwg.mxu0
  %913 = vmatprep.subr.bf16.mxu0 0
  %914 = vmatpush1.bf16.msra.mxu0 %v644
  %915 = vmatprep.subr.bf16.mxu0 0
  %916 = vmatpush1.bf16.msra.mxu0 %v643
  %917 = vmatprep.subr.bf16.mxu0 0
  %918 = vmatpush1.bf16.msra.mxu0 %v642
  %919 = vmatprep.subr.bf16.mxu0 0
  %920 = vmatpush1.bf16.msra.mxu0 %v641
  %921 = vmatprep.subr.bf16.mxu0 0
  %922 = vmatpush1.bf16.msra.mxu0 %v640
  %923 = vmatprep.subr.bf16.mxu0 0
  %924 = vmatpush1.bf16.msra.mxu0 %v639
  %925 = vmatprep.subr.bf16.mxu0 0
  %926 = vmatpush1.bf16.msra.mxu0 %v638
  %927 = vmatprep.subr.bf16.mxu0 0
  %928 = vmatpush1.bf16.msra.mxu0 %v637
  %929 = vmatprep.subr.bf16.mxu0 0
  %930 = vmatpush2.bf16.msra.mxu0 0
  %931 = vmatprep.subr.bf16.mxu0 0
  %932 = vmatpush2.bf16.msra.mxu0 0
  %933 = vmatprep.subr.bf16.mxu0 0
  %934 = vmatpush2.bf16.msra.mxu0 0
  %935 = vmatprep.subr.bf16.mxu0 0
  %936 = vmatpush2.bf16.msra.mxu0 0
  %937 = vmatprep.subr.bf16.mxu0 0
  %938 = vmatpush2.bf16.msra.mxu0 0
  %939 = vmatprep.subr.bf16.mxu0 0
  %940 = vmatpush2.bf16.msra.mxu0 0
  %941 = vmatprep.subr.bf16.mxu0 0
  %942 = vmatpush2.bf16.msra.mxu0 0
  %943 = vmatprep.subr.bf16.mxu0 0
  %944 = vmatpush2.bf16.msra.mxu0 0
  %945 = vmatprep.mubr.bf16.mxu0 0
  %946 = vmatmul.mubr.bf16.gmra.mxu0 %v257
  %v947 = vpop.f32.mrf.mxu0
  %v948 = vadd.f32 %v899, %v947
  %v949 = vpop.f32.mrf.mxu0
  %v950 = vpop.f32.mrf.mxu0
  %v951 = vadd.f32 %v902, %v950
  %v952 = vpop.f32.mrf.mxu0
  %953 = vmatprep.mubr.bf16.mxu0 0
  %954 = vmatmul.mubr.bf16.gmra.mxu0 %v266
  %v955 = vpop.f32.mrf.mxu0
  %v956 = vadd.f32 %v907, %v955
  %v957 = vpop.f32.mrf.mxu0
  %v958 = vpop.f32.mrf.mxu0
  %v959 = vadd.f32 %v910, %v958
  %v960 = vpop.f32.mrf.mxu0
  %961 = vdwg.mxu0
  %v962 = vld [vmem:[%s2] sm:$0x1]
  %v963 = vld [vmem:[%s3] sm:$0x1]
  %v964 = vadd.f32 %v948, %v951
  %v965 = vadd.f32 %v964, %v956
  %v966 = vadd.f32 %v965, %v959
  %v967 = vrot.slane %v966, 4
  %v968 = vadd.f32 %v966, %v967
  %v969 = vrot.slane %v968, 2
  %v970 = vadd.f32 %v968, %v969
  %v971 = vrot.slane %v970, 1
  %v972 = vadd.f32 %v970, %v971
  %v973 = vmul.f32 %v948, %v948
  %v974 = vmul.f32 %v951, %v951
  %v975 = vmul.f32 %v956, %v956
  %v976 = vmul.f32 %v959, %v959
  %v977 = vadd.f32 %v973, %v974
  %v978 = vadd.f32 %v977, %v975
  %v979 = vadd.f32 %v978, %v976
  %v980 = vrot.slane %v979, 4
  %v981 = vadd.f32 %v979, %v980
  %v982 = vrot.slane %v981, 2
  %v983 = vadd.f32 %v981, %v982
  %v984 = vrot.slane %v983, 1
  %v985 = vadd.f32 %v983, %v984
  %v986 = vmul.f32 %v972, 0.03125
  %v987 = vmul.f32 %v985, 0.03125
  %v988 = vmul.f32 %v986, %v986
  %v989 = vsub.f32 %v987, %v988
  %v990 = vmax.f32 %v989, 0.0
  %v991 = vsub.f32 %v948, %v986
  %v992 = vsub.f32 %v951, %v986
  %v993 = vsub.f32 %v956, %v986
  %v994 = vsub.f32 %v959, %v986
  %v995 = vadd.f32 %v990, 1e-05
  %v996 = vrsqrt.pop %v995
  %v997 = vmul.f32 %v991, %v996
  %v998 = vmul.f32 %v992, %v996
  %v999 = vmul.f32 %v993, %v996
  %v1000 = vmul.f32 %v994, %v996
  %v1002 = vlaneseq
  %v1003 = vshrl.u32 %v1002, 7
  %v1004 = vsub.s32 0, %v1003
  %v1005 = vrot.slane %v962, %v1004
  %v1007 = vmul.f32 %v997, %v1005
  %v1008 = vmul.f32 %v998, %v1005
  %v1009 = vmul.f32 %v999, %v1005
  %v1010 = vmul.f32 %v1000, %v1005
  %v1012 = vlaneseq
  %v1013 = vshrl.u32 %v1012, 7
  %v1014 = vsub.s32 0, %v1013
  %v1015 = vrot.slane %v963, %v1014
  %v1017 = vadd.f32 %v1007, %v1015
  %v1018 = vadd.f32 %v1008, %v1015
  %v1019 = vadd.f32 %v1009, %v1015
  %v1020 = vadd.f32 %v1010, %v1015
  %v1021 = vmax.f32 %v1017, 0.0
  %v1022 = vmax.f32 %v1018, 0.0
  %v1023 = vmax.f32 %v1019, 0.0
  %v1024 = vmax.f32 %v1020, 0.0
  %1025 = vst [vmem:[%s7] sm:$0xff] %v1021
  %1026 = vst [vmem:[%s7 + $0x8] sm:$0xff] %v1022
  %1027 = vst [vmem:[%s7 + $0x10] sm:$0xff] %v1023
  %1028 = vst [vmem:[%s7 + $0x18] sm:$0xff] %v1024
  %v1029 = vld [vmem:[%s4] sm:$0xf]
  %v1030 = vld [vmem:[%s4 + $0x4] sm:$0xf]
  %v1031 = vld [vmem:[%s4 + $0x8] sm:$0xf]
  %v1032 = vld [vmem:[%s4 + $0xc] sm:$0xf]
  %v1033 = vld [vmem:[%s4 + $0x10] sm:$0xf]
  %v1034 = vld [vmem:[%s4 + $0x14] sm:$0xf]
  %v1035 = vld [vmem:[%s4 + $0x18] sm:$0xf]
  %v1036 = vld [vmem:[%s4 + $0x1c] sm:$0xf]
  %v1037 = vld [vmem:[%s4 + $0x20] sm:$0xf]
  %v1038 = vld [vmem:[%s4 + $0x24] sm:$0xf]
  %v1039 = vld [vmem:[%s4 + $0x28] sm:$0xf]
  %v1040 = vld [vmem:[%s4 + $0x2c] sm:$0xf]
  %v1041 = vld [vmem:[%s4 + $0x30] sm:$0xf]
  %v1042 = vld [vmem:[%s4 + $0x34] sm:$0xf]
  %v1043 = vld [vmem:[%s4 + $0x38] sm:$0xf]
  %v1044 = vld [vmem:[%s4 + $0x3c] sm:$0xf]
  %v1061 = vunpack.c.l.b16 %v1029
  %v1062 = vunpack.c.l.b16 %v1030
  %v1063 = vunpack.c.l.b16 %v1031
  %v1064 = vunpack.c.l.b16 %v1032
  %v1065 = vunpack.c.l.b16 %v1033
  %v1066 = vunpack.c.l.b16 %v1034
  %v1067 = vunpack.c.l.b16 %v1035
  %v1068 = vunpack.c.l.b16 %v1036
  %v1069 = vunpack.c.l.b16 %v1037
  %v1070 = vunpack.c.l.b16 %v1038
  %v1071 = vunpack.c.l.b16 %v1039
  %v1072 = vunpack.c.l.b16 %v1040
  %v1073 = vunpack.c.l.b16 %v1041
  %v1074 = vunpack.c.l.b16 %v1042
  %v1075 = vunpack.c.l.b16 %v1043
  %v1076 = vunpack.c.l.b16 %v1044
  %v1077 = vpack.c.b16 %v1062, %v1061
  %v1078 = vpack.c.b16 %v1064, %v1063
  %v1079 = vpack.c.b16 %v1066, %v1065
  %v1080 = vpack.c.b16 %v1068, %v1067
  %v1081 = vpack.c.b16 %v1070, %v1069
  %v1082 = vpack.c.b16 %v1072, %v1071
  %v1083 = vpack.c.b16 %v1074, %v1073
  %v1084 = vpack.c.b16 %v1076, %v1075
  %1093 = vmatprep.subr.bf16.mxu0 0
  %1094 = vmatpush1.bf16.msra.mxu0 %v1084
  %1095 = vmatprep.subr.bf16.mxu0 0
  %1096 = vmatpush1.bf16.msra.mxu0 %v1083
  %1097 = vmatprep.subr.bf16.mxu0 0
  %1098 = vmatpush1.bf16.msra.mxu0 %v1082
  %1099 = vmatprep.subr.bf16.mxu0 0
  %1100 = vmatpush1.bf16.msra.mxu0 %v1081
  %1101 = vmatprep.subr.bf16.mxu0 0
  %1102 = vmatpush1.bf16.msra.mxu0 %v1080
  %1103 = vmatprep.subr.bf16.mxu0 0
  %1104 = vmatpush1.bf16.msra.mxu0 %v1079
  %1105 = vmatprep.subr.bf16.mxu0 0
  %1106 = vmatpush1.bf16.msra.mxu0 %v1078
  %1107 = vmatprep.subr.bf16.mxu0 0
  %1108 = vmatpush1.bf16.msra.mxu0 %v1077
  %1109 = vmatprep.subr.bf16.mxu0 0
  %1110 = vmatpush2.bf16.msra.mxu0 0
  %1111 = vmatprep.subr.bf16.mxu0 0
  %1112 = vmatpush2.bf16.msra.mxu0 0
  %1113 = vmatprep.subr.bf16.mxu0 0
  %1114 = vmatpush2.bf16.msra.mxu0 0
  %1115 = vmatprep.subr.bf16.mxu0 0
  %1116 = vmatpush2.bf16.msra.mxu0 0
  %1117 = vmatprep.subr.bf16.mxu0 0
  %1118 = vmatpush2.bf16.msra.mxu0 0
  %1119 = vmatprep.subr.bf16.mxu0 0
  %1120 = vmatpush2.bf16.msra.mxu0 0
  %1121 = vmatprep.subr.bf16.mxu0 0
  %1122 = vmatpush2.bf16.msra.mxu0 0
  %1123 = vmatprep.subr.bf16.mxu0 0
  %1124 = vmatpush2.bf16.msra.mxu0 0
  %1125 = vmatprep.mubr.bf16.mxu0 0
  %1126 = vmatmul.mubr.bf16.gmra.mxu0 %v253
  %v1127 = vpop.f32.mrf.mxu0
  %v1128 = vadd.f32 0.0, %v1127
  %v1129 = vpop.f32.mrf.mxu0
  %v1130 = vpop.f32.mrf.mxu0
  %v1131 = vadd.f32 0.0, %v1130
  %v1132 = vpop.f32.mrf.mxu0
  %1133 = vmatprep.mubr.bf16.mxu0 0
  %1134 = vmatmul.mubr.bf16.gmra.mxu0 %v262
  %v1135 = vpop.f32.mrf.mxu0
  %v1136 = vadd.f32 0.0, %v1135
  %v1137 = vpop.f32.mrf.mxu0
  %v1138 = vpop.f32.mrf.mxu0
  %v1139 = vadd.f32 0.0, %v1138
  %v1140 = vpop.f32.mrf.mxu0
  %1141 = vdwg.mxu0
  %v1142 = vld [vmem:[%s5] sm:$0x1]
  %v1143 = vld [vmem:[%s6] sm:$0x1]
  %v1144 = vadd.f32 %v1128, %v1131
  %v1145 = vadd.f32 %v1144, %v1136
  %v1146 = vadd.f32 %v1145, %v1139
  %v1147 = vrot.slane %v1146, 4
  %v1148 = vadd.f32 %v1146, %v1147
  %v1149 = vrot.slane %v1148, 2
  %v1150 = vadd.f32 %v1148, %v1149
  %v1151 = vrot.slane %v1150, 1
  %v1152 = vadd.f32 %v1150, %v1151
  %v1153 = vmul.f32 %v1128, %v1128
  %v1154 = vmul.f32 %v1131, %v1131
  %v1155 = vmul.f32 %v1136, %v1136
  %v1156 = vmul.f32 %v1139, %v1139
  %v1157 = vadd.f32 %v1153, %v1154
  %v1158 = vadd.f32 %v1157, %v1155
  %v1159 = vadd.f32 %v1158, %v1156
  %v1160 = vrot.slane %v1159, 4
  %v1161 = vadd.f32 %v1159, %v1160
  %v1162 = vrot.slane %v1161, 2
  %v1163 = vadd.f32 %v1161, %v1162
  %v1164 = vrot.slane %v1163, 1
  %v1165 = vadd.f32 %v1163, %v1164
  %v1166 = vmul.f32 %v1152, 0.03125
  %v1167 = vmul.f32 %v1165, 0.03125
  %v1168 = vmul.f32 %v1166, %v1166
  %v1169 = vsub.f32 %v1167, %v1168
  %v1170 = vmax.f32 %v1169, 0.0
  %v1171 = vsub.f32 %v1128, %v1166
  %v1172 = vsub.f32 %v1131, %v1166
  %v1173 = vsub.f32 %v1136, %v1166
  %v1174 = vsub.f32 %v1139, %v1166
  %v1175 = vadd.f32 %v1170, 1e-05
  %v1176 = vrsqrt.pop %v1175
  %v1177 = vmul.f32 %v1171, %v1176
  %v1178 = vmul.f32 %v1172, %v1176
  %v1179 = vmul.f32 %v1173, %v1176
  %v1180 = vmul.f32 %v1174, %v1176
  %v1182 = vlaneseq
  %v1183 = vshrl.u32 %v1182, 7
  %v1184 = vsub.s32 0, %v1183
  %v1185 = vrot.slane %v1142, %v1184
  %v1187 = vmul.f32 %v1177, %v1185
  %v1188 = vmul.f32 %v1178, %v1185
  %v1189 = vmul.f32 %v1179, %v1185
  %v1190 = vmul.f32 %v1180, %v1185
  %v1192 = vlaneseq
  %v1193 = vshrl.u32 %v1192, 7
  %v1194 = vsub.s32 0, %v1193
  %v1195 = vrot.slane %v1143, %v1194
  %v1197 = vadd.f32 %v1187, %v1195
  %v1198 = vadd.f32 %v1188, %v1195
  %v1199 = vadd.f32 %v1189, %v1195
  %v1200 = vadd.f32 %v1190, %v1195
  %1201 = vst [vmem:[%s8] sm:$0xff] %v1197
  %1202 = vst [vmem:[%s8 + $0x8] sm:$0xff] %v1198
  %1203 = vst [vmem:[%s8 + $0x10] sm:$0xff] %v1199
  %1204 = vst [vmem:[%s8 + $0x18] sm:$0xff] %v1200
  // Predicated region
  $region30: #{lupnet_forward.13} parent=0 // pred_check
    _
  $region31: #{lupnet_forward.13} parent=0 // pred_check_branch
    %1206 = sbr.rel (0) target = $region33
  $region32: #{lupnet_forward.13} parent=0 // pred_region
    _
  $region33: #{lupnet_forward.13} parent=0 // pred_fallthru
    _
  // Predicated region
  $region34: #{lupnet_forward.13} parent=0 // pred_check
    _
  $region35: #{lupnet_forward.13} parent=0 // pred_check_branch
    %1208 = sbr.rel (0) target = $region37
  $region36: #{lupnet_forward.13} parent=0 // pred_region
    _
  $region37: #{lupnet_forward.13} parent=0 // pred_fallthru
    _
  // Predicated region
  $region38: #{lupnet_forward.13} parent=0 // pred_check
    _
  $region39: #{lupnet_forward.13} parent=0 // pred_check_branch
    %1210 = sbr.rel (0) target = $region41
  $region40: #{lupnet_forward.13} parent=0 // pred_region
    _
  $region41: #{lupnet_forward.13} parent=0 // pred_fallthru
    _
  // Predicated region
  $region42: #{lupnet_forward.13} parent=0 // pred_check
    _
  $region43: #{lupnet_forward.13} parent=0 // pred_check_branch
    %1212 = sbr.rel (0) target = $region45
  $region44: #{lupnet_forward.13} parent=0 // pred_region
    _
  $region45: #{lupnet_forward.13} parent=0 // pred_fallthru
    _

// kernel: lupnet_forward.14
$region0: #{lupnet_forward.14}
  #allocation0 [shape = 'u32[]', space=smem, size = 0x4, offset = 0x4, fixed_abs, tag = 'smem constant byte address 0x4 - core index']
  #allocation1 [shape = 'u32[144,128]{1,0:T(1,128)}', space=vmem, size = 0x12000, scoped, tag = 'internal scratch']
  %s0 = inlined_call_operand.vmem [shape: bf16[32,1152], index: 0, kind: input, shape index: {}]
  %s1 = inlined_call_operand.vmem [shape: bf16[1152,128], index: 1, kind: input, shape index: {}]
  %s2 = inlined_call_operand.vmem [shape: f32[1,128], index: 2, kind: input, shape index: {}]
  %s3 = inlined_call_operand.vmem [shape: f32[1,128], index: 3, kind: input, shape index: {}]
  %s4 = inlined_call_operand.vmem [shape: f32[32,128], index: 4, kind: input, shape index: {}]
  %s5 = inlined_call_operand.vmem [shape: f32[32,128], index: 5, kind: output, shape index: {}]
  %s6 = sld [smem:[#allocation0]]
  $region30: #{lupnet_forward.14} parent=0
    _
  %s8 = ssub.s32 1, %s6
  %s9 = scalar_select 0, %s8, %s6
  // Predicated region
  $region2: #{lupnet_forward.14} parent=0 // pred_check
    _
  $region3: #{lupnet_forward.14} parent=0 // pred_check_branch
    %11 = sbr.rel (0) target = $region5
  $region4: #{lupnet_forward.14} parent=0 // pred_region
    _
  $region5: #{lupnet_forward.14} parent=0 // pred_fallthru
    _
  // Predicated region
  $region6: #{lupnet_forward.14} parent=0 // pred_check
    _
  $region7: #{lupnet_forward.14} parent=0 // pred_check_branch
    %13 = sbr.rel (0) target = $region9
  $region8: #{lupnet_forward.14} parent=0 // pred_region
    _
  $region9: #{lupnet_forward.14} parent=0 // pred_fallthru
    _
  // Predicated region
  $region10: #{lupnet_forward.14} parent=0 // pred_check
    _
  $region11: #{lupnet_forward.14} parent=0 // pred_check_branch
    %15 = sbr.rel (0) target = $region13
  $region12: #{lupnet_forward.14} parent=0 // pred_region
    _
  $region13: #{lupnet_forward.14} parent=0 // pred_fallthru
    _
  // Predicated region
  $region14: #{lupnet_forward.14} parent=0 // pred_check
    _
  $region15: #{lupnet_forward.14} parent=0 // pred_check_branch
    %17 = sbr.rel (0) target = $region17
  $region16: #{lupnet_forward.14} parent=0 // pred_region
    _
  $region17: #{lupnet_forward.14} parent=0 // pred_fallthru
    _
  // Predicated region
  $region18: #{lupnet_forward.14} parent=0 // pred_check
    _
  $region19: #{lupnet_forward.14} parent=0 // pred_check_branch
    %19 = sbr.rel (0) target = $region21
  $region20: #{lupnet_forward.14} parent=0 // pred_region
    _
  $region21: #{lupnet_forward.14} parent=0 // pred_fallthru
    _
  %v21 = vld [vmem:[%s0] sm:$0xff]
  %v22 = vld [vmem:[%s0 + $0x8] sm:$0xff]
  %v23 = vld [vmem:[%s0 + $0x10] sm:$0xff]
  %v24 = vld [vmem:[%s0 + $0x18] sm:$0xff]
  %v25 = vld [vmem:[%s0 + $0x20] sm:$0xf]
  %v26 = vld [vmem:[%s0 + $0x24] sm:$0xff]
  %v27 = vld [vmem:[%s0 + $0x2c] sm:$0xff]
  %v28 = vld [vmem:[%s0 + $0x34] sm:$0xff]
  %v29 = vld [vmem:[%s0 + $0x3c] sm:$0xff]
  %v30 = vld [vmem:[%s0 + $0x44] sm:$0xf]
  %v31 = vld [vmem:[%s0 + $0x48] sm:$0xff]
  %v32 = vld [vmem:[%s0 + $0x50] sm:$0xff]
  %v33 = vld [vmem:[%s0 + $0x58] sm:$0xff]
  %v34 = vld [vmem:[%s0 + $0x60] sm:$0xff]
  %v35 = vld [vmem:[%s0 + $0x68] sm:$0xf]
  %v36 = vld [vmem:[%s0 + $0x6c] sm:$0xff]
  %v37 = vld [vmem:[%s0 + $0x74] sm:$0xff]
  %v38 = vld [vmem:[%s0 + $0x7c] sm:$0xff]
  %v39 = vld [vmem:[%s0 + $0x84] sm:$0xff]
  %v40 = vld [vmem:[%s0 + $0x8c] sm:$0xf]
  %v41 = vld [vmem:[%s1] sm:$0xf]
  %v42 = vld [vmem:[%s1 + $0x4] sm:$0xf]
  %v43 = vld [vmem:[%s1 + $0x8] sm:$0xf]
  %v44 = vld [vmem:[%s1 + $0xc] sm:$0xf]
  %v45 = vld [vmem:[%s1 + $0x10] sm:$0xf]
  %v46 = vld [vmem:[%s1 + $0x14] sm:$0xf]
  %v47 = vld [vmem:[%s1 + $0x18] sm:$0xf]
  %v48 = vld [vmem:[%s1 + $0x1c] sm:$0xf]
  %v49 = vld [vmem:[%s1 + $0x20] sm:$0xf]
  %v50 = vld [vmem:[%s1 + $0x24] sm:$0xf]
  %v51 = vld [vmem:[%s1 + $0x28] sm:$0xf]
  %v52 = vld [vmem:[%s1 + $0x2c] sm:$0xf]
  %v53 = vld [vmem:[%s1 + $0x30] sm:$0xf]
  %v54 = vld [vmem:[%s1 + $0x34] sm:$0xf]
  %v55 = vld [vmem:[%s1 + $0x38] sm:$0xf]
  %v56 = vld [vmem:[%s1 + $0x3c] sm:$0xf]
  %v57 = vld [vmem:[%s1 + $0x40] sm:$0xf]
  %v58 = vld [vmem:[%s1 + $0x44] sm:$0xf]
  %v59 = vld [vmem:[%s1 + $0x48] sm:$0xf]
  %v60 = vld [vmem:[%s1 + $0x4c] sm:$0xf]
  %v61 = vld [vmem:[%s1 + $0x50] sm:$0xf]
  %v62 = vld [vmem:[%s1 + $0x54] sm:$0xf]
  %v63 = vld [vmem:[%s1 + $0x58] sm:$0xf]
  %v64 = vld [vmem:[%s1 + $0x5c] sm:$0xf]
  %v65 = vld [vmem:[%s1 + $0x60] sm:$0xf]
  %v66 = vld [vmem:[%s1 + $0x64] sm:$0xf]
  %v67 = vld [vmem:[%s1 + $0x68] sm:$0xf]
  %v68 = vld [vmem:[%s1 + $0x6c] sm:$0xf]
  %v69 = vld [vmem:[%s1 + $0x70] sm:$0xf]
  %v70 = vld [vmem:[%s1 + $0x74] sm:$0xf]
  %v71 = vld [vmem:[%s1 + $0x78] sm:$0xf]
  %v72 = vld [vmem:[%s1 + $0x7c] sm:$0xf]
  %v73 = vld [vmem:[%s1 + $0x80] sm:$0xf]
  %v74 = vld [vmem:[%s1 + $0x84] sm:$0xf]
  %v75 = vld [vmem:[%s1 + $0x88] sm:$0xf]
  %v76 = vld [vmem:[%s1 + $0x8c] sm:$0xf]
  %v77 = vld [vmem:[%s1 + $0x90] sm:$0xf]
  %v78 = vld [vmem:[%s1 + $0x94] sm:$0xf]
  %v79 = vld [vmem:[%s1 + $0x98] sm:$0xf]
  %v80 = vld [vmem:[%s1 + $0x9c] sm:$0xf]
  %v81 = vld [vmem:[%s1 + $0xa0] sm:$0xf]
  %v82 = vld [vmem:[%s1 + $0xa4] sm:$0xf]
  %v83 = vld [vmem:[%s1 + $0xa8] sm:$0xf]
  %v84 = vld [vmem:[%s1 + $0xac] sm:$0xf]
  %v85 = vld [vmem:[%s1 + $0xb0] sm:$0xf]
  %v86 = vld [vmem:[%s1 + $0xb4] sm:$0xf]
  %v87 = vld [vmem:[%s1 + $0xb8] sm:$0xf]
  %v88 = vld [vmem:[%s1 + $0xbc] sm:$0xf]
  %v89 = vld [vmem:[%s1 + $0xc0] sm:$0xf]
  %v90 = vld [vmem:[%s1 + $0xc4] sm:$0xf]
  %v91 = vld [vmem:[%s1 + $0xc8] sm:$0xf]
  %v92 = vld [vmem:[%s1 + $0xcc] sm:$0xf]
  %v93 = vld [vmem:[%s1 + $0xd0] sm:$0xf]
  %v94 = vld [vmem:[%s1 + $0xd4] sm:$0xf]
  %v95 = vld [vmem:[%s1 + $0xd8] sm:$0xf]
  %v96 = vld [vmem:[%s1 + $0xdc] sm:$0xf]
  %v97 = vld [vmem:[%s1 + $0xe0] sm:$0xf]
  %v98 = vld [vmem:[%s1 + $0xe4] sm:$0xf]
  %v99 = vld [vmem:[%s1 + $0xe8] sm:$0xf]
  %v100 = vld [vmem:[%s1 + $0xec] sm:$0xf]
  %v101 = vld [vmem:[%s1 + $0xf0] sm:$0xf]
  %v102 = vld [vmem:[%s1 + $0xf4] sm:$0xf]
  %v103 = vld [vmem:[%s1 + $0xf8] sm:$0xf]
  %v104 = vld [vmem:[%s1 + $0xfc] sm:$0xf]
  %v105 = vld [vmem:[%s1 + $0x100] sm:$0xf]
  %v106 = vld [vmem:[%s1 + $0x104] sm:$0xf]
  %v107 = vld [vmem:[%s1 + $0x108] sm:$0xf]
  %v108 = vld [vmem:[%s1 + $0x10c] sm:$0xf]
  %v109 = vld [vmem:[%s1 + $0x110] sm:$0xf]
  %v110 = vld [vmem:[%s1 + $0x114] sm:$0xf]
  %v111 = vld [vmem:[%s1 + $0x118] sm:$0xf]
  %v112 = vld [vmem:[%s1 + $0x11c] sm:$0xf]
  %v113 = vld [vmem:[%s1 + $0x120] sm:$0xf]
  %v114 = vld [vmem:[%s1 + $0x124] sm:$0xf]
  %v115 = vld [vmem:[%s1 + $0x128] sm:$0xf]
  %v116 = vld [vmem:[%s1 + $0x12c] sm:$0xf]
  %v117 = vld [vmem:[%s1 + $0x130] sm:$0xf]
  %v118 = vld [vmem:[%s1 + $0x134] sm:$0xf]
  %v119 = vld [vmem:[%s1 + $0x138] sm:$0xf]
  %v120 = vld [vmem:[%s1 + $0x13c] sm:$0xf]
  %v121 = vld [vmem:[%s1 + $0x140] sm:$0xf]
  %v122 = vld [vmem:[%s1 + $0x144] sm:$0xf]
  %v123 = vld [vmem:[%s1 + $0x148] sm:$0xf]
  %v124 = vld [vmem:[%s1 + $0x14c] sm:$0xf]
  %v125 = vld [vmem:[%s1 + $0x150] sm:$0xf]
  %v126 = vld [vmem:[%s1 + $0x154] sm:$0xf]
  %v127 = vld [vmem:[%s1 + $0x158] sm:$0xf]
  %v128 = vld [vmem:[%s1 + $0x15c] sm:$0xf]
  %v129 = vld [vmem:[%s1 + $0x160] sm:$0xf]
  %v130 = vld [vmem:[%s1 + $0x164] sm:$0xf]
  %v131 = vld [vmem:[%s1 + $0x168] sm:$0xf]
  %v132 = vld [vmem:[%s1 + $0x16c] sm:$0xf]
  %v133 = vld [vmem:[%s1 + $0x170] sm:$0xf]
  %v134 = vld [vmem:[%s1 + $0x174] sm:$0xf]
  %v135 = vld [vmem:[%s1 + $0x178] sm:$0xf]
  %v136 = vld [vmem:[%s1 + $0x17c] sm:$0xf]
  %v137 = vld [vmem:[%s1 + $0x180] sm:$0xf]
  %v138 = vld [vmem:[%s1 + $0x184] sm:$0xf]
  %v139 = vld [vmem:[%s1 + $0x188] sm:$0xf]
  %v140 = vld [vmem:[%s1 + $0x18c] sm:$0xf]
  %v141 = vld [vmem:[%s1 + $0x190] sm:$0xf]
  %v142 = vld [vmem:[%s1 + $0x194] sm:$0xf]
  %v143 = vld [vmem:[%s1 + $0x198] sm:$0xf]
  %v144 = vld [vmem:[%s1 + $0x19c] sm:$0xf]
  %v145 = vld [vmem:[%s1 + $0x1a0] sm:$0xf]
  %v146 = vld [vmem:[%s1 + $0x1a4] sm:$0xf]
  %v147 = vld [vmem:[%s1 + $0x1a8] sm:$0xf]
  %v148 = vld [vmem:[%s1 + $0x1ac] sm:$0xf]
  %v149 = vld [vmem:[%s1 + $0x1b0] sm:$0xf]
  %v150 = vld [vmem:[%s1 + $0x1b4] sm:$0xf]
  %v151 = vld [vmem:[%s1 + $0x1b8] sm:$0xf]
  %v152 = vld [vmem:[%s1 + $0x1bc] sm:$0xf]
  %v153 = vld [vmem:[%s1 + $0x1c0] sm:$0xf]
  %v154 = vld [vmem:[%s1 + $0x1c4] sm:$0xf]
  %v155 = vld [vmem:[%s1 + $0x1c8] sm:$0xf]
  %v156 = vld [vmem:[%s1 + $0x1cc] sm:$0xf]
  %v157 = vld [vmem:[%s1 + $0x1d0] sm:$0xf]
  %v158 = vld [vmem:[%s1 + $0x1d4] sm:$0xf]
  %v159 = vld [vmem:[%s1 + $0x1d8] sm:$0xf]
  %v160 = vld [vmem:[%s1 + $0x1dc] sm:$0xf]
  %v161 = vld [vmem:[%s1 + $0x1e0] sm:$0xf]
  %v162 = vld [vmem:[%s1 + $0x1e4] sm:$0xf]
  %v163 = vld [vmem:[%s1 + $0x1e8] sm:$0xf]
  %v164 = vld [vmem:[%s1 + $0x1ec] sm:$0xf]
  %v165 = vld [vmem:[%s1 + $0x1f0] sm:$0xf]
  %v166 = vld [vmem:[%s1 + $0x1f4] sm:$0xf]
  %v167 = vld [vmem:[%s1 + $0x1f8] sm:$0xf]
  %v168 = vld [vmem:[%s1 + $0x1fc] sm:$0xf]
  %v169 = vld [vmem:[%s1 + $0x200] sm:$0xf]
  %v170 = vld [vmem:[%s1 + $0x204] sm:$0xf]
  %v171 = vld [vmem:[%s1 + $0x208] sm:$0xf]
  %v172 = vld [vmem:[%s1 + $0x20c] sm:$0xf]
  %v173 = vld [vmem:[%s1 + $0x210] sm:$0xf]
  %v174 = vld [vmem:[%s1 + $0x214] sm:$0xf]
  %v175 = vld [vmem:[%s1 + $0x218] sm:$0xf]
  %v176 = vld [vmem:[%s1 + $0x21c] sm:$0xf]
  %v177 = vld [vmem:[%s1 + $0x220] sm:$0xf]
  %v178 = vld [vmem:[%s1 + $0x224] sm:$0xf]
  %v179 = vld [vmem:[%s1 + $0x228] sm:$0xf]
  %v180 = vld [vmem:[%s1 + $0x22c] sm:$0xf]
  %v181 = vld [vmem:[%s1 + $0x230] sm:$0xf]
  %v182 = vld [vmem:[%s1 + $0x234] sm:$0xf]
  %v183 = vld [vmem:[%s1 + $0x238] sm:$0xf]
  %v184 = vld [vmem:[%s1 + $0x23c] sm:$0xf]
  %v205 = vunpack.c.l.b16 %v21
  %v206 = vunpack.c.h.b16 %v21
  %v207 = vunpack.c.l.b16 %v22
  %v208 = vunpack.c.h.b16 %v22
  %v209 = vunpack.c.l.b16 %v23
  %v210 = vunpack.c.h.b16 %v23
  %v211 = vunpack.c.l.b16 %v24
  %v212 = vunpack.c.h.b16 %v24
  %v213 = vunpack.c.l.b16 %v25
  %v214 = vunpack.c.l.b16 %v26
  %v215 = vunpack.c.h.b16 %v26
  %v216 = vunpack.c.l.b16 %v27
  %v217 = vunpack.c.h.b16 %v27
  %v218 = vunpack.c.l.b16 %v28
  %v219 = vunpack.c.h.b16 %v28
  %v220 = vunpack.c.l.b16 %v29
  %v221 = vunpack.c.h.b16 %v29
  %v222 = vunpack.c.l.b16 %v30
  %v223 = vunpack.c.l.b16 %v31
  %v224 = vunpack.c.h.b16 %v31
  %v225 = vunpack.c.l.b16 %v32
  %v226 = vunpack.c.h.b16 %v32
  %v227 = vunpack.c.l.b16 %v33
  %v228 = vunpack.c.h.b16 %v33
  %v229 = vunpack.c.l.b16 %v34
  %v230 = vunpack.c.h.b16 %v34
  %v231 = vunpack.c.l.b16 %v35
  %v232 = vunpack.c.l.b16 %v36
  %v233 = vunpack.c.h.b16 %v36
  %v234 = vunpack.c.l.b16 %v37
  %v235 = vunpack.c.h.b16 %v37
  %v236 = vunpack.c.l.b16 %v38
  %v237 = vunpack.c.h.b16 %v38
  %v238 = vunpack.c.l.b16 %v39
  %v239 = vunpack.c.h.b16 %v39
  %v240 = vunpack.c.l.b16 %v40
  %v241 = vpack.c.b16 %v214, %v205
  %v242 = vpack.c.b16 %v215, %v206
  %v243 = vpack.c.b16 %v216, %v207
  %v244 = vpack.c.b16 %v217, %v208
  %v245 = vpack.c.b16 %v218, %v209
  %v246 = vpack.c.b16 %v219, %v210
  %v247 = vpack.c.b16 %v220, %v211
  %v248 = vpack.c.b16 %v221, %v212
  %v249 = vpack.c.b16 %v222, %v213
  %v250 = vpack.c.b16 %v232, %v223
  %v251 = vpack.c.b16 %v233, %v224
  %v252 = vpack.c.b16 %v234, %v225
  %v253 = vpack.c.b16 %v235, %v226
  %v254 = vpack.c.b16 %v236, %v227
  %v255 = vpack.c.b16 %v237, %v228
  %v256 = vpack.c.b16 %v238, %v229
  %v257 = vpack.c.b16 %v239, %v230
  %v258 = vpack.c.b16 %v240, %v231
  %v421 = vunpack.c.l.b16 %v41
  %v422 = vunpack.c.l.b16 %v42
  %v423 = vunpack.c.l.b16 %v43
  %v424 = vunpack.c.l.b16 %v44
  %v425 = vunpack.c.l.b16 %v45
  %v426 = vunpack.c.l.b16 %v46
  %v427 = vunpack.c.l.b16 %v47
  %v428 = vunpack.c.l.b16 %v48
  %v429 = vunpack.c.l.b16 %v49
  %v430 = vunpack.c.l.b16 %v50
  %v431 = vunpack.c.l.b16 %v51
  %v432 = vunpack.c.l.b16 %v52
  %v433 = vunpack.c.l.b16 %v53
  %v434 = vunpack.c.l.b16 %v54
  %v435 = vunpack.c.l.b16 %v55
  %v436 = vunpack.c.l.b16 %v56
  %v437 = vunpack.c.l.b16 %v57
  %v438 = vunpack.c.l.b16 %v58
  %v439 = vunpack.c.l.b16 %v59
  %v440 = vunpack.c.l.b16 %v60
  %v441 = vunpack.c.l.b16 %v61
  %v442 = vunpack.c.l.b16 %v62
  %v443 = vunpack.c.l.b16 %v63
  %v444 = vunpack.c.l.b16 %v64
  %v445 = vunpack.c.l.b16 %v65
  %v446 = vunpack.c.l.b16 %v66
  %v447 = vunpack.c.l.b16 %v67
  %v448 = vunpack.c.l.b16 %v68
  %v449 = vunpack.c.l.b16 %v69
  %v450 = vunpack.c.l.b16 %v70
  %v451 = vunpack.c.l.b16 %v71
  %v452 = vunpack.c.l.b16 %v72
  %v453 = vunpack.c.l.b16 %v73
  %v454 = vunpack.c.l.b16 %v74
  %v455 = vunpack.c.l.b16 %v75
  %v456 = vunpack.c.l.b16 %v76
  %v457 = vunpack.c.l.b16 %v77
  %v458 = vunpack.c.l.b16 %v78
  %v459 = vunpack.c.l.b16 %v79
  %v460 = vunpack.c.l.b16 %v80
  %v461 = vunpack.c.l.b16 %v81
  %v462 = vunpack.c.l.b16 %v82
  %v463 = vunpack.c.l.b16 %v83
  %v464 = vunpack.c.l.b16 %v84
  %v465 = vunpack.c.l.b16 %v85
  %v466 = vunpack.c.l.b16 %v86
  %v467 = vunpack.c.l.b16 %v87
  %v468 = vunpack.c.l.b16 %v88
  %v469 = vunpack.c.l.b16 %v89
  %v470 = vunpack.c.l.b16 %v90
  %v471 = vunpack.c.l.b16 %v91
  %v472 = vunpack.c.l.b16 %v92
  %v473 = vunpack.c.l.b16 %v93
  %v474 = vunpack.c.l.b16 %v94
  %v475 = vunpack.c.l.b16 %v95
  %v476 = vunpack.c.l.b16 %v96
  %v477 = vunpack.c.l.b16 %v97
  %v478 = vunpack.c.l.b16 %v98
  %v479 = vunpack.c.l.b16 %v99
  %v480 = vunpack.c.l.b16 %v100
  %v481 = vunpack.c.l.b16 %v101
  %v482 = vunpack.c.l.b16 %v102
  %v483 = vunpack.c.l.b16 %v103
  %v484 = vunpack.c.l.b16 %v104
  %v485 = vunpack.c.l.b16 %v105
  %v486 = vunpack.c.l.b16 %v106
  %v487 = vunpack.c.l.b16 %v107
  %v488 = vunpack.c.l.b16 %v108
  %v489 = vunpack.c.l.b16 %v109
  %v490 = vunpack.c.l.b16 %v110
  %v491 = vunpack.c.l.b16 %v111
  %v492 = vunpack.c.l.b16 %v112
  %v493 = vunpack.c.l.b16 %v113
  %v494 = vunpack.c.l.b16 %v114
  %v495 = vunpack.c.l.b16 %v115
  %v496 = vunpack.c.l.b16 %v116
  %v497 = vunpack.c.l.b16 %v117
  %v498 = vunpack.c.l.b16 %v118
  %v499 = vunpack.c.l.b16 %v119
  %v500 = vunpack.c.l.b16 %v120
  %v501 = vunpack.c.l.b16 %v121
  %v502 = vunpack.c.l.b16 %v122
  %v503 = vunpack.c.l.b16 %v123
  %v504 = vunpack.c.l.b16 %v124
  %v505 = vunpack.c.l.b16 %v125
  %v506 = vunpack.c.l.b16 %v126
  %v507 = vunpack.c.l.b16 %v127
  %v508 = vunpack.c.l.b16 %v128
  %v509 = vunpack.c.l.b16 %v129
  %v510 = vunpack.c.l.b16 %v130
  %v511 = vunpack.c.l.b16 %v131
  %v512 = vunpack.c.l.b16 %v132
  %v513 = vunpack.c.l.b16 %v133
  %v514 = vunpack.c.l.b16 %v134
  %v515 = vunpack.c.l.b16 %v135
  %v516 = vunpack.c.l.b16 %v136
  %v517 = vunpack.c.l.b16 %v137
  %v518 = vunpack.c.l.b16 %v138
  %v519 = vunpack.c.l.b16 %v139
  %v520 = vunpack.c.l.b16 %v140
  %v521 = vunpack.c.l.b16 %v141
  %v522 = vunpack.c.l.b16 %v142
  %v523 = vunpack.c.l.b16 %v143
  %v524 = vunpack.c.l.b16 %v144
  %v525 = vunpack.c.l.b16 %v145
  %v526 = vunpack.c.l.b16 %v146
  %v527 = vunpack.c.l.b16 %v147
  %v528 = vunpack.c.l.b16 %v148
  %v529 = vunpack.c.l.b16 %v149
  %v530 = vunpack.c.l.b16 %v150
  %v531 = vunpack.c.l.b16 %v151
  %v532 = vunpack.c.l.b16 %v152
  %v533 = vunpack.c.l.b16 %v153
  %v534 = vunpack.c.l.b16 %v154
  %v535 = vunpack.c.l.b16 %v155
  %v536 = vunpack.c.l.b16 %v156
  %v537 = vunpack.c.l.b16 %v157
  %v538 = vunpack.c.l.b16 %v158
  %v539 = vunpack.c.l.b16 %v159
  %v540 = vunpack.c.l.b16 %v160
  %v541 = vunpack.c.l.b16 %v161
  %v542 = vunpack.c.l.b16 %v162
  %v543 = vunpack.c.l.b16 %v163
  %v544 = vunpack.c.l.b16 %v164
  %v545 = vunpack.c.l.b16 %v165
  %v546 = vunpack.c.l.b16 %v166
  %v547 = vunpack.c.l.b16 %v167
  %v548 = vunpack.c.l.b16 %v168
  %v549 = vunpack.c.l.b16 %v169
  %v550 = vunpack.c.l.b16 %v170
  %v551 = vunpack.c.l.b16 %v171
  %v552 = vunpack.c.l.b16 %v172
  %v553 = vunpack.c.l.b16 %v173
  %v554 = vunpack.c.l.b16 %v174
  %v555 = vunpack.c.l.b16 %v175
  %v556 = vunpack.c.l.b16 %v176
  %v557 = vunpack.c.l.b16 %v177
  %v558 = vunpack.c.l.b16 %v178
  %v559 = vunpack.c.l.b16 %v179
  %v560 = vunpack.c.l.b16 %v180
  %v561 = vunpack.c.l.b16 %v181
  %v562 = vunpack.c.l.b16 %v182
  %v563 = vunpack.c.l.b16 %v183
  %v564 = vunpack.c.l.b16 %v184
  %v565 = vpack.c.b16 %v422, %v421
  %v566 = vpack.c.b16 %v424, %v423
  %v567 = vpack.c.b16 %v426, %v425
  %v568 = vpack.c.b16 %v428, %v427
  %v569 = vpack.c.b16 %v430, %v429
  %v570 = vpack.c.b16 %v432, %v431
  %v571 = vpack.c.b16 %v434, %v433
  %v572 = vpack.c.b16 %v436, %v435
  %v573 = vpack.c.b16 %v438, %v437
  %v574 = vpack.c.b16 %v440, %v439
  %v575 = vpack.c.b16 %v442, %v441
  %v576 = vpack.c.b16 %v444, %v443
  %v577 = vpack.c.b16 %v446, %v445
  %v578 = vpack.c.b16 %v448, %v447
  %v579 = vpack.c.b16 %v450, %v449
  %v580 = vpack.c.b16 %v452, %v451
  %v581 = vpack.c.b16 %v454, %v453
  %v582 = vpack.c.b16 %v456, %v455
  %v583 = vpack.c.b16 %v458, %v457
  %v584 = vpack.c.b16 %v460, %v459
  %v585 = vpack.c.b16 %v462, %v461
  %v586 = vpack.c.b16 %v464, %v463
  %v587 = vpack.c.b16 %v466, %v465
  %v588 = vpack.c.b16 %v468, %v467
  %v589 = vpack.c.b16 %v470, %v469
  %v590 = vpack.c.b16 %v472, %v471
  %v591 = vpack.c.b16 %v474, %v473
  %v592 = vpack.c.b16 %v476, %v475
  %v593 = vpack.c.b16 %v478, %v477
  %v594 = vpack.c.b16 %v480, %v479
  %v595 = vpack.c.b16 %v482, %v481
  %v596 = vpack.c.b16 %v484, %v483
  %v597 = vpack.c.b16 %v486, %v485
  %v598 = vpack.c.b16 %v488, %v487
  %v599 = vpack.c.b16 %v490, %v489
  %v600 = vpack.c.b16 %v492, %v491
  %v601 = vpack.c.b16 %v494, %v493
  %v602 = vpack.c.b16 %v496, %v495
  %v603 = vpack.c.b16 %v498, %v497
  %v604 = vpack.c.b16 %v500, %v499
  %v605 = vpack.c.b16 %v502, %v501
  %v606 = vpack.c.b16 %v504, %v503
  %v607 = vpack.c.b16 %v506, %v505
  %v608 = vpack.c.b16 %v508, %v507
  %v609 = vpack.c.b16 %v510, %v509
  %v610 = vpack.c.b16 %v512, %v511
  %v611 = vpack.c.b16 %v514, %v513
  %v612 = vpack.c.b16 %v516, %v515
  %v613 = vpack.c.b16 %v518, %v517
  %v614 = vpack.c.b16 %v520, %v519
  %v615 = vpack.c.b16 %v522, %v521
  %v616 = vpack.c.b16 %v524, %v523
  %v617 = vpack.c.b16 %v526, %v525
  %v618 = vpack.c.b16 %v528, %v527
  %v619 = vpack.c.b16 %v530, %v529
  %v620 = vpack.c.b16 %v532, %v531
  %v621 = vpack.c.b16 %v534, %v533
  %v622 = vpack.c.b16 %v536, %v535
  %v623 = vpack.c.b16 %v538, %v537
  %v624 = vpack.c.b16 %v540, %v539
  %v625 = vpack.c.b16 %v542, %v541
  %v626 = vpack.c.b16 %v544, %v543
  %v627 = vpack.c.b16 %v546, %v545
  %v628 = vpack.c.b16 %v548, %v547
  %v629 = vpack.c.b16 %v550, %v549
  %v630 = vpack.c.b16 %v552, %v551
  %v631 = vpack.c.b16 %v554, %v553
  %v632 = vpack.c.b16 %v556, %v555
  %v633 = vpack.c.b16 %v558, %v557
  %v634 = vpack.c.b16 %v560, %v559
  %v635 = vpack.c.b16 %v562, %v561
  %v636 = vpack.c.b16 %v564, %v563
  %709 = vmatprep.subr.bf16.mxu0 0
  %710 = vmatpush1.bf16.msra.mxu0 %v572
  %711 = vmatprep.subr.bf16.mxu0 0
  %712 = vmatpush1.bf16.msra.mxu0 %v571
  %713 = vmatprep.subr.bf16.mxu0 0
  %714 = vmatpush1.bf16.msra.mxu0 %v570
  %715 = vmatprep.subr.bf16.mxu0 0
  %716 = vmatpush1.bf16.msra.mxu0 %v569
  %717 = vmatprep.subr.bf16.mxu0 0
  %718 = vmatpush1.bf16.msra.mxu0 %v568
  %719 = vmatprep.subr.bf16.mxu0 0
  %720 = vmatpush1.bf16.msra.mxu0 %v567
  %721 = vmatprep.subr.bf16.mxu0 0
  %722 = vmatpush1.bf16.msra.mxu0 %v566
  %723 = vmatprep.subr.bf16.mxu0 0
  %724 = vmatpush1.bf16.msra.mxu0 %v565
  %725 = vmatprep.subr.bf16.mxu0 0
  %726 = vmatpush2.bf16.msra.mxu0 %v580
  %727 = vmatprep.subr.bf16.mxu0 0
  %728 = vmatpush2.bf16.msra.mxu0 %v579
  %729 = vmatprep.subr.bf16.mxu0 0
  %730 = vmatpush2.bf16.msra.mxu0 %v578
  %731 = vmatprep.subr.bf16.mxu0 0
  %732 = vmatpush2.bf16.msra.mxu0 %v577
  %733 = vmatprep.subr.bf16.mxu0 0
  %734 = vmatpush2.bf16.msra.mxu0 %v576
  %735 = vmatprep.subr.bf16.mxu0 0
  %736 = vmatpush2.bf16.msra.mxu0 %v575
  %737 = vmatprep.subr.bf16.mxu0 0
  %738 = vmatpush2.bf16.msra.mxu0 %v574
  %739 = vmatprep.subr.bf16.mxu0 0
  %740 = vmatpush2.bf16.msra.mxu0 %v573
  %741 = vmatprep.mubr.bf16.mxu0 %v242
  %742 = vmatmul.mubr.bf16.gmra.mxu0 %v241
  %v743 = vpop.f32.mrf.mxu0
  %v744 = vadd.f32 0.0, %v743
  %v745 = vpop.f32.mrf.mxu0
  %v746 = vpop.f32.mrf.mxu0
  %v747 = vadd.f32 0.0, %v746
  %v748 = vpop.f32.mrf.mxu0
  %749 = vmatprep.mubr.bf16.mxu0 %v251
  %750 = vmatmul.mubr.bf16.gmra.mxu0 %v250
  %v751 = vpop.f32.mrf.mxu0
  %v752 = vadd.f32 0.0, %v751
  %v753 = vpop.f32.mrf.mxu0
  %v754 = vpop.f32.mrf.mxu0
  %v755 = vadd.f32 0.0, %v754
  %v756 = vpop.f32.mrf.mxu0
  %757 = vdwg.mxu0
  %758 = vmatprep.subr.bf16.mxu0 0
  %759 = vmatpush1.bf16.msra.mxu0 %v588
  %760 = vmatprep.subr.bf16.mxu0 0
  %761 = vmatpush1.bf16.msra.mxu0 %v587
  %762 = vmatprep.subr.bf16.mxu0 0
  %763 = vmatpush1.bf16.msra.mxu0 %v586
  %764 = vmatprep.subr.bf16.mxu0 0
  %765 = vmatpush1.bf16.msra.mxu0 %v585
  %766 = vmatprep.subr.bf16.mxu0 0
  %767 = vmatpush1.bf16.msra.mxu0 %v584
  %768 = vmatprep.subr.bf16.mxu0 0
  %769 = vmatpush1.bf16.msra.mxu0 %v583
  %770 = vmatprep.subr.bf16.mxu0 0
  %771 = vmatpush1.bf16.msra.mxu0 %v582
  %772 = vmatprep.subr.bf16.mxu0 0
  %773 = vmatpush1.bf16.msra.mxu0 %v581
  %774 = vmatprep.subr.bf16.mxu0 0
  %775 = vmatpush2.bf16.msra.mxu0 %v596
  %776 = vmatprep.subr.bf16.mxu0 0
  %777 = vmatpush2.bf16.msra.mxu0 %v595
  %778 = vmatprep.subr.bf16.mxu0 0
  %779 = vmatpush2.bf16.msra.mxu0 %v594
  %780 = vmatprep.subr.bf16.mxu0 0
  %781 = vmatpush2.bf16.msra.mxu0 %v593
  %782 = vmatprep.subr.bf16.mxu0 0
  %783 = vmatpush2.bf16.msra.mxu0 %v592
  %784 = vmatprep.subr.bf16.mxu0 0
  %785 = vmatpush2.bf16.msra.mxu0 %v591
  %786 = vmatprep.subr.bf16.mxu0 0
  %787 = vmatpush2.bf16.msra.mxu0 %v590
  %788 = vmatprep.subr.bf16.mxu0 0
  %789 = vmatpush2.bf16.msra.mxu0 %v589
  %790 = vmatprep.mubr.bf16.mxu0 %v244
  %791 = vmatmul.mubr.bf16.gmra.mxu0 %v243
  %v792 = vpop.f32.mrf.mxu0
  %v793 = vadd.f32 %v744, %v792
  %v794 = vpop.f32.mrf.mxu0
  %v795 = vpop.f32.mrf.mxu0
  %v796 = vadd.f32 %v747, %v795
  %v797 = vpop.f32.mrf.mxu0
  %798 = vmatprep.mubr.bf16.mxu0 %v253
  %799 = vmatmul.mubr.bf16.gmra.mxu0 %v252
  %v800 = vpop.f32.mrf.mxu0
  %v801 = vadd.f32 %v752, %v800
  %v802 = vpop.f32.mrf.mxu0
  %v803 = vpop.f32.mrf.mxu0
  %v804 = vadd.f32 %v755, %v803
  %v805 = vpop.f32.mrf.mxu0
  %806 = vdwg.mxu0
  %807 = vmatprep.subr.bf16.mxu0 0
  %808 = vmatpush1.bf16.msra.mxu0 %v604
  %809 = vmatprep.subr.bf16.mxu0 0
  %810 = vmatpush1.bf16.msra.mxu0 %v603
  %811 = vmatprep.subr.bf16.mxu0 0
  %812 = vmatpush1.bf16.msra.mxu0 %v602
  %813 = vmatprep.subr.bf16.mxu0 0
  %814 = vmatpush1.bf16.msra.mxu0 %v601
  %815 = vmatprep.subr.bf16.mxu0 0
  %816 = vmatpush1.bf16.msra.mxu0 %v600
  %817 = vmatprep.subr.bf16.mxu0 0
  %818 = vmatpush1.bf16.msra.mxu0 %v599
  %819 = vmatprep.subr.bf16.mxu0 0
  %820 = vmatpush1.bf16.msra.mxu0 %v598
  %821 = vmatprep.subr.bf16.mxu0 0
  %822 = vmatpush1.bf16.msra.mxu0 %v597
  %823 = vmatprep.subr.bf16.mxu0 0
  %824 = vmatpush2.bf16.msra.mxu0 %v612
  %825 = vmatprep.subr.bf16.mxu0 0
  %826 = vmatpush2.bf16.msra.mxu0 %v611
  %827 = vmatprep.subr.bf16.mxu0 0
  %828 = vmatpush2.bf16.msra.mxu0 %v610
  %829 = vmatprep.subr.bf16.mxu0 0
  %830 = vmatpush2.bf16.msra.mxu0 %v609
  %831 = vmatprep.subr.bf16.mxu0 0
  %832 = vmatpush2.bf16.msra.mxu0 %v608
  %833 = vmatprep.subr.bf16.mxu0 0
  %834 = vmatpush2.bf16.msra.mxu0 %v607
  %835 = vmatprep.subr.bf16.mxu0 0
  %836 = vmatpush2.bf16.msra.mxu0 %v606
  %837 = vmatprep.subr.bf16.mxu0 0
  %838 = vmatpush2.bf16.msra.mxu0 %v605
  %839 = vmatprep.mubr.bf16.mxu0 %v246
  %840 = vmatmul.mubr.bf16.gmra.mxu0 %v245
  %v841 = vpop.f32.mrf.mxu0
  %v842 = vadd.f32 %v793, %v841
  %v843 = vpop.f32.mrf.mxu0
  %v844 = vpop.f32.mrf.mxu0
  %v845 = vadd.f32 %v796, %v844
  %v846 = vpop.f32.mrf.mxu0
  %847 = vmatprep.mubr.bf16.mxu0 %v255
  %848 = vmatmul.mubr.bf16.gmra.mxu0 %v254
  %v849 = vpop.f32.mrf.mxu0
  %v850 = vadd.f32 %v801, %v849
  %v851 = vpop.f32.mrf.mxu0
  %v852 = vpop.f32.mrf.mxu0
  %v853 = vadd.f32 %v804, %v852
  %v854 = vpop.f32.mrf.mxu0
  %855 = vdwg.mxu0
  %856 = vmatprep.subr.bf16.mxu0 0
  %857 = vmatpush1.bf16.msra.mxu0 %v620
  %858 = vmatprep.subr.bf16.mxu0 0
  %859 = vmatpush1.bf16.msra.mxu0 %v619
  %860 = vmatprep.subr.bf16.mxu0 0
  %861 = vmatpush1.bf16.msra.mxu0 %v618
  %862 = vmatprep.subr.bf16.mxu0 0
  %863 = vmatpush1.bf16.msra.mxu0 %v617
  %864 = vmatprep.subr.bf16.mxu0 0
  %865 = vmatpush1.bf16.msra.mxu0 %v616
  %866 = vmatprep.subr.bf16.mxu0 0
  %867 = vmatpush1.bf16.msra.mxu0 %v615
  %868 = vmatprep.subr.bf16.mxu0 0
  %869 = vmatpush1.bf16.msra.mxu0 %v614
  %870 = vmatprep.subr.bf16.mxu0 0
  %871 = vmatpush1.bf16.msra.mxu0 %v613
  %872 = vmatprep.subr.bf16.mxu0 0
  %873 = vmatpush2.bf16.msra.mxu0 %v628
  %874 = vmatprep.subr.bf16.mxu0 0
  %875 = vmatpush2.bf16.msra.mxu0 %v627
  %876 = vmatprep.subr.bf16.mxu0 0
  %877 = vmatpush2.bf16.msra.mxu0 %v626
  %878 = vmatprep.subr.bf16.mxu0 0
  %879 = vmatpush2.bf16.msra.mxu0 %v625
  %880 = vmatprep.subr.bf16.mxu0 0
  %881 = vmatpush2.bf16.msra.mxu0 %v624
  %882 = vmatprep.subr.bf16.mxu0 0
  %883 = vmatpush2.bf16.msra.mxu0 %v623
  %884 = vmatprep.subr.bf16.mxu0 0
  %885 = vmatpush2.bf16.msra.mxu0 %v622
  %886 = vmatprep.subr.bf16.mxu0 0
  %887 = vmatpush2.bf16.msra.mxu0 %v621
  %888 = vmatprep.mubr.bf16.mxu0 %v248
  %889 = vmatmul.mubr.bf16.gmra.mxu0 %v247
  %v890 = vpop.f32.mrf.mxu0
  %v891 = vadd.f32 %v842, %v890
  %v892 = vpop.f32.mrf.mxu0
  %v893 = vpop.f32.mrf.mxu0
  %v894 = vadd.f32 %v845, %v893
  %v895 = vpop.f32.mrf.mxu0
  %896 = vmatprep.mubr.bf16.mxu0 %v257
  %897 = vmatmul.mubr.bf16.gmra.mxu0 %v256
  %v898 = vpop.f32.mrf.mxu0
  %v899 = vadd.f32 %v850, %v898
  %v900 = vpop.f32.mrf.mxu0
  %v901 = vpop.f32.mrf.mxu0
  %v902 = vadd.f32 %v853, %v901
  %v903 = vpop.f32.mrf.mxu0
  %904 = vdwg.mxu0
  %905 = vmatprep.subr.bf16.mxu0 0
  %906 = vmatpush1.bf16.msra.mxu0 %v636
  %907 = vmatprep.subr.bf16.mxu0 0
  %908 = vmatpush1.bf16.msra.mxu0 %v635
  %909 = vmatprep.subr.bf16.mxu0 0
  %910 = vmatpush1.bf16.msra.mxu0 %v634
  %911 = vmatprep.subr.bf16.mxu0 0
  %912 = vmatpush1.bf16.msra.mxu0 %v633
  %913 = vmatprep.subr.bf16.mxu0 0
  %914 = vmatpush1.bf16.msra.mxu0 %v632
  %915 = vmatprep.subr.bf16.mxu0 0
  %916 = vmatpush1.bf16.msra.mxu0 %v631
  %917 = vmatprep.subr.bf16.mxu0 0
  %918 = vmatpush1.bf16.msra.mxu0 %v630
  %919 = vmatprep.subr.bf16.mxu0 0
  %920 = vmatpush1.bf16.msra.mxu0 %v629
  %921 = vmatprep.subr.bf16.mxu0 0
  %922 = vmatpush2.bf16.msra.mxu0 0
  %923 = vmatprep.subr.bf16.mxu0 0
  %924 = vmatpush2.bf16.msra.mxu0 0
  %925 = vmatprep.subr.bf16.mxu0 0
  %926 = vmatpush2.bf16.msra.mxu0 0
  %927 = vmatprep.subr.bf16.mxu0 0
  %928 = vmatpush2.bf16.msra.mxu0 0
  %929 = vmatprep.subr.bf16.mxu0 0
  %930 = vmatpush2.bf16.msra.mxu0 0
  %931 = vmatprep.subr.bf16.mxu0 0
  %932 = vmatpush2.bf16.msra.mxu0 0
  %933 = vmatprep.subr.bf16.mxu0 0
  %934 = vmatpush2.bf16.msra.mxu0 0
  %935 = vmatprep.subr.bf16.mxu0 0
  %936 = vmatpush2.bf16.msra.mxu0 0
  %937 = vmatprep.mubr.bf16.mxu0 0
  %938 = vmatmul.mubr.bf16.gmra.mxu0 %v249
  %v939 = vpop.f32.mrf.mxu0
  %v940 = vadd.f32 %v891, %v939
  %v941 = vpop.f32.mrf.mxu0
  %v942 = vpop.f32.mrf.mxu0
  %v943 = vadd.f32 %v894, %v942
  %v944 = vpop.f32.mrf.mxu0
  %945 = vmatprep.mubr.bf16.mxu0 0
  %946 = vmatmul.mubr.bf16.gmra.mxu0 %v258
  %v947 = vpop.f32.mrf.mxu0
  %v948 = vadd.f32 %v899, %v947
  %v949 = vpop.f32.mrf.mxu0
  %v950 = vpop.f32.mrf.mxu0
  %v951 = vadd.f32 %v902, %v950
  %v952 = vpop.f32.mrf.mxu0
  %953 = vdwg.mxu0
  %v954 = vld [vmem:[%s2] sm:$0x1]
  %v955 = vld [vmem:[%s3] sm:$0x1]
  %v956 = vadd.f32 %v940, %v943
  %v957 = vadd.f32 %v956, %v948
  %v958 = vadd.f32 %v957, %v951
  %v959 = vrot.slane %v958, 4
  %v960 = vadd.f32 %v958, %v959
  %v961 = vrot.slane %v960, 2
  %v962 = vadd.f32 %v960, %v961
  %v963 = vrot.slane %v962, 1
  %v964 = vadd.f32 %v962, %v963
  %v965 = vmul.f32 %v940, %v940
  %v966 = vmul.f32 %v943, %v943
  %v967 = vmul.f32 %v948, %v948
  %v968 = vmul.f32 %v951, %v951
  %v969 = vadd.f32 %v965, %v966
  %v970 = vadd.f32 %v969, %v967
  %v971 = vadd.f32 %v970, %v968
  %v972 = vrot.slane %v971, 4
  %v973 = vadd.f32 %v971, %v972
  %v974 = vrot.slane %v973, 2
  %v975 = vadd.f32 %v973, %v974
  %v976 = vrot.slane %v975, 1
  %v977 = vadd.f32 %v975, %v976
  %v978 = vmul.f32 %v964, 0.03125
  %v979 = vmul.f32 %v977, 0.03125
  %v980 = vmul.f32 %v978, %v978
  %v981 = vsub.f32 %v979, %v980
  %v982 = vmax.f32 %v981, 0.0
  %v983 = vsub.f32 %v940, %v978
  %v984 = vsub.f32 %v943, %v978
  %v985 = vsub.f32 %v948, %v978
  %v986 = vsub.f32 %v951, %v978
  %v987 = vadd.f32 %v982, 1e-05
  %v988 = vrsqrt.pop %v987
  %v989 = vmul.f32 %v983, %v988
  %v990 = vmul.f32 %v984, %v988
  %v991 = vmul.f32 %v985, %v988
  %v992 = vmul.f32 %v986, %v988
  %v994 = vlaneseq
  %v995 = vshrl.u32 %v994, 7
  %v996 = vsub.s32 0, %v995
  %v997 = vrot.slane %v954, %v996
  %v999 = vmul.f32 %v989, %v997
  %v1000 = vmul.f32 %v990, %v997
  %v1001 = vmul.f32 %v991, %v997
  %v1002 = vmul.f32 %v992, %v997
  %v1004 = vlaneseq
  %v1005 = vshrl.u32 %v1004, 7
  %v1006 = vsub.s32 0, %v1005
  %v1007 = vrot.slane %v955, %v1006
  %v1009 = vadd.f32 %v999, %v1007
  %v1010 = vadd.f32 %v1000, %v1007
  %v1011 = vadd.f32 %v1001, %v1007
  %v1012 = vadd.f32 %v1002, %v1007
  %v1013 = vld [vmem:[%s4] sm:$0xff]
  %v1014 = vld [vmem:[%s4 + $0x8] sm:$0xff]
  %v1015 = vld [vmem:[%s4 + $0x10] sm:$0xff]
  %v1016 = vld [vmem:[%s4 + $0x18] sm:$0xff]
  %v1017 = vadd.f32 %v1009, %v1013
  %v1018 = vadd.f32 %v1010, %v1014
  %v1019 = vadd.f32 %v1011, %v1015
  %v1020 = vadd.f32 %v1012, %v1016
  %v1021 = vmax.f32 %v1017, 0.0
  %v1022 = vmax.f32 %v1018, 0.0
  %v1023 = vmax.f32 %v1019, 0.0
  %v1024 = vmax.f32 %v1020, 0.0
  %1025 = vst [vmem:[%s5] sm:$0xff] %v1021
  %1026 = vst [vmem:[%s5 + $0x8] sm:$0xff] %v1022
  %1027 = vst [vmem:[%s5 + $0x10] sm:$0xff] %v1023
  %1028 = vst [vmem:[%s5 + $0x18] sm:$0xff] %v1024
  // Predicated region
  $region22: #{lupnet_forward.14} parent=0 // pred_check
    _
  $region23: #{lupnet_forward.14} parent=0 // pred_check_branch
    %1030 = sbr.rel (0) target = $region25
  $region24: #{lupnet_forward.14} parent=0 // pred_region
    _
  $region25: #{lupnet_forward.14} parent=0 // pred_fallthru
    _
  // Predicated region
  $region26: #{lupnet_forward.14} parent=0 // pred_check
    _
  $region27: #{lupnet_forward.14} parent=0 // pred_check_branch
    %1032 = sbr.rel (0) target = $region29
  $region28: #{lupnet_forward.14} parent=0 // pred_region
    _
  $region29: #{lupnet_forward.14} parent=0 // pred_fallthru
    _

// kernel: lupnet_forward.15
$region0: #{lupnet_forward.15}
  #allocation0 [shape = 'u32[]', space=smem, size = 0x4, offset = 0x4, fixed_abs, tag = 'smem constant byte address 0x4 - core index']
  #allocation1 [shape = 'u32[144,128]{1,0:T(1,128)}', space=vmem, size = 0x12000, scoped, tag = 'internal scratch']
  %s0 = inlined_call_operand.vmem [shape: bf16[8,1152], index: 0, kind: input, shape index: {}]
  %s1 = inlined_call_operand.vmem [shape: bf16[1152,128], index: 1, kind: input, shape index: {}]
  %s2 = inlined_call_operand.vmem [shape: f32[1,128], index: 2, kind: input, shape index: {}]
  %s3 = inlined_call_operand.vmem [shape: f32[1,128], index: 3, kind: input, shape index: {}]
  %s4 = inlined_call_operand.vmem [shape: bf16[128,128], index: 4, kind: input, shape index: {}]
  %s5 = inlined_call_operand.vmem [shape: f32[1,128], index: 5, kind: input, shape index: {}]
  %s6 = inlined_call_operand.vmem [shape: f32[1,128], index: 6, kind: input, shape index: {}]
  %s7 = inlined_call_operand.vmem [shape: f32[8,128], index: 7, kind: output, shape index: {0}]
  %s8 = inlined_call_operand.vmem [shape: f32[8,128], index: 8, kind: output, shape index: {1}]
  %9 = xla_tuple %s7, %s8
  %s10 = sld [smem:[#allocation0]]
  $region46: #{lupnet_forward.15} parent=0
    _
  %s12 = ssub.s32 1, %s10
  %s13 = scalar_select 0, %s12, %s10
  // Predicated region
  $region2: #{lupnet_forward.15} parent=0 // pred_check
    _
  $region3: #{lupnet_forward.15} parent=0 // pred_check_branch
    %15 = sbr.rel (0) target = $region5
  $region4: #{lupnet_forward.15} parent=0 // pred_region
    _
  $region5: #{lupnet_forward.15} parent=0 // pred_fallthru
    _
  // Predicated region
  $region6: #{lupnet_forward.15} parent=0 // pred_check
    _
  $region7: #{lupnet_forward.15} parent=0 // pred_check_branch
    %17 = sbr.rel (0) target = $region9
  $region8: #{lupnet_forward.15} parent=0 // pred_region
    _
  $region9: #{lupnet_forward.15} parent=0 // pred_fallthru
    _
  // Predicated region
  $region10: #{lupnet_forward.15} parent=0 // pred_check
    _
  $region11: #{lupnet_forward.15} parent=0 // pred_check_branch
    %19 = sbr.rel (0) target = $region13
  $region12: #{lupnet_forward.15} parent=0 // pred_region
    _
  $region13: #{lupnet_forward.15} parent=0 // pred_fallthru
    _
  // Predicated region
  $region14: #{lupnet_forward.15} parent=0 // pred_check
    _
  $region15: #{lupnet_forward.15} parent=0 // pred_check_branch
    %21 = sbr.rel (0) target = $region17
  $region16: #{lupnet_forward.15} parent=0 // pred_region
    _
  $region17: #{lupnet_forward.15} parent=0 // pred_fallthru
    _
  // Predicated region
  $region18: #{lupnet_forward.15} parent=0 // pred_check
    _
  $region19: #{lupnet_forward.15} parent=0 // pred_check_branch
    %23 = sbr.rel (0) target = $region21
  $region20: #{lupnet_forward.15} parent=0 // pred_region
    _
  $region21: #{lupnet_forward.15} parent=0 // pred_fallthru
    _
  // Predicated region
  $region22: #{lupnet_forward.15} parent=0 // pred_check
    _
  $region23: #{lupnet_forward.15} parent=0 // pred_check_branch
    %25 = sbr.rel (0) target = $region25
  $region24: #{lupnet_forward.15} parent=0 // pred_region
    _
  $region25: #{lupnet_forward.15} parent=0 // pred_fallthru
    _
  // Predicated region
  $region26: #{lupnet_forward.15} parent=0 // pred_check
    _
  $region27: #{lupnet_forward.15} parent=0 // pred_check_branch
    %27 = sbr.rel (0) target = $region29
  $region28: #{lupnet_forward.15} parent=0 // pred_region
    _
  $region29: #{lupnet_forward.15} parent=0 // pred_fallthru
    _
  %v29 = vld [vmem:[%s0] sm:$0xff]
  %v30 = vld [vmem:[%s0 + $0x8] sm:$0xff]
  %v31 = vld [vmem:[%s0 + $0x10] sm:$0xff]
  %v32 = vld [vmem:[%s0 + $0x18] sm:$0xff]
  %v33 = vld [vmem:[%s0 + $0x20] sm:$0xf]
  %v34 = vld [vmem:[%s1] sm:$0xf]
  %v35 = vld [vmem:[%s1 + $0x4] sm:$0xf]
  %v36 = vld [vmem:[%s1 + $0x8] sm:$0xf]
  %v37 = vld [vmem:[%s1 + $0xc] sm:$0xf]
  %v38 = vld [vmem:[%s1 + $0x10] sm:$0xf]
  %v39 = vld [vmem:[%s1 + $0x14] sm:$0xf]
  %v40 = vld [vmem:[%s1 + $0x18] sm:$0xf]
  %v41 = vld [vmem:[%s1 + $0x1c] sm:$0xf]
  %v42 = vld [vmem:[%s1 + $0x20] sm:$0xf]
  %v43 = vld [vmem:[%s1 + $0x24] sm:$0xf]
  %v44 = vld [vmem:[%s1 + $0x28] sm:$0xf]
  %v45 = vld [vmem:[%s1 + $0x2c] sm:$0xf]
  %v46 = vld [vmem:[%s1 + $0x30] sm:$0xf]
  %v47 = vld [vmem:[%s1 + $0x34] sm:$0xf]
  %v48 = vld [vmem:[%s1 + $0x38] sm:$0xf]
  %v49 = vld [vmem:[%s1 + $0x3c] sm:$0xf]
  %v50 = vld [vmem:[%s1 + $0x40] sm:$0xf]
  %v51 = vld [vmem:[%s1 + $0x44] sm:$0xf]
  %v52 = vld [vmem:[%s1 + $0x48] sm:$0xf]
  %v53 = vld [vmem:[%s1 + $0x4c] sm:$0xf]
  %v54 = vld [vmem:[%s1 + $0x50] sm:$0xf]
  %v55 = vld [vmem:[%s1 + $0x54] sm:$0xf]
  %v56 = vld [vmem:[%s1 + $0x58] sm:$0xf]
  %v57 = vld [vmem:[%s1 + $0x5c] sm:$0xf]
  %v58 = vld [vmem:[%s1 + $0x60] sm:$0xf]
  %v59 = vld [vmem:[%s1 + $0x64] sm:$0xf]
  %v60 = vld [vmem:[%s1 + $0x68] sm:$0xf]
  %v61 = vld [vmem:[%s1 + $0x6c] sm:$0xf]
  %v62 = vld [vmem:[%s1 + $0x70] sm:$0xf]
  %v63 = vld [vmem:[%s1 + $0x74] sm:$0xf]
  %v64 = vld [vmem:[%s1 + $0x78] sm:$0xf]
  %v65 = vld [vmem:[%s1 + $0x7c] sm:$0xf]
  %v66 = vld [vmem:[%s1 + $0x80] sm:$0xf]
  %v67 = vld [vmem:[%s1 + $0x84] sm:$0xf]
  %v68 = vld [vmem:[%s1 + $0x88] sm:$0xf]
  %v69 = vld [vmem:[%s1 + $0x8c] sm:$0xf]
  %v70 = vld [vmem:[%s1 + $0x90] sm:$0xf]
  %v71 = vld [vmem:[%s1 + $0x94] sm:$0xf]
  %v72 = vld [vmem:[%s1 + $0x98] sm:$0xf]
  %v73 = vld [vmem:[%s1 + $0x9c] sm:$0xf]
  %v74 = vld [vmem:[%s1 + $0xa0] sm:$0xf]
  %v75 = vld [vmem:[%s1 + $0xa4] sm:$0xf]
  %v76 = vld [vmem:[%s1 + $0xa8] sm:$0xf]
  %v77 = vld [vmem:[%s1 + $0xac] sm:$0xf]
  %v78 = vld [vmem:[%s1 + $0xb0] sm:$0xf]
  %v79 = vld [vmem:[%s1 + $0xb4] sm:$0xf]
  %v80 = vld [vmem:[%s1 + $0xb8] sm:$0xf]
  %v81 = vld [vmem:[%s1 + $0xbc] sm:$0xf]
  %v82 = vld [vmem:[%s1 + $0xc0] sm:$0xf]
  %v83 = vld [vmem:[%s1 + $0xc4] sm:$0xf]
  %v84 = vld [vmem:[%s1 + $0xc8] sm:$0xf]
  %v85 = vld [vmem:[%s1 + $0xcc] sm:$0xf]
  %v86 = vld [vmem:[%s1 + $0xd0] sm:$0xf]
  %v87 = vld [vmem:[%s1 + $0xd4] sm:$0xf]
  %v88 = vld [vmem:[%s1 + $0xd8] sm:$0xf]
  %v89 = vld [vmem:[%s1 + $0xdc] sm:$0xf]
  %v90 = vld [vmem:[%s1 + $0xe0] sm:$0xf]
  %v91 = vld [vmem:[%s1 + $0xe4] sm:$0xf]
  %v92 = vld [vmem:[%s1 + $0xe8] sm:$0xf]
  %v93 = vld [vmem:[%s1 + $0xec] sm:$0xf]
  %v94 = vld [vmem:[%s1 + $0xf0] sm:$0xf]
  %v95 = vld [vmem:[%s1 + $0xf4] sm:$0xf]
  %v96 = vld [vmem:[%s1 + $0xf8] sm:$0xf]
  %v97 = vld [vmem:[%s1 + $0xfc] sm:$0xf]
  %v98 = vld [vmem:[%s1 + $0x100] sm:$0xf]
  %v99 = vld [vmem:[%s1 + $0x104] sm:$0xf]
  %v100 = vld [vmem:[%s1 + $0x108] sm:$0xf]
  %v101 = vld [vmem:[%s1 + $0x10c] sm:$0xf]
  %v102 = vld [vmem:[%s1 + $0x110] sm:$0xf]
  %v103 = vld [vmem:[%s1 + $0x114] sm:$0xf]
  %v104 = vld [vmem:[%s1 + $0x118] sm:$0xf]
  %v105 = vld [vmem:[%s1 + $0x11c] sm:$0xf]
  %v106 = vld [vmem:[%s1 + $0x120] sm:$0xf]
  %v107 = vld [vmem:[%s1 + $0x124] sm:$0xf]
  %v108 = vld [vmem:[%s1 + $0x128] sm:$0xf]
  %v109 = vld [vmem:[%s1 + $0x12c] sm:$0xf]
  %v110 = vld [vmem:[%s1 + $0x130] sm:$0xf]
  %v111 = vld [vmem:[%s1 + $0x134] sm:$0xf]
  %v112 = vld [vmem:[%s1 + $0x138] sm:$0xf]
  %v113 = vld [vmem:[%s1 + $0x13c] sm:$0xf]
  %v114 = vld [vmem:[%s1 + $0x140] sm:$0xf]
  %v115 = vld [vmem:[%s1 + $0x144] sm:$0xf]
  %v116 = vld [vmem:[%s1 + $0x148] sm:$0xf]
  %v117 = vld [vmem:[%s1 + $0x14c] sm:$0xf]
  %v118 = vld [vmem:[%s1 + $0x150] sm:$0xf]
  %v119 = vld [vmem:[%s1 + $0x154] sm:$0xf]
  %v120 = vld [vmem:[%s1 + $0x158] sm:$0xf]
  %v121 = vld [vmem:[%s1 + $0x15c] sm:$0xf]
  %v122 = vld [vmem:[%s1 + $0x160] sm:$0xf]
  %v123 = vld [vmem:[%s1 + $0x164] sm:$0xf]
  %v124 = vld [vmem:[%s1 + $0x168] sm:$0xf]
  %v125 = vld [vmem:[%s1 + $0x16c] sm:$0xf]
  %v126 = vld [vmem:[%s1 + $0x170] sm:$0xf]
  %v127 = vld [vmem:[%s1 + $0x174] sm:$0xf]
  %v128 = vld [vmem:[%s1 + $0x178] sm:$0xf]
  %v129 = vld [vmem:[%s1 + $0x17c] sm:$0xf]
  %v130 = vld [vmem:[%s1 + $0x180] sm:$0xf]
  %v131 = vld [vmem:[%s1 + $0x184] sm:$0xf]
  %v132 = vld [vmem:[%s1 + $0x188] sm:$0xf]
  %v133 = vld [vmem:[%s1 + $0x18c] sm:$0xf]
  %v134 = vld [vmem:[%s1 + $0x190] sm:$0xf]
  %v135 = vld [vmem:[%s1 + $0x194] sm:$0xf]
  %v136 = vld [vmem:[%s1 + $0x198] sm:$0xf]
  %v137 = vld [vmem:[%s1 + $0x19c] sm:$0xf]
  %v138 = vld [vmem:[%s1 + $0x1a0] sm:$0xf]
  %v139 = vld [vmem:[%s1 + $0x1a4] sm:$0xf]
  %v140 = vld [vmem:[%s1 + $0x1a8] sm:$0xf]
  %v141 = vld [vmem:[%s1 + $0x1ac] sm:$0xf]
  %v142 = vld [vmem:[%s1 + $0x1b0] sm:$0xf]
  %v143 = vld [vmem:[%s1 + $0x1b4] sm:$0xf]
  %v144 = vld [vmem:[%s1 + $0x1b8] sm:$0xf]
  %v145 = vld [vmem:[%s1 + $0x1bc] sm:$0xf]
  %v146 = vld [vmem:[%s1 + $0x1c0] sm:$0xf]
  %v147 = vld [vmem:[%s1 + $0x1c4] sm:$0xf]
  %v148 = vld [vmem:[%s1 + $0x1c8] sm:$0xf]
  %v149 = vld [vmem:[%s1 + $0x1cc] sm:$0xf]
  %v150 = vld [vmem:[%s1 + $0x1d0] sm:$0xf]
  %v151 = vld [vmem:[%s1 + $0x1d4] sm:$0xf]
  %v152 = vld [vmem:[%s1 + $0x1d8] sm:$0xf]
  %v153 = vld [vmem:[%s1 + $0x1dc] sm:$0xf]
  %v154 = vld [vmem:[%s1 + $0x1e0] sm:$0xf]
  %v155 = vld [vmem:[%s1 + $0x1e4] sm:$0xf]
  %v156 = vld [vmem:[%s1 + $0x1e8] sm:$0xf]
  %v157 = vld [vmem:[%s1 + $0x1ec] sm:$0xf]
  %v158 = vld [vmem:[%s1 + $0x1f0] sm:$0xf]
  %v159 = vld [vmem:[%s1 + $0x1f4] sm:$0xf]
  %v160 = vld [vmem:[%s1 + $0x1f8] sm:$0xf]
  %v161 = vld [vmem:[%s1 + $0x1fc] sm:$0xf]
  %v162 = vld [vmem:[%s1 + $0x200] sm:$0xf]
  %v163 = vld [vmem:[%s1 + $0x204] sm:$0xf]
  %v164 = vld [vmem:[%s1 + $0x208] sm:$0xf]
  %v165 = vld [vmem:[%s1 + $0x20c] sm:$0xf]
  %v166 = vld [vmem:[%s1 + $0x210] sm:$0xf]
  %v167 = vld [vmem:[%s1 + $0x214] sm:$0xf]
  %v168 = vld [vmem:[%s1 + $0x218] sm:$0xf]
  %v169 = vld [vmem:[%s1 + $0x21c] sm:$0xf]
  %v170 = vld [vmem:[%s1 + $0x220] sm:$0xf]
  %v171 = vld [vmem:[%s1 + $0x224] sm:$0xf]
  %v172 = vld [vmem:[%s1 + $0x228] sm:$0xf]
  %v173 = vld [vmem:[%s1 + $0x22c] sm:$0xf]
  %v174 = vld [vmem:[%s1 + $0x230] sm:$0xf]
  %v175 = vld [vmem:[%s1 + $0x234] sm:$0xf]
  %v176 = vld [vmem:[%s1 + $0x238] sm:$0xf]
  %v177 = vld [vmem:[%s1 + $0x23c] sm:$0xf]
  %v183 = vunpack.c.l.b16 %v29
  %v184 = vunpack.c.h.b16 %v29
  %v185 = vunpack.c.l.b16 %v30
  %v186 = vunpack.c.h.b16 %v30
  %v187 = vunpack.c.l.b16 %v31
  %v188 = vunpack.c.h.b16 %v31
  %v189 = vunpack.c.l.b16 %v32
  %v190 = vunpack.c.h.b16 %v32
  %v191 = vunpack.c.l.b16 %v33
  %v192 = vpack.c.b16 %v183, %v183
  %v193 = vpack.c.b16 %v184, %v184
  %v194 = vpack.c.b16 %v185, %v185
  %v195 = vpack.c.b16 %v186, %v186
  %v196 = vpack.c.b16 %v187, %v187
  %v197 = vpack.c.b16 %v188, %v188
  %v198 = vpack.c.b16 %v189, %v189
  %v199 = vpack.c.b16 %v190, %v190
  %v200 = vpack.c.b16 %v191, %v191
  %v354 = vunpack.c.l.b16 %v34
  %v355 = vunpack.c.l.b16 %v35
  %v356 = vunpack.c.l.b16 %v36
  %v357 = vunpack.c.l.b16 %v37
  %v358 = vunpack.c.l.b16 %v38
  %v359 = vunpack.c.l.b16 %v39
  %v360 = vunpack.c.l.b16 %v40
  %v361 = vunpack.c.l.b16 %v41
  %v362 = vunpack.c.l.b16 %v42
  %v363 = vunpack.c.l.b16 %v43
  %v364 = vunpack.c.l.b16 %v44
  %v365 = vunpack.c.l.b16 %v45
  %v366 = vunpack.c.l.b16 %v46
  %v367 = vunpack.c.l.b16 %v47
  %v368 = vunpack.c.l.b16 %v48
  %v369 = vunpack.c.l.b16 %v49
  %v370 = vunpack.c.l.b16 %v50
  %v371 = vunpack.c.l.b16 %v51
  %v372 = vunpack.c.l.b16 %v52
  %v373 = vunpack.c.l.b16 %v53
  %v374 = vunpack.c.l.b16 %v54
  %v375 = vunpack.c.l.b16 %v55
  %v376 = vunpack.c.l.b16 %v56
  %v377 = vunpack.c.l.b16 %v57
  %v378 = vunpack.c.l.b16 %v58
  %v379 = vunpack.c.l.b16 %v59
  %v380 = vunpack.c.l.b16 %v60
  %v381 = vunpack.c.l.b16 %v61
  %v382 = vunpack.c.l.b16 %v62
  %v383 = vunpack.c.l.b16 %v63
  %v384 = vunpack.c.l.b16 %v64
  %v385 = vunpack.c.l.b16 %v65
  %v386 = vunpack.c.l.b16 %v66
  %v387 = vunpack.c.l.b16 %v67
  %v388 = vunpack.c.l.b16 %v68
  %v389 = vunpack.c.l.b16 %v69
  %v390 = vunpack.c.l.b16 %v70
  %v391 = vunpack.c.l.b16 %v71
  %v392 = vunpack.c.l.b16 %v72
  %v393 = vunpack.c.l.b16 %v73
  %v394 = vunpack.c.l.b16 %v74
  %v395 = vunpack.c.l.b16 %v75
  %v396 = vunpack.c.l.b16 %v76
  %v397 = vunpack.c.l.b16 %v77
  %v398 = vunpack.c.l.b16 %v78
  %v399 = vunpack.c.l.b16 %v79
  %v400 = vunpack.c.l.b16 %v80
  %v401 = vunpack.c.l.b16 %v81
  %v402 = vunpack.c.l.b16 %v82
  %v403 = vunpack.c.l.b16 %v83
  %v404 = vunpack.c.l.b16 %v84
  %v405 = vunpack.c.l.b16 %v85
  %v406 = vunpack.c.l.b16 %v86
  %v407 = vunpack.c.l.b16 %v87
  %v408 = vunpack.c.l.b16 %v88
  %v409 = vunpack.c.l.b16 %v89
  %v410 = vunpack.c.l.b16 %v90
  %v411 = vunpack.c.l.b16 %v91
  %v412 = vunpack.c.l.b16 %v92
  %v413 = vunpack.c.l.b16 %v93
  %v414 = vunpack.c.l.b16 %v94
  %v415 = vunpack.c.l.b16 %v95
  %v416 = vunpack.c.l.b16 %v96
  %v417 = vunpack.c.l.b16 %v97
  %v418 = vunpack.c.l.b16 %v98
  %v419 = vunpack.c.l.b16 %v99
  %v420 = vunpack.c.l.b16 %v100
  %v421 = vunpack.c.l.b16 %v101
  %v422 = vunpack.c.l.b16 %v102
  %v423 = vunpack.c.l.b16 %v103
  %v424 = vunpack.c.l.b16 %v104
  %v425 = vunpack.c.l.b16 %v105
  %v426 = vunpack.c.l.b16 %v106
  %v427 = vunpack.c.l.b16 %v107
  %v428 = vunpack.c.l.b16 %v108
  %v429 = vunpack.c.l.b16 %v109
  %v430 = vunpack.c.l.b16 %v110
  %v431 = vunpack.c.l.b16 %v111
  %v432 = vunpack.c.l.b16 %v112
  %v433 = vunpack.c.l.b16 %v113
  %v434 = vunpack.c.l.b16 %v114
  %v435 = vunpack.c.l.b16 %v115
  %v436 = vunpack.c.l.b16 %v116
  %v437 = vunpack.c.l.b16 %v117
  %v438 = vunpack.c.l.b16 %v118
  %v439 = vunpack.c.l.b16 %v119
  %v440 = vunpack.c.l.b16 %v120
  %v441 = vunpack.c.l.b16 %v121
  %v442 = vunpack.c.l.b16 %v122
  %v443 = vunpack.c.l.b16 %v123
  %v444 = vunpack.c.l.b16 %v124
  %v445 = vunpack.c.l.b16 %v125
  %v446 = vunpack.c.l.b16 %v126
  %v447 = vunpack.c.l.b16 %v127
  %v448 = vunpack.c.l.b16 %v128
  %v449 = vunpack.c.l.b16 %v129
  %v450 = vunpack.c.l.b16 %v130
  %v451 = vunpack.c.l.b16 %v131
  %v452 = vunpack.c.l.b16 %v132
  %v453 = vunpack.c.l.b16 %v133
  %v454 = vunpack.c.l.b16 %v134
  %v455 = vunpack.c.l.b16 %v135
  %v456 = vunpack.c.l.b16 %v136
  %v457 = vunpack.c.l.b16 %v137
  %v458 = vunpack.c.l.b16 %v138
  %v459 = vunpack.c.l.b16 %v139
  %v460 = vunpack.c.l.b16 %v140
  %v461 = vunpack.c.l.b16 %v141
  %v462 = vunpack.c.l.b16 %v142
  %v463 = vunpack.c.l.b16 %v143
  %v464 = vunpack.c.l.b16 %v144
  %v465 = vunpack.c.l.b16 %v145
  %v466 = vunpack.c.l.b16 %v146
  %v467 = vunpack.c.l.b16 %v147
  %v468 = vunpack.c.l.b16 %v148
  %v469 = vunpack.c.l.b16 %v149
  %v470 = vunpack.c.l.b16 %v150
  %v471 = vunpack.c.l.b16 %v151
  %v472 = vunpack.c.l.b16 %v152
  %v473 = vunpack.c.l.b16 %v153
  %v474 = vunpack.c.l.b16 %v154
  %v475 = vunpack.c.l.b16 %v155
  %v476 = vunpack.c.l.b16 %v156
  %v477 = vunpack.c.l.b16 %v157
  %v478 = vunpack.c.l.b16 %v158
  %v479 = vunpack.c.l.b16 %v159
  %v480 = vunpack.c.l.b16 %v160
  %v481 = vunpack.c.l.b16 %v161
  %v482 = vunpack.c.l.b16 %v162
  %v483 = vunpack.c.l.b16 %v163
  %v484 = vunpack.c.l.b16 %v164
  %v485 = vunpack.c.l.b16 %v165
  %v486 = vunpack.c.l.b16 %v166
  %v487 = vunpack.c.l.b16 %v167
  %v488 = vunpack.c.l.b16 %v168
  %v489 = vunpack.c.l.b16 %v169
  %v490 = vunpack.c.l.b16 %v170
  %v491 = vunpack.c.l.b16 %v171
  %v492 = vunpack.c.l.b16 %v172
  %v493 = vunpack.c.l.b16 %v173
  %v494 = vunpack.c.l.b16 %v174
  %v495 = vunpack.c.l.b16 %v175
  %v496 = vunpack.c.l.b16 %v176
  %v497 = vunpack.c.l.b16 %v177
  %v498 = vpack.c.b16 %v355, %v354
  %v499 = vpack.c.b16 %v357, %v356
  %v500 = vpack.c.b16 %v359, %v358
  %v501 = vpack.c.b16 %v361, %v360
  %v502 = vpack.c.b16 %v363, %v362
  %v503 = vpack.c.b16 %v365, %v364
  %v504 = vpack.c.b16 %v367, %v366
  %v505 = vpack.c.b16 %v369, %v368
  %v506 = vpack.c.b16 %v371, %v370
  %v507 = vpack.c.b16 %v373, %v372
  %v508 = vpack.c.b16 %v375, %v374
  %v509 = vpack.c.b16 %v377, %v376
  %v510 = vpack.c.b16 %v379, %v378
  %v511 = vpack.c.b16 %v381, %v380
  %v512 = vpack.c.b16 %v383, %v382
  %v513 = vpack.c.b16 %v385, %v384
  %v514 = vpack.c.b16 %v387, %v386
  %v515 = vpack.c.b16 %v389, %v388
  %v516 = vpack.c.b16 %v391, %v390
  %v517 = vpack.c.b16 %v393, %v392
  %v518 = vpack.c.b16 %v395, %v394
  %v519 = vpack.c.b16 %v397, %v396
  %v520 = vpack.c.b16 %v399, %v398
  %v521 = vpack.c.b16 %v401, %v400
  %v522 = vpack.c.b16 %v403, %v402
  %v523 = vpack.c.b16 %v405, %v404
  %v524 = vpack.c.b16 %v407, %v406
  %v525 = vpack.c.b16 %v409, %v408
  %v526 = vpack.c.b16 %v411, %v410
  %v527 = vpack.c.b16 %v413, %v412
  %v528 = vpack.c.b16 %v415, %v414
  %v529 = vpack.c.b16 %v417, %v416
  %v530 = vpack.c.b16 %v419, %v418
  %v531 = vpack.c.b16 %v421, %v420
  %v532 = vpack.c.b16 %v423, %v422
  %v533 = vpack.c.b16 %v425, %v424
  %v534 = vpack.c.b16 %v427, %v426
  %v535 = vpack.c.b16 %v429, %v428
  %v536 = vpack.c.b16 %v431, %v430
  %v537 = vpack.c.b16 %v433, %v432
  %v538 = vpack.c.b16 %v435, %v434
  %v539 = vpack.c.b16 %v437, %v436
  %v540 = vpack.c.b16 %v439, %v438
  %v541 = vpack.c.b16 %v441, %v440
  %v542 = vpack.c.b16 %v443, %v442
  %v543 = vpack.c.b16 %v445, %v444
  %v544 = vpack.c.b16 %v447, %v446
  %v545 = vpack.c.b16 %v449, %v448
  %v546 = vpack.c.b16 %v451, %v450
  %v547 = vpack.c.b16 %v453, %v452
  %v548 = vpack.c.b16 %v455, %v454
  %v549 = vpack.c.b16 %v457, %v456
  %v550 = vpack.c.b16 %v459, %v458
  %v551 = vpack.c.b16 %v461, %v460
  %v552 = vpack.c.b16 %v463, %v462
  %v553 = vpack.c.b16 %v465, %v464
  %v554 = vpack.c.b16 %v467, %v466
  %v555 = vpack.c.b16 %v469, %v468
  %v556 = vpack.c.b16 %v471, %v470
  %v557 = vpack.c.b16 %v473, %v472
  %v558 = vpack.c.b16 %v475, %v474
  %v559 = vpack.c.b16 %v477, %v476
  %v560 = vpack.c.b16 %v479, %v478
  %v561 = vpack.c.b16 %v481, %v480
  %v562 = vpack.c.b16 %v483, %v482
  %v563 = vpack.c.b16 %v485, %v484
  %v564 = vpack.c.b16 %v487, %v486
  %v565 = vpack.c.b16 %v489, %v488
  %v566 = vpack.c.b16 %v491, %v490
  %v567 = vpack.c.b16 %v493, %v492
  %v568 = vpack.c.b16 %v495, %v494
  %v569 = vpack.c.b16 %v497, %v496
  %642 = vmatprep.subr.bf16.mxu0 0
  %643 = vmatpush1.bf16.msra.mxu0 %v505
  %644 = vmatprep.subr.bf16.mxu0 0
  %645 = vmatpush1.bf16.msra.mxu0 %v504
  %646 = vmatprep.subr.bf16.mxu0 0
  %647 = vmatpush1.bf16.msra.mxu0 %v503
  %648 = vmatprep.subr.bf16.mxu0 0
  %649 = vmatpush1.bf16.msra.mxu0 %v502
  %650 = vmatprep.subr.bf16.mxu0 0
  %651 = vmatpush1.bf16.msra.mxu0 %v501
  %652 = vmatprep.subr.bf16.mxu0 0
  %653 = vmatpush1.bf16.msra.mxu0 %v500
  %654 = vmatprep.subr.bf16.mxu0 0
  %655 = vmatpush1.bf16.msra.mxu0 %v499
  %656 = vmatprep.subr.bf16.mxu0 0
  %657 = vmatpush1.bf16.msra.mxu0 %v498
  %658 = vmatprep.subr.bf16.mxu0 0
  %659 = vmatpush2.bf16.msra.mxu0 %v513
  %660 = vmatprep.subr.bf16.mxu0 0
  %661 = vmatpush2.bf16.msra.mxu0 %v512
  %662 = vmatprep.subr.bf16.mxu0 0
  %663 = vmatpush2.bf16.msra.mxu0 %v511
  %664 = vmatprep.subr.bf16.mxu0 0
  %665 = vmatpush2.bf16.msra.mxu0 %v510
  %666 = vmatprep.subr.bf16.mxu0 0
  %667 = vmatpush2.bf16.msra.mxu0 %v509
  %668 = vmatprep.subr.bf16.mxu0 0
  %669 = vmatpush2.bf16.msra.mxu0 %v508
  %670 = vmatprep.subr.bf16.mxu0 0
  %671 = vmatpush2.bf16.msra.mxu0 %v507
  %672 = vmatprep.subr.bf16.mxu0 0
  %673 = vmatpush2.bf16.msra.mxu0 %v506
  %674 = vmatprep.mubr.bf16.mxu0 %v193
  %675 = vmatmul.mubr.bf16.gmra.mxu0 %v192
  %v676 = vpop.f32.mrf.mxu0
  %v677 = vadd.f32 0.0, %v676
  %v678 = vpop.f32.mrf.mxu0
  %v679 = vpop.f32.mrf.mxu0
  %v680 = vpop.f32.mrf.mxu0
  %681 = vdwg.mxu0
  %682 = vmatprep.subr.bf16.mxu0 0
  %683 = vmatpush1.bf16.msra.mxu0 %v521
  %684 = vmatprep.subr.bf16.mxu0 0
  %685 = vmatpush1.bf16.msra.mxu0 %v520
  %686 = vmatprep.subr.bf16.mxu0 0
  %687 = vmatpush1.bf16.msra.mxu0 %v519
  %688 = vmatprep.subr.bf16.mxu0 0
  %689 = vmatpush1.bf16.msra.mxu0 %v518
  %690 = vmatprep.subr.bf16.mxu0 0
  %691 = vmatpush1.bf16.msra.mxu0 %v517
  %692 = vmatprep.subr.bf16.mxu0 0
  %693 = vmatpush1.bf16.msra.mxu0 %v516
  %694 = vmatprep.subr.bf16.mxu0 0
  %695 = vmatpush1.bf16.msra.mxu0 %v515
  %696 = vmatprep.subr.bf16.mxu0 0
  %697 = vmatpush1.bf16.msra.mxu0 %v514
  %698 = vmatprep.subr.bf16.mxu0 0
  %699 = vmatpush2.bf16.msra.mxu0 %v529
  %700 = vmatprep.subr.bf16.mxu0 0
  %701 = vmatpush2.bf16.msra.mxu0 %v528
  %702 = vmatprep.subr.bf16.mxu0 0
  %703 = vmatpush2.bf16.msra.mxu0 %v527
  %704 = vmatprep.subr.bf16.mxu0 0
  %705 = vmatpush2.bf16.msra.mxu0 %v526
  %706 = vmatprep.subr.bf16.mxu0 0
  %707 = vmatpush2.bf16.msra.mxu0 %v525
  %708 = vmatprep.subr.bf16.mxu0 0
  %709 = vmatpush2.bf16.msra.mxu0 %v524
  %710 = vmatprep.subr.bf16.mxu0 0
  %711 = vmatpush2.bf16.msra.mxu0 %v523
  %712 = vmatprep.subr.bf16.mxu0 0
  %713 = vmatpush2.bf16.msra.mxu0 %v522
  %714 = vmatprep.mubr.bf16.mxu0 %v195
  %715 = vmatmul.mubr.bf16.gmra.mxu0 %v194
  %v716 = vpop.f32.mrf.mxu0
  %v717 = vadd.f32 %v677, %v716
  %v718 = vpop.f32.mrf.mxu0
  %v719 = vpop.f32.mrf.mxu0
  %v720 = vpop.f32.mrf.mxu0
  %721 = vdwg.mxu0
  %722 = vmatprep.subr.bf16.mxu0 0
  %723 = vmatpush1.bf16.msra.mxu0 %v537
  %724 = vmatprep.subr.bf16.mxu0 0
  %725 = vmatpush1.bf16.msra.mxu0 %v536
  %726 = vmatprep.subr.bf16.mxu0 0
  %727 = vmatpush1.bf16.msra.mxu0 %v535
  %728 = vmatprep.subr.bf16.mxu0 0
  %729 = vmatpush1.bf16.msra.mxu0 %v534
  %730 = vmatprep.subr.bf16.mxu0 0
  %731 = vmatpush1.bf16.msra.mxu0 %v533
  %732 = vmatprep.subr.bf16.mxu0 0
  %733 = vmatpush1.bf16.msra.mxu0 %v532
  %734 = vmatprep.subr.bf16.mxu0 0
  %735 = vmatpush1.bf16.msra.mxu0 %v531
  %736 = vmatprep.subr.bf16.mxu0 0
  %737 = vmatpush1.bf16.msra.mxu0 %v530
  %738 = vmatprep.subr.bf16.mxu0 0
  %739 = vmatpush2.bf16.msra.mxu0 %v545
  %740 = vmatprep.subr.bf16.mxu0 0
  %741 = vmatpush2.bf16.msra.mxu0 %v544
  %742 = vmatprep.subr.bf16.mxu0 0
  %743 = vmatpush2.bf16.msra.mxu0 %v543
  %744 = vmatprep.subr.bf16.mxu0 0
  %745 = vmatpush2.bf16.msra.mxu0 %v542
  %746 = vmatprep.subr.bf16.mxu0 0
  %747 = vmatpush2.bf16.msra.mxu0 %v541
  %748 = vmatprep.subr.bf16.mxu0 0
  %749 = vmatpush2.bf16.msra.mxu0 %v540
  %750 = vmatprep.subr.bf16.mxu0 0
  %751 = vmatpush2.bf16.msra.mxu0 %v539
  %752 = vmatprep.subr.bf16.mxu0 0
  %753 = vmatpush2.bf16.msra.mxu0 %v538
  %754 = vmatprep.mubr.bf16.mxu0 %v197
  %755 = vmatmul.mubr.bf16.gmra.mxu0 %v196
  %v756 = vpop.f32.mrf.mxu0
  %v757 = vadd.f32 %v717, %v756
  %v758 = vpop.f32.mrf.mxu0
  %v759 = vpop.f32.mrf.mxu0
  %v760 = vpop.f32.mrf.mxu0
  %761 = vdwg.mxu0
  %762 = vmatprep.subr.bf16.mxu0 0
  %763 = vmatpush1.bf16.msra.mxu0 %v553
  %764 = vmatprep.subr.bf16.mxu0 0
  %765 = vmatpush1.bf16.msra.mxu0 %v552
  %766 = vmatprep.subr.bf16.mxu0 0
  %767 = vmatpush1.bf16.msra.mxu0 %v551
  %768 = vmatprep.subr.bf16.mxu0 0
  %769 = vmatpush1.bf16.msra.mxu0 %v550
  %770 = vmatprep.subr.bf16.mxu0 0
  %771 = vmatpush1.bf16.msra.mxu0 %v549
  %772 = vmatprep.subr.bf16.mxu0 0
  %773 = vmatpush1.bf16.msra.mxu0 %v548
  %774 = vmatprep.subr.bf16.mxu0 0
  %775 = vmatpush1.bf16.msra.mxu0 %v547
  %776 = vmatprep.subr.bf16.mxu0 0
  %777 = vmatpush1.bf16.msra.mxu0 %v546
  %778 = vmatprep.subr.bf16.mxu0 0
  %779 = vmatpush2.bf16.msra.mxu0 %v561
  %780 = vmatprep.subr.bf16.mxu0 0
  %781 = vmatpush2.bf16.msra.mxu0 %v560
  %782 = vmatprep.subr.bf16.mxu0 0
  %783 = vmatpush2.bf16.msra.mxu0 %v559
  %784 = vmatprep.subr.bf16.mxu0 0
  %785 = vmatpush2.bf16.msra.mxu0 %v558
  %786 = vmatprep.subr.bf16.mxu0 0
  %787 = vmatpush2.bf16.msra.mxu0 %v557
  %788 = vmatprep.subr.bf16.mxu0 0
  %789 = vmatpush2.bf16.msra.mxu0 %v556
  %790 = vmatprep.subr.bf16.mxu0 0
  %791 = vmatpush2.bf16.msra.mxu0 %v555
  %792 = vmatprep.subr.bf16.mxu0 0
  %793 = vmatpush2.bf16.msra.mxu0 %v554
  %794 = vmatprep.mubr.bf16.mxu0 %v199
  %795 = vmatmul.mubr.bf16.gmra.mxu0 %v198
  %v796 = vpop.f32.mrf.mxu0
  %v797 = vadd.f32 %v757, %v796
  %v798 = vpop.f32.mrf.mxu0
  %v799 = vpop.f32.mrf.mxu0
  %v800 = vpop.f32.mrf.mxu0
  %801 = vdwg.mxu0
  %802 = vmatprep.subr.bf16.mxu0 0
  %803 = vmatpush1.bf16.msra.mxu0 %v569
  %804 = vmatprep.subr.bf16.mxu0 0
  %805 = vmatpush1.bf16.msra.mxu0 %v568
  %806 = vmatprep.subr.bf16.mxu0 0
  %807 = vmatpush1.bf16.msra.mxu0 %v567
  %808 = vmatprep.subr.bf16.mxu0 0
  %809 = vmatpush1.bf16.msra.mxu0 %v566
  %810 = vmatprep.subr.bf16.mxu0 0
  %811 = vmatpush1.bf16.msra.mxu0 %v565
  %812 = vmatprep.subr.bf16.mxu0 0
  %813 = vmatpush1.bf16.msra.mxu0 %v564
  %814 = vmatprep.subr.bf16.mxu0 0
  %815 = vmatpush1.bf16.msra.mxu0 %v563
  %816 = vmatprep.subr.bf16.mxu0 0
  %817 = vmatpush1.bf16.msra.mxu0 %v562
  %818 = vmatprep.subr.bf16.mxu0 0
  %819 = vmatpush2.bf16.msra.mxu0 0
  %820 = vmatprep.subr.bf16.mxu0 0
  %821 = vmatpush2.bf16.msra.mxu0 0
  %822 = vmatprep.subr.bf16.mxu0 0
  %823 = vmatpush2.bf16.msra.mxu0 0
  %824 = vmatprep.subr.bf16.mxu0 0
  %825 = vmatpush2.bf16.msra.mxu0 0
  %826 = vmatprep.subr.bf16.mxu0 0
  %827 = vmatpush2.bf16.msra.mxu0 0
  %828 = vmatprep.subr.bf16.mxu0 0
  %829 = vmatpush2.bf16.msra.mxu0 0
  %830 = vmatprep.subr.bf16.mxu0 0
  %831 = vmatpush2.bf16.msra.mxu0 0
  %832 = vmatprep.subr.bf16.mxu0 0
  %833 = vmatpush2.bf16.msra.mxu0 0
  %834 = vmatprep.mubr.bf16.mxu0 0
  %835 = vmatmul.mubr.bf16.gmra.mxu0 %v200
  %v836 = vpop.f32.mrf.mxu0
  %v837 = vadd.f32 %v797, %v836
  %v838 = vpop.f32.mrf.mxu0
  %v839 = vpop.f32.mrf.mxu0
  %v840 = vpop.f32.mrf.mxu0
  %841 = vdwg.mxu0
  %v842 = vld [vmem:[%s2] sm:$0x1]
  %v843 = vld [vmem:[%s3] sm:$0x1]
  %v844 = vrot.slane %v837, 4
  %v845 = vadd.f32 %v837, %v844
  %v846 = vrot.slane %v845, 2
  %v847 = vadd.f32 %v845, %v846
  %v848 = vrot.slane %v847, 1
  %v849 = vadd.f32 %v847, %v848
  %v850 = vmul.f32 %v837, %v837
  %v851 = vrot.slane %v850, 4
  %v852 = vadd.f32 %v850, %v851
  %v853 = vrot.slane %v852, 2
  %v854 = vadd.f32 %v852, %v853
  %v855 = vrot.slane %v854, 1
  %v856 = vadd.f32 %v854, %v855
  %v857 = vmul.f32 %v849, 0.125
  %v858 = vmul.f32 %v856, 0.125
  %v859 = vmul.f32 %v857, %v857
  %v860 = vsub.f32 %v858, %v859
  %v861 = vmax.f32 %v860, 0.0
  %v862 = vsub.f32 %v837, %v857
  %v863 = vadd.f32 %v861, 1e-05
  %v864 = vrsqrt.pop %v863
  %v865 = vmul.f32 %v862, %v864
  %v867 = vlaneseq
  %v868 = vshrl.u32 %v867, 7
  %v869 = vsub.s32 0, %v868
  %v870 = vrot.slane %v842, %v869
  %v872 = vmul.f32 %v865, %v870
  %v874 = vlaneseq
  %v875 = vshrl.u32 %v874, 7
  %v876 = vsub.s32 0, %v875
  %v877 = vrot.slane %v843, %v876
  %v879 = vadd.f32 %v872, %v877
  %v880 = vmax.f32 %v879, 0.0
  %881 = vst [vmem:[%s7] sm:$0xff] %v880
  %v882 = vld [vmem:[%s4] sm:$0xf]
  %v883 = vld [vmem:[%s4 + $0x4] sm:$0xf]
  %v884 = vld [vmem:[%s4 + $0x8] sm:$0xf]
  %v885 = vld [vmem:[%s4 + $0xc] sm:$0xf]
  %v886 = vld [vmem:[%s4 + $0x10] sm:$0xf]
  %v887 = vld [vmem:[%s4 + $0x14] sm:$0xf]
  %v888 = vld [vmem:[%s4 + $0x18] sm:$0xf]
  %v889 = vld [vmem:[%s4 + $0x1c] sm:$0xf]
  %v890 = vld [vmem:[%s4 + $0x20] sm:$0xf]
  %v891 = vld [vmem:[%s4 + $0x24] sm:$0xf]
  %v892 = vld [vmem:[%s4 + $0x28] sm:$0xf]
  %v893 = vld [vmem:[%s4 + $0x2c] sm:$0xf]
  %v894 = vld [vmem:[%s4 + $0x30] sm:$0xf]
  %v895 = vld [vmem:[%s4 + $0x34] sm:$0xf]
  %v896 = vld [vmem:[%s4 + $0x38] sm:$0xf]
  %v897 = vld [vmem:[%s4 + $0x3c] sm:$0xf]
  %v914 = vunpack.c.l.b16 %v882
  %v915 = vunpack.c.l.b16 %v883
  %v916 = vunpack.c.l.b16 %v884
  %v917 = vunpack.c.l.b16 %v885
  %v918 = vunpack.c.l.b16 %v886
  %v919 = vunpack.c.l.b16 %v887
  %v920 = vunpack.c.l.b16 %v888
  %v921 = vunpack.c.l.b16 %v889
  %v922 = vunpack.c.l.b16 %v890
  %v923 = vunpack.c.l.b16 %v891
  %v924 = vunpack.c.l.b16 %v892
  %v925 = vunpack.c.l.b16 %v893
  %v926 = vunpack.c.l.b16 %v894
  %v927 = vunpack.c.l.b16 %v895
  %v928 = vunpack.c.l.b16 %v896
  %v929 = vunpack.c.l.b16 %v897
  %v930 = vpack.c.b16 %v915, %v914
  %v931 = vpack.c.b16 %v917, %v916
  %v932 = vpack.c.b16 %v919, %v918
  %v933 = vpack.c.b16 %v921, %v920
  %v934 = vpack.c.b16 %v923, %v922
  %v935 = vpack.c.b16 %v925, %v924
  %v936 = vpack.c.b16 %v927, %v926
  %v937 = vpack.c.b16 %v929, %v928
  %946 = vmatprep.subr.bf16.mxu0 0
  %947 = vmatpush1.bf16.msra.mxu0 %v937
  %948 = vmatprep.subr.bf16.mxu0 0
  %949 = vmatpush1.bf16.msra.mxu0 %v936
  %950 = vmatprep.subr.bf16.mxu0 0
  %951 = vmatpush1.bf16.msra.mxu0 %v935
  %952 = vmatprep.subr.bf16.mxu0 0
  %953 = vmatpush1.bf16.msra.mxu0 %v934
  %954 = vmatprep.subr.bf16.mxu0 0
  %955 = vmatpush1.bf16.msra.mxu0 %v933
  %956 = vmatprep.subr.bf16.mxu0 0
  %957 = vmatpush1.bf16.msra.mxu0 %v932
  %958 = vmatprep.subr.bf16.mxu0 0
  %959 = vmatpush1.bf16.msra.mxu0 %v931
  %960 = vmatprep.subr.bf16.mxu0 0
  %961 = vmatpush1.bf16.msra.mxu0 %v930
  %962 = vmatprep.subr.bf16.mxu0 0
  %963 = vmatpush2.bf16.msra.mxu0 0
  %964 = vmatprep.subr.bf16.mxu0 0
  %965 = vmatpush2.bf16.msra.mxu0 0
  %966 = vmatprep.subr.bf16.mxu0 0
  %967 = vmatpush2.bf16.msra.mxu0 0
  %968 = vmatprep.subr.bf16.mxu0 0
  %969 = vmatpush2.bf16.msra.mxu0 0
  %970 = vmatprep.subr.bf16.mxu0 0
  %971 = vmatpush2.bf16.msra.mxu0 0
  %972 = vmatprep.subr.bf16.mxu0 0
  %973 = vmatpush2.bf16.msra.mxu0 0
  %974 = vmatprep.subr.bf16.mxu0 0
  %975 = vmatpush2.bf16.msra.mxu0 0
  %976 = vmatprep.subr.bf16.mxu0 0
  %977 = vmatpush2.bf16.msra.mxu0 0
  %978 = vmatprep.mubr.bf16.mxu0 0
  %979 = vmatmul.mubr.bf16.gmra.mxu0 %v31
  %v980 = vpop.f32.mrf.mxu0
  %v981 = vadd.f32 0.0, %v980
  %v982 = vpop.f32.mrf.mxu0
  %v983 = vpop.f32.mrf.mxu0
  %v984 = vpop.f32.mrf.mxu0
  %985 = vdwg.mxu0
  %v986 = vld [vmem:[%s5] sm:$0x1]
  %v987 = vld [vmem:[%s6] sm:$0x1]
  %v988 = vrot.slane %v981, 4
  %v989 = vadd.f32 %v981, %v988
  %v990 = vrot.slane %v989, 2
  %v991 = vadd.f32 %v989, %v990
  %v992 = vrot.slane %v991, 1
  %v993 = vadd.f32 %v991, %v992
  %v994 = vmul.f32 %v981, %v981
  %v995 = vrot.slane %v994, 4
  %v996 = vadd.f32 %v994, %v995
  %v997 = vrot.slane %v996, 2
  %v998 = vadd.f32 %v996, %v997
  %v999 = vrot.slane %v998, 1
  %v1000 = vadd.f32 %v998, %v999
  %v1001 = vmul.f32 %v993, 0.125
  %v1002 = vmul.f32 %v1000, 0.125
  %v1003 = vmul.f32 %v1001, %v1001
  %v1004 = vsub.f32 %v1002, %v1003
  %v1005 = vmax.f32 %v1004, 0.0
  %v1006 = vsub.f32 %v981, %v1001
  %v1007 = vadd.f32 %v1005, 1e-05
  %v1008 = vrsqrt.pop %v1007
  %v1009 = vmul.f32 %v1006, %v1008
  %v1011 = vlaneseq
  %v1012 = vshrl.u32 %v1011, 7
  %v1013 = vsub.s32 0, %v1012
  %v1014 = vrot.slane %v986, %v1013
  %v1016 = vmul.f32 %v1009, %v1014
  %v1018 = vlaneseq
  %v1019 = vshrl.u32 %v1018, 7
  %v1020 = vsub.s32 0, %v1019
  %v1021 = vrot.slane %v987, %v1020
  %v1023 = vadd.f32 %v1016, %v1021
  %1024 = vst [vmem:[%s8] sm:$0xff] %v1023
  // Predicated region
  $region30: #{lupnet_forward.15} parent=0 // pred_check
    _
  $region31: #{lupnet_forward.15} parent=0 // pred_check_branch
    %1026 = sbr.rel (0) target = $region33
  $region32: #{lupnet_forward.15} parent=0 // pred_region
    _
  $region33: #{lupnet_forward.15} parent=0 // pred_fallthru
    _
  // Predicated region
  $region34: #{lupnet_forward.15} parent=0 // pred_check
    _
  $region35: #{lupnet_forward.15} parent=0 // pred_check_branch
    %1028 = sbr.rel (0) target = $region37
  $region36: #{lupnet_forward.15} parent=0 // pred_region
    _
  $region37: #{lupnet_forward.15} parent=0 // pred_fallthru
    _
  // Predicated region
  $region38: #{lupnet_forward.15} parent=0 // pred_check
    _
  $region39: #{lupnet_forward.15} parent=0 // pred_check_branch
    %1030 = sbr.rel (0) target = $region41
  $region40: #{lupnet_forward.15} parent=0 // pred_region
    _
  $region41: #{lupnet_forward.15} parent=0 // pred_fallthru
    _
  // Predicated region
  $region42: #{lupnet_forward.15} parent=0 // pred_check
    _
  $region43: #{lupnet_forward.15} parent=0 // pred_check_branch
    %1032 = sbr.rel (0) target = $region45
  $region44: #{lupnet_forward.15} parent=0 // pred_region
    _
  $region45: #{lupnet_forward.15} parent=0 // pred_fallthru
    _

// kernel: lupnet_forward.16
$region0: #{lupnet_forward.16}
  #allocation0 [shape = 'u32[]', space=smem, size = 0x4, offset = 0x4, fixed_abs, tag = 'smem constant byte address 0x4 - core index']
  #allocation1 [shape = 'u32[144,128]{1,0:T(1,128)}', space=vmem, size = 0x12000, scoped, tag = 'internal scratch']
  %s0 = inlined_call_operand.vmem [shape: bf16[8,1152], index: 0, kind: input, shape index: {}]
  %s1 = inlined_call_operand.vmem [shape: bf16[1152,128], index: 1, kind: input, shape index: {}]
  %s2 = inlined_call_operand.vmem [shape: f32[1,128], index: 2, kind: input, shape index: {}]
  %s3 = inlined_call_operand.vmem [shape: f32[1,128], index: 3, kind: input, shape index: {}]
  %s4 = inlined_call_operand.vmem [shape: f32[8,128], index: 4, kind: input, shape index: {}]
  %s5 = inlined_call_operand.vmem [shape: f32[8,128], index: 5, kind: output, shape index: {}]
  %s6 = sld [smem:[#allocation0]]
  $region30: #{lupnet_forward.16} parent=0
    _
  %s8 = ssub.s32 1, %s6
  %s9 = scalar_select 0, %s8, %s6
  // Predicated region
  $region2: #{lupnet_forward.16} parent=0 // pred_check
    _
  $region3: #{lupnet_forward.16} parent=0 // pred_check_branch
    %11 = sbr.rel (0) target = $region5
  $region4: #{lupnet_forward.16} parent=0 // pred_region
    _
  $region5: #{lupnet_forward.16} parent=0 // pred_fallthru
    _
  // Predicated region
  $region6: #{lupnet_forward.16} parent=0 // pred_check
    _
  $region7: #{lupnet_forward.16} parent=0 // pred_check_branch
    %13 = sbr.rel (0) target = $region9
  $region8: #{lupnet_forward.16} parent=0 // pred_region
    _
  $region9: #{lupnet_forward.16} parent=0 // pred_fallthru
    _
  // Predicated region
  $region10: #{lupnet_forward.16} parent=0 // pred_check
    _
  $region11: #{lupnet_forward.16} parent=0 // pred_check_branch
    %15 = sbr.rel (0) target = $region13
  $region12: #{lupnet_forward.16} parent=0 // pred_region
    _
  $region13: #{lupnet_forward.16} parent=0 // pred_fallthru
    _
  // Predicated region
  $region14: #{lupnet_forward.16} parent=0 // pred_check
    _
  $region15: #{lupnet_forward.16} parent=0 // pred_check_branch
    %17 = sbr.rel (0) target = $region17
  $region16: #{lupnet_forward.16} parent=0 // pred_region
    _
  $region17: #{lupnet_forward.16} parent=0 // pred_fallthru
    _
  // Predicated region
  $region18: #{lupnet_forward.16} parent=0 // pred_check
    _
  $region19: #{lupnet_forward.16} parent=0 // pred_check_branch
    %19 = sbr.rel (0) target = $region21
  $region20: #{lupnet_forward.16} parent=0 // pred_region
    _
  $region21: #{lupnet_forward.16} parent=0 // pred_fallthru
    _
  %v21 = vld [vmem:[%s0] sm:$0xff]
  %v22 = vld [vmem:[%s0 + $0x8] sm:$0xff]
  %v23 = vld [vmem:[%s0 + $0x10] sm:$0xff]
  %v24 = vld [vmem:[%s0 + $0x18] sm:$0xff]
  %v25 = vld [vmem:[%s0 + $0x20] sm:$0xf]
  %v26 = vld [vmem:[%s1] sm:$0xf]
  %v27 = vld [vmem:[%s1 + $0x4] sm:$0xf]
  %v28 = vld [vmem:[%s1 + $0x8] sm:$0xf]
  %v29 = vld [vmem:[%s1 + $0xc] sm:$0xf]
  %v30 = vld [vmem:[%s1 + $0x10] sm:$0xf]
  %v31 = vld [vmem:[%s1 + $0x14] sm:$0xf]
  %v32 = vld [vmem:[%s1 + $0x18] sm:$0xf]
  %v33 = vld [vmem:[%s1 + $0x1c] sm:$0xf]
  %v34 = vld [vmem:[%s1 + $0x20] sm:$0xf]
  %v35 = vld [vmem:[%s1 + $0x24] sm:$0xf]
  %v36 = vld [vmem:[%s1 + $0x28] sm:$0xf]
  %v37 = vld [vmem:[%s1 + $0x2c] sm:$0xf]
  %v38 = vld [vmem:[%s1 + $0x30] sm:$0xf]
  %v39 = vld [vmem:[%s1 + $0x34] sm:$0xf]
  %v40 = vld [vmem:[%s1 + $0x38] sm:$0xf]
  %v41 = vld [vmem:[%s1 + $0x3c] sm:$0xf]
  %v42 = vld [vmem:[%s1 + $0x40] sm:$0xf]
  %v43 = vld [vmem:[%s1 + $0x44] sm:$0xf]
  %v44 = vld [vmem:[%s1 + $0x48] sm:$0xf]
  %v45 = vld [vmem:[%s1 + $0x4c] sm:$0xf]
  %v46 = vld [vmem:[%s1 + $0x50] sm:$0xf]
  %v47 = vld [vmem:[%s1 + $0x54] sm:$0xf]
  %v48 = vld [vmem:[%s1 + $0x58] sm:$0xf]
  %v49 = vld [vmem:[%s1 + $0x5c] sm:$0xf]
  %v50 = vld [vmem:[%s1 + $0x60] sm:$0xf]
  %v51 = vld [vmem:[%s1 + $0x64] sm:$0xf]
  %v52 = vld [vmem:[%s1 + $0x68] sm:$0xf]
  %v53 = vld [vmem:[%s1 + $0x6c] sm:$0xf]
  %v54 = vld [vmem:[%s1 + $0x70] sm:$0xf]
  %v55 = vld [vmem:[%s1 + $0x74] sm:$0xf]
  %v56 = vld [vmem:[%s1 + $0x78] sm:$0xf]
  %v57 = vld [vmem:[%s1 + $0x7c] sm:$0xf]
  %v58 = vld [vmem:[%s1 + $0x80] sm:$0xf]
  %v59 = vld [vmem:[%s1 + $0x84] sm:$0xf]
  %v60 = vld [vmem:[%s1 + $0x88] sm:$0xf]
  %v61 = vld [vmem:[%s1 + $0x8c] sm:$0xf]
  %v62 = vld [vmem:[%s1 + $0x90] sm:$0xf]
  %v63 = vld [vmem:[%s1 + $0x94] sm:$0xf]
  %v64 = vld [vmem:[%s1 + $0x98] sm:$0xf]
  %v65 = vld [vmem:[%s1 + $0x9c] sm:$0xf]
  %v66 = vld [vmem:[%s1 + $0xa0] sm:$0xf]
  %v67 = vld [vmem:[%s1 + $0xa4] sm:$0xf]
  %v68 = vld [vmem:[%s1 + $0xa8] sm:$0xf]
  %v69 = vld [vmem:[%s1 + $0xac] sm:$0xf]
  %v70 = vld [vmem:[%s1 + $0xb0] sm:$0xf]
  %v71 = vld [vmem:[%s1 + $0xb4] sm:$0xf]
  %v72 = vld [vmem:[%s1 + $0xb8] sm:$0xf]
  %v73 = vld [vmem:[%s1 + $0xbc] sm:$0xf]
  %v74 = vld [vmem:[%s1 + $0xc0] sm:$0xf]
  %v75 = vld [vmem:[%s1 + $0xc4] sm:$0xf]
  %v76 = vld [vmem:[%s1 + $0xc8] sm:$0xf]
  %v77 = vld [vmem:[%s1 + $0xcc] sm:$0xf]
  %v78 = vld [vmem:[%s1 + $0xd0] sm:$0xf]
  %v79 = vld [vmem:[%s1 + $0xd4] sm:$0xf]
  %v80 = vld [vmem:[%s1 + $0xd8] sm:$0xf]
  %v81 = vld [vmem:[%s1 + $0xdc] sm:$0xf]
  %v82 = vld [vmem:[%s1 + $0xe0] sm:$0xf]
  %v83 = vld [vmem:[%s1 + $0xe4] sm:$0xf]
  %v84 = vld [vmem:[%s1 + $0xe8] sm:$0xf]
  %v85 = vld [vmem:[%s1 + $0xec] sm:$0xf]
  %v86 = vld [vmem:[%s1 + $0xf0] sm:$0xf]
  %v87 = vld [vmem:[%s1 + $0xf4] sm:$0xf]
  %v88 = vld [vmem:[%s1 + $0xf8] sm:$0xf]
  %v89 = vld [vmem:[%s1 + $0xfc] sm:$0xf]
  %v90 = vld [vmem:[%s1 + $0x100] sm:$0xf]
  %v91 = vld [vmem:[%s1 + $0x104] sm:$0xf]
  %v92 = vld [vmem:[%s1 + $0x108] sm:$0xf]
  %v93 = vld [vmem:[%s1 + $0x10c] sm:$0xf]
  %v94 = vld [vmem:[%s1 + $0x110] sm:$0xf]
  %v95 = vld [vmem:[%s1 + $0x114] sm:$0xf]
  %v96 = vld [vmem:[%s1 + $0x118] sm:$0xf]
  %v97 = vld [vmem:[%s1 + $0x11c] sm:$0xf]
  %v98 = vld [vmem:[%s1 + $0x120] sm:$0xf]
  %v99 = vld [vmem:[%s1 + $0x124] sm:$0xf]
  %v100 = vld [vmem:[%s1 + $0x128] sm:$0xf]
  %v101 = vld [vmem:[%s1 + $0x12c] sm:$0xf]
  %v102 = vld [vmem:[%s1 + $0x130] sm:$0xf]
  %v103 = vld [vmem:[%s1 + $0x134] sm:$0xf]
  %v104 = vld [vmem:[%s1 + $0x138] sm:$0xf]
  %v105 = vld [vmem:[%s1 + $0x13c] sm:$0xf]
  %v106 = vld [vmem:[%s1 + $0x140] sm:$0xf]
  %v107 = vld [vmem:[%s1 + $0x144] sm:$0xf]
  %v108 = vld [vmem:[%s1 + $0x148] sm:$0xf]
  %v109 = vld [vmem:[%s1 + $0x14c] sm:$0xf]
  %v110 = vld [vmem:[%s1 + $0x150] sm:$0xf]
  %v111 = vld [vmem:[%s1 + $0x154] sm:$0xf]
  %v112 = vld [vmem:[%s1 + $0x158] sm:$0xf]
  %v113 = vld [vmem:[%s1 + $0x15c] sm:$0xf]
  %v114 = vld [vmem:[%s1 + $0x160] sm:$0xf]
  %v115 = vld [vmem:[%s1 + $0x164] sm:$0xf]
  %v116 = vld [vmem:[%s1 + $0x168] sm:$0xf]
  %v117 = vld [vmem:[%s1 + $0x16c] sm:$0xf]
  %v118 = vld [vmem:[%s1 + $0x170] sm:$0xf]
  %v119 = vld [vmem:[%s1 + $0x174] sm:$0xf]
  %v120 = vld [vmem:[%s1 + $0x178] sm:$0xf]
  %v121 = vld [vmem:[%s1 + $0x17c] sm:$0xf]
  %v122 = vld [vmem:[%s1 + $0x180] sm:$0xf]
  %v123 = vld [vmem:[%s1 + $0x184] sm:$0xf]
  %v124 = vld [vmem:[%s1 + $0x188] sm:$0xf]
  %v125 = vld [vmem:[%s1 + $0x18c] sm:$0xf]
  %v126 = vld [vmem:[%s1 + $0x190] sm:$0xf]
  %v127 = vld [vmem:[%s1 + $0x194] sm:$0xf]
  %v128 = vld [vmem:[%s1 + $0x198] sm:$0xf]
  %v129 = vld [vmem:[%s1 + $0x19c] sm:$0xf]
  %v130 = vld [vmem:[%s1 + $0x1a0] sm:$0xf]
  %v131 = vld [vmem:[%s1 + $0x1a4] sm:$0xf]
  %v132 = vld [vmem:[%s1 + $0x1a8] sm:$0xf]
  %v133 = vld [vmem:[%s1 + $0x1ac] sm:$0xf]
  %v134 = vld [vmem:[%s1 + $0x1b0] sm:$0xf]
  %v135 = vld [vmem:[%s1 + $0x1b4] sm:$0xf]
  %v136 = vld [vmem:[%s1 + $0x1b8] sm:$0xf]
  %v137 = vld [vmem:[%s1 + $0x1bc] sm:$0xf]
  %v138 = vld [vmem:[%s1 + $0x1c0] sm:$0xf]
  %v139 = vld [vmem:[%s1 + $0x1c4] sm:$0xf]
  %v140 = vld [vmem:[%s1 + $0x1c8] sm:$0xf]
  %v141 = vld [vmem:[%s1 + $0x1cc] sm:$0xf]
  %v142 = vld [vmem:[%s1 + $0x1d0] sm:$0xf]
  %v143 = vld [vmem:[%s1 + $0x1d4] sm:$0xf]
  %v144 = vld [vmem:[%s1 + $0x1d8] sm:$0xf]
  %v145 = vld [vmem:[%s1 + $0x1dc] sm:$0xf]
  %v146 = vld [vmem:[%s1 + $0x1e0] sm:$0xf]
  %v147 = vld [vmem:[%s1 + $0x1e4] sm:$0xf]
  %v148 = vld [vmem:[%s1 + $0x1e8] sm:$0xf]
  %v149 = vld [vmem:[%s1 + $0x1ec] sm:$0xf]
  %v150 = vld [vmem:[%s1 + $0x1f0] sm:$0xf]
  %v151 = vld [vmem:[%s1 + $0x1f4] sm:$0xf]
  %v152 = vld [vmem:[%s1 + $0x1f8] sm:$0xf]
  %v153 = vld [vmem:[%s1 + $0x1fc] sm:$0xf]
  %v154 = vld [vmem:[%s1 + $0x200] sm:$0xf]
  %v155 = vld [vmem:[%s1 + $0x204] sm:$0xf]
  %v156 = vld [vmem:[%s1 + $0x208] sm:$0xf]
  %v157 = vld [vmem:[%s1 + $0x20c] sm:$0xf]
  %v158 = vld [vmem:[%s1 + $0x210] sm:$0xf]
  %v159 = vld [vmem:[%s1 + $0x214] sm:$0xf]
  %v160 = vld [vmem:[%s1 + $0x218] sm:$0xf]
  %v161 = vld [vmem:[%s1 + $0x21c] sm:$0xf]
  %v162 = vld [vmem:[%s1 + $0x220] sm:$0xf]
  %v163 = vld [vmem:[%s1 + $0x224] sm:$0xf]
  %v164 = vld [vmem:[%s1 + $0x228] sm:$0xf]
  %v165 = vld [vmem:[%s1 + $0x22c] sm:$0xf]
  %v166 = vld [vmem:[%s1 + $0x230] sm:$0xf]
  %v167 = vld [vmem:[%s1 + $0x234] sm:$0xf]
  %v168 = vld [vmem:[%s1 + $0x238] sm:$0xf]
  %v169 = vld [vmem:[%s1 + $0x23c] sm:$0xf]
  %v175 = vunpack.c.l.b16 %v21
  %v176 = vunpack.c.h.b16 %v21
  %v177 = vunpack.c.l.b16 %v22
  %v178 = vunpack.c.h.b16 %v22
  %v179 = vunpack.c.l.b16 %v23
  %v180 = vunpack.c.h.b16 %v23
  %v181 = vunpack.c.l.b16 %v24
  %v182 = vunpack.c.h.b16 %v24
  %v183 = vunpack.c.l.b16 %v25
  %v184 = vpack.c.b16 %v175, %v175
  %v185 = vpack.c.b16 %v176, %v176
  %v186 = vpack.c.b16 %v177, %v177
  %v187 = vpack.c.b16 %v178, %v178
  %v188 = vpack.c.b16 %v179, %v179
  %v189 = vpack.c.b16 %v180, %v180
  %v190 = vpack.c.b16 %v181, %v181
  %v191 = vpack.c.b16 %v182, %v182
  %v192 = vpack.c.b16 %v183, %v183
  %v346 = vunpack.c.l.b16 %v26
  %v347 = vunpack.c.l.b16 %v27
  %v348 = vunpack.c.l.b16 %v28
  %v349 = vunpack.c.l.b16 %v29
  %v350 = vunpack.c.l.b16 %v30
  %v351 = vunpack.c.l.b16 %v31
  %v352 = vunpack.c.l.b16 %v32
  %v353 = vunpack.c.l.b16 %v33
  %v354 = vunpack.c.l.b16 %v34
  %v355 = vunpack.c.l.b16 %v35
  %v356 = vunpack.c.l.b16 %v36
  %v357 = vunpack.c.l.b16 %v37
  %v358 = vunpack.c.l.b16 %v38
  %v359 = vunpack.c.l.b16 %v39
  %v360 = vunpack.c.l.b16 %v40
  %v361 = vunpack.c.l.b16 %v41
  %v362 = vunpack.c.l.b16 %v42
  %v363 = vunpack.c.l.b16 %v43
  %v364 = vunpack.c.l.b16 %v44
  %v365 = vunpack.c.l.b16 %v45
  %v366 = vunpack.c.l.b16 %v46
  %v367 = vunpack.c.l.b16 %v47
  %v368 = vunpack.c.l.b16 %v48
  %v369 = vunpack.c.l.b16 %v49
  %v370 = vunpack.c.l.b16 %v50
  %v371 = vunpack.c.l.b16 %v51
  %v372 = vunpack.c.l.b16 %v52
  %v373 = vunpack.c.l.b16 %v53
  %v374 = vunpack.c.l.b16 %v54
  %v375 = vunpack.c.l.b16 %v55
  %v376 = vunpack.c.l.b16 %v56
  %v377 = vunpack.c.l.b16 %v57
  %v378 = vunpack.c.l.b16 %v58
  %v379 = vunpack.c.l.b16 %v59
  %v380 = vunpack.c.l.b16 %v60
  %v381 = vunpack.c.l.b16 %v61
  %v382 = vunpack.c.l.b16 %v62
  %v383 = vunpack.c.l.b16 %v63
  %v384 = vunpack.c.l.b16 %v64
  %v385 = vunpack.c.l.b16 %v65
  %v386 = vunpack.c.l.b16 %v66
  %v387 = vunpack.c.l.b16 %v67
  %v388 = vunpack.c.l.b16 %v68
  %v389 = vunpack.c.l.b16 %v69
  %v390 = vunpack.c.l.b16 %v70
  %v391 = vunpack.c.l.b16 %v71
  %v392 = vunpack.c.l.b16 %v72
  %v393 = vunpack.c.l.b16 %v73
  %v394 = vunpack.c.l.b16 %v74
  %v395 = vunpack.c.l.b16 %v75
  %v396 = vunpack.c.l.b16 %v76
  %v397 = vunpack.c.l.b16 %v77
  %v398 = vunpack.c.l.b16 %v78
  %v399 = vunpack.c.l.b16 %v79
  %v400 = vunpack.c.l.b16 %v80
  %v401 = vunpack.c.l.b16 %v81
  %v402 = vunpack.c.l.b16 %v82
  %v403 = vunpack.c.l.b16 %v83
  %v404 = vunpack.c.l.b16 %v84
  %v405 = vunpack.c.l.b16 %v85
  %v406 = vunpack.c.l.b16 %v86
  %v407 = vunpack.c.l.b16 %v87
  %v408 = vunpack.c.l.b16 %v88
  %v409 = vunpack.c.l.b16 %v89
  %v410 = vunpack.c.l.b16 %v90
  %v411 = vunpack.c.l.b16 %v91
  %v412 = vunpack.c.l.b16 %v92
  %v413 = vunpack.c.l.b16 %v93
  %v414 = vunpack.c.l.b16 %v94
  %v415 = vunpack.c.l.b16 %v95
  %v416 = vunpack.c.l.b16 %v96
  %v417 = vunpack.c.l.b16 %v97
  %v418 = vunpack.c.l.b16 %v98
  %v419 = vunpack.c.l.b16 %v99
  %v420 = vunpack.c.l.b16 %v100
  %v421 = vunpack.c.l.b16 %v101
  %v422 = vunpack.c.l.b16 %v102
  %v423 = vunpack.c.l.b16 %v103
  %v424 = vunpack.c.l.b16 %v104
  %v425 = vunpack.c.l.b16 %v105
  %v426 = vunpack.c.l.b16 %v106
  %v427 = vunpack.c.l.b16 %v107
  %v428 = vunpack.c.l.b16 %v108
  %v429 = vunpack.c.l.b16 %v109
  %v430 = vunpack.c.l.b16 %v110
  %v431 = vunpack.c.l.b16 %v111
  %v432 = vunpack.c.l.b16 %v112
  %v433 = vunpack.c.l.b16 %v113
  %v434 = vunpack.c.l.b16 %v114
  %v435 = vunpack.c.l.b16 %v115
  %v436 = vunpack.c.l.b16 %v116
  %v437 = vunpack.c.l.b16 %v117
  %v438 = vunpack.c.l.b16 %v118
  %v439 = vunpack.c.l.b16 %v119
  %v440 = vunpack.c.l.b16 %v120
  %v441 = vunpack.c.l.b16 %v121
  %v442 = vunpack.c.l.b16 %v122
  %v443 = vunpack.c.l.b16 %v123
  %v444 = vunpack.c.l.b16 %v124
  %v445 = vunpack.c.l.b16 %v125
  %v446 = vunpack.c.l.b16 %v126
  %v447 = vunpack.c.l.b16 %v127
  %v448 = vunpack.c.l.b16 %v128
  %v449 = vunpack.c.l.b16 %v129
  %v450 = vunpack.c.l.b16 %v130
  %v451 = vunpack.c.l.b16 %v131
  %v452 = vunpack.c.l.b16 %v132
  %v453 = vunpack.c.l.b16 %v133
  %v454 = vunpack.c.l.b16 %v134
  %v455 = vunpack.c.l.b16 %v135
  %v456 = vunpack.c.l.b16 %v136
  %v457 = vunpack.c.l.b16 %v137
  %v458 = vunpack.c.l.b16 %v138
  %v459 = vunpack.c.l.b16 %v139
  %v460 = vunpack.c.l.b16 %v140
  %v461 = vunpack.c.l.b16 %v141
  %v462 = vunpack.c.l.b16 %v142
  %v463 = vunpack.c.l.b16 %v143
  %v464 = vunpack.c.l.b16 %v144
  %v465 = vunpack.c.l.b16 %v145
  %v466 = vunpack.c.l.b16 %v146
  %v467 = vunpack.c.l.b16 %v147
  %v468 = vunpack.c.l.b16 %v148
  %v469 = vunpack.c.l.b16 %v149
  %v470 = vunpack.c.l.b16 %v150
  %v471 = vunpack.c.l.b16 %v151
  %v472 = vunpack.c.l.b16 %v152
  %v473 = vunpack.c.l.b16 %v153
  %v474 = vunpack.c.l.b16 %v154
  %v475 = vunpack.c.l.b16 %v155
  %v476 = vunpack.c.l.b16 %v156
  %v477 = vunpack.c.l.b16 %v157
  %v478 = vunpack.c.l.b16 %v158
  %v479 = vunpack.c.l.b16 %v159
  %v480 = vunpack.c.l.b16 %v160
  %v481 = vunpack.c.l.b16 %v161
  %v482 = vunpack.c.l.b16 %v162
  %v483 = vunpack.c.l.b16 %v163
  %v484 = vunpack.c.l.b16 %v164
  %v485 = vunpack.c.l.b16 %v165
  %v486 = vunpack.c.l.b16 %v166
  %v487 = vunpack.c.l.b16 %v167
  %v488 = vunpack.c.l.b16 %v168
  %v489 = vunpack.c.l.b16 %v169
  %v490 = vpack.c.b16 %v347, %v346
  %v491 = vpack.c.b16 %v349, %v348
  %v492 = vpack.c.b16 %v351, %v350
  %v493 = vpack.c.b16 %v353, %v352
  %v494 = vpack.c.b16 %v355, %v354
  %v495 = vpack.c.b16 %v357, %v356
  %v496 = vpack.c.b16 %v359, %v358
  %v497 = vpack.c.b16 %v361, %v360
  %v498 = vpack.c.b16 %v363, %v362
  %v499 = vpack.c.b16 %v365, %v364
  %v500 = vpack.c.b16 %v367, %v366
  %v501 = vpack.c.b16 %v369, %v368
  %v502 = vpack.c.b16 %v371, %v370
  %v503 = vpack.c.b16 %v373, %v372
  %v504 = vpack.c.b16 %v375, %v374
  %v505 = vpack.c.b16 %v377, %v376
  %v506 = vpack.c.b16 %v379, %v378
  %v507 = vpack.c.b16 %v381, %v380
  %v508 = vpack.c.b16 %v383, %v382
  %v509 = vpack.c.b16 %v385, %v384
  %v510 = vpack.c.b16 %v387, %v386
  %v511 = vpack.c.b16 %v389, %v388
  %v512 = vpack.c.b16 %v391, %v390
  %v513 = vpack.c.b16 %v393, %v392
  %v514 = vpack.c.b16 %v395, %v394
  %v515 = vpack.c.b16 %v397, %v396
  %v516 = vpack.c.b16 %v399, %v398
  %v517 = vpack.c.b16 %v401, %v400
  %v518 = vpack.c.b16 %v403, %v402
  %v519 = vpack.c.b16 %v405, %v404
  %v520 = vpack.c.b16 %v407, %v406
  %v521 = vpack.c.b16 %v409, %v408
  %v522 = vpack.c.b16 %v411, %v410
  %v523 = vpack.c.b16 %v413, %v412
  %v524 = vpack.c.b16 %v415, %v414
  %v525 = vpack.c.b16 %v417, %v416
  %v526 = vpack.c.b16 %v419, %v418
  %v527 = vpack.c.b16 %v421, %v420
  %v528 = vpack.c.b16 %v423, %v422
  %v529 = vpack.c.b16 %v425, %v424
  %v530 = vpack.c.b16 %v427, %v426
  %v531 = vpack.c.b16 %v429, %v428
  %v532 = vpack.c.b16 %v431, %v430
  %v533 = vpack.c.b16 %v433, %v432
  %v534 = vpack.c.b16 %v435, %v434
  %v535 = vpack.c.b16 %v437, %v436
  %v536 = vpack.c.b16 %v439, %v438
  %v537 = vpack.c.b16 %v441, %v440
  %v538 = vpack.c.b16 %v443, %v442
  %v539 = vpack.c.b16 %v445, %v444
  %v540 = vpack.c.b16 %v447, %v446
  %v541 = vpack.c.b16 %v449, %v448
  %v542 = vpack.c.b16 %v451, %v450
  %v543 = vpack.c.b16 %v453, %v452
  %v544 = vpack.c.b16 %v455, %v454
  %v545 = vpack.c.b16 %v457, %v456
  %v546 = vpack.c.b16 %v459, %v458
  %v547 = vpack.c.b16 %v461, %v460
  %v548 = vpack.c.b16 %v463, %v462
  %v549 = vpack.c.b16 %v465, %v464
  %v550 = vpack.c.b16 %v467, %v466
  %v551 = vpack.c.b16 %v469, %v468
  %v552 = vpack.c.b16 %v471, %v470
  %v553 = vpack.c.b16 %v473, %v472
  %v554 = vpack.c.b16 %v475, %v474
  %v555 = vpack.c.b16 %v477, %v476
  %v556 = vpack.c.b16 %v479, %v478
  %v557 = vpack.c.b16 %v481, %v480
  %v558 = vpack.c.b16 %v483, %v482
  %v559 = vpack.c.b16 %v485, %v484
  %v560 = vpack.c.b16 %v487, %v486
  %v561 = vpack.c.b16 %v489, %v488
  %634 = vmatprep.subr.bf16.mxu0 0
  %635 = vmatpush1.bf16.msra.mxu0 %v497
  %636 = vmatprep.subr.bf16.mxu0 0
  %637 = vmatpush1.bf16.msra.mxu0 %v496
  %638 = vmatprep.subr.bf16.mxu0 0
  %639 = vmatpush1.bf16.msra.mxu0 %v495
  %640 = vmatprep.subr.bf16.mxu0 0
  %641 = vmatpush1.bf16.msra.mxu0 %v494
  %642 = vmatprep.subr.bf16.mxu0 0
  %643 = vmatpush1.bf16.msra.mxu0 %v493
  %644 = vmatprep.subr.bf16.mxu0 0
  %645 = vmatpush1.bf16.msra.mxu0 %v492
  %646 = vmatprep.subr.bf16.mxu0 0
  %647 = vmatpush1.bf16.msra.mxu0 %v491
  %648 = vmatprep.subr.bf16.mxu0 0
  %649 = vmatpush1.bf16.msra.mxu0 %v490
  %650 = vmatprep.subr.bf16.mxu0 0
  %651 = vmatpush2.bf16.msra.mxu0 %v505
  %652 = vmatprep.subr.bf16.mxu0 0
  %653 = vmatpush2.bf16.msra.mxu0 %v504
  %654 = vmatprep.subr.bf16.mxu0 0
  %655 = vmatpush2.bf16.msra.mxu0 %v503
  %656 = vmatprep.subr.bf16.mxu0 0
  %657 = vmatpush2.bf16.msra.mxu0 %v502
  %658 = vmatprep.subr.bf16.mxu0 0
  %659 = vmatpush2.bf16.msra.mxu0 %v501
  %660 = vmatprep.subr.bf16.mxu0 0
  %661 = vmatpush2.bf16.msra.mxu0 %v500
  %662 = vmatprep.subr.bf16.mxu0 0
  %663 = vmatpush2.bf16.msra.mxu0 %v499
  %664 = vmatprep.subr.bf16.mxu0 0
  %665 = vmatpush2.bf16.msra.mxu0 %v498
  %666 = vmatprep.mubr.bf16.mxu0 %v185
  %667 = vmatmul.mubr.bf16.gmra.mxu0 %v184
  %v668 = vpop.f32.mrf.mxu0
  %v669 = vadd.f32 0.0, %v668
  %v670 = vpop.f32.mrf.mxu0
  %v671 = vpop.f32.mrf.mxu0
  %v672 = vpop.f32.mrf.mxu0
  %673 = vdwg.mxu0
  %674 = vmatprep.subr.bf16.mxu0 0
  %675 = vmatpush1.bf16.msra.mxu0 %v513
  %676 = vmatprep.subr.bf16.mxu0 0
  %677 = vmatpush1.bf16.msra.mxu0 %v512
  %678 = vmatprep.subr.bf16.mxu0 0
  %679 = vmatpush1.bf16.msra.mxu0 %v511
  %680 = vmatprep.subr.bf16.mxu0 0
  %681 = vmatpush1.bf16.msra.mxu0 %v510
  %682 = vmatprep.subr.bf16.mxu0 0
  %683 = vmatpush1.bf16.msra.mxu0 %v509
  %684 = vmatprep.subr.bf16.mxu0 0
  %685 = vmatpush1.bf16.msra.mxu0 %v508
  %686 = vmatprep.subr.bf16.mxu0 0
  %687 = vmatpush1.bf16.msra.mxu0 %v507
  %688 = vmatprep.subr.bf16.mxu0 0
  %689 = vmatpush1.bf16.msra.mxu0 %v506
  %690 = vmatprep.subr.bf16.mxu0 0
  %691 = vmatpush2.bf16.msra.mxu0 %v521
  %692 = vmatprep.subr.bf16.mxu0 0
  %693 = vmatpush2.bf16.msra.mxu0 %v520
  %694 = vmatprep.subr.bf16.mxu0 0
  %695 = vmatpush2.bf16.msra.mxu0 %v519
  %696 = vmatprep.subr.bf16.mxu0 0
  %697 = vmatpush2.bf16.msra.mxu0 %v518
  %698 = vmatprep.subr.bf16.mxu0 0
  %699 = vmatpush2.bf16.msra.mxu0 %v517
  %700 = vmatprep.subr.bf16.mxu0 0
  %701 = vmatpush2.bf16.msra.mxu0 %v516
  %702 = vmatprep.subr.bf16.mxu0 0
  %703 = vmatpush2.bf16.msra.mxu0 %v515
  %704 = vmatprep.subr.bf16.mxu0 0
  %705 = vmatpush2.bf16.msra.mxu0 %v514
  %706 = vmatprep.mubr.bf16.mxu0 %v187
  %707 = vmatmul.mubr.bf16.gmra.mxu0 %v186
  %v708 = vpop.f32.mrf.mxu0
  %v709 = vadd.f32 %v669, %v708
  %v710 = vpop.f32.mrf.mxu0
  %v711 = vpop.f32.mrf.mxu0
  %v712 = vpop.f32.mrf.mxu0
  %713 = vdwg.mxu0
  %714 = vmatprep.subr.bf16.mxu0 0
  %715 = vmatpush1.bf16.msra.mxu0 %v529
  %716 = vmatprep.subr.bf16.mxu0 0
  %717 = vmatpush1.bf16.msra.mxu0 %v528
  %718 = vmatprep.subr.bf16.mxu0 0
  %719 = vmatpush1.bf16.msra.mxu0 %v527
  %720 = vmatprep.subr.bf16.mxu0 0
  %721 = vmatpush1.bf16.msra.mxu0 %v526
  %722 = vmatprep.subr.bf16.mxu0 0
  %723 = vmatpush1.bf16.msra.mxu0 %v525
  %724 = vmatprep.subr.bf16.mxu0 0
  %725 = vmatpush1.bf16.msra.mxu0 %v524
  %726 = vmatprep.subr.bf16.mxu0 0
  %727 = vmatpush1.bf16.msra.mxu0 %v523
  %728 = vmatprep.subr.bf16.mxu0 0
  %729 = vmatpush1.bf16.msra.mxu0 %v522
  %730 = vmatprep.subr.bf16.mxu0 0
  %731 = vmatpush2.bf16.msra.mxu0 %v537
  %732 = vmatprep.subr.bf16.mxu0 0
  %733 = vmatpush2.bf16.msra.mxu0 %v536
  %734 = vmatprep.subr.bf16.mxu0 0
  %735 = vmatpush2.bf16.msra.mxu0 %v535
  %736 = vmatprep.subr.bf16.mxu0 0
  %737 = vmatpush2.bf16.msra.mxu0 %v534
  %738 = vmatprep.subr.bf16.mxu0 0
  %739 = vmatpush2.bf16.msra.mxu0 %v533
  %740 = vmatprep.subr.bf16.mxu0 0
  %741 = vmatpush2.bf16.msra.mxu0 %v532
  %742 = vmatprep.subr.bf16.mxu0 0
  %743 = vmatpush2.bf16.msra.mxu0 %v531
  %744 = vmatprep.subr.bf16.mxu0 0
  %745 = vmatpush2.bf16.msra.mxu0 %v530
  %746 = vmatprep.mubr.bf16.mxu0 %v189
  %747 = vmatmul.mubr.bf16.gmra.mxu0 %v188
  %v748 = vpop.f32.mrf.mxu0
  %v749 = vadd.f32 %v709, %v748
  %v750 = vpop.f32.mrf.mxu0
  %v751 = vpop.f32.mrf.mxu0
  %v752 = vpop.f32.mrf.mxu0
  %753 = vdwg.mxu0
  %754 = vmatprep.subr.bf16.mxu0 0
  %755 = vmatpush1.bf16.msra.mxu0 %v545
  %756 = vmatprep.subr.bf16.mxu0 0
  %757 = vmatpush1.bf16.msra.mxu0 %v544
  %758 = vmatprep.subr.bf16.mxu0 0
  %759 = vmatpush1.bf16.msra.mxu0 %v543
  %760 = vmatprep.subr.bf16.mxu0 0
  %761 = vmatpush1.bf16.msra.mxu0 %v542
  %762 = vmatprep.subr.bf16.mxu0 0
  %763 = vmatpush1.bf16.msra.mxu0 %v541
  %764 = vmatprep.subr.bf16.mxu0 0
  %765 = vmatpush1.bf16.msra.mxu0 %v540
  %766 = vmatprep.subr.bf16.mxu0 0
  %767 = vmatpush1.bf16.msra.mxu0 %v539
  %768 = vmatprep.subr.bf16.mxu0 0
  %769 = vmatpush1.bf16.msra.mxu0 %v538
  %770 = vmatprep.subr.bf16.mxu0 0
  %771 = vmatpush2.bf16.msra.mxu0 %v553
  %772 = vmatprep.subr.bf16.mxu0 0
  %773 = vmatpush2.bf16.msra.mxu0 %v552
  %774 = vmatprep.subr.bf16.mxu0 0
  %775 = vmatpush2.bf16.msra.mxu0 %v551
  %776 = vmatprep.subr.bf16.mxu0 0
  %777 = vmatpush2.bf16.msra.mxu0 %v550
  %778 = vmatprep.subr.bf16.mxu0 0
  %779 = vmatpush2.bf16.msra.mxu0 %v549
  %780 = vmatprep.subr.bf16.mxu0 0
  %781 = vmatpush2.bf16.msra.mxu0 %v548
  %782 = vmatprep.subr.bf16.mxu0 0
  %783 = vmatpush2.bf16.msra.mxu0 %v547
  %784 = vmatprep.subr.bf16.mxu0 0
  %785 = vmatpush2.bf16.msra.mxu0 %v546
  %786 = vmatprep.mubr.bf16.mxu0 %v191
  %787 = vmatmul.mubr.bf16.gmra.mxu0 %v190
  %v788 = vpop.f32.mrf.mxu0
  %v789 = vadd.f32 %v749, %v788
  %v790 = vpop.f32.mrf.mxu0
  %v791 = vpop.f32.mrf.mxu0
  %v792 = vpop.f32.mrf.mxu0
  %793 = vdwg.mxu0
  %794 = vmatprep.subr.bf16.mxu0 0
  %795 = vmatpush1.bf16.msra.mxu0 %v561
  %796 = vmatprep.subr.bf16.mxu0 0
  %797 = vmatpush1.bf16.msra.mxu0 %v560
  %798 = vmatprep.subr.bf16.mxu0 0
  %799 = vmatpush1.bf16.msra.mxu0 %v559
  %800 = vmatprep.subr.bf16.mxu0 0
  %801 = vmatpush1.bf16.msra.mxu0 %v558
  %802 = vmatprep.subr.bf16.mxu0 0
  %803 = vmatpush1.bf16.msra.mxu0 %v557
  %804 = vmatprep.subr.bf16.mxu0 0
  %805 = vmatpush1.bf16.msra.mxu0 %v556
  %806 = vmatprep.subr.bf16.mxu0 0
  %807 = vmatpush1.bf16.msra.mxu0 %v555
  %808 = vmatprep.subr.bf16.mxu0 0
  %809 = vmatpush1.bf16.msra.mxu0 %v554
  %810 = vmatprep.subr.bf16.mxu0 0
  %811 = vmatpush2.bf16.msra.mxu0 0
  %812 = vmatprep.subr.bf16.mxu0 0
  %813 = vmatpush2.bf16.msra.mxu0 0
  %814 = vmatprep.subr.bf16.mxu0 0
  %815 = vmatpush2.bf16.msra.mxu0 0
  %816 = vmatprep.subr.bf16.mxu0 0
  %817 = vmatpush2.bf16.msra.mxu0 0
  %818 = vmatprep.subr.bf16.mxu0 0
  %819 = vmatpush2.bf16.msra.mxu0 0
  %820 = vmatprep.subr.bf16.mxu0 0
  %821 = vmatpush2.bf16.msra.mxu0 0
  %822 = vmatprep.subr.bf16.mxu0 0
  %823 = vmatpush2.bf16.msra.mxu0 0
  %824 = vmatprep.subr.bf16.mxu0 0
  %825 = vmatpush2.bf16.msra.mxu0 0
  %826 = vmatprep.mubr.bf16.mxu0 0
  %827 = vmatmul.mubr.bf16.gmra.mxu0 %v192
  %v828 = vpop.f32.mrf.mxu0
  %v829 = vadd.f32 %v789, %v828
  %v830 = vpop.f32.mrf.mxu0
  %v831 = vpop.f32.mrf.mxu0
  %v832 = vpop.f32.mrf.mxu0
  %833 = vdwg.mxu0
  %v834 = vld [vmem:[%s2] sm:$0x1]
  %v835 = vld [vmem:[%s3] sm:$0x1]
  %v836 = vrot.slane %v829, 4
  %v837 = vadd.f32 %v829, %v836
  %v838 = vrot.slane %v837, 2
  %v839 = vadd.f32 %v837, %v838
  %v840 = vrot.slane %v839, 1
  %v841 = vadd.f32 %v839, %v840
  %v842 = vmul.f32 %v829, %v829
  %v843 = vrot.slane %v842, 4
  %v844 = vadd.f32 %v842, %v843
  %v845 = vrot.slane %v844, 2
  %v846 = vadd.f32 %v844, %v845
  %v847 = vrot.slane %v846, 1
  %v848 = vadd.f32 %v846, %v847
  %v849 = vmul.f32 %v841, 0.125
  %v850 = vmul.f32 %v848, 0.125
  %v851 = vmul.f32 %v849, %v849
  %v852 = vsub.f32 %v850, %v851
  %v853 = vmax.f32 %v852, 0.0
  %v854 = vsub.f32 %v829, %v849
  %v855 = vadd.f32 %v853, 1e-05
  %v856 = vrsqrt.pop %v855
  %v857 = vmul.f32 %v854, %v856
  %v859 = vlaneseq
  %v860 = vshrl.u32 %v859, 7
  %v861 = vsub.s32 0, %v860
  %v862 = vrot.slane %v834, %v861
  %v864 = vmul.f32 %v857, %v862
  %v866 = vlaneseq
  %v867 = vshrl.u32 %v866, 7
  %v868 = vsub.s32 0, %v867
  %v869 = vrot.slane %v835, %v868
  %v871 = vadd.f32 %v864, %v869
  %v872 = vld [vmem:[%s4] sm:$0xff]
  %v873 = vadd.f32 %v871, %v872
  %v874 = vmax.f32 %v873, 0.0
  %875 = vst [vmem:[%s5] sm:$0xff] %v874
  // Predicated region
  $region22: #{lupnet_forward.16} parent=0 // pred_check
    _
  $region23: #{lupnet_forward.16} parent=0 // pred_check_branch
    %877 = sbr.rel (0) target = $region25
  $region24: #{lupnet_forward.16} parent=0 // pred_region
    _
  $region25: #{lupnet_forward.16} parent=0 // pred_fallthru
    _
  // Predicated region
  $region26: #{lupnet_forward.16} parent=0 // pred_check
    _
  $region27: #{lupnet_forward.16} parent=0 // pred_check_branch
    %879 = sbr.rel (0) target = $region29
  $region28: #{lupnet_forward.16} parent=0 // pred_region
    _
  $region29: #{lupnet_forward.16} parent=0 // pred_fallthru
    _

// kernel: lupnet_forward.17
$region0: #{lupnet_forward.17}
  #allocation0 [shape = 'u32[]', space=smem, size = 0x4, offset = 0x4, fixed_abs, tag = 'smem constant byte address 0x4 - core index']
  #allocation1 [shape = 'u32[144,128]{1,0:T(1,128)}', space=vmem, size = 0x12000, scoped, tag = 'internal scratch']
  %s0 = inlined_call_operand.vmem [shape: bf16[2,1152], index: 0, kind: input, shape index: {}]
  %s1 = inlined_call_operand.vmem [shape: bf16[1152,128], index: 1, kind: input, shape index: {}]
  %s2 = inlined_call_operand.vmem [shape: f32[1,128], index: 2, kind: input, shape index: {}]
  %s3 = inlined_call_operand.vmem [shape: f32[1,128], index: 3, kind: input, shape index: {}]
  %s4 = inlined_call_operand.vmem [shape: bf16[128,128], index: 4, kind: input, shape index: {}]
  %s5 = inlined_call_operand.vmem [shape: f32[1,128], index: 5, kind: input, shape index: {}]
  %s6 = inlined_call_operand.vmem [shape: f32[1,128], index: 6, kind: input, shape index: {}]
  %s7 = inlined_call_operand.vmem [shape: f32[2,128], index: 7, kind: output, shape index: {0}]
  %s8 = inlined_call_operand.vmem [shape: f32[2,128], index: 8, kind: output, shape index: {1}]
  %9 = xla_tuple %s7, %s8
  %s10 = sld [smem:[#allocation0]]
  $region46: #{lupnet_forward.17} parent=0
    _
  %s12 = ssub.s32 1, %s10
  %s13 = scalar_select 0, %s12, %s10
  // Predicated region
  $region2: #{lupnet_forward.17} parent=0 // pred_check
    _
  $region3: #{lupnet_forward.17} parent=0 // pred_check_branch
    %15 = sbr.rel (0) target = $region5
  $region4: #{lupnet_forward.17} parent=0 // pred_region
    _
  $region5: #{lupnet_forward.17} parent=0 // pred_fallthru
    _
  // Predicated region
  $region6: #{lupnet_forward.17} parent=0 // pred_check
    _
  $region7: #{lupnet_forward.17} parent=0 // pred_check_branch
    %17 = sbr.rel (0) target = $region9
  $region8: #{lupnet_forward.17} parent=0 // pred_region
    _
  $region9: #{lupnet_forward.17} parent=0 // pred_fallthru
    _
  // Predicated region
  $region10: #{lupnet_forward.17} parent=0 // pred_check
    _
  $region11: #{lupnet_forward.17} parent=0 // pred_check_branch
    %19 = sbr.rel (0) target = $region13
  $region12: #{lupnet_forward.17} parent=0 // pred_region
    _
  $region13: #{lupnet_forward.17} parent=0 // pred_fallthru
    _
  // Predicated region
  $region14: #{lupnet_forward.17} parent=0 // pred_check
    _
  $region15: #{lupnet_forward.17} parent=0 // pred_check_branch
    %21 = sbr.rel (0) target = $region17
  $region16: #{lupnet_forward.17} parent=0 // pred_region
    _
  $region17: #{lupnet_forward.17} parent=0 // pred_fallthru
    _
  // Predicated region
  $region18: #{lupnet_forward.17} parent=0 // pred_check
    _
  $region19: #{lupnet_forward.17} parent=0 // pred_check_branch
    %23 = sbr.rel (0) target = $region21
  $region20: #{lupnet_forward.17} parent=0 // pred_region
    _
  $region21: #{lupnet_forward.17} parent=0 // pred_fallthru
    _
  // Predicated region
  $region22: #{lupnet_forward.17} parent=0 // pred_check
    _
  $region23: #{lupnet_forward.17} parent=0 // pred_check_branch
    %25 = sbr.rel (0) target = $region25
  $region24: #{lupnet_forward.17} parent=0 // pred_region
    _
  $region25: #{lupnet_forward.17} parent=0 // pred_fallthru
    _
  // Predicated region
  $region26: #{lupnet_forward.17} parent=0 // pred_check
    _
  $region27: #{lupnet_forward.17} parent=0 // pred_check_branch
    %27 = sbr.rel (0) target = $region29
  $region28: #{lupnet_forward.17} parent=0 // pred_region
    _
  $region29: #{lupnet_forward.17} parent=0 // pred_fallthru
    _
  %v29 = vld [vmem:[%s0] sm:$0xff]
  %v30 = vld [vmem:[%s0 + $0x8] sm:$0x1]
  %v31 = vld [vmem:[%s1] sm:$0xf]
  %v32 = vld [vmem:[%s1 + $0x4] sm:$0xf]
  %v33 = vld [vmem:[%s1 + $0x8] sm:$0xf]
  %v34 = vld [vmem:[%s1 + $0xc] sm:$0xf]
  %v35 = vld [vmem:[%s1 + $0x10] sm:$0xf]
  %v36 = vld [vmem:[%s1 + $0x14] sm:$0xf]
  %v37 = vld [vmem:[%s1 + $0x18] sm:$0xf]
  %v38 = vld [vmem:[%s1 + $0x1c] sm:$0xf]
  %v39 = vld [vmem:[%s1 + $0x20] sm:$0xf]
  %v40 = vld [vmem:[%s1 + $0x24] sm:$0xf]
  %v41 = vld [vmem:[%s1 + $0x28] sm:$0xf]
  %v42 = vld [vmem:[%s1 + $0x2c] sm:$0xf]
  %v43 = vld [vmem:[%s1 + $0x30] sm:$0xf]
  %v44 = vld [vmem:[%s1 + $0x34] sm:$0xf]
  %v45 = vld [vmem:[%s1 + $0x38] sm:$0xf]
  %v46 = vld [vmem:[%s1 + $0x3c] sm:$0xf]
  %v47 = vld [vmem:[%s1 + $0x40] sm:$0xf]
  %v48 = vld [vmem:[%s1 + $0x44] sm:$0xf]
  %v49 = vld [vmem:[%s1 + $0x48] sm:$0xf]
  %v50 = vld [vmem:[%s1 + $0x4c] sm:$0xf]
  %v51 = vld [vmem:[%s1 + $0x50] sm:$0xf]
  %v52 = vld [vmem:[%s1 + $0x54] sm:$0xf]
  %v53 = vld [vmem:[%s1 + $0x58] sm:$0xf]
  %v54 = vld [vmem:[%s1 + $0x5c] sm:$0xf]
  %v55 = vld [vmem:[%s1 + $0x60] sm:$0xf]
  %v56 = vld [vmem:[%s1 + $0x64] sm:$0xf]
  %v57 = vld [vmem:[%s1 + $0x68] sm:$0xf]
  %v58 = vld [vmem:[%s1 + $0x6c] sm:$0xf]
  %v59 = vld [vmem:[%s1 + $0x70] sm:$0xf]
  %v60 = vld [vmem:[%s1 + $0x74] sm:$0xf]
  %v61 = vld [vmem:[%s1 + $0x78] sm:$0xf]
  %v62 = vld [vmem:[%s1 + $0x7c] sm:$0xf]
  %v63 = vld [vmem:[%s1 + $0x80] sm:$0xf]
  %v64 = vld [vmem:[%s1 + $0x84] sm:$0xf]
  %v65 = vld [vmem:[%s1 + $0x88] sm:$0xf]
  %v66 = vld [vmem:[%s1 + $0x8c] sm:$0xf]
  %v67 = vld [vmem:[%s1 + $0x90] sm:$0xf]
  %v68 = vld [vmem:[%s1 + $0x94] sm:$0xf]
  %v69 = vld [vmem:[%s1 + $0x98] sm:$0xf]
  %v70 = vld [vmem:[%s1 + $0x9c] sm:$0xf]
  %v71 = vld [vmem:[%s1 + $0xa0] sm:$0xf]
  %v72 = vld [vmem:[%s1 + $0xa4] sm:$0xf]
  %v73 = vld [vmem:[%s1 + $0xa8] sm:$0xf]
  %v74 = vld [vmem:[%s1 + $0xac] sm:$0xf]
  %v75 = vld [vmem:[%s1 + $0xb0] sm:$0xf]
  %v76 = vld [vmem:[%s1 + $0xb4] sm:$0xf]
  %v77 = vld [vmem:[%s1 + $0xb8] sm:$0xf]
  %v78 = vld [vmem:[%s1 + $0xbc] sm:$0xf]
  %v79 = vld [vmem:[%s1 + $0xc0] sm:$0xf]
  %v80 = vld [vmem:[%s1 + $0xc4] sm:$0xf]
  %v81 = vld [vmem:[%s1 + $0xc8] sm:$0xf]
  %v82 = vld [vmem:[%s1 + $0xcc] sm:$0xf]
  %v83 = vld [vmem:[%s1 + $0xd0] sm:$0xf]
  %v84 = vld [vmem:[%s1 + $0xd4] sm:$0xf]
  %v85 = vld [vmem:[%s1 + $0xd8] sm:$0xf]
  %v86 = vld [vmem:[%s1 + $0xdc] sm:$0xf]
  %v87 = vld [vmem:[%s1 + $0xe0] sm:$0xf]
  %v88 = vld [vmem:[%s1 + $0xe4] sm:$0xf]
  %v89 = vld [vmem:[%s1 + $0xe8] sm:$0xf]
  %v90 = vld [vmem:[%s1 + $0xec] sm:$0xf]
  %v91 = vld [vmem:[%s1 + $0xf0] sm:$0xf]
  %v92 = vld [vmem:[%s1 + $0xf4] sm:$0xf]
  %v93 = vld [vmem:[%s1 + $0xf8] sm:$0xf]
  %v94 = vld [vmem:[%s1 + $0xfc] sm:$0xf]
  %v95 = vld [vmem:[%s1 + $0x100] sm:$0xf]
  %v96 = vld [vmem:[%s1 + $0x104] sm:$0xf]
  %v97 = vld [vmem:[%s1 + $0x108] sm:$0xf]
  %v98 = vld [vmem:[%s1 + $0x10c] sm:$0xf]
  %v99 = vld [vmem:[%s1 + $0x110] sm:$0xf]
  %v100 = vld [vmem:[%s1 + $0x114] sm:$0xf]
  %v101 = vld [vmem:[%s1 + $0x118] sm:$0xf]
  %v102 = vld [vmem:[%s1 + $0x11c] sm:$0xf]
  %v103 = vld [vmem:[%s1 + $0x120] sm:$0xf]
  %v104 = vld [vmem:[%s1 + $0x124] sm:$0xf]
  %v105 = vld [vmem:[%s1 + $0x128] sm:$0xf]
  %v106 = vld [vmem:[%s1 + $0x12c] sm:$0xf]
  %v107 = vld [vmem:[%s1 + $0x130] sm:$0xf]
  %v108 = vld [vmem:[%s1 + $0x134] sm:$0xf]
  %v109 = vld [vmem:[%s1 + $0x138] sm:$0xf]
  %v110 = vld [vmem:[%s1 + $0x13c] sm:$0xf]
  %v111 = vld [vmem:[%s1 + $0x140] sm:$0xf]
  %v112 = vld [vmem:[%s1 + $0x144] sm:$0xf]
  %v113 = vld [vmem:[%s1 + $0x148] sm:$0xf]
  %v114 = vld [vmem:[%s1 + $0x14c] sm:$0xf]
  %v115 = vld [vmem:[%s1 + $0x150] sm:$0xf]
  %v116 = vld [vmem:[%s1 + $0x154] sm:$0xf]
  %v117 = vld [vmem:[%s1 + $0x158] sm:$0xf]
  %v118 = vld [vmem:[%s1 + $0x15c] sm:$0xf]
  %v119 = vld [vmem:[%s1 + $0x160] sm:$0xf]
  %v120 = vld [vmem:[%s1 + $0x164] sm:$0xf]
  %v121 = vld [vmem:[%s1 + $0x168] sm:$0xf]
  %v122 = vld [vmem:[%s1 + $0x16c] sm:$0xf]
  %v123 = vld [vmem:[%s1 + $0x170] sm:$0xf]
  %v124 = vld [vmem:[%s1 + $0x174] sm:$0xf]
  %v125 = vld [vmem:[%s1 + $0x178] sm:$0xf]
  %v126 = vld [vmem:[%s1 + $0x17c] sm:$0xf]
  %v127 = vld [vmem:[%s1 + $0x180] sm:$0xf]
  %v128 = vld [vmem:[%s1 + $0x184] sm:$0xf]
  %v129 = vld [vmem:[%s1 + $0x188] sm:$0xf]
  %v130 = vld [vmem:[%s1 + $0x18c] sm:$0xf]
  %v131 = vld [vmem:[%s1 + $0x190] sm:$0xf]
  %v132 = vld [vmem:[%s1 + $0x194] sm:$0xf]
  %v133 = vld [vmem:[%s1 + $0x198] sm:$0xf]
  %v134 = vld [vmem:[%s1 + $0x19c] sm:$0xf]
  %v135 = vld [vmem:[%s1 + $0x1a0] sm:$0xf]
  %v136 = vld [vmem:[%s1 + $0x1a4] sm:$0xf]
  %v137 = vld [vmem:[%s1 + $0x1a8] sm:$0xf]
  %v138 = vld [vmem:[%s1 + $0x1ac] sm:$0xf]
  %v139 = vld [vmem:[%s1 + $0x1b0] sm:$0xf]
  %v140 = vld [vmem:[%s1 + $0x1b4] sm:$0xf]
  %v141 = vld [vmem:[%s1 + $0x1b8] sm:$0xf]
  %v142 = vld [vmem:[%s1 + $0x1bc] sm:$0xf]
  %v143 = vld [vmem:[%s1 + $0x1c0] sm:$0xf]
  %v144 = vld [vmem:[%s1 + $0x1c4] sm:$0xf]
  %v145 = vld [vmem:[%s1 + $0x1c8] sm:$0xf]
  %v146 = vld [vmem:[%s1 + $0x1cc] sm:$0xf]
  %v147 = vld [vmem:[%s1 + $0x1d0] sm:$0xf]
  %v148 = vld [vmem:[%s1 + $0x1d4] sm:$0xf]
  %v149 = vld [vmem:[%s1 + $0x1d8] sm:$0xf]
  %v150 = vld [vmem:[%s1 + $0x1dc] sm:$0xf]
  %v151 = vld [vmem:[%s1 + $0x1e0] sm:$0xf]
  %v152 = vld [vmem:[%s1 + $0x1e4] sm:$0xf]
  %v153 = vld [vmem:[%s1 + $0x1e8] sm:$0xf]
  %v154 = vld [vmem:[%s1 + $0x1ec] sm:$0xf]
  %v155 = vld [vmem:[%s1 + $0x1f0] sm:$0xf]
  %v156 = vld [vmem:[%s1 + $0x1f4] sm:$0xf]
  %v157 = vld [vmem:[%s1 + $0x1f8] sm:$0xf]
  %v158 = vld [vmem:[%s1 + $0x1fc] sm:$0xf]
  %v159 = vld [vmem:[%s1 + $0x200] sm:$0xf]
  %v160 = vld [vmem:[%s1 + $0x204] sm:$0xf]
  %v161 = vld [vmem:[%s1 + $0x208] sm:$0xf]
  %v162 = vld [vmem:[%s1 + $0x20c] sm:$0xf]
  %v163 = vld [vmem:[%s1 + $0x210] sm:$0xf]
  %v164 = vld [vmem:[%s1 + $0x214] sm:$0xf]
  %v165 = vld [vmem:[%s1 + $0x218] sm:$0xf]
  %v166 = vld [vmem:[%s1 + $0x21c] sm:$0xf]
  %v167 = vld [vmem:[%s1 + $0x220] sm:$0xf]
  %v168 = vld [vmem:[%s1 + $0x224] sm:$0xf]
  %v169 = vld [vmem:[%s1 + $0x228] sm:$0xf]
  %v170 = vld [vmem:[%s1 + $0x22c] sm:$0xf]
  %v171 = vld [vmem:[%s1 + $0x230] sm:$0xf]
  %v172 = vld [vmem:[%s1 + $0x234] sm:$0xf]
  %v173 = vld [vmem:[%s1 + $0x238] sm:$0xf]
  %v174 = vld [vmem:[%s1 + $0x23c] sm:$0xf]
  %v177 = vcombine.high %v29, %v29
  %v179 = vunpack.c.l.s4 1966171168
  %v180 = vunpack.c.0.s8 %v179
  %v181 = vlaneseq
  %v182 = vshrl.u32 %v181, 7
  %v183 = vsub.s32 %v180, %v182
  %v184 = vrot.slane %v29, %v183
  %v186 = vunpack.c.l.s4 1966171168
  %v187 = vunpack.c.0.s8 %v186
  %v188 = vlaneseq
  %v189 = vshrl.u32 %v188, 7
  %v190 = vsub.s32 %v187, %v189
  %v191 = vrot.slane %v177, %v190
  %v192 = vcombine.high %v184, %v184
  %v193 = vcombine.high %v191, %v191
  %v195 = vunpack.c.l.s4 1966171168
  %v196 = vunpack.c.0.s8 %v195
  %v197 = vlaneseq
  %v198 = vshrl.u32 %v197, 7
  %v199 = vsub.s32 %v196, %v198
  %v200 = vrot.slane %v184, %v199
  %v202 = vunpack.c.l.s4 1966171168
  %v203 = vunpack.c.0.s8 %v202
  %v204 = vlaneseq
  %v205 = vshrl.u32 %v204, 7
  %v206 = vsub.s32 %v203, %v205
  %v207 = vrot.slane %v191, %v206
  %v209 = vunpack.c.l.s4 1966171168
  %v210 = vunpack.c.0.s8 %v209
  %v211 = vlaneseq
  %v212 = vshrl.u32 %v211, 7
  %v213 = vsub.s32 %v210, %v212
  %v214 = vrot.slane %v192, %v213
  %v216 = vunpack.c.l.s4 1966171168
  %v217 = vunpack.c.0.s8 %v216
  %v218 = vlaneseq
  %v219 = vshrl.u32 %v218, 7
  %v220 = vsub.s32 %v217, %v219
  %v221 = vrot.slane %v193, %v220
  %v222 = vcombine.high %v200, %v200
  %v223 = vcombine.high %v207, %v207
  %v224 = vcombine.high %v214, %v214
  %v225 = vcombine.high %v221, %v221
  %v227 = vunpack.c.l.s4 1966171168
  %v228 = vunpack.c.0.s8 %v227
  %v229 = vlaneseq
  %v230 = vshrl.u32 %v229, 7
  %v231 = vsub.s32 %v228, %v230
  %v232 = vrot.slane %v30, %v231
  %v234 = vunpack.c.l.s4 1966171168
  %v235 = vunpack.c.0.s8 %v234
  %v236 = vlaneseq
  %v237 = vshrl.u32 %v236, 7
  %v238 = vsub.s32 %v235, %v237
  %v239 = vrot.slane %v232, %v238
  %v393 = vunpack.c.l.b16 %v31
  %v394 = vunpack.c.l.b16 %v32
  %v395 = vunpack.c.l.b16 %v33
  %v396 = vunpack.c.l.b16 %v34
  %v397 = vunpack.c.l.b16 %v35
  %v398 = vunpack.c.l.b16 %v36
  %v399 = vunpack.c.l.b16 %v37
  %v400 = vunpack.c.l.b16 %v38
  %v401 = vunpack.c.l.b16 %v39
  %v402 = vunpack.c.l.b16 %v40
  %v403 = vunpack.c.l.b16 %v41
  %v404 = vunpack.c.l.b16 %v42
  %v405 = vunpack.c.l.b16 %v43
  %v406 = vunpack.c.l.b16 %v44
  %v407 = vunpack.c.l.b16 %v45
  %v408 = vunpack.c.l.b16 %v46
  %v409 = vunpack.c.l.b16 %v47
  %v410 = vunpack.c.l.b16 %v48
  %v411 = vunpack.c.l.b16 %v49
  %v412 = vunpack.c.l.b16 %v50
  %v413 = vunpack.c.l.b16 %v51
  %v414 = vunpack.c.l.b16 %v52
  %v415 = vunpack.c.l.b16 %v53
  %v416 = vunpack.c.l.b16 %v54
  %v417 = vunpack.c.l.b16 %v55
  %v418 = vunpack.c.l.b16 %v56
  %v419 = vunpack.c.l.b16 %v57
  %v420 = vunpack.c.l.b16 %v58
  %v421 = vunpack.c.l.b16 %v59
  %v422 = vunpack.c.l.b16 %v60
  %v423 = vunpack.c.l.b16 %v61
  %v424 = vunpack.c.l.b16 %v62
  %v425 = vunpack.c.l.b16 %v63
  %v426 = vunpack.c.l.b16 %v64
  %v427 = vunpack.c.l.b16 %v65
  %v428 = vunpack.c.l.b16 %v66
  %v429 = vunpack.c.l.b16 %v67
  %v430 = vunpack.c.l.b16 %v68
  %v431 = vunpack.c.l.b16 %v69
  %v432 = vunpack.c.l.b16 %v70
  %v433 = vunpack.c.l.b16 %v71
  %v434 = vunpack.c.l.b16 %v72
  %v435 = vunpack.c.l.b16 %v73
  %v436 = vunpack.c.l.b16 %v74
  %v437 = vunpack.c.l.b16 %v75
  %v438 = vunpack.c.l.b16 %v76
  %v439 = vunpack.c.l.b16 %v77
  %v440 = vunpack.c.l.b16 %v78
  %v441 = vunpack.c.l.b16 %v79
  %v442 = vunpack.c.l.b16 %v80
  %v443 = vunpack.c.l.b16 %v81
  %v444 = vunpack.c.l.b16 %v82
  %v445 = vunpack.c.l.b16 %v83
  %v446 = vunpack.c.l.b16 %v84
  %v447 = vunpack.c.l.b16 %v85
  %v448 = vunpack.c.l.b16 %v86
  %v449 = vunpack.c.l.b16 %v87
  %v450 = vunpack.c.l.b16 %v88
  %v451 = vunpack.c.l.b16 %v89
  %v452 = vunpack.c.l.b16 %v90
  %v453 = vunpack.c.l.b16 %v91
  %v454 = vunpack.c.l.b16 %v92
  %v455 = vunpack.c.l.b16 %v93
  %v456 = vunpack.c.l.b16 %v94
  %v457 = vunpack.c.l.b16 %v95
  %v458 = vunpack.c.l.b16 %v96
  %v459 = vunpack.c.l.b16 %v97
  %v460 = vunpack.c.l.b16 %v98
  %v461 = vunpack.c.l.b16 %v99
  %v462 = vunpack.c.l.b16 %v100
  %v463 = vunpack.c.l.b16 %v101
  %v464 = vunpack.c.l.b16 %v102
  %v465 = vunpack.c.l.b16 %v103
  %v466 = vunpack.c.l.b16 %v104
  %v467 = vunpack.c.l.b16 %v105
  %v468 = vunpack.c.l.b16 %v106
  %v469 = vunpack.c.l.b16 %v107
  %v470 = vunpack.c.l.b16 %v108
  %v471 = vunpack.c.l.b16 %v109
  %v472 = vunpack.c.l.b16 %v110
  %v473 = vunpack.c.l.b16 %v111
  %v474 = vunpack.c.l.b16 %v112
  %v475 = vunpack.c.l.b16 %v113
  %v476 = vunpack.c.l.b16 %v114
  %v477 = vunpack.c.l.b16 %v115
  %v478 = vunpack.c.l.b16 %v116
  %v479 = vunpack.c.l.b16 %v117
  %v480 = vunpack.c.l.b16 %v118
  %v481 = vunpack.c.l.b16 %v119
  %v482 = vunpack.c.l.b16 %v120
  %v483 = vunpack.c.l.b16 %v121
  %v484 = vunpack.c.l.b16 %v122
  %v485 = vunpack.c.l.b16 %v123
  %v486 = vunpack.c.l.b16 %v124
  %v487 = vunpack.c.l.b16 %v125
  %v488 = vunpack.c.l.b16 %v126
  %v489 = vunpack.c.l.b16 %v127
  %v490 = vunpack.c.l.b16 %v128
  %v491 = vunpack.c.l.b16 %v129
  %v492 = vunpack.c.l.b16 %v130
  %v493 = vunpack.c.l.b16 %v131
  %v494 = vunpack.c.l.b16 %v132
  %v495 = vunpack.c.l.b16 %v133
  %v496 = vunpack.c.l.b16 %v134
  %v497 = vunpack.c.l.b16 %v135
  %v498 = vunpack.c.l.b16 %v136
  %v499 = vunpack.c.l.b16 %v137
  %v500 = vunpack.c.l.b16 %v138
  %v501 = vunpack.c.l.b16 %v139
  %v502 = vunpack.c.l.b16 %v140
  %v503 = vunpack.c.l.b16 %v141
  %v504 = vunpack.c.l.b16 %v142
  %v505 = vunpack.c.l.b16 %v143
  %v506 = vunpack.c.l.b16 %v144
  %v507 = vunpack.c.l.b16 %v145
  %v508 = vunpack.c.l.b16 %v146
  %v509 = vunpack.c.l.b16 %v147
  %v510 = vunpack.c.l.b16 %v148
  %v511 = vunpack.c.l.b16 %v149
  %v512 = vunpack.c.l.b16 %v150
  %v513 = vunpack.c.l.b16 %v151
  %v514 = vunpack.c.l.b16 %v152
  %v515 = vunpack.c.l.b16 %v153
  %v516 = vunpack.c.l.b16 %v154
  %v517 = vunpack.c.l.b16 %v155
  %v518 = vunpack.c.l.b16 %v156
  %v519 = vunpack.c.l.b16 %v157
  %v520 = vunpack.c.l.b16 %v158
  %v521 = vunpack.c.l.b16 %v159
  %v522 = vunpack.c.l.b16 %v160
  %v523 = vunpack.c.l.b16 %v161
  %v524 = vunpack.c.l.b16 %v162
  %v525 = vunpack.c.l.b16 %v163
  %v526 = vunpack.c.l.b16 %v164
  %v527 = vunpack.c.l.b16 %v165
  %v528 = vunpack.c.l.b16 %v166
  %v529 = vunpack.c.l.b16 %v167
  %v530 = vunpack.c.l.b16 %v168
  %v531 = vunpack.c.l.b16 %v169
  %v532 = vunpack.c.l.b16 %v170
  %v533 = vunpack.c.l.b16 %v171
  %v534 = vunpack.c.l.b16 %v172
  %v535 = vunpack.c.l.b16 %v173
  %v536 = vunpack.c.l.b16 %v174
  %v537 = vpack.c.b16 %v394, %v393
  %v538 = vpack.c.b16 %v396, %v395
  %v539 = vpack.c.b16 %v398, %v397
  %v540 = vpack.c.b16 %v400, %v399
  %v541 = vpack.c.b16 %v402, %v401
  %v542 = vpack.c.b16 %v404, %v403
  %v543 = vpack.c.b16 %v406, %v405
  %v544 = vpack.c.b16 %v408, %v407
  %v545 = vpack.c.b16 %v410, %v409
  %v546 = vpack.c.b16 %v412, %v411
  %v547 = vpack.c.b16 %v414, %v413
  %v548 = vpack.c.b16 %v416, %v415
  %v549 = vpack.c.b16 %v418, %v417
  %v550 = vpack.c.b16 %v420, %v419
  %v551 = vpack.c.b16 %v422, %v421
  %v552 = vpack.c.b16 %v424, %v423
  %v553 = vpack.c.b16 %v426, %v425
  %v554 = vpack.c.b16 %v428, %v427
  %v555 = vpack.c.b16 %v430, %v429
  %v556 = vpack.c.b16 %v432, %v431
  %v557 = vpack.c.b16 %v434, %v433
  %v558 = vpack.c.b16 %v436, %v435
  %v559 = vpack.c.b16 %v438, %v437
  %v560 = vpack.c.b16 %v440, %v439
  %v561 = vpack.c.b16 %v442, %v441
  %v562 = vpack.c.b16 %v444, %v443
  %v563 = vpack.c.b16 %v446, %v445
  %v564 = vpack.c.b16 %v448, %v447
  %v565 = vpack.c.b16 %v450, %v449
  %v566 = vpack.c.b16 %v452, %v451
  %v567 = vpack.c.b16 %v454, %v453
  %v568 = vpack.c.b16 %v456, %v455
  %v569 = vpack.c.b16 %v458, %v457
  %v570 = vpack.c.b16 %v460, %v459
  %v571 = vpack.c.b16 %v462, %v461
  %v572 = vpack.c.b16 %v464, %v463
  %v573 = vpack.c.b16 %v466, %v465
  %v574 = vpack.c.b16 %v468, %v467
  %v575 = vpack.c.b16 %v470, %v469
  %v576 = vpack.c.b16 %v472, %v471
  %v577 = vpack.c.b16 %v474, %v473
  %v578 = vpack.c.b16 %v476, %v475
  %v579 = vpack.c.b16 %v478, %v477
  %v580 = vpack.c.b16 %v480, %v479
  %v581 = vpack.c.b16 %v482, %v481
  %v582 = vpack.c.b16 %v484, %v483
  %v583 = vpack.c.b16 %v486, %v485
  %v584 = vpack.c.b16 %v488, %v487
  %v585 = vpack.c.b16 %v490, %v489
  %v586 = vpack.c.b16 %v492, %v491
  %v587 = vpack.c.b16 %v494, %v493
  %v588 = vpack.c.b16 %v496, %v495
  %v589 = vpack.c.b16 %v498, %v497
  %v590 = vpack.c.b16 %v500, %v499
  %v591 = vpack.c.b16 %v502, %v501
  %v592 = vpack.c.b16 %v504, %v503
  %v593 = vpack.c.b16 %v506, %v505
  %v594 = vpack.c.b16 %v508, %v507
  %v595 = vpack.c.b16 %v510, %v509
  %v596 = vpack.c.b16 %v512, %v511
  %v597 = vpack.c.b16 %v514, %v513
  %v598 = vpack.c.b16 %v516, %v515
  %v599 = vpack.c.b16 %v518, %v517
  %v600 = vpack.c.b16 %v520, %v519
  %v601 = vpack.c.b16 %v522, %v521
  %v602 = vpack.c.b16 %v524, %v523
  %v603 = vpack.c.b16 %v526, %v525
  %v604 = vpack.c.b16 %v528, %v527
  %v605 = vpack.c.b16 %v530, %v529
  %v606 = vpack.c.b16 %v532, %v531
  %v607 = vpack.c.b16 %v534, %v533
  %v608 = vpack.c.b16 %v536, %v535
  %681 = vmatprep.subr.bf16.mxu0 0
  %682 = vmatpush1.bf16.msra.mxu0 %v544
  %683 = vmatprep.subr.bf16.mxu0 0
  %684 = vmatpush1.bf16.msra.mxu0 %v543
  %685 = vmatprep.subr.bf16.mxu0 0
  %686 = vmatpush1.bf16.msra.mxu0 %v542
  %687 = vmatprep.subr.bf16.mxu0 0
  %688 = vmatpush1.bf16.msra.mxu0 %v541
  %689 = vmatprep.subr.bf16.mxu0 0
  %690 = vmatpush1.bf16.msra.mxu0 %v540
  %691 = vmatprep.subr.bf16.mxu0 0
  %692 = vmatpush1.bf16.msra.mxu0 %v539
  %693 = vmatprep.subr.bf16.mxu0 0
  %694 = vmatpush1.bf16.msra.mxu0 %v538
  %695 = vmatprep.subr.bf16.mxu0 0
  %696 = vmatpush1.bf16.msra.mxu0 %v537
  %697 = vmatprep.subr.bf16.mxu0 0
  %698 = vmatpush2.bf16.msra.mxu0 %v552
  %699 = vmatprep.subr.bf16.mxu0 0
  %700 = vmatpush2.bf16.msra.mxu0 %v551
  %701 = vmatprep.subr.bf16.mxu0 0
  %702 = vmatpush2.bf16.msra.mxu0 %v550
  %703 = vmatprep.subr.bf16.mxu0 0
  %704 = vmatpush2.bf16.msra.mxu0 %v549
  %705 = vmatprep.subr.bf16.mxu0 0
  %706 = vmatpush2.bf16.msra.mxu0 %v548
  %707 = vmatprep.subr.bf16.mxu0 0
  %708 = vmatpush2.bf16.msra.mxu0 %v547
  %709 = vmatprep.subr.bf16.mxu0 0
  %710 = vmatpush2.bf16.msra.mxu0 %v546
  %711 = vmatprep.subr.bf16.mxu0 0
  %712 = vmatpush2.bf16.msra.mxu0 %v545
  %713 = vmatprep.mubr.bf16.mxu0 %v214
  %714 = vmatmul.mubr.bf16.gmra.mxu0 %v200
  %v715 = vpop.f32.mrf.mxu0
  %v716 = vadd.f32 0.0, %v715
  %v717 = vpop.f32.mrf.mxu0
  %v718 = vpop.f32.mrf.mxu0
  %v719 = vpop.f32.mrf.mxu0
  %720 = vdwg.mxu0
  %721 = vmatprep.subr.bf16.mxu0 0
  %722 = vmatpush1.bf16.msra.mxu0 %v560
  %723 = vmatprep.subr.bf16.mxu0 0
  %724 = vmatpush1.bf16.msra.mxu0 %v559
  %725 = vmatprep.subr.bf16.mxu0 0
  %726 = vmatpush1.bf16.msra.mxu0 %v558
  %727 = vmatprep.subr.bf16.mxu0 0
  %728 = vmatpush1.bf16.msra.mxu0 %v557
  %729 = vmatprep.subr.bf16.mxu0 0
  %730 = vmatpush1.bf16.msra.mxu0 %v556
  %731 = vmatprep.subr.bf16.mxu0 0
  %732 = vmatpush1.bf16.msra.mxu0 %v555
  %733 = vmatprep.subr.bf16.mxu0 0
  %734 = vmatpush1.bf16.msra.mxu0 %v554
  %735 = vmatprep.subr.bf16.mxu0 0
  %736 = vmatpush1.bf16.msra.mxu0 %v553
  %737 = vmatprep.subr.bf16.mxu0 0
  %738 = vmatpush2.bf16.msra.mxu0 %v568
  %739 = vmatprep.subr.bf16.mxu0 0
  %740 = vmatpush2.bf16.msra.mxu0 %v567
  %741 = vmatprep.subr.bf16.mxu0 0
  %742 = vmatpush2.bf16.msra.mxu0 %v566
  %743 = vmatprep.subr.bf16.mxu0 0
  %744 = vmatpush2.bf16.msra.mxu0 %v565
  %745 = vmatprep.subr.bf16.mxu0 0
  %746 = vmatpush2.bf16.msra.mxu0 %v564
  %747 = vmatprep.subr.bf16.mxu0 0
  %748 = vmatpush2.bf16.msra.mxu0 %v563
  %749 = vmatprep.subr.bf16.mxu0 0
  %750 = vmatpush2.bf16.msra.mxu0 %v562
  %751 = vmatprep.subr.bf16.mxu0 0
  %752 = vmatpush2.bf16.msra.mxu0 %v561
  %753 = vmatprep.mubr.bf16.mxu0 %v224
  %754 = vmatmul.mubr.bf16.gmra.mxu0 %v222
  %v755 = vpop.f32.mrf.mxu0
  %v756 = vadd.f32 %v716, %v755
  %v757 = vpop.f32.mrf.mxu0
  %v758 = vpop.f32.mrf.mxu0
  %v759 = vpop.f32.mrf.mxu0
  %760 = vdwg.mxu0
  %761 = vmatprep.subr.bf16.mxu0 0
  %762 = vmatpush1.bf16.msra.mxu0 %v576
  %763 = vmatprep.subr.bf16.mxu0 0
  %764 = vmatpush1.bf16.msra.mxu0 %v575
  %765 = vmatprep.subr.bf16.mxu0 0
  %766 = vmatpush1.bf16.msra.mxu0 %v574
  %767 = vmatprep.subr.bf16.mxu0 0
  %768 = vmatpush1.bf16.msra.mxu0 %v573
  %769 = vmatprep.subr.bf16.mxu0 0
  %770 = vmatpush1.bf16.msra.mxu0 %v572
  %771 = vmatprep.subr.bf16.mxu0 0
  %772 = vmatpush1.bf16.msra.mxu0 %v571
  %773 = vmatprep.subr.bf16.mxu0 0
  %774 = vmatpush1.bf16.msra.mxu0 %v570
  %775 = vmatprep.subr.bf16.mxu0 0
  %776 = vmatpush1.bf16.msra.mxu0 %v569
  %777 = vmatprep.subr.bf16.mxu0 0
  %778 = vmatpush2.bf16.msra.mxu0 %v584
  %779 = vmatprep.subr.bf16.mxu0 0
  %780 = vmatpush2.bf16.msra.mxu0 %v583
  %781 = vmatprep.subr.bf16.mxu0 0
  %782 = vmatpush2.bf16.msra.mxu0 %v582
  %783 = vmatprep.subr.bf16.mxu0 0
  %784 = vmatpush2.bf16.msra.mxu0 %v581
  %785 = vmatprep.subr.bf16.mxu0 0
  %786 = vmatpush2.bf16.msra.mxu0 %v580
  %787 = vmatprep.subr.bf16.mxu0 0
  %788 = vmatpush2.bf16.msra.mxu0 %v579
  %789 = vmatprep.subr.bf16.mxu0 0
  %790 = vmatpush2.bf16.msra.mxu0 %v578
  %791 = vmatprep.subr.bf16.mxu0 0
  %792 = vmatpush2.bf16.msra.mxu0 %v577
  %793 = vmatprep.mubr.bf16.mxu0 %v221
  %794 = vmatmul.mubr.bf16.gmra.mxu0 %v207
  %v795 = vpop.f32.mrf.mxu0
  %v796 = vadd.f32 %v756, %v795
  %v797 = vpop.f32.mrf.mxu0
  %v798 = vpop.f32.mrf.mxu0
  %v799 = vpop.f32.mrf.mxu0
  %800 = vdwg.mxu0
  %801 = vmatprep.subr.bf16.mxu0 0
  %802 = vmatpush1.bf16.msra.mxu0 %v592
  %803 = vmatprep.subr.bf16.mxu0 0
  %804 = vmatpush1.bf16.msra.mxu0 %v591
  %805 = vmatprep.subr.bf16.mxu0 0
  %806 = vmatpush1.bf16.msra.mxu0 %v590
  %807 = vmatprep.subr.bf16.mxu0 0
  %808 = vmatpush1.bf16.msra.mxu0 %v589
  %809 = vmatprep.subr.bf16.mxu0 0
  %810 = vmatpush1.bf16.msra.mxu0 %v588
  %811 = vmatprep.subr.bf16.mxu0 0
  %812 = vmatpush1.bf16.msra.mxu0 %v587
  %813 = vmatprep.subr.bf16.mxu0 0
  %814 = vmatpush1.bf16.msra.mxu0 %v586
  %815 = vmatprep.subr.bf16.mxu0 0
  %816 = vmatpush1.bf16.msra.mxu0 %v585
  %817 = vmatprep.subr.bf16.mxu0 0
  %818 = vmatpush2.bf16.msra.mxu0 %v600
  %819 = vmatprep.subr.bf16.mxu0 0
  %820 = vmatpush2.bf16.msra.mxu0 %v599
  %821 = vmatprep.subr.bf16.mxu0 0
  %822 = vmatpush2.bf16.msra.mxu0 %v598
  %823 = vmatprep.subr.bf16.mxu0 0
  %824 = vmatpush2.bf16.msra.mxu0 %v597
  %825 = vmatprep.subr.bf16.mxu0 0
  %826 = vmatpush2.bf16.msra.mxu0 %v596
  %827 = vmatprep.subr.bf16.mxu0 0
  %828 = vmatpush2.bf16.msra.mxu0 %v595
  %829 = vmatprep.subr.bf16.mxu0 0
  %830 = vmatpush2.bf16.msra.mxu0 %v594
  %831 = vmatprep.subr.bf16.mxu0 0
  %832 = vmatpush2.bf16.msra.mxu0 %v593
  %833 = vmatprep.mubr.bf16.mxu0 %v225
  %834 = vmatmul.mubr.bf16.gmra.mxu0 %v223
  %v835 = vpop.f32.mrf.mxu0
  %v836 = vadd.f32 %v796, %v835
  %v837 = vpop.f32.mrf.mxu0
  %v838 = vpop.f32.mrf.mxu0
  %v839 = vpop.f32.mrf.mxu0
  %840 = vdwg.mxu0
  %841 = vmatprep.subr.bf16.mxu0 0
  %842 = vmatpush1.bf16.msra.mxu0 %v608
  %843 = vmatprep.subr.bf16.mxu0 0
  %844 = vmatpush1.bf16.msra.mxu0 %v607
  %845 = vmatprep.subr.bf16.mxu0 0
  %846 = vmatpush1.bf16.msra.mxu0 %v606
  %847 = vmatprep.subr.bf16.mxu0 0
  %848 = vmatpush1.bf16.msra.mxu0 %v605
  %849 = vmatprep.subr.bf16.mxu0 0
  %850 = vmatpush1.bf16.msra.mxu0 %v604
  %851 = vmatprep.subr.bf16.mxu0 0
  %852 = vmatpush1.bf16.msra.mxu0 %v603
  %853 = vmatprep.subr.bf16.mxu0 0
  %854 = vmatpush1.bf16.msra.mxu0 %v602
  %855 = vmatprep.subr.bf16.mxu0 0
  %856 = vmatpush1.bf16.msra.mxu0 %v601
  %857 = vmatprep.subr.bf16.mxu0 0
  %858 = vmatpush2.bf16.msra.mxu0 0
  %859 = vmatprep.subr.bf16.mxu0 0
  %860 = vmatpush2.bf16.msra.mxu0 0
  %861 = vmatprep.subr.bf16.mxu0 0
  %862 = vmatpush2.bf16.msra.mxu0 0
  %863 = vmatprep.subr.bf16.mxu0 0
  %864 = vmatpush2.bf16.msra.mxu0 0
  %865 = vmatprep.subr.bf16.mxu0 0
  %866 = vmatpush2.bf16.msra.mxu0 0
  %867 = vmatprep.subr.bf16.mxu0 0
  %868 = vmatpush2.bf16.msra.mxu0 0
  %869 = vmatprep.subr.bf16.mxu0 0
  %870 = vmatpush2.bf16.msra.mxu0 0
  %871 = vmatprep.subr.bf16.mxu0 0
  %872 = vmatpush2.bf16.msra.mxu0 0
  %873 = vmatprep.mubr.bf16.mxu0 0
  %874 = vmatmul.mubr.bf16.gmra.mxu0 %v239
  %v875 = vpop.f32.mrf.mxu0
  %v876 = vadd.f32 %v836, %v875
  %v877 = vpop.f32.mrf.mxu0
  %v878 = vpop.f32.mrf.mxu0
  %v879 = vpop.f32.mrf.mxu0
  %880 = vdwg.mxu0
  %v881 = vld [vmem:[%s2] sm:$0x1]
  %v882 = vld [vmem:[%s3] sm:$0x1]
  %vm883 = vcmask 1041408
  %v884 = vsel %vm883, %v876, 0.0
  %v885 = vrot.slane %v884, 4
  %v886 = vadd.f32 %v884, %v885
  %v887 = vrot.slane %v886, 2
  %v888 = vadd.f32 %v886, %v887
  %v889 = vrot.slane %v888, 1
  %v890 = vadd.f32 %v888, %v889
  %v891 = vmul.f32 %v876, %v876
  %v892 = vsel %vm883, %v891, 0.0
  %v893 = vrot.slane %v892, 4
  %v894 = vadd.f32 %v892, %v893
  %v895 = vrot.slane %v894, 2
  %v896 = vadd.f32 %v894, %v895
  %v897 = vrot.slane %v896, 1
  %v898 = vadd.f32 %v896, %v897
  %v899 = vmul.f32 %v890, 0.5
  %v900 = vmul.f32 %v898, 0.5
  %v901 = vmul.f32 %v899, %v899
  %v902 = vsub.f32 %v900, %v901
  %v903 = vmax.f32 %v902, 0.0
  %v904 = vsub.f32 %v876, %v899
  %v905 = vadd.f32 %v903, 1e-05
  %v906 = vrsqrt.pop %v905
  %v907 = vmul.f32 %v904, %v906
  %v909 = vlaneseq
  %v910 = vshrl.u32 %v909, 7
  %v911 = vsub.s32 0, %v910
  %v912 = vrot.slane %v881, %v911
  %v914 = vmul.f32 %v907, %v912
  %v916 = vlaneseq
  %v917 = vshrl.u32 %v916, 7
  %v918 = vsub.s32 0, %v917
  %v919 = vrot.slane %v882, %v918
  %v921 = vadd.f32 %v914, %v919
  %v922 = vmax.f32 %v921, 0.0
  %923 = vst [vmem:[%s7] sm:$0x3] %v922
  %v924 = vld [vmem:[%s4] sm:$0xf]
  %v925 = vld [vmem:[%s4 + $0x4] sm:$0xf]
  %v926 = vld [vmem:[%s4 + $0x8] sm:$0xf]
  %v927 = vld [vmem:[%s4 + $0xc] sm:$0xf]
  %v928 = vld [vmem:[%s4 + $0x10] sm:$0xf]
  %v929 = vld [vmem:[%s4 + $0x14] sm:$0xf]
  %v930 = vld [vmem:[%s4 + $0x18] sm:$0xf]
  %v931 = vld [vmem:[%s4 + $0x1c] sm:$0xf]
  %v932 = vld [vmem:[%s4 + $0x20] sm:$0xf]
  %v933 = vld [vmem:[%s4 + $0x24] sm:$0xf]
  %v934 = vld [vmem:[%s4 + $0x28] sm:$0xf]
  %v935 = vld [vmem:[%s4 + $0x2c] sm:$0xf]
  %v936 = vld [vmem:[%s4 + $0x30] sm:$0xf]
  %v937 = vld [vmem:[%s4 + $0x34] sm:$0xf]
  %v938 = vld [vmem:[%s4 + $0x38] sm:$0xf]
  %v939 = vld [vmem:[%s4 + $0x3c] sm:$0xf]
  %v956 = vunpack.c.l.b16 %v924
  %v957 = vunpack.c.l.b16 %v925
  %v958 = vunpack.c.l.b16 %v926
  %v959 = vunpack.c.l.b16 %v927
  %v960 = vunpack.c.l.b16 %v928
  %v961 = vunpack.c.l.b16 %v929
  %v962 = vunpack.c.l.b16 %v930
  %v963 = vunpack.c.l.b16 %v931
  %v964 = vunpack.c.l.b16 %v932
  %v965 = vunpack.c.l.b16 %v933
  %v966 = vunpack.c.l.b16 %v934
  %v967 = vunpack.c.l.b16 %v935
  %v968 = vunpack.c.l.b16 %v936
  %v969 = vunpack.c.l.b16 %v937
  %v970 = vunpack.c.l.b16 %v938
  %v971 = vunpack.c.l.b16 %v939
  %v972 = vpack.c.b16 %v957, %v956
  %v973 = vpack.c.b16 %v959, %v958
  %v974 = vpack.c.b16 %v961, %v960
  %v975 = vpack.c.b16 %v963, %v962
  %v976 = vpack.c.b16 %v965, %v964
  %v977 = vpack.c.b16 %v967, %v966
  %v978 = vpack.c.b16 %v969, %v968
  %v979 = vpack.c.b16 %v971, %v970
  %988 = vmatprep.subr.bf16.mxu0 0
  %989 = vmatpush1.bf16.msra.mxu0 %v979
  %990 = vmatprep.subr.bf16.mxu0 0
  %991 = vmatpush1.bf16.msra.mxu0 %v978
  %992 = vmatprep.subr.bf16.mxu0 0
  %993 = vmatpush1.bf16.msra.mxu0 %v977
  %994 = vmatprep.subr.bf16.mxu0 0
  %995 = vmatpush1.bf16.msra.mxu0 %v976
  %996 = vmatprep.subr.bf16.mxu0 0
  %997 = vmatpush1.bf16.msra.mxu0 %v975
  %998 = vmatprep.subr.bf16.mxu0 0
  %999 = vmatpush1.bf16.msra.mxu0 %v974
  %1000 = vmatprep.subr.bf16.mxu0 0
  %1001 = vmatpush1.bf16.msra.mxu0 %v973
  %1002 = vmatprep.subr.bf16.mxu0 0
  %1003 = vmatpush1.bf16.msra.mxu0 %v972
  %1004 = vmatprep.subr.bf16.mxu0 0
  %1005 = vmatpush2.bf16.msra.mxu0 0
  %1006 = vmatprep.subr.bf16.mxu0 0
  %1007 = vmatpush2.bf16.msra.mxu0 0
  %1008 = vmatprep.subr.bf16.mxu0 0
  %1009 = vmatpush2.bf16.msra.mxu0 0
  %1010 = vmatprep.subr.bf16.mxu0 0
  %1011 = vmatpush2.bf16.msra.mxu0 0
  %1012 = vmatprep.subr.bf16.mxu0 0
  %1013 = vmatpush2.bf16.msra.mxu0 0
  %1014 = vmatprep.subr.bf16.mxu0 0
  %1015 = vmatpush2.bf16.msra.mxu0 0
  %1016 = vmatprep.subr.bf16.mxu0 0
  %1017 = vmatpush2.bf16.msra.mxu0 0
  %1018 = vmatprep.subr.bf16.mxu0 0
  %1019 = vmatpush2.bf16.msra.mxu0 0
  %1020 = vmatprep.mubr.bf16.mxu0 0
  %1021 = vmatmul.mubr.bf16.gmra.mxu0 %v207
  %v1022 = vpop.f32.mrf.mxu0
  %v1023 = vadd.f32 0.0, %v1022
  %v1024 = vpop.f32.mrf.mxu0
  %v1025 = vpop.f32.mrf.mxu0
  %v1026 = vpop.f32.mrf.mxu0
  %1027 = vdwg.mxu0
  %v1028 = vld [vmem:[%s5] sm:$0x1]
  %v1029 = vld [vmem:[%s6] sm:$0x1]
  %v1030 = vsel %vm883, %v1023, 0.0
  %v1031 = vrot.slane %v1030, 4
  %v1032 = vadd.f32 %v1030, %v1031
  %v1033 = vrot.slane %v1032, 2
  %v1034 = vadd.f32 %v1032, %v1033
  %v1035 = vrot.slane %v1034, 1
  %v1036 = vadd.f32 %v1034, %v1035
  %v1037 = vmul.f32 %v1023, %v1023
  %v1038 = vsel %vm883, %v1037, 0.0
  %v1039 = vrot.slane %v1038, 4
  %v1040 = vadd.f32 %v1038, %v1039
  %v1041 = vrot.slane %v1040, 2
  %v1042 = vadd.f32 %v1040, %v1041
  %v1043 = vrot.slane %v1042, 1
  %v1044 = vadd.f32 %v1042, %v1043
  %v1045 = vmul.f32 %v1036, 0.5
  %v1046 = vmul.f32 %v1044, 0.5
  %v1047 = vmul.f32 %v1045, %v1045
  %v1048 = vsub.f32 %v1046, %v1047
  %v1049 = vmax.f32 %v1048, 0.0
  %v1050 = vsub.f32 %v1023, %v1045
  %v1051 = vadd.f32 %v1049, 1e-05
  %v1052 = vrsqrt.pop %v1051
  %v1053 = vmul.f32 %v1050, %v1052
  %v1055 = vlaneseq
  %v1056 = vshrl.u32 %v1055, 7
  %v1057 = vsub.s32 0, %v1056
  %v1058 = vrot.slane %v1028, %v1057
  %v1060 = vmul.f32 %v1053, %v1058
  %v1062 = vlaneseq
  %v1063 = vshrl.u32 %v1062, 7
  %v1064 = vsub.s32 0, %v1063
  %v1065 = vrot.slane %v1029, %v1064
  %v1067 = vadd.f32 %v1060, %v1065
  %1068 = vst [vmem:[%s8] sm:$0x3] %v1067
  // Predicated region
  $region30: #{lupnet_forward.17} parent=0 // pred_check
    _
  $region31: #{lupnet_forward.17} parent=0 // pred_check_branch
    %1070 = sbr.rel (0) target = $region33
  $region32: #{lupnet_forward.17} parent=0 // pred_region
    _
  $region33: #{lupnet_forward.17} parent=0 // pred_fallthru
    _
  // Predicated region
  $region34: #{lupnet_forward.17} parent=0 // pred_check
    _
  $region35: #{lupnet_forward.17} parent=0 // pred_check_branch
    %1072 = sbr.rel (0) target = $region37
  $region36: #{lupnet_forward.17} parent=0 // pred_region
    _
  $region37: #{lupnet_forward.17} parent=0 // pred_fallthru
    _
  // Predicated region
  $region38: #{lupnet_forward.17} parent=0 // pred_check
    _
  $region39: #{lupnet_forward.17} parent=0 // pred_check_branch
    %1074 = sbr.rel (0) target = $region41
  $region40: #{lupnet_forward.17} parent=0 // pred_region
    _
  $region41: #{lupnet_forward.17} parent=0 // pred_fallthru
    _
  // Predicated region
  $region42: #{lupnet_forward.17} parent=0 // pred_check
    _
  $region43: #{lupnet_forward.17} parent=0 // pred_check_branch
    %1076 = sbr.rel (0) target = $region45
  $region44: #{lupnet_forward.17} parent=0 // pred_region
    _
  $region45: #{lupnet_forward.17} parent=0 // pred_fallthru
    _

// kernel: lupnet_forward.18
$region0: #{lupnet_forward.18}
  #allocation0 [shape = 'u32[]', space=smem, size = 0x4, offset = 0x4, fixed_abs, tag = 'smem constant byte address 0x4 - core index']
  #allocation1 [shape = 'u32[144,128]{1,0:T(1,128)}', space=vmem, size = 0x12000, scoped, tag = 'internal scratch']
  %s0 = inlined_call_operand.vmem [shape: bf16[2,1152], index: 0, kind: input, shape index: {}]
  %s1 = inlined_call_operand.vmem [shape: bf16[1152,128], index: 1, kind: input, shape index: {}]
  %s2 = inlined_call_operand.vmem [shape: f32[1,128], index: 2, kind: input, shape index: {}]
  %s3 = inlined_call_operand.vmem [shape: f32[1,128], index: 3, kind: input, shape index: {}]
  %s4 = inlined_call_operand.vmem [shape: f32[2,128], index: 4, kind: input, shape index: {}]
  %s5 = inlined_call_operand.vmem [shape: f32[2,128], index: 5, kind: output, shape index: {}]
  %s6 = sld [smem:[#allocation0]]
  $region30: #{lupnet_forward.18} parent=0
    _
  %s8 = ssub.s32 1, %s6
  %s9 = scalar_select 0, %s8, %s6
  // Predicated region
  $region2: #{lupnet_forward.18} parent=0 // pred_check
    _
  $region3: #{lupnet_forward.18} parent=0 // pred_check_branch
    %11 = sbr.rel (0) target = $region5
  $region4: #{lupnet_forward.18} parent=0 // pred_region
    _
  $region5: #{lupnet_forward.18} parent=0 // pred_fallthru
    _
  // Predicated region
  $region6: #{lupnet_forward.18} parent=0 // pred_check
    _
  $region7: #{lupnet_forward.18} parent=0 // pred_check_branch
    %13 = sbr.rel (0) target = $region9
  $region8: #{lupnet_forward.18} parent=0 // pred_region
    _
  $region9: #{lupnet_forward.18} parent=0 // pred_fallthru
    _
  // Predicated region
  $region10: #{lupnet_forward.18} parent=0 // pred_check
    _
  $region11: #{lupnet_forward.18} parent=0 // pred_check_branch
    %15 = sbr.rel (0) target = $region13
  $region12: #{lupnet_forward.18} parent=0 // pred_region
    _
  $region13: #{lupnet_forward.18} parent=0 // pred_fallthru
    _
  // Predicated region
  $region14: #{lupnet_forward.18} parent=0 // pred_check
    _
  $region15: #{lupnet_forward.18} parent=0 // pred_check_branch
    %17 = sbr.rel (0) target = $region17
  $region16: #{lupnet_forward.18} parent=0 // pred_region
    _
  $region17: #{lupnet_forward.18} parent=0 // pred_fallthru
    _
  // Predicated region
  $region18: #{lupnet_forward.18} parent=0 // pred_check
    _
  $region19: #{lupnet_forward.18} parent=0 // pred_check_branch
    %19 = sbr.rel (0) target = $region21
  $region20: #{lupnet_forward.18} parent=0 // pred_region
    _
  $region21: #{lupnet_forward.18} parent=0 // pred_fallthru
    _
  %v21 = vld [vmem:[%s0] sm:$0xff]
  %v22 = vld [vmem:[%s0 + $0x8] sm:$0x1]
  %v23 = vld [vmem:[%s1] sm:$0xf]
  %v24 = vld [vmem:[%s1 + $0x4] sm:$0xf]
  %v25 = vld [vmem:[%s1 + $0x8] sm:$0xf]
  %v26 = vld [vmem:[%s1 + $0xc] sm:$0xf]
  %v27 = vld [vmem:[%s1 + $0x10] sm:$0xf]
  %v28 = vld [vmem:[%s1 + $0x14] sm:$0xf]
  %v29 = vld [vmem:[%s1 + $0x18] sm:$0xf]
  %v30 = vld [vmem:[%s1 + $0x1c] sm:$0xf]
  %v31 = vld [vmem:[%s1 + $0x20] sm:$0xf]
  %v32 = vld [vmem:[%s1 + $0x24] sm:$0xf]
  %v33 = vld [vmem:[%s1 + $0x28] sm:$0xf]
  %v34 = vld [vmem:[%s1 + $0x2c] sm:$0xf]
  %v35 = vld [vmem:[%s1 + $0x30] sm:$0xf]
  %v36 = vld [vmem:[%s1 + $0x34] sm:$0xf]
  %v37 = vld [vmem:[%s1 + $0x38] sm:$0xf]
  %v38 = vld [vmem:[%s1 + $0x3c] sm:$0xf]
  %v39 = vld [vmem:[%s1 + $0x40] sm:$0xf]
  %v40 = vld [vmem:[%s1 + $0x44] sm:$0xf]
  %v41 = vld [vmem:[%s1 + $0x48] sm:$0xf]
  %v42 = vld [vmem:[%s1 + $0x4c] sm:$0xf]
  %v43 = vld [vmem:[%s1 + $0x50] sm:$0xf]
  %v44 = vld [vmem:[%s1 + $0x54] sm:$0xf]
  %v45 = vld [vmem:[%s1 + $0x58] sm:$0xf]
  %v46 = vld [vmem:[%s1 + $0x5c] sm:$0xf]
  %v47 = vld [vmem:[%s1 + $0x60] sm:$0xf]
  %v48 = vld [vmem:[%s1 + $0x64] sm:$0xf]
  %v49 = vld [vmem:[%s1 + $0x68] sm:$0xf]
  %v50 = vld [vmem:[%s1 + $0x6c] sm:$0xf]
  %v51 = vld [vmem:[%s1 + $0x70] sm:$0xf]
  %v52 = vld [vmem:[%s1 + $0x74] sm:$0xf]
  %v53 = vld [vmem:[%s1 + $0x78] sm:$0xf]
  %v54 = vld [vmem:[%s1 + $0x7c] sm:$0xf]
  %v55 = vld [vmem:[%s1 + $0x80] sm:$0xf]
  %v56 = vld [vmem:[%s1 + $0x84] sm:$0xf]
  %v57 = vld [vmem:[%s1 + $0x88] sm:$0xf]
  %v58 = vld [vmem:[%s1 + $0x8c] sm:$0xf]
  %v59 = vld [vmem:[%s1 + $0x90] sm:$0xf]
  %v60 = vld [vmem:[%s1 + $0x94] sm:$0xf]
  %v61 = vld [vmem:[%s1 + $0x98] sm:$0xf]
  %v62 = vld [vmem:[%s1 + $0x9c] sm:$0xf]
  %v63 = vld [vmem:[%s1 + $0xa0] sm:$0xf]
  %v64 = vld [vmem:[%s1 + $0xa4] sm:$0xf]
  %v65 = vld [vmem:[%s1 + $0xa8] sm:$0xf]
  %v66 = vld [vmem:[%s1 + $0xac] sm:$0xf]
  %v67 = vld [vmem:[%s1 + $0xb0] sm:$0xf]
  %v68 = vld [vmem:[%s1 + $0xb4] sm:$0xf]
  %v69 = vld [vmem:[%s1 + $0xb8] sm:$0xf]
  %v70 = vld [vmem:[%s1 + $0xbc] sm:$0xf]
  %v71 = vld [vmem:[%s1 + $0xc0] sm:$0xf]
  %v72 = vld [vmem:[%s1 + $0xc4] sm:$0xf]
  %v73 = vld [vmem:[%s1 + $0xc8] sm:$0xf]
  %v74 = vld [vmem:[%s1 + $0xcc] sm:$0xf]
  %v75 = vld [vmem:[%s1 + $0xd0] sm:$0xf]
  %v76 = vld [vmem:[%s1 + $0xd4] sm:$0xf]
  %v77 = vld [vmem:[%s1 + $0xd8] sm:$0xf]
  %v78 = vld [vmem:[%s1 + $0xdc] sm:$0xf]
  %v79 = vld [vmem:[%s1 + $0xe0] sm:$0xf]
  %v80 = vld [vmem:[%s1 + $0xe4] sm:$0xf]
  %v81 = vld [vmem:[%s1 + $0xe8] sm:$0xf]
  %v82 = vld [vmem:[%s1 + $0xec] sm:$0xf]
  %v83 = vld [vmem:[%s1 + $0xf0] sm:$0xf]
  %v84 = vld [vmem:[%s1 + $0xf4] sm:$0xf]
  %v85 = vld [vmem:[%s1 + $0xf8] sm:$0xf]
  %v86 = vld [vmem:[%s1 + $0xfc] sm:$0xf]
  %v87 = vld [vmem:[%s1 + $0x100] sm:$0xf]
  %v88 = vld [vmem:[%s1 + $0x104] sm:$0xf]
  %v89 = vld [vmem:[%s1 + $0x108] sm:$0xf]
  %v90 = vld [vmem:[%s1 + $0x10c] sm:$0xf]
  %v91 = vld [vmem:[%s1 + $0x110] sm:$0xf]
  %v92 = vld [vmem:[%s1 + $0x114] sm:$0xf]
  %v93 = vld [vmem:[%s1 + $0x118] sm:$0xf]
  %v94 = vld [vmem:[%s1 + $0x11c] sm:$0xf]
  %v95 = vld [vmem:[%s1 + $0x120] sm:$0xf]
  %v96 = vld [vmem:[%s1 + $0x124] sm:$0xf]
  %v97 = vld [vmem:[%s1 + $0x128] sm:$0xf]
  %v98 = vld [vmem:[%s1 + $0x12c] sm:$0xf]
  %v99 = vld [vmem:[%s1 + $0x130] sm:$0xf]
  %v100 = vld [vmem:[%s1 + $0x134] sm:$0xf]
  %v101 = vld [vmem:[%s1 + $0x138] sm:$0xf]
  %v102 = vld [vmem:[%s1 + $0x13c] sm:$0xf]
  %v103 = vld [vmem:[%s1 + $0x140] sm:$0xf]
  %v104 = vld [vmem:[%s1 + $0x144] sm:$0xf]
  %v105 = vld [vmem:[%s1 + $0x148] sm:$0xf]
  %v106 = vld [vmem:[%s1 + $0x14c] sm:$0xf]
  %v107 = vld [vmem:[%s1 + $0x150] sm:$0xf]
  %v108 = vld [vmem:[%s1 + $0x154] sm:$0xf]
  %v109 = vld [vmem:[%s1 + $0x158] sm:$0xf]
  %v110 = vld [vmem:[%s1 + $0x15c] sm:$0xf]
  %v111 = vld [vmem:[%s1 + $0x160] sm:$0xf]
  %v112 = vld [vmem:[%s1 + $0x164] sm:$0xf]
  %v113 = vld [vmem:[%s1 + $0x168] sm:$0xf]
  %v114 = vld [vmem:[%s1 + $0x16c] sm:$0xf]
  %v115 = vld [vmem:[%s1 + $0x170] sm:$0xf]
  %v116 = vld [vmem:[%s1 + $0x174] sm:$0xf]
  %v117 = vld [vmem:[%s1 + $0x178] sm:$0xf]
  %v118 = vld [vmem:[%s1 + $0x17c] sm:$0xf]
  %v119 = vld [vmem:[%s1 + $0x180] sm:$0xf]
  %v120 = vld [vmem:[%s1 + $0x184] sm:$0xf]
  %v121 = vld [vmem:[%s1 + $0x188] sm:$0xf]
  %v122 = vld [vmem:[%s1 + $0x18c] sm:$0xf]
  %v123 = vld [vmem:[%s1 + $0x190] sm:$0xf]
  %v124 = vld [vmem:[%s1 + $0x194] sm:$0xf]
  %v125 = vld [vmem:[%s1 + $0x198] sm:$0xf]
  %v126 = vld [vmem:[%s1 + $0x19c] sm:$0xf]
  %v127 = vld [vmem:[%s1 + $0x1a0] sm:$0xf]
  %v128 = vld [vmem:[%s1 + $0x1a4] sm:$0xf]
  %v129 = vld [vmem:[%s1 + $0x1a8] sm:$0xf]
  %v130 = vld [vmem:[%s1 + $0x1ac] sm:$0xf]
  %v131 = vld [vmem:[%s1 + $0x1b0] sm:$0xf]
  %v132 = vld [vmem:[%s1 + $0x1b4] sm:$0xf]
  %v133 = vld [vmem:[%s1 + $0x1b8] sm:$0xf]
  %v134 = vld [vmem:[%s1 + $0x1bc] sm:$0xf]
  %v135 = vld [vmem:[%s1 + $0x1c0] sm:$0xf]
  %v136 = vld [vmem:[%s1 + $0x1c4] sm:$0xf]
  %v137 = vld [vmem:[%s1 + $0x1c8] sm:$0xf]
  %v138 = vld [vmem:[%s1 + $0x1cc] sm:$0xf]
  %v139 = vld [vmem:[%s1 + $0x1d0] sm:$0xf]
  %v140 = vld [vmem:[%s1 + $0x1d4] sm:$0xf]
  %v141 = vld [vmem:[%s1 + $0x1d8] sm:$0xf]
  %v142 = vld [vmem:[%s1 + $0x1dc] sm:$0xf]
  %v143 = vld [vmem:[%s1 + $0x1e0] sm:$0xf]
  %v144 = vld [vmem:[%s1 + $0x1e4] sm:$0xf]
  %v145 = vld [vmem:[%s1 + $0x1e8] sm:$0xf]
  %v146 = vld [vmem:[%s1 + $0x1ec] sm:$0xf]
  %v147 = vld [vmem:[%s1 + $0x1f0] sm:$0xf]
  %v148 = vld [vmem:[%s1 + $0x1f4] sm:$0xf]
  %v149 = vld [vmem:[%s1 + $0x1f8] sm:$0xf]
  %v150 = vld [vmem:[%s1 + $0x1fc] sm:$0xf]
  %v151 = vld [vmem:[%s1 + $0x200] sm:$0xf]
  %v152 = vld [vmem:[%s1 + $0x204] sm:$0xf]
  %v153 = vld [vmem:[%s1 + $0x208] sm:$0xf]
  %v154 = vld [vmem:[%s1 + $0x20c] sm:$0xf]
  %v155 = vld [vmem:[%s1 + $0x210] sm:$0xf]
  %v156 = vld [vmem:[%s1 + $0x214] sm:$0xf]
  %v157 = vld [vmem:[%s1 + $0x218] sm:$0xf]
  %v158 = vld [vmem:[%s1 + $0x21c] sm:$0xf]
  %v159 = vld [vmem:[%s1 + $0x220] sm:$0xf]
  %v160 = vld [vmem:[%s1 + $0x224] sm:$0xf]
  %v161 = vld [vmem:[%s1 + $0x228] sm:$0xf]
  %v162 = vld [vmem:[%s1 + $0x22c] sm:$0xf]
  %v163 = vld [vmem:[%s1 + $0x230] sm:$0xf]
  %v164 = vld [vmem:[%s1 + $0x234] sm:$0xf]
  %v165 = vld [vmem:[%s1 + $0x238] sm:$0xf]
  %v166 = vld [vmem:[%s1 + $0x23c] sm:$0xf]
  %v169 = vcombine.high %v21, %v21
  %v171 = vunpack.c.l.s4 1966171168
  %v172 = vunpack.c.0.s8 %v171
  %v173 = vlaneseq
  %v174 = vshrl.u32 %v173, 7
  %v175 = vsub.s32 %v172, %v174
  %v176 = vrot.slane %v21, %v175
  %v178 = vunpack.c.l.s4 1966171168
  %v179 = vunpack.c.0.s8 %v178
  %v180 = vlaneseq
  %v181 = vshrl.u32 %v180, 7
  %v182 = vsub.s32 %v179, %v181
  %v183 = vrot.slane %v169, %v182
  %v184 = vcombine.high %v176, %v176
  %v185 = vcombine.high %v183, %v183
  %v187 = vunpack.c.l.s4 1966171168
  %v188 = vunpack.c.0.s8 %v187
  %v189 = vlaneseq
  %v190 = vshrl.u32 %v189, 7
  %v191 = vsub.s32 %v188, %v190
  %v192 = vrot.slane %v176, %v191
  %v194 = vunpack.c.l.s4 1966171168
  %v195 = vunpack.c.0.s8 %v194
  %v196 = vlaneseq
  %v197 = vshrl.u32 %v196, 7
  %v198 = vsub.s32 %v195, %v197
  %v199 = vrot.slane %v183, %v198
  %v201 = vunpack.c.l.s4 1966171168
  %v202 = vunpack.c.0.s8 %v201
  %v203 = vlaneseq
  %v204 = vshrl.u32 %v203, 7
  %v205 = vsub.s32 %v202, %v204
  %v206 = vrot.slane %v184, %v205
  %v208 = vunpack.c.l.s4 1966171168
  %v209 = vunpack.c.0.s8 %v208
  %v210 = vlaneseq
  %v211 = vshrl.u32 %v210, 7
  %v212 = vsub.s32 %v209, %v211
  %v213 = vrot.slane %v185, %v212
  %v214 = vcombine.high %v192, %v192
  %v215 = vcombine.high %v199, %v199
  %v216 = vcombine.high %v206, %v206
  %v217 = vcombine.high %v213, %v213
  %v219 = vunpack.c.l.s4 1966171168
  %v220 = vunpack.c.0.s8 %v219
  %v221 = vlaneseq
  %v222 = vshrl.u32 %v221, 7
  %v223 = vsub.s32 %v220, %v222
  %v224 = vrot.slane %v22, %v223
  %v226 = vunpack.c.l.s4 1966171168
  %v227 = vunpack.c.0.s8 %v226
  %v228 = vlaneseq
  %v229 = vshrl.u32 %v228, 7
  %v230 = vsub.s32 %v227, %v229
  %v231 = vrot.slane %v224, %v230
  %v385 = vunpack.c.l.b16 %v23
  %v386 = vunpack.c.l.b16 %v24
  %v387 = vunpack.c.l.b16 %v25
  %v388 = vunpack.c.l.b16 %v26
  %v389 = vunpack.c.l.b16 %v27
  %v390 = vunpack.c.l.b16 %v28
  %v391 = vunpack.c.l.b16 %v29
  %v392 = vunpack.c.l.b16 %v30
  %v393 = vunpack.c.l.b16 %v31
  %v394 = vunpack.c.l.b16 %v32
  %v395 = vunpack.c.l.b16 %v33
  %v396 = vunpack.c.l.b16 %v34
  %v397 = vunpack.c.l.b16 %v35
  %v398 = vunpack.c.l.b16 %v36
  %v399 = vunpack.c.l.b16 %v37
  %v400 = vunpack.c.l.b16 %v38
  %v401 = vunpack.c.l.b16 %v39
  %v402 = vunpack.c.l.b16 %v40
  %v403 = vunpack.c.l.b16 %v41
  %v404 = vunpack.c.l.b16 %v42
  %v405 = vunpack.c.l.b16 %v43
  %v406 = vunpack.c.l.b16 %v44
  %v407 = vunpack.c.l.b16 %v45
  %v408 = vunpack.c.l.b16 %v46
  %v409 = vunpack.c.l.b16 %v47
  %v410 = vunpack.c.l.b16 %v48
  %v411 = vunpack.c.l.b16 %v49
  %v412 = vunpack.c.l.b16 %v50
  %v413 = vunpack.c.l.b16 %v51
  %v414 = vunpack.c.l.b16 %v52
  %v415 = vunpack.c.l.b16 %v53
  %v416 = vunpack.c.l.b16 %v54
  %v417 = vunpack.c.l.b16 %v55
  %v418 = vunpack.c.l.b16 %v56
  %v419 = vunpack.c.l.b16 %v57
  %v420 = vunpack.c.l.b16 %v58
  %v421 = vunpack.c.l.b16 %v59
  %v422 = vunpack.c.l.b16 %v60
  %v423 = vunpack.c.l.b16 %v61
  %v424 = vunpack.c.l.b16 %v62
  %v425 = vunpack.c.l.b16 %v63
  %v426 = vunpack.c.l.b16 %v64
  %v427 = vunpack.c.l.b16 %v65
  %v428 = vunpack.c.l.b16 %v66
  %v429 = vunpack.c.l.b16 %v67
  %v430 = vunpack.c.l.b16 %v68
  %v431 = vunpack.c.l.b16 %v69
  %v432 = vunpack.c.l.b16 %v70
  %v433 = vunpack.c.l.b16 %v71
  %v434 = vunpack.c.l.b16 %v72
  %v435 = vunpack.c.l.b16 %v73
  %v436 = vunpack.c.l.b16 %v74
  %v437 = vunpack.c.l.b16 %v75
  %v438 = vunpack.c.l.b16 %v76
  %v439 = vunpack.c.l.b16 %v77
  %v440 = vunpack.c.l.b16 %v78
  %v441 = vunpack.c.l.b16 %v79
  %v442 = vunpack.c.l.b16 %v80
  %v443 = vunpack.c.l.b16 %v81
  %v444 = vunpack.c.l.b16 %v82
  %v445 = vunpack.c.l.b16 %v83
  %v446 = vunpack.c.l.b16 %v84
  %v447 = vunpack.c.l.b16 %v85
  %v448 = vunpack.c.l.b16 %v86
  %v449 = vunpack.c.l.b16 %v87
  %v450 = vunpack.c.l.b16 %v88
  %v451 = vunpack.c.l.b16 %v89
  %v452 = vunpack.c.l.b16 %v90
  %v453 = vunpack.c.l.b16 %v91
  %v454 = vunpack.c.l.b16 %v92
  %v455 = vunpack.c.l.b16 %v93
  %v456 = vunpack.c.l.b16 %v94
  %v457 = vunpack.c.l.b16 %v95
  %v458 = vunpack.c.l.b16 %v96
  %v459 = vunpack.c.l.b16 %v97
  %v460 = vunpack.c.l.b16 %v98
  %v461 = vunpack.c.l.b16 %v99
  %v462 = vunpack.c.l.b16 %v100
  %v463 = vunpack.c.l.b16 %v101
  %v464 = vunpack.c.l.b16 %v102
  %v465 = vunpack.c.l.b16 %v103
  %v466 = vunpack.c.l.b16 %v104
  %v467 = vunpack.c.l.b16 %v105
  %v468 = vunpack.c.l.b16 %v106
  %v469 = vunpack.c.l.b16 %v107
  %v470 = vunpack.c.l.b16 %v108
  %v471 = vunpack.c.l.b16 %v109
  %v472 = vunpack.c.l.b16 %v110
  %v473 = vunpack.c.l.b16 %v111
  %v474 = vunpack.c.l.b16 %v112
  %v475 = vunpack.c.l.b16 %v113
  %v476 = vunpack.c.l.b16 %v114
  %v477 = vunpack.c.l.b16 %v115
  %v478 = vunpack.c.l.b16 %v116
  %v479 = vunpack.c.l.b16 %v117
  %v480 = vunpack.c.l.b16 %v118
  %v481 = vunpack.c.l.b16 %v119
  %v482 = vunpack.c.l.b16 %v120
  %v483 = vunpack.c.l.b16 %v121
  %v484 = vunpack.c.l.b16 %v122
  %v485 = vunpack.c.l.b16 %v123
  %v486 = vunpack.c.l.b16 %v124
  %v487 = vunpack.c.l.b16 %v125
  %v488 = vunpack.c.l.b16 %v126
  %v489 = vunpack.c.l.b16 %v127
  %v490 = vunpack.c.l.b16 %v128
  %v491 = vunpack.c.l.b16 %v129
  %v492 = vunpack.c.l.b16 %v130
  %v493 = vunpack.c.l.b16 %v131
  %v494 = vunpack.c.l.b16 %v132
  %v495 = vunpack.c.l.b16 %v133
  %v496 = vunpack.c.l.b16 %v134
  %v497 = vunpack.c.l.b16 %v135
  %v498 = vunpack.c.l.b16 %v136
  %v499 = vunpack.c.l.b16 %v137
  %v500 = vunpack.c.l.b16 %v138
  %v501 = vunpack.c.l.b16 %v139
  %v502 = vunpack.c.l.b16 %v140
  %v503 = vunpack.c.l.b16 %v141
  %v504 = vunpack.c.l.b16 %v142
  %v505 = vunpack.c.l.b16 %v143
  %v506 = vunpack.c.l.b16 %v144
  %v507 = vunpack.c.l.b16 %v145
  %v508 = vunpack.c.l.b16 %v146
  %v509 = vunpack.c.l.b16 %v147
  %v510 = vunpack.c.l.b16 %v148
  %v511 = vunpack.c.l.b16 %v149
  %v512 = vunpack.c.l.b16 %v150
  %v513 = vunpack.c.l.b16 %v151
  %v514 = vunpack.c.l.b16 %v152
  %v515 = vunpack.c.l.b16 %v153
  %v516 = vunpack.c.l.b16 %v154
  %v517 = vunpack.c.l.b16 %v155
  %v518 = vunpack.c.l.b16 %v156
  %v519 = vunpack.c.l.b16 %v157
  %v520 = vunpack.c.l.b16 %v158
  %v521 = vunpack.c.l.b16 %v159
  %v522 = vunpack.c.l.b16 %v160
  %v523 = vunpack.c.l.b16 %v161
  %v524 = vunpack.c.l.b16 %v162
  %v525 = vunpack.c.l.b16 %v163
  %v526 = vunpack.c.l.b16 %v164
  %v527 = vunpack.c.l.b16 %v165
  %v528 = vunpack.c.l.b16 %v166
  %v529 = vpack.c.b16 %v386, %v385
  %v530 = vpack.c.b16 %v388, %v387
  %v531 = vpack.c.b16 %v390, %v389
  %v532 = vpack.c.b16 %v392, %v391
  %v533 = vpack.c.b16 %v394, %v393
  %v534 = vpack.c.b16 %v396, %v395
  %v535 = vpack.c.b16 %v398, %v397
  %v536 = vpack.c.b16 %v400, %v399
  %v537 = vpack.c.b16 %v402, %v401
  %v538 = vpack.c.b16 %v404, %v403
  %v539 = vpack.c.b16 %v406, %v405
  %v540 = vpack.c.b16 %v408, %v407
  %v541 = vpack.c.b16 %v410, %v409
  %v542 = vpack.c.b16 %v412, %v411
  %v543 = vpack.c.b16 %v414, %v413
  %v544 = vpack.c.b16 %v416, %v415
  %v545 = vpack.c.b16 %v418, %v417
  %v546 = vpack.c.b16 %v420, %v419
  %v547 = vpack.c.b16 %v422, %v421
  %v548 = vpack.c.b16 %v424, %v423
  %v549 = vpack.c.b16 %v426, %v425
  %v550 = vpack.c.b16 %v428, %v427
  %v551 = vpack.c.b16 %v430, %v429
  %v552 = vpack.c.b16 %v432, %v431
  %v553 = vpack.c.b16 %v434, %v433
  %v554 = vpack.c.b16 %v436, %v435
  %v555 = vpack.c.b16 %v438, %v437
  %v556 = vpack.c.b16 %v440, %v439
  %v557 = vpack.c.b16 %v442, %v441
  %v558 = vpack.c.b16 %v444, %v443
  %v559 = vpack.c.b16 %v446, %v445
  %v560 = vpack.c.b16 %v448, %v447
  %v561 = vpack.c.b16 %v450, %v449
  %v562 = vpack.c.b16 %v452, %v451
  %v563 = vpack.c.b16 %v454, %v453
  %v564 = vpack.c.b16 %v456, %v455
  %v565 = vpack.c.b16 %v458, %v457
  %v566 = vpack.c.b16 %v460, %v459
  %v567 = vpack.c.b16 %v462, %v461
  %v568 = vpack.c.b16 %v464, %v463
  %v569 = vpack.c.b16 %v466, %v465
  %v570 = vpack.c.b16 %v468, %v467
  %v571 = vpack.c.b16 %v470, %v469
  %v572 = vpack.c.b16 %v472, %v471
  %v573 = vpack.c.b16 %v474, %v473
  %v574 = vpack.c.b16 %v476, %v475
  %v575 = vpack.c.b16 %v478, %v477
  %v576 = vpack.c.b16 %v480, %v479
  %v577 = vpack.c.b16 %v482, %v481
  %v578 = vpack.c.b16 %v484, %v483
  %v579 = vpack.c.b16 %v486, %v485
  %v580 = vpack.c.b16 %v488, %v487
  %v581 = vpack.c.b16 %v490, %v489
  %v582 = vpack.c.b16 %v492, %v491
  %v583 = vpack.c.b16 %v494, %v493
  %v584 = vpack.c.b16 %v496, %v495
  %v585 = vpack.c.b16 %v498, %v497
  %v586 = vpack.c.b16 %v500, %v499
  %v587 = vpack.c.b16 %v502, %v501
  %v588 = vpack.c.b16 %v504, %v503
  %v589 = vpack.c.b16 %v506, %v505
  %v590 = vpack.c.b16 %v508, %v507
  %v591 = vpack.c.b16 %v510, %v509
  %v592 = vpack.c.b16 %v512, %v511
  %v593 = vpack.c.b16 %v514, %v513
  %v594 = vpack.c.b16 %v516, %v515
  %v595 = vpack.c.b16 %v518, %v517
  %v596 = vpack.c.b16 %v520, %v519
  %v597 = vpack.c.b16 %v522, %v521
  %v598 = vpack.c.b16 %v524, %v523
  %v599 = vpack.c.b16 %v526, %v525
  %v600 = vpack.c.b16 %v528, %v527
  %673 = vmatprep.subr.bf16.mxu0 0
  %674 = vmatpush1.bf16.msra.mxu0 %v536
  %675 = vmatprep.subr.bf16.mxu0 0
  %676 = vmatpush1.bf16.msra.mxu0 %v535
  %677 = vmatprep.subr.bf16.mxu0 0
  %678 = vmatpush1.bf16.msra.mxu0 %v534
  %679 = vmatprep.subr.bf16.mxu0 0
  %680 = vmatpush1.bf16.msra.mxu0 %v533
  %681 = vmatprep.subr.bf16.mxu0 0
  %682 = vmatpush1.bf16.msra.mxu0 %v532
  %683 = vmatprep.subr.bf16.mxu0 0
  %684 = vmatpush1.bf16.msra.mxu0 %v531
  %685 = vmatprep.subr.bf16.mxu0 0
  %686 = vmatpush1.bf16.msra.mxu0 %v530
  %687 = vmatprep.subr.bf16.mxu0 0
  %688 = vmatpush1.bf16.msra.mxu0 %v529
  %689 = vmatprep.subr.bf16.mxu0 0
  %690 = vmatpush2.bf16.msra.mxu0 %v544
  %691 = vmatprep.subr.bf16.mxu0 0
  %692 = vmatpush2.bf16.msra.mxu0 %v543
  %693 = vmatprep.subr.bf16.mxu0 0
  %694 = vmatpush2.bf16.msra.mxu0 %v542
  %695 = vmatprep.subr.bf16.mxu0 0
  %696 = vmatpush2.bf16.msra.mxu0 %v541
  %697 = vmatprep.subr.bf16.mxu0 0
  %698 = vmatpush2.bf16.msra.mxu0 %v540
  %699 = vmatprep.subr.bf16.mxu0 0
  %700 = vmatpush2.bf16.msra.mxu0 %v539
  %701 = vmatprep.subr.bf16.mxu0 0
  %702 = vmatpush2.bf16.msra.mxu0 %v538
  %703 = vmatprep.subr.bf16.mxu0 0
  %704 = vmatpush2.bf16.msra.mxu0 %v537
  %705 = vmatprep.mubr.bf16.mxu0 %v206
  %706 = vmatmul.mubr.bf16.gmra.mxu0 %v192
  %v707 = vpop.f32.mrf.mxu0
  %v708 = vadd.f32 0.0, %v707
  %v709 = vpop.f32.mrf.mxu0
  %v710 = vpop.f32.mrf.mxu0
  %v711 = vpop.f32.mrf.mxu0
  %712 = vdwg.mxu0
  %713 = vmatprep.subr.bf16.mxu0 0
  %714 = vmatpush1.bf16.msra.mxu0 %v552
  %715 = vmatprep.subr.bf16.mxu0 0
  %716 = vmatpush1.bf16.msra.mxu0 %v551
  %717 = vmatprep.subr.bf16.mxu0 0
  %718 = vmatpush1.bf16.msra.mxu0 %v550
  %719 = vmatprep.subr.bf16.mxu0 0
  %720 = vmatpush1.bf16.msra.mxu0 %v549
  %721 = vmatprep.subr.bf16.mxu0 0
  %722 = vmatpush1.bf16.msra.mxu0 %v548
  %723 = vmatprep.subr.bf16.mxu0 0
  %724 = vmatpush1.bf16.msra.mxu0 %v547
  %725 = vmatprep.subr.bf16.mxu0 0
  %726 = vmatpush1.bf16.msra.mxu0 %v546
  %727 = vmatprep.subr.bf16.mxu0 0
  %728 = vmatpush1.bf16.msra.mxu0 %v545
  %729 = vmatprep.subr.bf16.mxu0 0
  %730 = vmatpush2.bf16.msra.mxu0 %v560
  %731 = vmatprep.subr.bf16.mxu0 0
  %732 = vmatpush2.bf16.msra.mxu0 %v559
  %733 = vmatprep.subr.bf16.mxu0 0
  %734 = vmatpush2.bf16.msra.mxu0 %v558
  %735 = vmatprep.subr.bf16.mxu0 0
  %736 = vmatpush2.bf16.msra.mxu0 %v557
  %737 = vmatprep.subr.bf16.mxu0 0
  %738 = vmatpush2.bf16.msra.mxu0 %v556
  %739 = vmatprep.subr.bf16.mxu0 0
  %740 = vmatpush2.bf16.msra.mxu0 %v555
  %741 = vmatprep.subr.bf16.mxu0 0
  %742 = vmatpush2.bf16.msra.mxu0 %v554
  %743 = vmatprep.subr.bf16.mxu0 0
  %744 = vmatpush2.bf16.msra.mxu0 %v553
  %745 = vmatprep.mubr.bf16.mxu0 %v216
  %746 = vmatmul.mubr.bf16.gmra.mxu0 %v214
  %v747 = vpop.f32.mrf.mxu0
  %v748 = vadd.f32 %v708, %v747
  %v749 = vpop.f32.mrf.mxu0
  %v750 = vpop.f32.mrf.mxu0
  %v751 = vpop.f32.mrf.mxu0
  %752 = vdwg.mxu0
  %753 = vmatprep.subr.bf16.mxu0 0
  %754 = vmatpush1.bf16.msra.mxu0 %v568
  %755 = vmatprep.subr.bf16.mxu0 0
  %756 = vmatpush1.bf16.msra.mxu0 %v567
  %757 = vmatprep.subr.bf16.mxu0 0
  %758 = vmatpush1.bf16.msra.mxu0 %v566
  %759 = vmatprep.subr.bf16.mxu0 0
  %760 = vmatpush1.bf16.msra.mxu0 %v565
  %761 = vmatprep.subr.bf16.mxu0 0
  %762 = vmatpush1.bf16.msra.mxu0 %v564
  %763 = vmatprep.subr.bf16.mxu0 0
  %764 = vmatpush1.bf16.msra.mxu0 %v563
  %765 = vmatprep.subr.bf16.mxu0 0
  %766 = vmatpush1.bf16.msra.mxu0 %v562
  %767 = vmatprep.subr.bf16.mxu0 0
  %768 = vmatpush1.bf16.msra.mxu0 %v561
  %769 = vmatprep.subr.bf16.mxu0 0
  %770 = vmatpush2.bf16.msra.mxu0 %v576
  %771 = vmatprep.subr.bf16.mxu0 0
  %772 = vmatpush2.bf16.msra.mxu0 %v575
  %773 = vmatprep.subr.bf16.mxu0 0
  %774 = vmatpush2.bf16.msra.mxu0 %v574
  %775 = vmatprep.subr.bf16.mxu0 0
  %776 = vmatpush2.bf16.msra.mxu0 %v573
  %777 = vmatprep.subr.bf16.mxu0 0
  %778 = vmatpush2.bf16.msra.mxu0 %v572
  %779 = vmatprep.subr.bf16.mxu0 0
  %780 = vmatpush2.bf16.msra.mxu0 %v571
  %781 = vmatprep.subr.bf16.mxu0 0
  %782 = vmatpush2.bf16.msra.mxu0 %v570
  %783 = vmatprep.subr.bf16.mxu0 0
  %784 = vmatpush2.bf16.msra.mxu0 %v569
  %785 = vmatprep.mubr.bf16.mxu0 %v213
  %786 = vmatmul.mubr.bf16.gmra.mxu0 %v199
  %v787 = vpop.f32.mrf.mxu0
  %v788 = vadd.f32 %v748, %v787
  %v789 = vpop.f32.mrf.mxu0
  %v790 = vpop.f32.mrf.mxu0
  %v791 = vpop.f32.mrf.mxu0
  %792 = vdwg.mxu0
  %793 = vmatprep.subr.bf16.mxu0 0
  %794 = vmatpush1.bf16.msra.mxu0 %v584
  %795 = vmatprep.subr.bf16.mxu0 0
  %796 = vmatpush1.bf16.msra.mxu0 %v583
  %797 = vmatprep.subr.bf16.mxu0 0
  %798 = vmatpush1.bf16.msra.mxu0 %v582
  %799 = vmatprep.subr.bf16.mxu0 0
  %800 = vmatpush1.bf16.msra.mxu0 %v581
  %801 = vmatprep.subr.bf16.mxu0 0
  %802 = vmatpush1.bf16.msra.mxu0 %v580
  %803 = vmatprep.subr.bf16.mxu0 0
  %804 = vmatpush1.bf16.msra.mxu0 %v579
  %805 = vmatprep.subr.bf16.mxu0 0
  %806 = vmatpush1.bf16.msra.mxu0 %v578
  %807 = vmatprep.subr.bf16.mxu0 0
  %808 = vmatpush1.bf16.msra.mxu0 %v577
  %809 = vmatprep.subr.bf16.mxu0 0
  %810 = vmatpush2.bf16.msra.mxu0 %v592
  %811 = vmatprep.subr.bf16.mxu0 0
  %812 = vmatpush2.bf16.msra.mxu0 %v591
  %813 = vmatprep.subr.bf16.mxu0 0
  %814 = vmatpush2.bf16.msra.mxu0 %v590
  %815 = vmatprep.subr.bf16.mxu0 0
  %816 = vmatpush2.bf16.msra.mxu0 %v589
  %817 = vmatprep.subr.bf16.mxu0 0
  %818 = vmatpush2.bf16.msra.mxu0 %v588
  %819 = vmatprep.subr.bf16.mxu0 0
  %820 = vmatpush2.bf16.msra.mxu0 %v587
  %821 = vmatprep.subr.bf16.mxu0 0
  %822 = vmatpush2.bf16.msra.mxu0 %v586
  %823 = vmatprep.subr.bf16.mxu0 0
  %824 = vmatpush2.bf16.msra.mxu0 %v585
  %825 = vmatprep.mubr.bf16.mxu0 %v217
  %826 = vmatmul.mubr.bf16.gmra.mxu0 %v215
  %v827 = vpop.f32.mrf.mxu0
  %v828 = vadd.f32 %v788, %v827
  %v829 = vpop.f32.mrf.mxu0
  %v830 = vpop.f32.mrf.mxu0
  %v831 = vpop.f32.mrf.mxu0
  %832 = vdwg.mxu0
  %833 = vmatprep.subr.bf16.mxu0 0
  %834 = vmatpush1.bf16.msra.mxu0 %v600
  %835 = vmatprep.subr.bf16.mxu0 0
  %836 = vmatpush1.bf16.msra.mxu0 %v599
  %837 = vmatprep.subr.bf16.mxu0 0
  %838 = vmatpush1.bf16.msra.mxu0 %v598
  %839 = vmatprep.subr.bf16.mxu0 0
  %840 = vmatpush1.bf16.msra.mxu0 %v597
  %841 = vmatprep.subr.bf16.mxu0 0
  %842 = vmatpush1.bf16.msra.mxu0 %v596
  %843 = vmatprep.subr.bf16.mxu0 0
  %844 = vmatpush1.bf16.msra.mxu0 %v595
  %845 = vmatprep.subr.bf16.mxu0 0
  %846 = vmatpush1.bf16.msra.mxu0 %v594
  %847 = vmatprep.subr.bf16.mxu0 0
  %848 = vmatpush1.bf16.msra.mxu0 %v593
  %849 = vmatprep.subr.bf16.mxu0 0
  %850 = vmatpush2.bf16.msra.mxu0 0
  %851 = vmatprep.subr.bf16.mxu0 0
  %852 = vmatpush2.bf16.msra.mxu0 0
  %853 = vmatprep.subr.bf16.mxu0 0
  %854 = vmatpush2.bf16.msra.mxu0 0
  %855 = vmatprep.subr.bf16.mxu0 0
  %856 = vmatpush2.bf16.msra.mxu0 0
  %857 = vmatprep.subr.bf16.mxu0 0
  %858 = vmatpush2.bf16.msra.mxu0 0
  %859 = vmatprep.subr.bf16.mxu0 0
  %860 = vmatpush2.bf16.msra.mxu0 0
  %861 = vmatprep.subr.bf16.mxu0 0
  %862 = vmatpush2.bf16.msra.mxu0 0
  %863 = vmatprep.subr.bf16.mxu0 0
  %864 = vmatpush2.bf16.msra.mxu0 0
  %865 = vmatprep.mubr.bf16.mxu0 0
  %866 = vmatmul.mubr.bf16.gmra.mxu0 %v231
  %v867 = vpop.f32.mrf.mxu0
  %v868 = vadd.f32 %v828, %v867
  %v869 = vpop.f32.mrf.mxu0
  %v870 = vpop.f32.mrf.mxu0
  %v871 = vpop.f32.mrf.mxu0
  %872 = vdwg.mxu0
  %v873 = vld [vmem:[%s2] sm:$0x1]
  %v874 = vld [vmem:[%s3] sm:$0x1]
  %vm875 = vcmask 1041408
  %v876 = vsel %vm875, %v868, 0.0
  %v877 = vrot.slane %v876, 4
  %v878 = vadd.f32 %v876, %v877
  %v879 = vrot.slane %v878, 2
  %v880 = vadd.f32 %v878, %v879
  %v881 = vrot.slane %v880, 1
  %v882 = vadd.f32 %v880, %v881
  %v883 = vmul.f32 %v868, %v868
  %v884 = vsel %vm875, %v883, 0.0
  %v885 = vrot.slane %v884, 4
  %v886 = vadd.f32 %v884, %v885
  %v887 = vrot.slane %v886, 2
  %v888 = vadd.f32 %v886, %v887
  %v889 = vrot.slane %v888, 1
  %v890 = vadd.f32 %v888, %v889
  %v891 = vmul.f32 %v882, 0.5
  %v892 = vmul.f32 %v890, 0.5
  %v893 = vmul.f32 %v891, %v891
  %v894 = vsub.f32 %v892, %v893
  %v895 = vmax.f32 %v894, 0.0
  %v896 = vsub.f32 %v868, %v891
  %v897 = vadd.f32 %v895, 1e-05
  %v898 = vrsqrt.pop %v897
  %v899 = vmul.f32 %v896, %v898
  %v901 = vlaneseq
  %v902 = vshrl.u32 %v901, 7
  %v903 = vsub.s32 0, %v902
  %v904 = vrot.slane %v873, %v903
  %v906 = vmul.f32 %v899, %v904
  %v908 = vlaneseq
  %v909 = vshrl.u32 %v908, 7
  %v910 = vsub.s32 0, %v909
  %v911 = vrot.slane %v874, %v910
  %v913 = vadd.f32 %v906, %v911
  %v914 = vld [vmem:[%s4] sm:$0x3]
  %v915 = vadd.f32 %v913, %v914
  %v916 = vmax.f32 %v915, 0.0
  %917 = vst [vmem:[%s5] sm:$0x3] %v916
  // Predicated region
  $region22: #{lupnet_forward.18} parent=0 // pred_check
    _
  $region23: #{lupnet_forward.18} parent=0 // pred_check_branch
    %919 = sbr.rel (0) target = $region25
  $region24: #{lupnet_forward.18} parent=0 // pred_region
    _
  $region25: #{lupnet_forward.18} parent=0 // pred_fallthru
    _
  // Predicated region
  $region26: #{lupnet_forward.18} parent=0 // pred_check
    _
  $region27: #{lupnet_forward.18} parent=0 // pred_check_branch
    %921 = sbr.rel (0) target = $region29
  $region28: #{lupnet_forward.18} parent=0 // pred_region
    _
  $region29: #{lupnet_forward.18} parent=0 // pred_fallthru
    _

// kernel: lupnet_forward.19
$region0: #{lupnet_forward.19}
  #allocation0 [shape = 'u32[]', space=smem, size = 0x4, offset = 0x4, fixed_abs, tag = 'smem constant byte address 0x4 - core index']
  #allocation1 [shape = 'u32[144,128]{1,0:T(1,128)}', space=vmem, size = 0x12000, scoped, tag = 'internal scratch']
  %s0 = inlined_call_operand.vmem [shape: f32[2,1,128], index: 0, kind: input, shape index: {}]
  %s1 = inlined_call_operand.vmem [shape: bf16[128,128], index: 1, kind: input, shape index: {}]
  %s2 = inlined_call_operand.vmem [shape: f32[1,128], index: 2, kind: input, shape index: {}]
  %s3 = inlined_call_operand.vmem [shape: bf16[128,128], index: 3, kind: input, shape index: {}]
  %s4 = inlined_call_operand.vmem [shape: f32[1,128], index: 4, kind: input, shape index: {}]
  %s5 = inlined_call_operand.hbm [shape: f32[2,128], index: 5, kind: output, shape index: {}]
  %s6 = sld [smem:[#allocation0]]
  $region30: #{lupnet_forward.19} parent=0
    _
  %s8 = ssub.s32 1, %s6
  %s9 = scalar_select 0, %s8, %s6
  $region1: #{lupnet_forward.19} parent=0
    #allocation2 [shape = 'u8[1024]{0}', space=vmem, size = 0x400, scoped, tag = 'output window, operand 0, single buffered']
    #allocation3 [shape = 's32[1]{0}', space=sflag, size = 0x4, scoped, tag = 'scoped memory for lupnet_forward.19']
    %10 = vsyncpa [#allocation3], 0
    // Predicated region
    $region2: #{lupnet_forward.19} parent=1 // pred_check
      _
    $region3: #{lupnet_forward.19} parent=1 // pred_check_branch
      %12 = sbr.rel (0) target = $region5
    $region4: #{lupnet_forward.19} parent=1 // pred_region
      _
    $region5: #{lupnet_forward.19} parent=1 // pred_fallthru
      _
    // Predicated region
    $region6: #{lupnet_forward.19} parent=1 // pred_check
      _
    $region7: #{lupnet_forward.19} parent=1 // pred_check_branch
      %14 = sbr.rel (0) target = $region9
    $region8: #{lupnet_forward.19} parent=1 // pred_region
      _
    $region9: #{lupnet_forward.19} parent=1 // pred_fallthru
      _
    // Predicated region
    $region10: #{lupnet_forward.19} parent=1 // pred_check
      _
    $region11: #{lupnet_forward.19} parent=1 // pred_check_branch
      %16 = sbr.rel (0) target = $region13
    $region12: #{lupnet_forward.19} parent=1 // pred_region
      _
    $region13: #{lupnet_forward.19} parent=1 // pred_fallthru
      _
    // Predicated region
    $region14: #{lupnet_forward.19} parent=1 // pred_check
      _
    $region15: #{lupnet_forward.19} parent=1 // pred_check_branch
      %18 = sbr.rel (0) target = $region17
    $region16: #{lupnet_forward.19} parent=1 // pred_region
      _
    $region17: #{lupnet_forward.19} parent=1 // pred_fallthru
      _
    // Predicated region
    $region18: #{lupnet_forward.19} parent=1 // pred_check
      _
    $region19: #{lupnet_forward.19} parent=1 // pred_check_branch
      %20 = sbr.rel (0) target = $region21
    $region20: #{lupnet_forward.19} parent=1 // pred_region
      _
    $region21: #{lupnet_forward.19} parent=1 // pred_fallthru
      _
    %v22 = vld [vmem:[%s0] sm:$0x1]
    %v23 = vld [vmem:[%s0 + $0x1] sm:$0x1]
    %v24 = vadd.f32 %v22, 0.0
    %v25 = vadd.f32 %v23, 0.0
    %v26 = vpack.c.bf16 %v24, %v24
    %v27 = vpack.c.bf16 %v25, %v25
    %v28 = vld [vmem:[%s1] sm:$0xf]
    %v29 = vld [vmem:[%s1 + $0x4] sm:$0xf]
    %v30 = vld [vmem:[%s1 + $0x8] sm:$0xf]
    %v31 = vld [vmem:[%s1 + $0xc] sm:$0xf]
    %v32 = vld [vmem:[%s1 + $0x10] sm:$0xf]
    %v33 = vld [vmem:[%s1 + $0x14] sm:$0xf]
    %v34 = vld [vmem:[%s1 + $0x18] sm:$0xf]
    %v35 = vld [vmem:[%s1 + $0x1c] sm:$0xf]
    %v36 = vld [vmem:[%s1 + $0x20] sm:$0xf]
    %v37 = vld [vmem:[%s1 + $0x24] sm:$0xf]
    %v38 = vld [vmem:[%s1 + $0x28] sm:$0xf]
    %v39 = vld [vmem:[%s1 + $0x2c] sm:$0xf]
    %v40 = vld [vmem:[%s1 + $0x30] sm:$0xf]
    %v41 = vld [vmem:[%s1 + $0x34] sm:$0xf]
    %v42 = vld [vmem:[%s1 + $0x38] sm:$0xf]
    %v43 = vld [vmem:[%s1 + $0x3c] sm:$0xf]
    %v44 = vld [vmem:[%s2] sm:$0x1]
    %v46 = vlaneseq
    %v47 = vshrl.u32 %v46, 7
    %v48 = vsub.s32 0, %v47
    %v49 = vrot.slane %v44, %v48
    %v53 = vunpack.c.l.b16 %v26
    %v54 = vunpack.c.l.b16 %v27
    %v55 = vrot.slane %v54, 7
    %vm56 = vcmask 1041409
    %v57 = vsel %vm56, %v55, %v53
    %v58 = vpack.c.b16 %v57, %v57
    %v76 = vunpack.c.l.b16 %v28
    %v77 = vunpack.c.l.b16 %v29
    %v78 = vunpack.c.l.b16 %v30
    %v79 = vunpack.c.l.b16 %v31
    %v80 = vunpack.c.l.b16 %v32
    %v81 = vunpack.c.l.b16 %v33
    %v82 = vunpack.c.l.b16 %v34
    %v83 = vunpack.c.l.b16 %v35
    %v84 = vunpack.c.l.b16 %v36
    %v85 = vunpack.c.l.b16 %v37
    %v86 = vunpack.c.l.b16 %v38
    %v87 = vunpack.c.l.b16 %v39
    %v88 = vunpack.c.l.b16 %v40
    %v89 = vunpack.c.l.b16 %v41
    %v90 = vunpack.c.l.b16 %v42
    %v91 = vunpack.c.l.b16 %v43
    %v92 = vpack.c.b16 %v77, %v76
    %v93 = vpack.c.b16 %v79, %v78
    %v94 = vpack.c.b16 %v81, %v80
    %v95 = vpack.c.b16 %v83, %v82
    %v96 = vpack.c.b16 %v85, %v84
    %v97 = vpack.c.b16 %v87, %v86
    %v98 = vpack.c.b16 %v89, %v88
    %v99 = vpack.c.b16 %v91, %v90
    %108 = vmatprep.subr.bf16.mxu0 0
    %109 = vmatpush1.bf16.msra.mxu0 %v99
    %110 = vmatprep.subr.bf16.mxu0 0
    %111 = vmatpush1.bf16.msra.mxu0 %v98
    %112 = vmatprep.subr.bf16.mxu0 0
    %113 = vmatpush1.bf16.msra.mxu0 %v97
    %114 = vmatprep.subr.bf16.mxu0 0
    %115 = vmatpush1.bf16.msra.mxu0 %v96
    %116 = vmatprep.subr.bf16.mxu0 0
    %117 = vmatpush1.bf16.msra.mxu0 %v95
    %118 = vmatprep.subr.bf16.mxu0 0
    %119 = vmatpush1.bf16.msra.mxu0 %v94
    %120 = vmatprep.subr.bf16.mxu0 0
    %121 = vmatpush1.bf16.msra.mxu0 %v93
    %122 = vmatprep.subr.bf16.mxu0 0
    %123 = vmatpush1.bf16.msra.mxu0 %v92
    %124 = vmatprep.subr.bf16.mxu0 0
    %125 = vmatpush2.bf16.msra.mxu0 0
    %126 = vmatprep.subr.bf16.mxu0 0
    %127 = vmatpush2.bf16.msra.mxu0 0
    %128 = vmatprep.subr.bf16.mxu0 0
    %129 = vmatpush2.bf16.msra.mxu0 0
    %130 = vmatprep.subr.bf16.mxu0 0
    %131 = vmatpush2.bf16.msra.mxu0 0
    %132 = vmatprep.subr.bf16.mxu0 0
    %133 = vmatpush2.bf16.msra.mxu0 0
    %134 = vmatprep.subr.bf16.mxu0 0
    %135 = vmatpush2.bf16.msra.mxu0 0
    %136 = vmatprep.subr.bf16.mxu0 0
    %137 = vmatpush2.bf16.msra.mxu0 0
    %138 = vmatprep.subr.bf16.mxu0 0
    %139 = vmatpush2.bf16.msra.mxu0 0
    %140 = vmatprep.mubr.bf16.mxu0 0
    %141 = vmatmul.mubr.bf16.gmra.mxu0 %v58
    %v142 = vpop.f32.mrf.mxu0
    %v143 = vadd.f32 %v49, %v142
    %v144 = vpop.f32.mrf.mxu0
    %v145 = vpop.f32.mrf.mxu0
    %v146 = vpop.f32.mrf.mxu0
    %147 = vdwg.mxu0
    %v148 = vmax.f32 %v143, 0.0
    %v149 = vpack.c.bf16 %v148, %v148
    %v150 = vld [vmem:[%s3] sm:$0xf]
    %v151 = vld [vmem:[%s3 + $0x4] sm:$0xf]
    %v152 = vld [vmem:[%s3 + $0x8] sm:$0xf]
    %v153 = vld [vmem:[%s3 + $0xc] sm:$0xf]
    %v154 = vld [vmem:[%s3 + $0x10] sm:$0xf]
    %v155 = vld [vmem:[%s3 + $0x14] sm:$0xf]
    %v156 = vld [vmem:[%s3 + $0x18] sm:$0xf]
    %v157 = vld [vmem:[%s3 + $0x1c] sm:$0xf]
    %v158 = vld [vmem:[%s3 + $0x20] sm:$0xf]
    %v159 = vld [vmem:[%s3 + $0x24] sm:$0xf]
    %v160 = vld [vmem:[%s3 + $0x28] sm:$0xf]
    %v161 = vld [vmem:[%s3 + $0x2c] sm:$0xf]
    %v162 = vld [vmem:[%s3 + $0x30] sm:$0xf]
    %v163 = vld [vmem:[%s3 + $0x34] sm:$0xf]
    %v164 = vld [vmem:[%s3 + $0x38] sm:$0xf]
    %v165 = vld [vmem:[%s3 + $0x3c] sm:$0xf]
    %v166 = vld [vmem:[%s4] sm:$0x1]
    %v168 = vlaneseq
    %v169 = vshrl.u32 %v168, 7
    %v170 = vsub.s32 0, %v169
    %v171 = vrot.slane %v166, %v170
    %v189 = vunpack.c.l.b16 %v150
    %v190 = vunpack.c.l.b16 %v151
    %v191 = vunpack.c.l.b16 %v152
    %v192 = vunpack.c.l.b16 %v153
    %v193 = vunpack.c.l.b16 %v154
    %v194 = vunpack.c.l.b16 %v155
    %v195 = vunpack.c.l.b16 %v156
    %v196 = vunpack.c.l.b16 %v157
    %v197 = vunpack.c.l.b16 %v158
    %v198 = vunpack.c.l.b16 %v159
    %v199 = vunpack.c.l.b16 %v160
    %v200 = vunpack.c.l.b16 %v161
    %v201 = vunpack.c.l.b16 %v162
    %v202 = vunpack.c.l.b16 %v163
    %v203 = vunpack.c.l.b16 %v164
    %v204 = vunpack.c.l.b16 %v165
    %v205 = vpack.c.b16 %v190, %v189
    %v206 = vpack.c.b16 %v192, %v191
    %v207 = vpack.c.b16 %v194, %v193
    %v208 = vpack.c.b16 %v196, %v195
    %v209 = vpack.c.b16 %v198, %v197
    %v210 = vpack.c.b16 %v200, %v199
    %v211 = vpack.c.b16 %v202, %v201
    %v212 = vpack.c.b16 %v204, %v203
    %221 = vmatprep.subr.bf16.mxu0 0
    %222 = vmatpush1.bf16.msra.mxu0 %v212
    %223 = vmatprep.subr.bf16.mxu0 0
    %224 = vmatpush1.bf16.msra.mxu0 %v211
    %225 = vmatprep.subr.bf16.mxu0 0
    %226 = vmatpush1.bf16.msra.mxu0 %v210
    %227 = vmatprep.subr.bf16.mxu0 0
    %228 = vmatpush1.bf16.msra.mxu0 %v209
    %229 = vmatprep.subr.bf16.mxu0 0
    %230 = vmatpush1.bf16.msra.mxu0 %v208
    %231 = vmatprep.subr.bf16.mxu0 0
    %232 = vmatpush1.bf16.msra.mxu0 %v207
    %233 = vmatprep.subr.bf16.mxu0 0
    %234 = vmatpush1.bf16.msra.mxu0 %v206
    %235 = vmatprep.subr.bf16.mxu0 0
    %236 = vmatpush1.bf16.msra.mxu0 %v205
    %237 = vmatprep.subr.bf16.mxu0 0
    %238 = vmatpush2.bf16.msra.mxu0 0
    %239 = vmatprep.subr.bf16.mxu0 0
    %240 = vmatpush2.bf16.msra.mxu0 0
    %241 = vmatprep.subr.bf16.mxu0 0
    %242 = vmatpush2.bf16.msra.mxu0 0
    %243 = vmatprep.subr.bf16.mxu0 0
    %244 = vmatpush2.bf16.msra.mxu0 0
    %245 = vmatprep.subr.bf16.mxu0 0
    %246 = vmatpush2.bf16.msra.mxu0 0
    %247 = vmatprep.subr.bf16.mxu0 0
    %248 = vmatpush2.bf16.msra.mxu0 0
    %249 = vmatprep.subr.bf16.mxu0 0
    %250 = vmatpush2.bf16.msra.mxu0 0
    %251 = vmatprep.subr.bf16.mxu0 0
    %252 = vmatpush2.bf16.msra.mxu0 0
    %253 = vmatprep.mubr.bf16.mxu0 0
    %254 = vmatmul.mubr.bf16.gmra.mxu0 %v149
    %v255 = vpop.f32.mrf.mxu0
    %v256 = vadd.f32 %v171, %v255
    %v257 = vpop.f32.mrf.mxu0
    %v258 = vpop.f32.mrf.mxu0
    %v259 = vpop.f32.mrf.mxu0
    %260 = vdwg.mxu0
    %261 = vst [vmem:[#allocation2] sm:$0x3] %v256
    // Predicated region
    $region22: #{lupnet_forward.19} parent=1 // pred_check
      _
    $region23: #{lupnet_forward.19} parent=1 // pred_check_branch
      %263 = sbr.rel (0) target = $region25
    $region24: #{lupnet_forward.19} parent=1 // pred_region
      %s265 = ssub.s32 32, 32
      %266 = vsyncadd [#allocation3], %s265
      %s268 = sshll.u32 [#allocation2], 4
      %s269 = int_to_ptr.vmem [resolvable:$true] %s268
      %271 = dma.vmem_to_hbm [thread:$0]  %s269, 32, %s5, [#allocation3]
    $region25: #{lupnet_forward.19} parent=1 // pred_fallthru
      _
    // Predicated region
    $region26: #{lupnet_forward.19} parent=1 // pred_check
      _
    $region27: #{lupnet_forward.19} parent=1 // pred_check_branch
      %273 = sbr.rel (0) target = $region29
    $region28: #{lupnet_forward.19} parent=1 // pred_region
      %274 = dma.done [#allocation3], 32
    $region29: #{lupnet_forward.19} parent=1 // pred_fallthru
      _
    %275 = vsyncpa [#allocation3], 1

</llo_original>
